<compile_context>
chip_gen: v7x
topology: tpu7x:2x2x1
jax: 0.10.0
libtpu: 0.0.40
codegen_flags: <defaults>
</compile_context>

<pallas_src>
import math

import jax
import jax.numpy as jnp
from jax.experimental import pallas as pl
from jax.experimental.pallas import tpu as pltpu

# ----------------------------- hyper-parameters ------------------------------
NUM_CLASSES = 10
N_MELS = 8            # "n_mels" (small for the demo)
D_MODEL = 128         # "transformer_dim"
N_HEADS = 4
HEAD_DIM = D_MODEL // N_HEADS
N_LAYERS = 2
D_FF = 256            # dim_feedforward
SR = 16000
N_FFT = 400
HOP = 160
NCHUNK = -(-N_FFT // HOP)     # 3 hop-sized chunks cover one frame
N_FREQS = N_FFT // 2 + 1
NFREQ_PAD = 256       # next multiple of 128 >= N_FREQS (lane-dense DFT output)
MAX_POS = 101
LN_EPS = 1e-5
BN_EPS = 1e-5
C1, C2 = 32, 64
CLS_PAD = 128         # classifier lanes padded to 128, sliced to NUM_CLASSES outside
LOG10_FAC = 10.0 / math.log(10.0)


# =============================== fused Pallas kernel ===============================
def _mel_transformer_kernel(
        wav_ref, dft_ref, fb_ref, m1_ref, b1_ref, m2_ref, b2_ref, pw_ref, pbpos_ref,
        wqkv_ref, bqkv_ref, wout_ref, bout_ref, ln1g_ref, ln1b_ref,
        wff1_ref, bff1_ref, wff2_ref, bff2_ref, ln2g_ref, ln2b_ref,
        clsg_ref, clsb_ref, clsw_ref, clsbb_ref, o_ref):
    """Whole Mel_transformer forward for one batch item (grid over batch)."""
    s = pbpos_ref.shape[0]                                   # sequence length (static)

    # ---- STFT power spectrogram: framing folded into 3 accumulated chunk matmuls ----
    # frame f = wav rows [f, f+1, f+2] (each HOP wide); dft_ref[r] holds the windowed
    # cos|-sin coefficients for chunk r (zero-padded past N_FFT).
    spec = jnp.dot(wav_ref[0, pl.ds(0, s), :].astype(jnp.bfloat16), dft_ref[0],
                   preferred_element_type=jnp.float32)
    for r in range(1, NCHUNK):
        spec += jnp.dot(wav_ref[0, pl.ds(r, s), :].astype(jnp.bfloat16), dft_ref[r],
                        preferred_element_type=jnp.float32)
    re = spec[:, :NFREQ_PAD]
    im = spec[:, NFREQ_PAD:]
    power = re * re + im * im                                # (S, 256), padded freqs are 0

    # ---- mel filterbank + AmplitudeToDB ----
    mel = jnp.dot(power.astype(jnp.bfloat16), fb_ref[...],
                  preferred_element_type=jnp.float32)        # (S, n_mels)
    img = LOG10_FAC * jnp.log(jnp.maximum(mel, 1e-10))       # layout: (W=S frames, H=n_mels)

    # ---- 3x3 conv "kw" taps via sublane rolls + boundary masks (no shift matmuls) ----
    def taps(v):
        row = jax.lax.broadcasted_iota(jnp.int32, v.shape, 0)
        down = jnp.where(row == 0, 0.0, pltpu.roll(v, 1, axis=0))          # v[w-1]
        up = jnp.where(row == s - 1, 0.0, pltpu.roll(v, s - 1, axis=0))    # v[w+1]
        return down, v, up

    # conv1 + BN + ReLU : y1[w, h*C1 + c] (kh taps + H-boundary folded into m1)
    t0, t1, t2 = taps(img)
    acc1 = jnp.dot(t0.astype(jnp.bfloat16), m1_ref[0], preferred_element_type=jnp.float32)
    acc1 += jnp.dot(t1.astype(jnp.bfloat16), m1_ref[1], preferred_element_type=jnp.float32)
    acc1 += jnp.dot(t2.astype(jnp.bfloat16), m1_ref[2], preferred_element_type=jnp.float32)
    y1 = jnp.maximum(acc1 + b1_ref[...], 0.0)                # (S, H*C1)

    # conv2 + BN + ReLU : y2[w, h*C2 + c]
    u0, u1, u2 = taps(y1)
    acc2 = jnp.dot(u0.astype(jnp.bfloat16), m2_ref[0], preferred_element_type=jnp.float32)
    acc2 += jnp.dot(u1.astype(jnp.bfloat16), m2_ref[1], preferred_element_type=jnp.float32)
    acc2 += jnp.dot(u2.astype(jnp.bfloat16), m2_ref[2], preferred_element_type=jnp.float32)
    y2 = jnp.maximum(acc2 + b2_ref[...], 0.0)                # (S, H*C2)

    # ---- patch projection (PyTorch view/permute folded into pw) + bias + pos emb ----
    x = jnp.dot(y2.astype(jnp.bfloat16), pw_ref[...],
                preferred_element_type=jnp.float32) + pbpos_ref[...]        # (S, D)

    # ---- transformer encoder (post-norm), all layers fused ----
    def layer_norm(v, g, b):
        mu = jnp.mean(v, axis=-1, keepdims=True)
        var = jnp.mean((v - mu) ** 2, axis=-1, keepdims=True)
        return (v - mu) * jax.lax.rsqrt(var + LN_EPS) * g + b

    lane = jax.lax.broadcasted_iota(jnp.int32, (s, D_MODEL), 1)
    scale = 1.0 / math.sqrt(HEAD_DIM)
    xb = x.astype(jnp.bfloat16)                              # bf16 shadow of residual stream
    for l in range(N_LAYERS):
        qkv = jnp.dot(xb, wqkv_ref[l], preferred_element_type=jnp.float32) + bqkv_ref[l]
        q = qkv[:, :D_MODEL]                                 # aligned 128-lane slices only
        k = (qkv[:, D_MODEL:2 * D_MODEL] * scale).astype(jnp.bfloat16)
        v = qkv[:, 2 * D_MODEL:]

        heads = None                                         # per-head outputs summed into
        for h in range(N_HEADS):                             # their own lane blocks
            hmask = (lane >= h * HEAD_DIM) & (lane < (h + 1) * HEAD_DIM)
            qm = jnp.where(hmask, q, 0.0).astype(jnp.bfloat16)
            sc = jax.lax.dot_general(qm, k, (((1,), (1,)), ((), ())),
                                     preferred_element_type=jnp.float32)   # (S, S)
            sc = sc - jnp.max(sc, axis=-1, keepdims=True)
            p = jnp.exp(sc)
            p = p * pl.reciprocal(jnp.sum(p, axis=-1, keepdims=True), approx=True)
            vm = jnp.where(hmask, v, 0.0).astype(jnp.bfloat16)
            oh = jnp.dot(p.astype(jnp.bfloat16), vm, preferred_element_type=jnp.float32)
            heads = oh if heads is None else heads + oh      # lanes of other heads are zero

        attn = jnp.dot(heads.astype(jnp.bfloat16), wout_ref[l],
                       preferred_element_type=jnp.float32) + bout_ref[l]    # one out-proj
        x = layer_norm(x + attn, ln1g_ref[l], ln1b_ref[l])
        xb = x.astype(jnp.bfloat16)

        ff = jnp.maximum(jnp.dot(xb, wff1_ref[l], preferred_element_type=jnp.float32)
                         + bff1_ref[l], 0.0)
        ff = jnp.dot(ff.astype(jnp.bfloat16), wff2_ref[l],
                     preferred_element_type=jnp.float32) + bff2_ref[l]
        x = layer_norm(x + ff, ln2g_ref[l], ln2b_ref[l])
        xb = x.astype(jnp.bfloat16)

    # ---- classifier head: mean over sequence + LayerNorm + Linear (padded lanes) ----
    pooled = jnp.mean(x, axis=0, keepdims=True)              # (1, D)
    hcls = layer_norm(pooled, clsg_ref[...], clsb_ref[...])
    o_ref[0] = jnp.dot(hcls.astype(jnp.bfloat16), clsw_ref[...],
                       preferred_element_type=jnp.float32) + clsbb_ref[...]


# ============================ constant / weight prep ===========================
def _hz_to_mel(f):
    return 2595.0 * jnp.log10(1.0 + f / 700.0)


def _mel_to_hz(m):
    return 700.0 * (10.0 ** (m / 2595.0) - 1.0)


def mel_filterbank(n_freqs, n_mels, sr, f_min=0.0, f_max=None):
    # torchaudio defaults: mel_scale="htk", norm=None
    f_max = sr / 2.0 if f_max is None else f_max
    all_freqs = jnp.linspace(0.0, sr / 2.0, n_freqs)
    m_pts = jnp.linspace(_hz_to_mel(f_min), _hz_to_mel(f_max), n_mels + 2)
    f_pts = _mel_to_hz(m_pts)
    f_diff = f_pts[1:] - f_pts[:-1]
    slopes = f_pts[None, :] - all_freqs[:, None]             # (n_freqs, n_mels+2)
    down = -slopes[:, :-2] / f_diff[:-1]
    up = slopes[:, 2:] / f_diff[1:]
    return jnp.maximum(0.0, jnp.minimum(down, up)).astype(jnp.float32)


def dft_mel_constants():
    """Windowed DFT (cos|-sin packed) split into NCHUNK hop-sized row chunks, + mel fb."""
    n = jnp.arange(N_FFT, dtype=jnp.float32)
    window = 0.5 - 0.5 * jnp.cos(2.0 * jnp.pi * n / N_FFT)   # periodic Hann
    k = jnp.arange(N_FREQS, dtype=jnp.float32)
    ang = 2.0 * jnp.pi * n[:, None] * k[None, :] / N_FFT
    cosm = window[:, None] * jnp.cos(ang)                    # (N_FFT, N_FREQS)
    sinm = -window[:, None] * jnp.sin(ang)
    padf = NFREQ_PAD - N_FREQS
    dft = jnp.concatenate([jnp.pad(cosm, ((0, 0), (0, padf))),
                           jnp.pad(sinm, ((0, 0), (0, padf)))], axis=1)     # (400, 512)
    dft = jnp.pad(dft, ((0, NCHUNK * HOP - N_FFT), (0, 0)))                 # (480, 512)
    dftc = dft.reshape(NCHUNK, HOP, 2 * NFREQ_PAD).astype(jnp.bfloat16)
    fb = jnp.pad(mel_filterbank(N_FREQS, N_MELS, SR),
                 ((0, padf), (0, 0))).astype(jnp.bfloat16)                  # (512... (256, n_mels)
    return dftc, fb


def _fold_bn(w, b, g, beta, mean, var):
    scale = g * jax.lax.rsqrt(var + BN_EPS)
    return w * scale[:, None, None, None], (b - mean) * scale + beta


def _conv_expansions(params):
    """Block-expanded 3x3 conv weights (kh taps + H boundary + channel mix) - all tiny."""
    H = N_MELS
    w1f, b1f = _fold_bn(params["conv1_w"], params["conv1_b"], params["bn1_g"],
                        params["bn1_b"], params["bn1_m"], params["bn1_v"])
    w2f, b2f = _fold_bn(params["conv2_w"], params["conv2_b"], params["bn2_g"],
                        params["bn2_b"], params["bn2_m"], params["bn2_v"])

    d = jnp.arange(H)[:, None] - jnp.arange(H)[None, :] + 1      # h_in - h_out + 1
    valid = ((d >= 0) & (d <= 2)).astype(jnp.float32)            # (H, H)
    dclip = jnp.clip(d, 0, 2)

    # conv1 (Cin=1): m1[kw][h_in, h_out*C1 + c] = K1f[c, 0, kh, kw]  (kh = h_in - h_out + 1)
    w1t = jnp.transpose(w1f[:, 0, :, :], (2, 1, 0))              # (kw, kh, C1)
    m1 = w1t[:, dclip, :] * valid[None, :, :, None]              # (3, H, H, C1)
    m1 = m1.reshape(3, H, H * C1).astype(jnp.bfloat16)
    b1e = jnp.tile(b1f, H).reshape(1, H * C1)

    # conv2: m2[kw][h_in*C1 + ci, h_out*C2 + co] = K2f[co, ci, kh, kw]
    w2t = jnp.transpose(w2f, (3, 2, 1, 0))                       # (kw, kh, C1, C2)
    m2 = w2t[:, dclip, :, :] * valid[None, :, :, None, None]     # (3, H, H, C1, C2)
    m2 = jnp.transpose(m2, (0, 1, 3, 2, 4)).reshape(3, H * C1, H * C2).astype(jnp.bfloat16)
    b2e = jnp.tile(b2f, H).reshape(1, H * C2)

    # patch_proj with the (c*H + h) -> (h*C2 + c) feature permutation folded in
    pw = params["patch_w"].reshape(C2, H, D_MODEL)
    pw_perm = jnp.transpose(pw, (1, 0, 2)).reshape(H * C2, D_MODEL).astype(jnp.bfloat16)
    return m1, b1e, m2, b2e, pw_perm


def _stack_layers(layers):
    def st(name, dtype=jnp.float32, bias=False):
        a = jnp.stack([lp[name] for lp in layers])
        if bias:
            a = a[:, None, :]
        return a.astype(dtype)

    return (st("in_proj_w", jnp.bfloat16), st("in_proj_b", bias=True),
            st("out_proj_w", jnp.bfloat16), st("out_proj_b", bias=True),
            st("ln1_g", bias=True), st("ln1_b", bias=True),
            st("ff1_w", jnp.bfloat16), st("ff1_b", bias=True),
            st("ff2_w", jnp.bfloat16), st("ff2_b", bias=True),
            st("ln2_g", bias=True), st("ln2_b", bias=True))


# ------------------------------ parameter init --------------------------------
def init_params(key):
    keys = iter(jax.random.split(key, 64))
    nrm = lambda shape, s=0.02: s * jax.random.normal(next(keys), shape, jnp.float32)
    zeros = lambda shape: jnp.zeros(shape, jnp.float32)
    ones = lambda shape: jnp.ones(shape, jnp.float32)

    p = {
        "conv1_w": nrm((32, 1, 3, 3)), "conv1_b": zeros((32,)),
        "bn1_g": ones((32,)), "bn1_b": zeros((32,)),
        "bn1_m": zeros((32,)), "bn1_v": ones((32,)),
        "conv2_w": nrm((64, 32, 3, 3)), "conv2_b": zeros((64,)),
        "bn2_g": ones((64,)), "bn2_b": zeros((64,)),
        "bn2_m": zeros((64,)), "bn2_v": ones((64,)),
        "patch_w": nrm((N_MELS * 64, D_MODEL)), "patch_b": zeros((D_MODEL,)),
        "pos": nrm((1, MAX_POS, D_MODEL)),
        "cls_ln_g": ones((D_MODEL,)), "cls_ln_b": zeros((D_MODEL,)),
        "cls_w": nrm((D_MODEL, NUM_CLASSES)), "cls_b": zeros((NUM_CLASSES,)),
    }
    layers = []
    for _ in range(N_LAYERS):
        layers.append({
            "in_proj_w": nrm((D_MODEL, 3 * D_MODEL)), "in_proj_b": zeros((3 * D_MODEL,)),
            "out_proj_w": nrm((D_MODEL, D_MODEL)), "out_proj_b": zeros((D_MODEL,)),
            "ff1_w": nrm((D_MODEL, D_FF)), "ff1_b": zeros((D_FF,)),
            "ff2_w": nrm((D_FF, D_MODEL)), "ff2_b": zeros((D_MODEL,)),
            "ln1_g": ones((D_MODEL,)), "ln1_b": zeros((D_MODEL,)),
            "ln2_g": ones((D_MODEL,)), "ln2_b": zeros((D_MODEL,)),
        })
    p["layers"] = layers
    return p


# ------------------------------ forward pass ----------------------------------
def mel_transformer_forward(params, x):
    B = x.shape[0]
    wav = x[:, 0, :]                                            # (B, T)
    T = wav.shape[1]
    S = T // HOP + 1                                            # center=True frame count
    assert S <= MAX_POS

    # reflect padding (center=True) + reshape into HOP-wide rows; framing happens in-kernel
    pad = N_FFT // 2
    xp = jnp.pad(wav, ((0, 0), (pad, pad)), mode="reflect")     # (B, T + N_FFT)
    NR = S - 1 + NCHUNK                                         # rows needed by the kernel
    need = NR * HOP
    Tp = xp.shape[1]
    xp = jnp.pad(xp, ((0, 0), (0, need - Tp))) if need >= Tp else xp[:, :need]
    wav_rows = xp.reshape(B, NR, HOP)                           # (B, S+2, HOP) f32

    dftc, fb = dft_mel_constants()
    m1, b1e, m2, b2e, pw_perm = _conv_expansions(params)
    pbpos = params["pos"][0, :S, :] + params["patch_b"][None, :]   # bias + pos emb fused

    (wqkv, bqkv, wout, bout, ln1g, ln1b,
     wff1, bff1, wff2, bff2, ln2g, ln2b) = _stack_layers(params["layers"])
    clsg = params["cls_ln_g"].reshape(1, D_MODEL)
    clsb = params["cls_ln_b"].reshape(1, D_MODEL)
    clsw = jnp.pad(params["cls_w"],
                   ((0, 0), (0, CLS_PAD - NUM_CLASSES))).astype(jnp.bfloat16)
    clsbb = jnp.pad(params["cls_b"], (0, CLS_PAD - NUM_CLASSES)).reshape(1, CLS_PAD)

    L = N_LAYERS
    c2 = lambda shape: pl.BlockSpec(shape, lambda b: (0, 0))          # resident 2-D constant
    c3 = lambda shape: pl.BlockSpec(shape, lambda b: (0, 0, 0))       # resident 3-D constant

    logits_pad = pl.pallas_call(
        _mel_transformer_kernel,
        out_shape=jax.ShapeDtypeStruct((B, 1, CLS_PAD), jnp.float32),
        grid=(B,),
        in_specs=[
            pl.BlockSpec((1, NR, HOP), lambda b: (b, 0, 0)),          # waveform rows
            c3((NCHUNK, HOP, 2 * NFREQ_PAD)),                         # chunked DFT (bf16)
            c2((NFREQ_PAD, N_MELS)),                                  # mel filterbank
            c3((3, N_MELS, N_MELS * C1)),                             # conv1 expanded
            c2((1, N_MELS * C1)),
            c3((3, N_MELS * C1, N_MELS * C2)),                        # conv2 expanded
            c2((1, N_MELS * C2)),
            c2((N_MELS * C2, D_MODEL)),                               # patch proj
            c2((S, D_MODEL)),                                         # patch bias + pos emb
            c3((L, D_MODEL, 3 * D_MODEL)),                            # QKV
            c3((L, 1, 3 * D_MODEL)),
            c3((L, D_MODEL, D_MODEL)),                                # out proj
            c3((L, 1, D_MODEL)),
            c3((L, 1, D_MODEL)), c3((L, 1, D_MODEL)),                 # ln1
            c3((L, D_MODEL, D_FF)), c3((L, 1, D_FF)),                 # ff1
            c3((L, D_FF, D_MODEL)), c3((L, 1, D_MODEL)),              # ff2
            c3((L, 1, D_MODEL)), c3((L, 1, D_MODEL)),                 # ln2
            c2((1, D_MODEL)), c2((1, D_MODEL)),                       # head LayerNorm
            c2((D_MODEL, CLS_PAD)), c2((1, CLS_PAD)),                 # classifier
        ],
        out_specs=pl.BlockSpec((1, 1, CLS_PAD), lambda b: (b, 0, 0)),
        compiler_params=pltpu.CompilerParams(dimension_semantics=("parallel",)),
    )(wav_rows, dftc, fb, m1, b1e, m2, b2e, pw_perm, pbpos,
      wqkv, bqkv, wout, bout, ln1g, ln1b, wff1, bff1, wff2, bff2, ln2g, ln2b,
      clsg, clsb, clsw, clsbb)

    return logits_pad[:, 0, :NUM_CLASSES]


if __name__ == "__main__":
    key = jax.random.PRNGKey(0)
    pkey, xkey = jax.random.split(key)
    params = init_params(pkey)

    B, T = 2, 1120                      # -> n_frames = T//HOP + 1 = 8 (seq len 8)
    x = 0.1 * jax.random.normal(xkey, (B, 1, T), dtype=jnp.float32)

    logits = jax.jit(mel_transformer_forward)(params, x)
    logits = jax.block_until_ready(logits)
    assert logits.shape == (B, NUM_CLASSES)
    assert bool(jnp.all(jnp.isfinite(logits)))
    print("KERNEL_OK")
</pallas_src>

<mosaic_0001>
module attributes {stable_mosaic.version = 11 : i64} {
  func.func @_mel_transformer_kernel(%arg0: i32, %arg1: memref<1x10x160xf32, #tpu.memory_space<vmem>>, %arg2: memref<3x160x512xbf16, #tpu.memory_space<vmem>>, %arg3: memref<256x8xbf16, #tpu.memory_space<vmem>>, %arg4: memref<3x8x256xbf16, #tpu.memory_space<vmem>>, %arg5: memref<1x256xf32, #tpu.memory_space<vmem>>, %arg6: memref<3x256x512xbf16, #tpu.memory_space<vmem>>, %arg7: memref<1x512xf32, #tpu.memory_space<vmem>>, %arg8: memref<512x128xbf16, #tpu.memory_space<vmem>>, %arg9: memref<8x128xf32, #tpu.memory_space<vmem>>, %arg10: memref<2x128x384xbf16, #tpu.memory_space<vmem>>, %arg11: memref<2x1x384xf32, #tpu.memory_space<vmem>>, %arg12: memref<2x128x128xbf16, #tpu.memory_space<vmem>>, %arg13: memref<2x1x128xf32, #tpu.memory_space<vmem>>, %arg14: memref<2x1x128xf32, #tpu.memory_space<vmem>>, %arg15: memref<2x1x128xf32, #tpu.memory_space<vmem>>, %arg16: memref<2x128x256xbf16, #tpu.memory_space<vmem>>, %arg17: memref<2x1x256xf32, #tpu.memory_space<vmem>>, %arg18: memref<2x256x128xbf16, #tpu.memory_space<vmem>>, %arg19: memref<2x1x128xf32, #tpu.memory_space<vmem>>, %arg20: memref<2x1x128xf32, #tpu.memory_space<vmem>>, %arg21: memref<2x1x128xf32, #tpu.memory_space<vmem>>, %arg22: memref<1x128xf32, #tpu.memory_space<vmem>>, %arg23: memref<1x128xf32, #tpu.memory_space<vmem>>, %arg24: memref<128x128xbf16, #tpu.memory_space<vmem>>, %arg25: memref<1x128xf32, #tpu.memory_space<vmem>>, %arg26: memref<1x1x128xf32, #tpu.memory_space<vmem>>) attributes {dimension_semantics = [#tpu.dimension_semantics<parallel>], iteration_bounds = array<i64: 2>, scalar_prefetch = 0 : i64, scratch_operands = 0 : i64, tpu.core_type = #tpu.core_type<tc>, window_params = [{transform_indices = @transform_0, window_bounds = array<i64: 1, 10, 160>}, {pipeline_mode = #tpu.pipeline_mode<synchronous>, transform_indices = @transform_1, window_bounds = array<i64: 3, 160, 512>}, {pipeline_mode = #tpu.pipeline_mode<synchronous>, transform_indices = @transform_2, window_bounds = array<i64: 256, 8>}, {pipeline_mode = #tpu.pipeline_mode<synchronous>, transform_indices = @transform_3, window_bounds = array<i64: 3, 8, 256>}, {pipeline_mode = #tpu.pipeline_mode<synchronous>, transform_indices = @transform_4, window_bounds = array<i64: 1, 256>}, {pipeline_mode = #tpu.pipeline_mode<synchronous>, transform_indices = @transform_5, window_bounds = array<i64: 3, 256, 512>}, {pipeline_mode = #tpu.pipeline_mode<synchronous>, transform_indices = @transform_6, window_bounds = array<i64: 1, 512>}, {pipeline_mode = #tpu.pipeline_mode<synchronous>, transform_indices = @transform_7, window_bounds = array<i64: 512, 128>}, {pipeline_mode = #tpu.pipeline_mode<synchronous>, transform_indices = @transform_8, window_bounds = array<i64: 8, 128>}, {pipeline_mode = #tpu.pipeline_mode<synchronous>, transform_indices = @transform_9, window_bounds = array<i64: 2, 128, 384>}, {pipeline_mode = #tpu.pipeline_mode<synchronous>, transform_indices = @transform_10, window_bounds = array<i64: 2, 1, 384>}, {pipeline_mode = #tpu.pipeline_mode<synchronous>, transform_indices = @transform_11, window_bounds = array<i64: 2, 128, 128>}, {pipeline_mode = #tpu.pipeline_mode<synchronous>, transform_indices = @transform_12, window_bounds = array<i64: 2, 1, 128>}, {pipeline_mode = #tpu.pipeline_mode<synchronous>, transform_indices = @transform_13, window_bounds = array<i64: 2, 1, 128>}, {pipeline_mode = #tpu.pipeline_mode<synchronous>, transform_indices = @transform_14, window_bounds = array<i64: 2, 1, 128>}, {pipeline_mode = #tpu.pipeline_mode<synchronous>, transform_indices = @transform_15, window_bounds = array<i64: 2, 128, 256>}, {pipeline_mode = #tpu.pipeline_mode<synchronous>, transform_indices = @transform_16, window_bounds = array<i64: 2, 1, 256>}, {pipeline_mode = #tpu.pipeline_mode<synchronous>, transform_indices = @transform_17, window_bounds = array<i64: 2, 256, 128>}, {pipeline_mode = #tpu.pipeline_mode<synchronous>, transform_indices = @transform_18, window_bounds = array<i64: 2, 1, 128>}, {pipeline_mode = #tpu.pipeline_mode<synchronous>, transform_indices = @transform_19, window_bounds = array<i64: 2, 1, 128>}, {pipeline_mode = #tpu.pipeline_mode<synchronous>, transform_indices = @transform_20, window_bounds = array<i64: 2, 1, 128>}, {pipeline_mode = #tpu.pipeline_mode<synchronous>, transform_indices = @transform_21, window_bounds = array<i64: 1, 128>}, {pipeline_mode = #tpu.pipeline_mode<synchronous>, transform_indices = @transform_22, window_bounds = array<i64: 1, 128>}, {pipeline_mode = #tpu.pipeline_mode<synchronous>, transform_indices = @transform_23, window_bounds = array<i64: 128, 128>}, {pipeline_mode = #tpu.pipeline_mode<synchronous>, transform_indices = @transform_24, window_bounds = array<i64: 1, 128>}, {transform_indices = @transform_25, window_bounds = array<i64: 1, 1, 128>}]} {
    %c0 = arith.constant 0 : index
    %c0_0 = arith.constant 0 : index
    %c0_1 = arith.constant 0 : index
    %0 = vector.load %arg1[%c0, %c0_0, %c0_1] : memref<1x10x160xf32, #tpu.memory_space<vmem>>, vector<1x8x160xf32>
    %1 = vector.shape_cast %0 : vector<1x8x160xf32> to vector<8x160xf32>
    %2 = arith.truncf %1 : vector<8x160xf32> to vector<8x160xbf16>
    %c0_2 = arith.constant 0 : index
    %c0_3 = arith.constant 0 : index
    %c0_4 = arith.constant 0 : index
    %3 = vector.load %arg2[%c0_2, %c0_3, %c0_4] : memref<3x160x512xbf16, #tpu.memory_space<vmem>>, vector<1x160x512xbf16>
    %4 = vector.shape_cast %3 : vector<1x160x512xbf16> to vector<160x512xbf16>
    %cst = arith.constant dense<0.000000e+00> : vector<8x512xf32>
    %5 = tpu.matmul %2, %4, %cst {dimension_numbers = #tpu.dot_dimension_numbers<[1], [0], [0], [1], [0, 0, 1, 1], [], []>} : vector<8x160xbf16>, vector<160x512xbf16>, vector<8x512xf32> -> vector<8x512xf32>
    %c0_5 = arith.constant 0 : index
    %c1 = arith.constant 1 : index
    %c0_6 = arith.constant 0 : index
    %6 = vector.load %arg1[%c0_5, %c1, %c0_6] : memref<1x10x160xf32, #tpu.memory_space<vmem>>, vector<1x8x160xf32>
    %7 = vector.shape_cast %6 : vector<1x8x160xf32> to vector<8x160xf32>
    %8 = arith.truncf %7 : vector<8x160xf32> to vector<8x160xbf16>
    %c1_7 = arith.constant 1 : index
    %c0_8 = arith.constant 0 : index
    %c0_9 = arith.constant 0 : index
    %9 = vector.load %arg2[%c1_7, %c0_8, %c0_9] : memref<3x160x512xbf16, #tpu.memory_space<vmem>>, vector<1x160x512xbf16>
    %10 = vector.shape_cast %9 : vector<1x160x512xbf16> to vector<160x512xbf16>
    %cst_10 = arith.constant dense<0.000000e+00> : vector<8x512xf32>
    %11 = tpu.matmul %8, %10, %cst_10 {dimension_numbers = #tpu.dot_dimension_numbers<[1], [0], [0], [1], [0, 0, 1, 1], [], []>} : vector<8x160xbf16>, vector<160x512xbf16>, vector<8x512xf32> -> vector<8x512xf32>
    %12 = arith.addf %5, %11 : vector<8x512xf32>
    %c0_11 = arith.constant 0 : index
    %c2 = arith.constant 2 : index
    %c0_12 = arith.constant 0 : index
    %13 = vector.load %arg1[%c0_11, %c2, %c0_12] : memref<1x10x160xf32, #tpu.memory_space<vmem>>, vector<1x8x160xf32>
    %14 = vector.shape_cast %13 : vector<1x8x160xf32> to vector<8x160xf32>
    %15 = arith.truncf %14 : vector<8x160xf32> to vector<8x160xbf16>
    %c2_13 = arith.constant 2 : index
    %c0_14 = arith.constant 0 : index
    %c0_15 = arith.constant 0 : index
    %16 = vector.load %arg2[%c2_13, %c0_14, %c0_15] : memref<3x160x512xbf16, #tpu.memory_space<vmem>>, vector<1x160x512xbf16>
    %17 = vector.shape_cast %16 : vector<1x160x512xbf16> to vector<160x512xbf16>
    %cst_16 = arith.constant dense<0.000000e+00> : vector<8x512xf32>
    %18 = tpu.matmul %15, %17, %cst_16 {dimension_numbers = #tpu.dot_dimension_numbers<[1], [0], [0], [1], [0, 0, 1, 1], [], []>} : vector<8x160xbf16>, vector<160x512xbf16>, vector<8x512xf32> -> vector<8x512xf32>
    %19 = arith.addf %12, %18 : vector<8x512xf32>
    %20 = vector.extract_strided_slice %19 {offsets = [0, 0], sizes = [8, 256], strides = [1, 1]} : vector<8x512xf32> to vector<8x256xf32>
    %21 = vector.extract_strided_slice %19 {offsets = [0, 256], sizes = [8, 256], strides = [1, 1]} : vector<8x512xf32> to vector<8x256xf32>
    %22 = arith.mulf %20, %20 : vector<8x256xf32>
    %23 = arith.mulf %21, %21 : vector<8x256xf32>
    %24 = arith.addf %22, %23 : vector<8x256xf32>
    %25 = arith.truncf %24 : vector<8x256xf32> to vector<8x256xbf16>
    %c0_17 = arith.constant 0 : index
    %c0_18 = arith.constant 0 : index
    %26 = vector.load %arg3[%c0_17, %c0_18] : memref<256x8xbf16, #tpu.memory_space<vmem>>, vector<256x8xbf16>
    %cst_19 = arith.constant dense<0.000000e+00> : vector<8x8xf32>
    %27 = tpu.matmul %25, %26, %cst_19 {dimension_numbers = #tpu.dot_dimension_numbers<[1], [0], [0], [1], [0, 0, 1, 1], [], []>} : vector<8x256xbf16>, vector<256x8xbf16>, vector<8x8xf32> -> vector<8x8xf32>
    %cst_20 = arith.constant 1.000000e-10 : f32
    %28 = vector.broadcast %cst_20 : f32 to vector<8x8xf32>
    %29 = arith.maximumf %27, %28 : vector<8x8xf32>
    %30 = math.log %29 : vector<8x8xf32>
    %cst_21 = arith.constant 4.34294462 : f32
    %31 = vector.broadcast %cst_21 : f32 to vector<8x8xf32>
    %32 = arith.mulf %31, %30 : vector<8x8xf32>
    %33 = tpu.iota {dimensions = array<i32: 0>} : vector<8x8xi32>
    %c0_i32 = arith.constant 0 : i32
    %34 = vector.broadcast %c0_i32 : i32 to vector<8x8xi32>
    %35 = arith.cmpi eq, %33, %34 : vector<8x8xi32>
    %c1_i32 = arith.constant 1 : i32
    %36 = tpu.dynamic_rotate %32 by %c1_i32 dim 0 : vector<8x8xf32>, i32 -> vector<8x8xf32>
    %cst_22 = arith.constant 0.000000e+00 : f32
    %37 = vector.broadcast %cst_22 : f32 to vector<8x8xf32>
    %38 = arith.select %35, %37, %36 : vector<8x8xi1>, vector<8x8xf32>
    %c7_i32 = arith.constant 7 : i32
    %39 = vector.broadcast %c7_i32 : i32 to vector<8x8xi32>
    %40 = arith.cmpi eq, %33, %39 : vector<8x8xi32>
    %c7_i32_23 = arith.constant 7 : i32
    %41 = tpu.dynamic_rotate %32 by %c7_i32_23 dim 0 : vector<8x8xf32>, i32 -> vector<8x8xf32>
    %cst_24 = arith.constant 0.000000e+00 : f32
    %42 = vector.broadcast %cst_24 : f32 to vector<8x8xf32>
    %43 = arith.select %40, %42, %41 : vector<8x8xi1>, vector<8x8xf32>
    %44 = arith.truncf %38 : vector<8x8xf32> to vector<8x8xbf16>
    %c0_25 = arith.constant 0 : index
    %c0_26 = arith.constant 0 : index
    %c0_27 = arith.constant 0 : index
    %45 = vector.load %arg4[%c0_25, %c0_26, %c0_27] : memref<3x8x256xbf16, #tpu.memory_space<vmem>>, vector<1x8x256xbf16>
    %46 = vector.shape_cast %45 : vector<1x8x256xbf16> to vector<8x256xbf16>
    %cst_28 = arith.constant dense<0.000000e+00> : vector<8x256xf32>
    %47 = tpu.matmul %44, %46, %cst_28 {dimension_numbers = #tpu.dot_dimension_numbers<[1], [0], [0], [1], [0, 0, 1, 1], [], []>} : vector<8x8xbf16>, vector<8x256xbf16>, vector<8x256xf32> -> vector<8x256xf32>
    %48 = arith.truncf %32 : vector<8x8xf32> to vector<8x8xbf16>
    %c1_29 = arith.constant 1 : index
    %c0_30 = arith.constant 0 : index
    %c0_31 = arith.constant 0 : index
    %49 = vector.load %arg4[%c1_29, %c0_30, %c0_31] : memref<3x8x256xbf16, #tpu.memory_space<vmem>>, vector<1x8x256xbf16>
    %50 = vector.shape_cast %49 : vector<1x8x256xbf16> to vector<8x256xbf16>
    %cst_32 = arith.constant dense<0.000000e+00> : vector<8x256xf32>
    %51 = tpu.matmul %48, %50, %cst_32 {dimension_numbers = #tpu.dot_dimension_numbers<[1], [0], [0], [1], [0, 0, 1, 1], [], []>} : vector<8x8xbf16>, vector<8x256xbf16>, vector<8x256xf32> -> vector<8x256xf32>
    %52 = arith.addf %47, %51 : vector<8x256xf32>
    %53 = arith.truncf %43 : vector<8x8xf32> to vector<8x8xbf16>
    %c2_33 = arith.constant 2 : index
    %c0_34 = arith.constant 0 : index
    %c0_35 = arith.constant 0 : index
    %54 = vector.load %arg4[%c2_33, %c0_34, %c0_35] : memref<3x8x256xbf16, #tpu.memory_space<vmem>>, vector<1x8x256xbf16>
    %55 = vector.shape_cast %54 : vector<1x8x256xbf16> to vector<8x256xbf16>
    %cst_36 = arith.constant dense<0.000000e+00> : vector<8x256xf32>
    %56 = tpu.matmul %53, %55, %cst_36 {dimension_numbers = #tpu.dot_dimension_numbers<[1], [0], [0], [1], [0, 0, 1, 1], [], []>} : vector<8x8xbf16>, vector<8x256xbf16>, vector<8x256xf32> -> vector<8x256xf32>
    %57 = arith.addf %52, %56 : vector<8x256xf32>
    %c0_37 = arith.constant 0 : index
    %c0_38 = arith.constant 0 : index
    %58 = vector.load %arg5[%c0_37, %c0_38] : memref<1x256xf32, #tpu.memory_space<vmem>>, vector<1x256xf32>
    %59 = vector.broadcast %58 : vector<1x256xf32> to vector<8x256xf32>
    %60 = arith.addf %57, %59 : vector<8x256xf32>
    %cst_39 = arith.constant 0.000000e+00 : f32
    %61 = vector.broadcast %cst_39 : f32 to vector<8x256xf32>
    %62 = arith.maximumf %60, %61 : vector<8x256xf32>
    %63 = tpu.iota {dimensions = array<i32: 0>} : vector<8x256xi32>
    %c0_i32_40 = arith.constant 0 : i32
    %64 = vector.broadcast %c0_i32_40 : i32 to vector<8x256xi32>
    %65 = arith.cmpi eq, %63, %64 : vector<8x256xi32>
    %c1_i32_41 = arith.constant 1 : i32
    %66 = tpu.dynamic_rotate %62 by %c1_i32_41 dim 0 : vector<8x256xf32>, i32 -> vector<8x256xf32>
    %cst_42 = arith.constant 0.000000e+00 : f32
    %67 = vector.broadcast %cst_42 : f32 to vector<8x256xf32>
    %68 = arith.select %65, %67, %66 : vector<8x256xi1>, vector<8x256xf32>
    %c7_i32_43 = arith.constant 7 : i32
    %69 = vector.broadcast %c7_i32_43 : i32 to vector<8x256xi32>
    %70 = arith.cmpi eq, %63, %69 : vector<8x256xi32>
    %c7_i32_44 = arith.constant 7 : i32
    %71 = tpu.dynamic_rotate %62 by %c7_i32_44 dim 0 : vector<8x256xf32>, i32 -> vector<8x256xf32>
    %cst_45 = arith.constant 0.000000e+00 : f32
    %72 = vector.broadcast %cst_45 : f32 to vector<8x256xf32>
    %73 = arith.select %70, %72, %71 : vector<8x256xi1>, vector<8x256xf32>
    %74 = arith.truncf %68 : vector<8x256xf32> to vector<8x256xbf16>
    %c0_46 = arith.constant 0 : index
    %c0_47 = arith.constant 0 : index
    %c0_48 = arith.constant 0 : index
    %75 = vector.load %arg6[%c0_46, %c0_47, %c0_48] : memref<3x256x512xbf16, #tpu.memory_space<vmem>>, vector<1x256x512xbf16>
    %76 = vector.shape_cast %75 : vector<1x256x512xbf16> to vector<256x512xbf16>
    %cst_49 = arith.constant dense<0.000000e+00> : vector<8x512xf32>
    %77 = tpu.matmul %74, %76, %cst_49 {dimension_numbers = #tpu.dot_dimension_numbers<[1], [0], [0], [1], [0, 0, 1, 1], [], []>} : vector<8x256xbf16>, vector<256x512xbf16>, vector<8x512xf32> -> vector<8x512xf32>
    %78 = arith.truncf %62 : vector<8x256xf32> to vector<8x256xbf16>
    %c1_50 = arith.constant 1 : index
    %c0_51 = arith.constant 0 : index
    %c0_52 = arith.constant 0 : index
    %79 = vector.load %arg6[%c1_50, %c0_51, %c0_52] : memref<3x256x512xbf16, #tpu.memory_space<vmem>>, vector<1x256x512xbf16>
    %80 = vector.shape_cast %79 : vector<1x256x512xbf16> to vector<256x512xbf16>
    %cst_53 = arith.constant dense<0.000000e+00> : vector<8x512xf32>
    %81 = tpu.matmul %78, %80, %cst_53 {dimension_numbers = #tpu.dot_dimension_numbers<[1], [0], [0], [1], [0, 0, 1, 1], [], []>} : vector<8x256xbf16>, vector<256x512xbf16>, vector<8x512xf32> -> vector<8x512xf32>
    %82 = arith.addf %77, %81 : vector<8x512xf32>
    %83 = arith.truncf %73 : vector<8x256xf32> to vector<8x256xbf16>
    %c2_54 = arith.constant 2 : index
    %c0_55 = arith.constant 0 : index
    %c0_56 = arith.constant 0 : index
    %84 = vector.load %arg6[%c2_54, %c0_55, %c0_56] : memref<3x256x512xbf16, #tpu.memory_space<vmem>>, vector<1x256x512xbf16>
    %85 = vector.shape_cast %84 : vector<1x256x512xbf16> to vector<256x512xbf16>
    %cst_57 = arith.constant dense<0.000000e+00> : vector<8x512xf32>
    %86 = tpu.matmul %83, %85, %cst_57 {dimension_numbers = #tpu.dot_dimension_numbers<[1], [0], [0], [1], [0, 0, 1, 1], [], []>} : vector<8x256xbf16>, vector<256x512xbf16>, vector<8x512xf32> -> vector<8x512xf32>
    %87 = arith.addf %82, %86 : vector<8x512xf32>
    %c0_58 = arith.constant 0 : index
    %c0_59 = arith.constant 0 : index
    %88 = vector.load %arg7[%c0_58, %c0_59] : memref<1x512xf32, #tpu.memory_space<vmem>>, vector<1x512xf32>
    %89 = vector.broadcast %88 : vector<1x512xf32> to vector<8x512xf32>
    %90 = arith.addf %87, %89 : vector<8x512xf32>
    %cst_60 = arith.constant 0.000000e+00 : f32
    %91 = vector.broadcast %cst_60 : f32 to vector<8x512xf32>
    %92 = arith.maximumf %90, %91 : vector<8x512xf32>
    %93 = arith.truncf %92 : vector<8x512xf32> to vector<8x512xbf16>
    %c0_61 = arith.constant 0 : index
    %c0_62 = arith.constant 0 : index
    %94 = vector.load %arg8[%c0_61, %c0_62] : memref<512x128xbf16, #tpu.memory_space<vmem>>, vector<512x128xbf16>
    %cst_63 = arith.constant dense<0.000000e+00> : vector<8x128xf32>
    %95 = tpu.matmul %93, %94, %cst_63 {dimension_numbers = #tpu.dot_dimension_numbers<[1], [0], [0], [1], [0, 0, 1, 1], [], []>} : vector<8x512xbf16>, vector<512x128xbf16>, vector<8x128xf32> -> vector<8x128xf32>
    %c0_64 = arith.constant 0 : index
    %c0_65 = arith.constant 0 : index
    %96 = vector.load %arg9[%c0_64, %c0_65] : memref<8x128xf32, #tpu.memory_space<vmem>>, vector<8x128xf32>
    %97 = arith.addf %95, %96 : vector<8x128xf32>
    %98 = tpu.iota {dimensions = array<i32: 1>} : vector<8x128xi32>
    %99 = arith.truncf %97 : vector<8x128xf32> to vector<8x128xbf16>
    %c0_66 = arith.constant 0 : index
    %c0_67 = arith.constant 0 : index
    %c0_68 = arith.constant 0 : index
    %100 = vector.load %arg10[%c0_66, %c0_67, %c0_68] : memref<2x128x384xbf16, #tpu.memory_space<vmem>>, vector<1x128x384xbf16>
    %101 = vector.shape_cast %100 : vector<1x128x384xbf16> to vector<128x384xbf16>
    %cst_69 = arith.constant dense<0.000000e+00> : vector<8x384xf32>
    %102 = tpu.matmul %99, %101, %cst_69 {dimension_numbers = #tpu.dot_dimension_numbers<[1], [0], [0], [1], [0, 0, 1, 1], [], []>} : vector<8x128xbf16>, vector<128x384xbf16>, vector<8x384xf32> -> vector<8x384xf32>
    %c0_70 = arith.constant 0 : index
    %c0_71 = arith.constant 0 : index
    %c0_72 = arith.constant 0 : index
    %103 = vector.load %arg11[%c0_70, %c0_71, %c0_72] : memref<2x1x384xf32, #tpu.memory_space<vmem>>, vector<1x1x384xf32>
    %104 = vector.shape_cast %103 : vector<1x1x384xf32> to vector<1x384xf32>
    %105 = vector.broadcast %104 : vector<1x384xf32> to vector<8x384xf32>
    %106 = arith.addf %102, %105 : vector<8x384xf32>
    %107 = vector.extract_strided_slice %106 {offsets = [0, 0], sizes = [8, 128], strides = [1, 1]} : vector<8x384xf32> to vector<8x128xf32>
    %108 = vector.extract_strided_slice %106 {offsets = [0, 128], sizes = [8, 128], strides = [1, 1]} : vector<8x384xf32> to vector<8x128xf32>
    %cst_73 = arith.constant 0.176776692 : f32
    %109 = vector.broadcast %cst_73 : f32 to vector<8x128xf32>
    %110 = arith.mulf %108, %109 : vector<8x128xf32>
    %111 = arith.truncf %110 : vector<8x128xf32> to vector<8x128xbf16>
    %112 = vector.extract_strided_slice %106 {offsets = [0, 256], sizes = [8, 128], strides = [1, 1]} : vector<8x384xf32> to vector<8x128xf32>
    %c0_i32_74 = arith.constant 0 : i32
    %113 = vector.broadcast %c0_i32_74 : i32 to vector<8x128xi32>
    %114 = arith.cmpi sge, %98, %113 : vector<8x128xi32>
    %c32_i32 = arith.constant 32 : i32
    %115 = vector.broadcast %c32_i32 : i32 to vector<8x128xi32>
    %116 = arith.cmpi slt, %98, %115 : vector<8x128xi32>
    %117 = arith.andi %114, %116 : vector<8x128xi1>
    %cst_75 = arith.constant 0.000000e+00 : f32
    %118 = vector.broadcast %cst_75 : f32 to vector<8x128xf32>
    %119 = arith.select %117, %107, %118 : vector<8x128xi1>, vector<8x128xf32>
    %120 = arith.truncf %119 : vector<8x128xf32> to vector<8x128xbf16>
    %cst_76 = arith.constant dense<0.000000e+00> : vector<8x8xf32>
    %121 = tpu.matmul %120, %111, %cst_76 {dimension_numbers = #tpu.dot_dimension_numbers<[1], [1], [0], [0], [0, 0, 1, 0], [], []>} : vector<8x128xbf16>, vector<8x128xbf16>, vector<8x8xf32> -> vector<8x8xf32>
    %cst_77 = arith.constant dense<0xFF800000> : vector<8xf32>
    %122 = vector.multi_reduction <maximumf>, %121, %cst_77 [1] : vector<8x8xf32> to vector<8xf32>
    %123 = vector.shape_cast %122 : vector<8xf32> to vector<8x1xf32>
    %124 = vector.broadcast %123 : vector<8x1xf32> to vector<8x8xf32>
    %125 = arith.subf %121, %124 : vector<8x8xf32>
    %126 = math.exp %125 : vector<8x8xf32>
    %cst_78 = arith.constant dense<0.000000e+00> : vector<8xf32>
    %127 = vector.multi_reduction <add>, %126, %cst_78 [1] : vector<8x8xf32> to vector<8xf32>
    %128 = vector.shape_cast %127 : vector<8xf32> to vector<8x1xf32>
    %129 = tpu.reciprocal %128 {approx = true} : vector<8x1xf32> -> vector<8x1xf32>
    %130 = vector.broadcast %129 : vector<8x1xf32> to vector<8x8xf32>
    %131 = arith.mulf %126, %130 : vector<8x8xf32>
    %cst_79 = arith.constant 0.000000e+00 : f32
    %132 = vector.broadcast %cst_79 : f32 to vector<8x128xf32>
    %133 = arith.select %117, %112, %132 : vector<8x128xi1>, vector<8x128xf32>
    %134 = arith.truncf %133 : vector<8x128xf32> to vector<8x128xbf16>
    %135 = arith.truncf %131 : vector<8x8xf32> to vector<8x8xbf16>
    %cst_80 = arith.constant dense<0.000000e+00> : vector<8x128xf32>
    %136 = tpu.matmul %135, %134, %cst_80 {dimension_numbers = #tpu.dot_dimension_numbers<[1], [0], [0], [1], [0, 0, 1, 1], [], []>} : vector<8x8xbf16>, vector<8x128xbf16>, vector<8x128xf32> -> vector<8x128xf32>
    %c32_i32_81 = arith.constant 32 : i32
    %137 = vector.broadcast %c32_i32_81 : i32 to vector<8x128xi32>
    %138 = arith.cmpi sge, %98, %137 : vector<8x128xi32>
    %c64_i32 = arith.constant 64 : i32
    %139 = vector.broadcast %c64_i32 : i32 to vector<8x128xi32>
    %140 = arith.cmpi slt, %98, %139 : vector<8x128xi32>
    %141 = arith.andi %138, %140 : vector<8x128xi1>
    %cst_82 = arith.constant 0.000000e+00 : f32
    %142 = vector.broadcast %cst_82 : f32 to vector<8x128xf32>
    %143 = arith.select %141, %107, %142 : vector<8x128xi1>, vector<8x128xf32>
    %144 = arith.truncf %143 : vector<8x128xf32> to vector<8x128xbf16>
    %cst_83 = arith.constant dense<0.000000e+00> : vector<8x8xf32>
    %145 = tpu.matmul %144, %111, %cst_83 {dimension_numbers = #tpu.dot_dimension_numbers<[1], [1], [0], [0], [0, 0, 1, 0], [], []>} : vector<8x128xbf16>, vector<8x128xbf16>, vector<8x8xf32> -> vector<8x8xf32>
    %cst_84 = arith.constant dense<0xFF800000> : vector<8xf32>
    %146 = vector.multi_reduction <maximumf>, %145, %cst_84 [1] : vector<8x8xf32> to vector<8xf32>
    %147 = vector.shape_cast %146 : vector<8xf32> to vector<8x1xf32>
    %148 = vector.broadcast %147 : vector<8x1xf32> to vector<8x8xf32>
    %149 = arith.subf %145, %148 : vector<8x8xf32>
    %150 = math.exp %149 : vector<8x8xf32>
    %cst_85 = arith.constant dense<0.000000e+00> : vector<8xf32>
    %151 = vector.multi_reduction <add>, %150, %cst_85 [1] : vector<8x8xf32> to vector<8xf32>
    %152 = vector.shape_cast %151 : vector<8xf32> to vector<8x1xf32>
    %153 = tpu.reciprocal %152 {approx = true} : vector<8x1xf32> -> vector<8x1xf32>
    %154 = vector.broadcast %153 : vector<8x1xf32> to vector<8x8xf32>
    %155 = arith.mulf %150, %154 : vector<8x8xf32>
    %cst_86 = arith.constant 0.000000e+00 : f32
    %156 = vector.broadcast %cst_86 : f32 to vector<8x128xf32>
    %157 = arith.select %141, %112, %156 : vector<8x128xi1>, vector<8x128xf32>
    %158 = arith.truncf %157 : vector<8x128xf32> to vector<8x128xbf16>
    %159 = arith.truncf %155 : vector<8x8xf32> to vector<8x8xbf16>
    %cst_87 = arith.constant dense<0.000000e+00> : vector<8x128xf32>
    %160 = tpu.matmul %159, %158, %cst_87 {dimension_numbers = #tpu.dot_dimension_numbers<[1], [0], [0], [1], [0, 0, 1, 1], [], []>} : vector<8x8xbf16>, vector<8x128xbf16>, vector<8x128xf32> -> vector<8x128xf32>
    %161 = arith.addf %136, %160 : vector<8x128xf32>
    %c64_i32_88 = arith.constant 64 : i32
    %162 = vector.broadcast %c64_i32_88 : i32 to vector<8x128xi32>
    %163 = arith.cmpi sge, %98, %162 : vector<8x128xi32>
    %c96_i32 = arith.constant 96 : i32
    %164 = vector.broadcast %c96_i32 : i32 to vector<8x128xi32>
    %165 = arith.cmpi slt, %98, %164 : vector<8x128xi32>
    %166 = arith.andi %163, %165 : vector<8x128xi1>
    %cst_89 = arith.constant 0.000000e+00 : f32
    %167 = vector.broadcast %cst_89 : f32 to vector<8x128xf32>
    %168 = arith.select %166, %107, %167 : vector<8x128xi1>, vector<8x128xf32>
    %169 = arith.truncf %168 : vector<8x128xf32> to vector<8x128xbf16>
    %cst_90 = arith.constant dense<0.000000e+00> : vector<8x8xf32>
    %170 = tpu.matmul %169, %111, %cst_90 {dimension_numbers = #tpu.dot_dimension_numbers<[1], [1], [0], [0], [0, 0, 1, 0], [], []>} : vector<8x128xbf16>, vector<8x128xbf16>, vector<8x8xf32> -> vector<8x8xf32>
    %cst_91 = arith.constant dense<0xFF800000> : vector<8xf32>
    %171 = vector.multi_reduction <maximumf>, %170, %cst_91 [1] : vector<8x8xf32> to vector<8xf32>
    %172 = vector.shape_cast %171 : vector<8xf32> to vector<8x1xf32>
    %173 = vector.broadcast %172 : vector<8x1xf32> to vector<8x8xf32>
    %174 = arith.subf %170, %173 : vector<8x8xf32>
    %175 = math.exp %174 : vector<8x8xf32>
    %cst_92 = arith.constant dense<0.000000e+00> : vector<8xf32>
    %176 = vector.multi_reduction <add>, %175, %cst_92 [1] : vector<8x8xf32> to vector<8xf32>
    %177 = vector.shape_cast %176 : vector<8xf32> to vector<8x1xf32>
    %178 = tpu.reciprocal %177 {approx = true} : vector<8x1xf32> -> vector<8x1xf32>
    %179 = vector.broadcast %178 : vector<8x1xf32> to vector<8x8xf32>
    %180 = arith.mulf %175, %179 : vector<8x8xf32>
    %cst_93 = arith.constant 0.000000e+00 : f32
    %181 = vector.broadcast %cst_93 : f32 to vector<8x128xf32>
    %182 = arith.select %166, %112, %181 : vector<8x128xi1>, vector<8x128xf32>
    %183 = arith.truncf %182 : vector<8x128xf32> to vector<8x128xbf16>
    %184 = arith.truncf %180 : vector<8x8xf32> to vector<8x8xbf16>
    %cst_94 = arith.constant dense<0.000000e+00> : vector<8x128xf32>
    %185 = tpu.matmul %184, %183, %cst_94 {dimension_numbers = #tpu.dot_dimension_numbers<[1], [0], [0], [1], [0, 0, 1, 1], [], []>} : vector<8x8xbf16>, vector<8x128xbf16>, vector<8x128xf32> -> vector<8x128xf32>
    %186 = arith.addf %161, %185 : vector<8x128xf32>
    %c96_i32_95 = arith.constant 96 : i32
    %187 = vector.broadcast %c96_i32_95 : i32 to vector<8x128xi32>
    %188 = arith.cmpi sge, %98, %187 : vector<8x128xi32>
    %c128_i32 = arith.constant 128 : i32
    %189 = vector.broadcast %c128_i32 : i32 to vector<8x128xi32>
    %190 = arith.cmpi slt, %98, %189 : vector<8x128xi32>
    %191 = arith.andi %188, %190 : vector<8x128xi1>
    %cst_96 = arith.constant 0.000000e+00 : f32
    %192 = vector.broadcast %cst_96 : f32 to vector<8x128xf32>
    %193 = arith.select %191, %107, %192 : vector<8x128xi1>, vector<8x128xf32>
    %194 = arith.truncf %193 : vector<8x128xf32> to vector<8x128xbf16>
    %cst_97 = arith.constant dense<0.000000e+00> : vector<8x8xf32>
    %195 = tpu.matmul %194, %111, %cst_97 {dimension_numbers = #tpu.dot_dimension_numbers<[1], [1], [0], [0], [0, 0, 1, 0], [], []>} : vector<8x128xbf16>, vector<8x128xbf16>, vector<8x8xf32> -> vector<8x8xf32>
    %cst_98 = arith.constant dense<0xFF800000> : vector<8xf32>
    %196 = vector.multi_reduction <maximumf>, %195, %cst_98 [1] : vector<8x8xf32> to vector<8xf32>
    %197 = vector.shape_cast %196 : vector<8xf32> to vector<8x1xf32>
    %198 = vector.broadcast %197 : vector<8x1xf32> to vector<8x8xf32>
    %199 = arith.subf %195, %198 : vector<8x8xf32>
    %200 = math.exp %199 : vector<8x8xf32>
    %cst_99 = arith.constant dense<0.000000e+00> : vector<8xf32>
    %201 = vector.multi_reduction <add>, %200, %cst_99 [1] : vector<8x8xf32> to vector<8xf32>
    %202 = vector.shape_cast %201 : vector<8xf32> to vector<8x1xf32>
    %203 = tpu.reciprocal %202 {approx = true} : vector<8x1xf32> -> vector<8x1xf32>
    %204 = vector.broadcast %203 : vector<8x1xf32> to vector<8x8xf32>
    %205 = arith.mulf %200, %204 : vector<8x8xf32>
    %cst_100 = arith.constant 0.000000e+00 : f32
    %206 = vector.broadcast %cst_100 : f32 to vector<8x128xf32>
    %207 = arith.select %191, %112, %206 : vector<8x128xi1>, vector<8x128xf32>
    %208 = arith.truncf %207 : vector<8x128xf32> to vector<8x128xbf16>
    %209 = arith.truncf %205 : vector<8x8xf32> to vector<8x8xbf16>
    %cst_101 = arith.constant dense<0.000000e+00> : vector<8x128xf32>
    %210 = tpu.matmul %209, %208, %cst_101 {dimension_numbers = #tpu.dot_dimension_numbers<[1], [0], [0], [1], [0, 0, 1, 1], [], []>} : vector<8x8xbf16>, vector<8x128xbf16>, vector<8x128xf32> -> vector<8x128xf32>
    %211 = arith.addf %186, %210 : vector<8x128xf32>
    %212 = arith.truncf %211 : vector<8x128xf32> to vector<8x128xbf16>
    %c0_102 = arith.constant 0 : index
    %c0_103 = arith.constant 0 : index
    %c0_104 = arith.constant 0 : index
    %213 = vector.load %arg12[%c0_102, %c0_103, %c0_104] : memref<2x128x128xbf16, #tpu.memory_space<vmem>>, vector<1x128x128xbf16>
    %214 = vector.shape_cast %213 : vector<1x128x128xbf16> to vector<128x128xbf16>
    %cst_105 = arith.constant dense<0.000000e+00> : vector<8x128xf32>
    %215 = tpu.matmul %212, %214, %cst_105 {dimension_numbers = #tpu.dot_dimension_numbers<[1], [0], [0], [1], [0, 0, 1, 1], [], []>} : vector<8x128xbf16>, vector<128x128xbf16>, vector<8x128xf32> -> vector<8x128xf32>
    %c0_106 = arith.constant 0 : index
    %c0_107 = arith.constant 0 : index
    %c0_108 = arith.constant 0 : index
    %216 = vector.load %arg13[%c0_106, %c0_107, %c0_108] : memref<2x1x128xf32, #tpu.memory_space<vmem>>, vector<1x1x128xf32>
    %217 = vector.shape_cast %216 : vector<1x1x128xf32> to vector<1x128xf32>
    %218 = vector.broadcast %217 : vector<1x128xf32> to vector<8x128xf32>
    %219 = arith.addf %215, %218 : vector<8x128xf32>
    %220 = arith.addf %97, %219 : vector<8x128xf32>
    %c0_109 = arith.constant 0 : index
    %c0_110 = arith.constant 0 : index
    %c0_111 = arith.constant 0 : index
    %221 = vector.load %arg14[%c0_109, %c0_110, %c0_111] : memref<2x1x128xf32, #tpu.memory_space<vmem>>, vector<1x1x128xf32>
    %222 = vector.shape_cast %221 : vector<1x1x128xf32> to vector<1x128xf32>
    %c0_112 = arith.constant 0 : index
    %c0_113 = arith.constant 0 : index
    %c0_114 = arith.constant 0 : index
    %223 = vector.load %arg15[%c0_112, %c0_113, %c0_114] : memref<2x1x128xf32, #tpu.memory_space<vmem>>, vector<1x1x128xf32>
    %224 = vector.shape_cast %223 : vector<1x1x128xf32> to vector<1x128xf32>
    %cst_115 = arith.constant dense<0.000000e+00> : vector<8xf32>
    %225 = vector.multi_reduction <add>, %220, %cst_115 [1] : vector<8x128xf32> to vector<8xf32>
    %226 = vector.shape_cast %225 : vector<8xf32> to vector<8x1xf32>
    %cst_116 = arith.constant 1.280000e+02 : f32
    %227 = vector.broadcast %cst_116 : f32 to vector<8x1xf32>
    %228 = arith.divf %226, %227 : vector<8x1xf32>
    %229 = vector.broadcast %228 : vector<8x1xf32> to vector<8x128xf32>
    %230 = arith.subf %220, %229 : vector<8x128xf32>
    %231 = arith.mulf %230, %230 : vector<8x128xf32>
    %cst_117 = arith.constant dense<0.000000e+00> : vector<8xf32>
    %232 = vector.multi_reduction <add>, %231, %cst_117 [1] : vector<8x128xf32> to vector<8xf32>
    %233 = vector.shape_cast %232 : vector<8xf32> to vector<8x1xf32>
    %cst_118 = arith.constant 1.280000e+02 : f32
    %234 = vector.broadcast %cst_118 : f32 to vector<8x1xf32>
    %235 = arith.divf %233, %234 : vector<8x1xf32>
    %236 = vector.broadcast %228 : vector<8x1xf32> to vector<8x128xf32>
    %237 = arith.subf %220, %236 : vector<8x128xf32>
    %cst_119 = arith.constant 9.99999974E-6 : f32
    %238 = vector.broadcast %cst_119 : f32 to vector<8x1xf32>
    %239 = arith.addf %235, %238 : vector<8x1xf32>
    %240 = math.rsqrt %239 : vector<8x1xf32>
    %241 = vector.broadcast %240 : vector<8x1xf32> to vector<8x128xf32>
    %242 = arith.mulf %237, %241 : vector<8x128xf32>
    %243 = vector.broadcast %222 : vector<1x128xf32> to vector<8x128xf32>
    %244 = arith.mulf %242, %243 : vector<8x128xf32>
    %245 = vector.broadcast %224 : vector<1x128xf32> to vector<8x128xf32>
    %246 = arith.addf %244, %245 : vector<8x128xf32>
    %247 = arith.truncf %246 : vector<8x128xf32> to vector<8x128xbf16>
    %c0_120 = arith.constant 0 : index
    %c0_121 = arith.constant 0 : index
    %c0_122 = arith.constant 0 : index
    %248 = vector.load %arg16[%c0_120, %c0_121, %c0_122] : memref<2x128x256xbf16, #tpu.memory_space<vmem>>, vector<1x128x256xbf16>
    %249 = vector.shape_cast %248 : vector<1x128x256xbf16> to vector<128x256xbf16>
    %cst_123 = arith.constant dense<0.000000e+00> : vector<8x256xf32>
    %250 = tpu.matmul %247, %249, %cst_123 {dimension_numbers = #tpu.dot_dimension_numbers<[1], [0], [0], [1], [0, 0, 1, 1], [], []>} : vector<8x128xbf16>, vector<128x256xbf16>, vector<8x256xf32> -> vector<8x256xf32>
    %c0_124 = arith.constant 0 : index
    %c0_125 = arith.constant 0 : index
    %c0_126 = arith.constant 0 : index
    %251 = vector.load %arg17[%c0_124, %c0_125, %c0_126] : memref<2x1x256xf32, #tpu.memory_space<vmem>>, vector<1x1x256xf32>
    %252 = vector.shape_cast %251 : vector<1x1x256xf32> to vector<1x256xf32>
    %253 = vector.broadcast %252 : vector<1x256xf32> to vector<8x256xf32>
    %254 = arith.addf %250, %253 : vector<8x256xf32>
    %cst_127 = arith.constant 0.000000e+00 : f32
    %255 = vector.broadcast %cst_127 : f32 to vector<8x256xf32>
    %256 = arith.maximumf %254, %255 : vector<8x256xf32>
    %257 = arith.truncf %256 : vector<8x256xf32> to vector<8x256xbf16>
    %c0_128 = arith.constant 0 : index
    %c0_129 = arith.constant 0 : index
    %c0_130 = arith.constant 0 : index
    %258 = vector.load %arg18[%c0_128, %c0_129, %c0_130] : memref<2x256x128xbf16, #tpu.memory_space<vmem>>, vector<1x256x128xbf16>
    %259 = vector.shape_cast %258 : vector<1x256x128xbf16> to vector<256x128xbf16>
    %cst_131 = arith.constant dense<0.000000e+00> : vector<8x128xf32>
    %260 = tpu.matmul %257, %259, %cst_131 {dimension_numbers = #tpu.dot_dimension_numbers<[1], [0], [0], [1], [0, 0, 1, 1], [], []>} : vector<8x256xbf16>, vector<256x128xbf16>, vector<8x128xf32> -> vector<8x128xf32>
    %c0_132 = arith.constant 0 : index
    %c0_133 = arith.constant 0 : index
    %c0_134 = arith.constant 0 : index
    %261 = vector.load %arg19[%c0_132, %c0_133, %c0_134] : memref<2x1x128xf32, #tpu.memory_space<vmem>>, vector<1x1x128xf32>
    %262 = vector.shape_cast %261 : vector<1x1x128xf32> to vector<1x128xf32>
    %263 = vector.broadcast %262 : vector<1x128xf32> to vector<8x128xf32>
    %264 = arith.addf %260, %263 : vector<8x128xf32>
    %265 = arith.addf %246, %264 : vector<8x128xf32>
    %c0_135 = arith.constant 0 : index
    %c0_136 = arith.constant 0 : index
    %c0_137 = arith.constant 0 : index
    %266 = vector.load %arg20[%c0_135, %c0_136, %c0_137] : memref<2x1x128xf32, #tpu.memory_space<vmem>>, vector<1x1x128xf32>
    %267 = vector.shape_cast %266 : vector<1x1x128xf32> to vector<1x128xf32>
    %c0_138 = arith.constant 0 : index
    %c0_139 = arith.constant 0 : index
    %c0_140 = arith.constant 0 : index
    %268 = vector.load %arg21[%c0_138, %c0_139, %c0_140] : memref<2x1x128xf32, #tpu.memory_space<vmem>>, vector<1x1x128xf32>
    %269 = vector.shape_cast %268 : vector<1x1x128xf32> to vector<1x128xf32>
    %cst_141 = arith.constant dense<0.000000e+00> : vector<8xf32>
    %270 = vector.multi_reduction <add>, %265, %cst_141 [1] : vector<8x128xf32> to vector<8xf32>
    %271 = vector.shape_cast %270 : vector<8xf32> to vector<8x1xf32>
    %cst_142 = arith.constant 1.280000e+02 : f32
    %272 = vector.broadcast %cst_142 : f32 to vector<8x1xf32>
    %273 = arith.divf %271, %272 : vector<8x1xf32>
    %274 = vector.broadcast %273 : vector<8x1xf32> to vector<8x128xf32>
    %275 = arith.subf %265, %274 : vector<8x128xf32>
    %276 = arith.mulf %275, %275 : vector<8x128xf32>
    %cst_143 = arith.constant dense<0.000000e+00> : vector<8xf32>
    %277 = vector.multi_reduction <add>, %276, %cst_143 [1] : vector<8x128xf32> to vector<8xf32>
    %278 = vector.shape_cast %277 : vector<8xf32> to vector<8x1xf32>
    %cst_144 = arith.constant 1.280000e+02 : f32
    %279 = vector.broadcast %cst_144 : f32 to vector<8x1xf32>
    %280 = arith.divf %278, %279 : vector<8x1xf32>
    %281 = vector.broadcast %273 : vector<8x1xf32> to vector<8x128xf32>
    %282 = arith.subf %265, %281 : vector<8x128xf32>
    %cst_145 = arith.constant 9.99999974E-6 : f32
    %283 = vector.broadcast %cst_145 : f32 to vector<8x1xf32>
    %284 = arith.addf %280, %283 : vector<8x1xf32>
    %285 = math.rsqrt %284 : vector<8x1xf32>
    %286 = vector.broadcast %285 : vector<8x1xf32> to vector<8x128xf32>
    %287 = arith.mulf %282, %286 : vector<8x128xf32>
    %288 = vector.broadcast %267 : vector<1x128xf32> to vector<8x128xf32>
    %289 = arith.mulf %287, %288 : vector<8x128xf32>
    %290 = vector.broadcast %269 : vector<1x128xf32> to vector<8x128xf32>
    %291 = arith.addf %289, %290 : vector<8x128xf32>
    %292 = arith.truncf %291 : vector<8x128xf32> to vector<8x128xbf16>
    %c1_146 = arith.constant 1 : index
    %c0_147 = arith.constant 0 : index
    %c0_148 = arith.constant 0 : index
    %293 = vector.load %arg10[%c1_146, %c0_147, %c0_148] : memref<2x128x384xbf16, #tpu.memory_space<vmem>>, vector<1x128x384xbf16>
    %294 = vector.shape_cast %293 : vector<1x128x384xbf16> to vector<128x384xbf16>
    %cst_149 = arith.constant dense<0.000000e+00> : vector<8x384xf32>
    %295 = tpu.matmul %292, %294, %cst_149 {dimension_numbers = #tpu.dot_dimension_numbers<[1], [0], [0], [1], [0, 0, 1, 1], [], []>} : vector<8x128xbf16>, vector<128x384xbf16>, vector<8x384xf32> -> vector<8x384xf32>
    %c1_150 = arith.constant 1 : index
    %c0_151 = arith.constant 0 : index
    %c0_152 = arith.constant 0 : index
    %296 = vector.load %arg11[%c1_150, %c0_151, %c0_152] : memref<2x1x384xf32, #tpu.memory_space<vmem>>, vector<1x1x384xf32>
    %297 = vector.shape_cast %296 : vector<1x1x384xf32> to vector<1x384xf32>
    %298 = vector.broadcast %297 : vector<1x384xf32> to vector<8x384xf32>
    %299 = arith.addf %295, %298 : vector<8x384xf32>
    %300 = vector.extract_strided_slice %299 {offsets = [0, 0], sizes = [8, 128], strides = [1, 1]} : vector<8x384xf32> to vector<8x128xf32>
    %301 = vector.extract_strided_slice %299 {offsets = [0, 128], sizes = [8, 128], strides = [1, 1]} : vector<8x384xf32> to vector<8x128xf32>
    %cst_153 = arith.constant 0.176776692 : f32
    %302 = vector.broadcast %cst_153 : f32 to vector<8x128xf32>
    %303 = arith.mulf %301, %302 : vector<8x128xf32>
    %304 = arith.truncf %303 : vector<8x128xf32> to vector<8x128xbf16>
    %305 = vector.extract_strided_slice %299 {offsets = [0, 256], sizes = [8, 128], strides = [1, 1]} : vector<8x384xf32> to vector<8x128xf32>
    %c0_i32_154 = arith.constant 0 : i32
    %306 = vector.broadcast %c0_i32_154 : i32 to vector<8x128xi32>
    %307 = arith.cmpi sge, %98, %306 : vector<8x128xi32>
    %c32_i32_155 = arith.constant 32 : i32
    %308 = vector.broadcast %c32_i32_155 : i32 to vector<8x128xi32>
    %309 = arith.cmpi slt, %98, %308 : vector<8x128xi32>
    %310 = arith.andi %307, %309 : vector<8x128xi1>
    %cst_156 = arith.constant 0.000000e+00 : f32
    %311 = vector.broadcast %cst_156 : f32 to vector<8x128xf32>
    %312 = arith.select %310, %300, %311 : vector<8x128xi1>, vector<8x128xf32>
    %313 = arith.truncf %312 : vector<8x128xf32> to vector<8x128xbf16>
    %cst_157 = arith.constant dense<0.000000e+00> : vector<8x8xf32>
    %314 = tpu.matmul %313, %304, %cst_157 {dimension_numbers = #tpu.dot_dimension_numbers<[1], [1], [0], [0], [0, 0, 1, 0], [], []>} : vector<8x128xbf16>, vector<8x128xbf16>, vector<8x8xf32> -> vector<8x8xf32>
    %cst_158 = arith.constant dense<0xFF800000> : vector<8xf32>
    %315 = vector.multi_reduction <maximumf>, %314, %cst_158 [1] : vector<8x8xf32> to vector<8xf32>
    %316 = vector.shape_cast %315 : vector<8xf32> to vector<8x1xf32>
    %317 = vector.broadcast %316 : vector<8x1xf32> to vector<8x8xf32>
    %318 = arith.subf %314, %317 : vector<8x8xf32>
    %319 = math.exp %318 : vector<8x8xf32>
    %cst_159 = arith.constant dense<0.000000e+00> : vector<8xf32>
    %320 = vector.multi_reduction <add>, %319, %cst_159 [1] : vector<8x8xf32> to vector<8xf32>
    %321 = vector.shape_cast %320 : vector<8xf32> to vector<8x1xf32>
    %322 = tpu.reciprocal %321 {approx = true} : vector<8x1xf32> -> vector<8x1xf32>
    %323 = vector.broadcast %322 : vector<8x1xf32> to vector<8x8xf32>
    %324 = arith.mulf %319, %323 : vector<8x8xf32>
    %cst_160 = arith.constant 0.000000e+00 : f32
    %325 = vector.broadcast %cst_160 : f32 to vector<8x128xf32>
    %326 = arith.select %310, %305, %325 : vector<8x128xi1>, vector<8x128xf32>
    %327 = arith.truncf %326 : vector<8x128xf32> to vector<8x128xbf16>
    %328 = arith.truncf %324 : vector<8x8xf32> to vector<8x8xbf16>
    %cst_161 = arith.constant dense<0.000000e+00> : vector<8x128xf32>
    %329 = tpu.matmul %328, %327, %cst_161 {dimension_numbers = #tpu.dot_dimension_numbers<[1], [0], [0], [1], [0, 0, 1, 1], [], []>} : vector<8x8xbf16>, vector<8x128xbf16>, vector<8x128xf32> -> vector<8x128xf32>
    %c32_i32_162 = arith.constant 32 : i32
    %330 = vector.broadcast %c32_i32_162 : i32 to vector<8x128xi32>
    %331 = arith.cmpi sge, %98, %330 : vector<8x128xi32>
    %c64_i32_163 = arith.constant 64 : i32
    %332 = vector.broadcast %c64_i32_163 : i32 to vector<8x128xi32>
    %333 = arith.cmpi slt, %98, %332 : vector<8x128xi32>
    %334 = arith.andi %331, %333 : vector<8x128xi1>
    %cst_164 = arith.constant 0.000000e+00 : f32
    %335 = vector.broadcast %cst_164 : f32 to vector<8x128xf32>
    %336 = arith.select %334, %300, %335 : vector<8x128xi1>, vector<8x128xf32>
    %337 = arith.truncf %336 : vector<8x128xf32> to vector<8x128xbf16>
    %cst_165 = arith.constant dense<0.000000e+00> : vector<8x8xf32>
    %338 = tpu.matmul %337, %304, %cst_165 {dimension_numbers = #tpu.dot_dimension_numbers<[1], [1], [0], [0], [0, 0, 1, 0], [], []>} : vector<8x128xbf16>, vector<8x128xbf16>, vector<8x8xf32> -> vector<8x8xf32>
    %cst_166 = arith.constant dense<0xFF800000> : vector<8xf32>
    %339 = vector.multi_reduction <maximumf>, %338, %cst_166 [1] : vector<8x8xf32> to vector<8xf32>
    %340 = vector.shape_cast %339 : vector<8xf32> to vector<8x1xf32>
    %341 = vector.broadcast %340 : vector<8x1xf32> to vector<8x8xf32>
    %342 = arith.subf %338, %341 : vector<8x8xf32>
    %343 = math.exp %342 : vector<8x8xf32>
    %cst_167 = arith.constant dense<0.000000e+00> : vector<8xf32>
    %344 = vector.multi_reduction <add>, %343, %cst_167 [1] : vector<8x8xf32> to vector<8xf32>
    %345 = vector.shape_cast %344 : vector<8xf32> to vector<8x1xf32>
    %346 = tpu.reciprocal %345 {approx = true} : vector<8x1xf32> -> vector<8x1xf32>
    %347 = vector.broadcast %346 : vector<8x1xf32> to vector<8x8xf32>
    %348 = arith.mulf %343, %347 : vector<8x8xf32>
    %cst_168 = arith.constant 0.000000e+00 : f32
    %349 = vector.broadcast %cst_168 : f32 to vector<8x128xf32>
    %350 = arith.select %334, %305, %349 : vector<8x128xi1>, vector<8x128xf32>
    %351 = arith.truncf %350 : vector<8x128xf32> to vector<8x128xbf16>
    %352 = arith.truncf %348 : vector<8x8xf32> to vector<8x8xbf16>
    %cst_169 = arith.constant dense<0.000000e+00> : vector<8x128xf32>
    %353 = tpu.matmul %352, %351, %cst_169 {dimension_numbers = #tpu.dot_dimension_numbers<[1], [0], [0], [1], [0, 0, 1, 1], [], []>} : vector<8x8xbf16>, vector<8x128xbf16>, vector<8x128xf32> -> vector<8x128xf32>
    %354 = arith.addf %329, %353 : vector<8x128xf32>
    %c64_i32_170 = arith.constant 64 : i32
    %355 = vector.broadcast %c64_i32_170 : i32 to vector<8x128xi32>
    %356 = arith.cmpi sge, %98, %355 : vector<8x128xi32>
    %c96_i32_171 = arith.constant 96 : i32
    %357 = vector.broadcast %c96_i32_171 : i32 to vector<8x128xi32>
    %358 = arith.cmpi slt, %98, %357 : vector<8x128xi32>
    %359 = arith.andi %356, %358 : vector<8x128xi1>
    %cst_172 = arith.constant 0.000000e+00 : f32
    %360 = vector.broadcast %cst_172 : f32 to vector<8x128xf32>
    %361 = arith.select %359, %300, %360 : vector<8x128xi1>, vector<8x128xf32>
    %362 = arith.truncf %361 : vector<8x128xf32> to vector<8x128xbf16>
    %cst_173 = arith.constant dense<0.000000e+00> : vector<8x8xf32>
    %363 = tpu.matmul %362, %304, %cst_173 {dimension_numbers = #tpu.dot_dimension_numbers<[1], [1], [0], [0], [0, 0, 1, 0], [], []>} : vector<8x128xbf16>, vector<8x128xbf16>, vector<8x8xf32> -> vector<8x8xf32>
    %cst_174 = arith.constant dense<0xFF800000> : vector<8xf32>
    %364 = vector.multi_reduction <maximumf>, %363, %cst_174 [1] : vector<8x8xf32> to vector<8xf32>
    %365 = vector.shape_cast %364 : vector<8xf32> to vector<8x1xf32>
    %366 = vector.broadcast %365 : vector<8x1xf32> to vector<8x8xf32>
    %367 = arith.subf %363, %366 : vector<8x8xf32>
    %368 = math.exp %367 : vector<8x8xf32>
    %cst_175 = arith.constant dense<0.000000e+00> : vector<8xf32>
    %369 = vector.multi_reduction <add>, %368, %cst_175 [1] : vector<8x8xf32> to vector<8xf32>
    %370 = vector.shape_cast %369 : vector<8xf32> to vector<8x1xf32>
    %371 = tpu.reciprocal %370 {approx = true} : vector<8x1xf32> -> vector<8x1xf32>
    %372 = vector.broadcast %371 : vector<8x1xf32> to vector<8x8xf32>
    %373 = arith.mulf %368, %372 : vector<8x8xf32>
    %cst_176 = arith.constant 0.000000e+00 : f32
    %374 = vector.broadcast %cst_176 : f32 to vector<8x128xf32>
    %375 = arith.select %359, %305, %374 : vector<8x128xi1>, vector<8x128xf32>
    %376 = arith.truncf %375 : vector<8x128xf32> to vector<8x128xbf16>
    %377 = arith.truncf %373 : vector<8x8xf32> to vector<8x8xbf16>
    %cst_177 = arith.constant dense<0.000000e+00> : vector<8x128xf32>
    %378 = tpu.matmul %377, %376, %cst_177 {dimension_numbers = #tpu.dot_dimension_numbers<[1], [0], [0], [1], [0, 0, 1, 1], [], []>} : vector<8x8xbf16>, vector<8x128xbf16>, vector<8x128xf32> -> vector<8x128xf32>
    %379 = arith.addf %354, %378 : vector<8x128xf32>
    %c96_i32_178 = arith.constant 96 : i32
    %380 = vector.broadcast %c96_i32_178 : i32 to vector<8x128xi32>
    %381 = arith.cmpi sge, %98, %380 : vector<8x128xi32>
    %c128_i32_179 = arith.constant 128 : i32
    %382 = vector.broadcast %c128_i32_179 : i32 to vector<8x128xi32>
    %383 = arith.cmpi slt, %98, %382 : vector<8x128xi32>
    %384 = arith.andi %381, %383 : vector<8x128xi1>
    %cst_180 = arith.constant 0.000000e+00 : f32
    %385 = vector.broadcast %cst_180 : f32 to vector<8x128xf32>
    %386 = arith.select %384, %300, %385 : vector<8x128xi1>, vector<8x128xf32>
    %387 = arith.truncf %386 : vector<8x128xf32> to vector<8x128xbf16>
    %cst_181 = arith.constant dense<0.000000e+00> : vector<8x8xf32>
    %388 = tpu.matmul %387, %304, %cst_181 {dimension_numbers = #tpu.dot_dimension_numbers<[1], [1], [0], [0], [0, 0, 1, 0], [], []>} : vector<8x128xbf16>, vector<8x128xbf16>, vector<8x8xf32> -> vector<8x8xf32>
    %cst_182 = arith.constant dense<0xFF800000> : vector<8xf32>
    %389 = vector.multi_reduction <maximumf>, %388, %cst_182 [1] : vector<8x8xf32> to vector<8xf32>
    %390 = vector.shape_cast %389 : vector<8xf32> to vector<8x1xf32>
    %391 = vector.broadcast %390 : vector<8x1xf32> to vector<8x8xf32>
    %392 = arith.subf %388, %391 : vector<8x8xf32>
    %393 = math.exp %392 : vector<8x8xf32>
    %cst_183 = arith.constant dense<0.000000e+00> : vector<8xf32>
    %394 = vector.multi_reduction <add>, %393, %cst_183 [1] : vector<8x8xf32> to vector<8xf32>
    %395 = vector.shape_cast %394 : vector<8xf32> to vector<8x1xf32>
    %396 = tpu.reciprocal %395 {approx = true} : vector<8x1xf32> -> vector<8x1xf32>
    %397 = vector.broadcast %396 : vector<8x1xf32> to vector<8x8xf32>
    %398 = arith.mulf %393, %397 : vector<8x8xf32>
    %cst_184 = arith.constant 0.000000e+00 : f32
    %399 = vector.broadcast %cst_184 : f32 to vector<8x128xf32>
    %400 = arith.select %384, %305, %399 : vector<8x128xi1>, vector<8x128xf32>
    %401 = arith.truncf %400 : vector<8x128xf32> to vector<8x128xbf16>
    %402 = arith.truncf %398 : vector<8x8xf32> to vector<8x8xbf16>
    %cst_185 = arith.constant dense<0.000000e+00> : vector<8x128xf32>
    %403 = tpu.matmul %402, %401, %cst_185 {dimension_numbers = #tpu.dot_dimension_numbers<[1], [0], [0], [1], [0, 0, 1, 1], [], []>} : vector<8x8xbf16>, vector<8x128xbf16>, vector<8x128xf32> -> vector<8x128xf32>
    %404 = arith.addf %379, %403 : vector<8x128xf32>
    %405 = arith.truncf %404 : vector<8x128xf32> to vector<8x128xbf16>
    %c1_186 = arith.constant 1 : index
    %c0_187 = arith.constant 0 : index
    %c0_188 = arith.constant 0 : index
    %406 = vector.load %arg12[%c1_186, %c0_187, %c0_188] : memref<2x128x128xbf16, #tpu.memory_space<vmem>>, vector<1x128x128xbf16>
    %407 = vector.shape_cast %406 : vector<1x128x128xbf16> to vector<128x128xbf16>
    %cst_189 = arith.constant dense<0.000000e+00> : vector<8x128xf32>
    %408 = tpu.matmul %405, %407, %cst_189 {dimension_numbers = #tpu.dot_dimension_numbers<[1], [0], [0], [1], [0, 0, 1, 1], [], []>} : vector<8x128xbf16>, vector<128x128xbf16>, vector<8x128xf32> -> vector<8x128xf32>
    %c1_190 = arith.constant 1 : index
    %c0_191 = arith.constant 0 : index
    %c0_192 = arith.constant 0 : index
    %409 = vector.load %arg13[%c1_190, %c0_191, %c0_192] : memref<2x1x128xf32, #tpu.memory_space<vmem>>, vector<1x1x128xf32>
    %410 = vector.shape_cast %409 : vector<1x1x128xf32> to vector<1x128xf32>
    %411 = vector.broadcast %410 : vector<1x128xf32> to vector<8x128xf32>
    %412 = arith.addf %408, %411 : vector<8x128xf32>
    %413 = arith.addf %291, %412 : vector<8x128xf32>
    %c1_193 = arith.constant 1 : index
    %c0_194 = arith.constant 0 : index
    %c0_195 = arith.constant 0 : index
    %414 = vector.load %arg14[%c1_193, %c0_194, %c0_195] : memref<2x1x128xf32, #tpu.memory_space<vmem>>, vector<1x1x128xf32>
    %415 = vector.shape_cast %414 : vector<1x1x128xf32> to vector<1x128xf32>
    %c1_196 = arith.constant 1 : index
    %c0_197 = arith.constant 0 : index
    %c0_198 = arith.constant 0 : index
    %416 = vector.load %arg15[%c1_196, %c0_197, %c0_198] : memref<2x1x128xf32, #tpu.memory_space<vmem>>, vector<1x1x128xf32>
    %417 = vector.shape_cast %416 : vector<1x1x128xf32> to vector<1x128xf32>
    %cst_199 = arith.constant dense<0.000000e+00> : vector<8xf32>
    %418 = vector.multi_reduction <add>, %413, %cst_199 [1] : vector<8x128xf32> to vector<8xf32>
    %419 = vector.shape_cast %418 : vector<8xf32> to vector<8x1xf32>
    %cst_200 = arith.constant 1.280000e+02 : f32
    %420 = vector.broadcast %cst_200 : f32 to vector<8x1xf32>
    %421 = arith.divf %419, %420 : vector<8x1xf32>
    %422 = vector.broadcast %421 : vector<8x1xf32> to vector<8x128xf32>
    %423 = arith.subf %413, %422 : vector<8x128xf32>
    %424 = arith.mulf %423, %423 : vector<8x128xf32>
    %cst_201 = arith.constant dense<0.000000e+00> : vector<8xf32>
    %425 = vector.multi_reduction <add>, %424, %cst_201 [1] : vector<8x128xf32> to vector<8xf32>
    %426 = vector.shape_cast %425 : vector<8xf32> to vector<8x1xf32>
    %cst_202 = arith.constant 1.280000e+02 : f32
    %427 = vector.broadcast %cst_202 : f32 to vector<8x1xf32>
    %428 = arith.divf %426, %427 : vector<8x1xf32>
    %429 = vector.broadcast %421 : vector<8x1xf32> to vector<8x128xf32>
    %430 = arith.subf %413, %429 : vector<8x128xf32>
    %cst_203 = arith.constant 9.99999974E-6 : f32
    %431 = vector.broadcast %cst_203 : f32 to vector<8x1xf32>
    %432 = arith.addf %428, %431 : vector<8x1xf32>
    %433 = math.rsqrt %432 : vector<8x1xf32>
    %434 = vector.broadcast %433 : vector<8x1xf32> to vector<8x128xf32>
    %435 = arith.mulf %430, %434 : vector<8x128xf32>
    %436 = vector.broadcast %415 : vector<1x128xf32> to vector<8x128xf32>
    %437 = arith.mulf %435, %436 : vector<8x128xf32>
    %438 = vector.broadcast %417 : vector<1x128xf32> to vector<8x128xf32>
    %439 = arith.addf %437, %438 : vector<8x128xf32>
    %440 = arith.truncf %439 : vector<8x128xf32> to vector<8x128xbf16>
    %c1_204 = arith.constant 1 : index
    %c0_205 = arith.constant 0 : index
    %c0_206 = arith.constant 0 : index
    %441 = vector.load %arg16[%c1_204, %c0_205, %c0_206] : memref<2x128x256xbf16, #tpu.memory_space<vmem>>, vector<1x128x256xbf16>
    %442 = vector.shape_cast %441 : vector<1x128x256xbf16> to vector<128x256xbf16>
    %cst_207 = arith.constant dense<0.000000e+00> : vector<8x256xf32>
    %443 = tpu.matmul %440, %442, %cst_207 {dimension_numbers = #tpu.dot_dimension_numbers<[1], [0], [0], [1], [0, 0, 1, 1], [], []>} : vector<8x128xbf16>, vector<128x256xbf16>, vector<8x256xf32> -> vector<8x256xf32>
    %c1_208 = arith.constant 1 : index
    %c0_209 = arith.constant 0 : index
    %c0_210 = arith.constant 0 : index
    %444 = vector.load %arg17[%c1_208, %c0_209, %c0_210] : memref<2x1x256xf32, #tpu.memory_space<vmem>>, vector<1x1x256xf32>
    %445 = vector.shape_cast %444 : vector<1x1x256xf32> to vector<1x256xf32>
    %446 = vector.broadcast %445 : vector<1x256xf32> to vector<8x256xf32>
    %447 = arith.addf %443, %446 : vector<8x256xf32>
    %cst_211 = arith.constant 0.000000e+00 : f32
    %448 = vector.broadcast %cst_211 : f32 to vector<8x256xf32>
    %449 = arith.maximumf %447, %448 : vector<8x256xf32>
    %450 = arith.truncf %449 : vector<8x256xf32> to vector<8x256xbf16>
    %c1_212 = arith.constant 1 : index
    %c0_213 = arith.constant 0 : index
    %c0_214 = arith.constant 0 : index
    %451 = vector.load %arg18[%c1_212, %c0_213, %c0_214] : memref<2x256x128xbf16, #tpu.memory_space<vmem>>, vector<1x256x128xbf16>
    %452 = vector.shape_cast %451 : vector<1x256x128xbf16> to vector<256x128xbf16>
    %cst_215 = arith.constant dense<0.000000e+00> : vector<8x128xf32>
    %453 = tpu.matmul %450, %452, %cst_215 {dimension_numbers = #tpu.dot_dimension_numbers<[1], [0], [0], [1], [0, 0, 1, 1], [], []>} : vector<8x256xbf16>, vector<256x128xbf16>, vector<8x128xf32> -> vector<8x128xf32>
    %c1_216 = arith.constant 1 : index
    %c0_217 = arith.constant 0 : index
    %c0_218 = arith.constant 0 : index
    %454 = vector.load %arg19[%c1_216, %c0_217, %c0_218] : memref<2x1x128xf32, #tpu.memory_space<vmem>>, vector<1x1x128xf32>
    %455 = vector.shape_cast %454 : vector<1x1x128xf32> to vector<1x128xf32>
    %456 = vector.broadcast %455 : vector<1x128xf32> to vector<8x128xf32>
    %457 = arith.addf %453, %456 : vector<8x128xf32>
    %458 = arith.addf %439, %457 : vector<8x128xf32>
    %c1_219 = arith.constant 1 : index
    %c0_220 = arith.constant 0 : index
    %c0_221 = arith.constant 0 : index
    %459 = vector.load %arg20[%c1_219, %c0_220, %c0_221] : memref<2x1x128xf32, #tpu.memory_space<vmem>>, vector<1x1x128xf32>
    %460 = vector.shape_cast %459 : vector<1x1x128xf32> to vector<1x128xf32>
    %c1_222 = arith.constant 1 : index
    %c0_223 = arith.constant 0 : index
    %c0_224 = arith.constant 0 : index
    %461 = vector.load %arg21[%c1_222, %c0_223, %c0_224] : memref<2x1x128xf32, #tpu.memory_space<vmem>>, vector<1x1x128xf32>
    %462 = vector.shape_cast %461 : vector<1x1x128xf32> to vector<1x128xf32>
    %cst_225 = arith.constant dense<0.000000e+00> : vector<8xf32>
    %463 = vector.multi_reduction <add>, %458, %cst_225 [1] : vector<8x128xf32> to vector<8xf32>
    %464 = vector.shape_cast %463 : vector<8xf32> to vector<8x1xf32>
    %cst_226 = arith.constant 1.280000e+02 : f32
    %465 = vector.broadcast %cst_226 : f32 to vector<8x1xf32>
    %466 = arith.divf %464, %465 : vector<8x1xf32>
    %467 = vector.broadcast %466 : vector<8x1xf32> to vector<8x128xf32>
    %468 = arith.subf %458, %467 : vector<8x128xf32>
    %469 = arith.mulf %468, %468 : vector<8x128xf32>
    %cst_227 = arith.constant dense<0.000000e+00> : vector<8xf32>
    %470 = vector.multi_reduction <add>, %469, %cst_227 [1] : vector<8x128xf32> to vector<8xf32>
    %471 = vector.shape_cast %470 : vector<8xf32> to vector<8x1xf32>
    %cst_228 = arith.constant 1.280000e+02 : f32
    %472 = vector.broadcast %cst_228 : f32 to vector<8x1xf32>
    %473 = arith.divf %471, %472 : vector<8x1xf32>
    %474 = vector.broadcast %466 : vector<8x1xf32> to vector<8x128xf32>
    %475 = arith.subf %458, %474 : vector<8x128xf32>
    %cst_229 = arith.constant 9.99999974E-6 : f32
    %476 = vector.broadcast %cst_229 : f32 to vector<8x1xf32>
    %477 = arith.addf %473, %476 : vector<8x1xf32>
    %478 = math.rsqrt %477 : vector<8x1xf32>
    %479 = vector.broadcast %478 : vector<8x1xf32> to vector<8x128xf32>
    %480 = arith.mulf %475, %479 : vector<8x128xf32>
    %481 = vector.broadcast %460 : vector<1x128xf32> to vector<8x128xf32>
    %482 = arith.mulf %480, %481 : vector<8x128xf32>
    %483 = vector.broadcast %462 : vector<1x128xf32> to vector<8x128xf32>
    %484 = arith.addf %482, %483 : vector<8x128xf32>
    %cst_230 = arith.constant dense<0.000000e+00> : vector<128xf32>
    %485 = vector.multi_reduction <add>, %484, %cst_230 [0] : vector<8x128xf32> to vector<128xf32>
    %486 = vector.shape_cast %485 : vector<128xf32> to vector<1x128xf32>
    %cst_231 = arith.constant 8.000000e+00 : f32
    %487 = vector.broadcast %cst_231 : f32 to vector<1x128xf32>
    %488 = arith.divf %486, %487 : vector<1x128xf32>
    %c0_232 = arith.constant 0 : index
    %c0_233 = arith.constant 0 : index
    %489 = vector.load %arg22[%c0_232, %c0_233] : memref<1x128xf32, #tpu.memory_space<vmem>>, vector<1x128xf32>
    %c0_234 = arith.constant 0 : index
    %c0_235 = arith.constant 0 : index
    %490 = vector.load %arg23[%c0_234, %c0_235] : memref<1x128xf32, #tpu.memory_space<vmem>>, vector<1x128xf32>
    %cst_236 = arith.constant dense<0.000000e+00> : vector<1xf32>
    %491 = vector.multi_reduction <add>, %488, %cst_236 [1] : vector<1x128xf32> to vector<1xf32>
    %492 = vector.shape_cast %491 : vector<1xf32> to vector<1x1xf32>
    %cst_237 = arith.constant 1.280000e+02 : f32
    %493 = vector.broadcast %cst_237 : f32 to vector<1x1xf32>
    %494 = arith.divf %492, %493 : vector<1x1xf32>
    %495 = vector.broadcast %494 : vector<1x1xf32> to vector<1x128xf32>
    %496 = arith.subf %488, %495 : vector<1x128xf32>
    %497 = arith.mulf %496, %496 : vector<1x128xf32>
    %cst_238 = arith.constant dense<0.000000e+00> : vector<1xf32>
    %498 = vector.multi_reduction <add>, %497, %cst_238 [1] : vector<1x128xf32> to vector<1xf32>
    %499 = vector.shape_cast %498 : vector<1xf32> to vector<1x1xf32>
    %cst_239 = arith.constant 1.280000e+02 : f32
    %500 = vector.broadcast %cst_239 : f32 to vector<1x1xf32>
    %501 = arith.divf %499, %500 : vector<1x1xf32>
    %502 = vector.broadcast %494 : vector<1x1xf32> to vector<1x128xf32>
    %503 = arith.subf %488, %502 : vector<1x128xf32>
    %cst_240 = arith.constant 9.99999974E-6 : f32
    %504 = vector.broadcast %cst_240 : f32 to vector<1x1xf32>
    %505 = arith.addf %501, %504 : vector<1x1xf32>
    %506 = math.rsqrt %505 : vector<1x1xf32>
    %507 = vector.broadcast %506 : vector<1x1xf32> to vector<1x128xf32>
    %508 = arith.mulf %503, %507 : vector<1x128xf32>
    %509 = arith.mulf %508, %489 : vector<1x128xf32>
    %510 = arith.addf %509, %490 : vector<1x128xf32>
    %511 = arith.truncf %510 : vector<1x128xf32> to vector<1x128xbf16>
    %c0_241 = arith.constant 0 : index
    %c0_242 = arith.constant 0 : index
    %512 = vector.load %arg24[%c0_241, %c0_242] : memref<128x128xbf16, #tpu.memory_space<vmem>>, vector<128x128xbf16>
    %cst_243 = arith.constant dense<0.000000e+00> : vector<1x128xf32>
    %513 = tpu.matmul %511, %512, %cst_243 {dimension_numbers = #tpu.dot_dimension_numbers<[1], [0], [0], [1], [0, 0, 1, 1], [], []>} : vector<1x128xbf16>, vector<128x128xbf16>, vector<1x128xf32> -> vector<1x128xf32>
    %c0_244 = arith.constant 0 : index
    %c0_245 = arith.constant 0 : index
    %514 = vector.load %arg25[%c0_244, %c0_245] : memref<1x128xf32, #tpu.memory_space<vmem>>, vector<1x128xf32>
    %515 = arith.addf %513, %514 : vector<1x128xf32>
    %c0_246 = arith.constant 0 : index
    %c0_247 = arith.constant 0 : index
    %c0_248 = arith.constant 0 : index
    %516 = vector.load %arg26[%c0_246, %c0_247, %c0_248] : memref<1x1x128xf32, #tpu.memory_space<vmem>>, vector<1x1x128xf32>
    %517 = vector.shape_cast %516 : vector<1x1x128xf32> to vector<1x128xf32>
    %518 = vector.shape_cast %515 : vector<1x128xf32> to vector<1x1x128xf32>
    tpu.vector_store %arg26[%c0_246, %c0_247, %c0_248], %518 {strides = array<i32>} : memref<1x1x128xf32, #tpu.memory_space<vmem>>, vector<1x1x128xf32>,
    return
  }
  func.func @transform_0(%arg0: i32) -> (i32, i32, i32) {
    %c0_i32 = arith.constant 0 : i32
    %c0_i32_0 = arith.constant 0 : i32
    %c0_i32_1 = arith.constant 0 : i32
    return %arg0, %c0_i32, %c0_i32_0 : i32, i32, i32
  }
  func.func @transform_1(%arg0: i32) -> (i32, i32, i32) {
    %c0_i32 = arith.constant 0 : i32
    %c0_i32_0 = arith.constant 0 : i32
    %c0_i32_1 = arith.constant 0 : i32
    %c0_i32_2 = arith.constant 0 : i32
    return %c0_i32, %c0_i32_0, %c0_i32_1 : i32, i32, i32
  }
  func.func @transform_2(%arg0: i32) -> (i32, i32) {
    %c0_i32 = arith.constant 0 : i32
    %c0_i32_0 = arith.constant 0 : i32
    %c0_i32_1 = arith.constant 0 : i32
    return %c0_i32, %c0_i32_0 : i32, i32
  }
  func.func @transform_3(%arg0: i32) -> (i32, i32, i32) {
    %c0_i32 = arith.constant 0 : i32
    %c0_i32_0 = arith.constant 0 : i32
    %c0_i32_1 = arith.constant 0 : i32
    %c0_i32_2 = arith.constant 0 : i32
    return %c0_i32, %c0_i32_0, %c0_i32_1 : i32, i32, i32
  }
  func.func @transform_4(%arg0: i32) -> (i32, i32) {
    %c0_i32 = arith.constant 0 : i32
    %c0_i32_0 = arith.constant 0 : i32
    %c0_i32_1 = arith.constant 0 : i32
    return %c0_i32, %c0_i32_0 : i32, i32
  }
  func.func @transform_5(%arg0: i32) -> (i32, i32, i32) {
    %c0_i32 = arith.constant 0 : i32
    %c0_i32_0 = arith.constant 0 : i32
    %c0_i32_1 = arith.constant 0 : i32
    %c0_i32_2 = arith.constant 0 : i32
    return %c0_i32, %c0_i32_0, %c0_i32_1 : i32, i32, i32
  }
  func.func @transform_6(%arg0: i32) -> (i32, i32) {
    %c0_i32 = arith.constant 0 : i32
    %c0_i32_0 = arith.constant 0 : i32
    %c0_i32_1 = arith.constant 0 : i32
    return %c0_i32, %c0_i32_0 : i32, i32
  }
  func.func @transform_7(%arg0: i32) -> (i32, i32) {
    %c0_i32 = arith.constant 0 : i32
    %c0_i32_0 = arith.constant 0 : i32
    %c0_i32_1 = arith.constant 0 : i32
    return %c0_i32, %c0_i32_0 : i32, i32
  }
  func.func @transform_8(%arg0: i32) -> (i32, i32) {
    %c0_i32 = arith.constant 0 : i32
    %c0_i32_0 = arith.constant 0 : i32
    %c0_i32_1 = arith.constant 0 : i32
    return %c0_i32, %c0_i32_0 : i32, i32
  }
  func.func @transform_9(%arg0: i32) -> (i32, i32, i32) {
    %c0_i32 = arith.constant 0 : i32
    %c0_i32_0 = arith.constant 0 : i32
    %c0_i32_1 = arith.constant 0 : i32
    %c0_i32_2 = arith.constant 0 : i32
    return %c0_i32, %c0_i32_0, %c0_i32_1 : i32, i32, i32
  }
  func.func @transform_10(%arg0: i32) -> (i32, i32, i32) {
    %c0_i32 = arith.constant 0 : i32
    %c0_i32_0 = arith.constant 0 : i32
    %c0_i32_1 = arith.constant 0 : i32
    %c0_i32_2 = arith.constant 0 : i32
    return %c0_i32, %c0_i32_0, %c0_i32_1 : i32, i32, i32
  }
  func.func @transform_11(%arg0: i32) -> (i32, i32, i32) {
    %c0_i32 = arith.constant 0 : i32
    %c0_i32_0 = arith.constant 0 : i32
    %c0_i32_1 = arith.constant 0 : i32
    %c0_i32_2 = arith.constant 0 : i32
    return %c0_i32, %c0_i32_0, %c0_i32_1 : i32, i32, i32
  }
  func.func @transform_12(%arg0: i32) -> (i32, i32, i32) {
    %c0_i32 = arith.constant 0 : i32
    %c0_i32_0 = arith.constant 0 : i32
    %c0_i32_1 = arith.constant 0 : i32
    %c0_i32_2 = arith.constant 0 : i32
    return %c0_i32, %c0_i32_0, %c0_i32_1 : i32, i32, i32
  }
  func.func @transform_13(%arg0: i32) -> (i32, i32, i32) {
    %c0_i32 = arith.constant 0 : i32
    %c0_i32_0 = arith.constant 0 : i32
    %c0_i32_1 = arith.constant 0 : i32
    %c0_i32_2 = arith.constant 0 : i32
    return %c0_i32, %c0_i32_0, %c0_i32_1 : i32, i32, i32
  }
  func.func @transform_14(%arg0: i32) -> (i32, i32, i32) {
    %c0_i32 = arith.constant 0 : i32
    %c0_i32_0 = arith.constant 0 : i32
    %c0_i32_1 = arith.constant 0 : i32
    %c0_i32_2 = arith.constant 0 : i32
    return %c0_i32, %c0_i32_0, %c0_i32_1 : i32, i32, i32
  }
  func.func @transform_15(%arg0: i32) -> (i32, i32, i32) {
    %c0_i32 = arith.constant 0 : i32
    %c0_i32_0 = arith.constant 0 : i32
    %c0_i32_1 = arith.constant 0 : i32
    %c0_i32_2 = arith.constant 0 : i32
    return %c0_i32, %c0_i32_0, %c0_i32_1 : i32, i32, i32
  }
  func.func @transform_16(%arg0: i32) -> (i32, i32, i32) {
    %c0_i32 = arith.constant 0 : i32
    %c0_i32_0 = arith.constant 0 : i32
    %c0_i32_1 = arith.constant 0 : i32
    %c0_i32_2 = arith.constant 0 : i32
    return %c0_i32, %c0_i32_0, %c0_i32_1 : i32, i32, i32
  }
  func.func @transform_17(%arg0: i32) -> (i32, i32, i32) {
    %c0_i32 = arith.constant 0 : i32
    %c0_i32_0 = arith.constant 0 : i32
    %c0_i32_1 = arith.constant 0 : i32
    %c0_i32_2 = arith.constant 0 : i32
    return %c0_i32, %c0_i32_0, %c0_i32_1 : i32, i32, i32
  }
  func.func @transform_18(%arg0: i32) -> (i32, i32, i32) {
    %c0_i32 = arith.constant 0 : i32
    %c0_i32_0 = arith.constant 0 : i32
    %c0_i32_1 = arith.constant 0 : i32
    %c0_i32_2 = arith.constant 0 : i32
    return %c0_i32, %c0_i32_0, %c0_i32_1 : i32, i32, i32
  }
  func.func @transform_19(%arg0: i32) -> (i32, i32, i32) {
    %c0_i32 = arith.constant 0 : i32
    %c0_i32_0 = arith.constant 0 : i32
    %c0_i32_1 = arith.constant 0 : i32
    %c0_i32_2 = arith.constant 0 : i32
    return %c0_i32, %c0_i32_0, %c0_i32_1 : i32, i32, i32
  }
  func.func @transform_20(%arg0: i32) -> (i32, i32, i32) {
    %c0_i32 = arith.constant 0 : i32
    %c0_i32_0 = arith.constant 0 : i32
    %c0_i32_1 = arith.constant 0 : i32
    %c0_i32_2 = arith.constant 0 : i32
    return %c0_i32, %c0_i32_0, %c0_i32_1 : i32, i32, i32
  }
  func.func @transform_21(%arg0: i32) -> (i32, i32) {
    %c0_i32 = arith.constant 0 : i32
    %c0_i32_0 = arith.constant 0 : i32
    %c0_i32_1 = arith.constant 0 : i32
    return %c0_i32, %c0_i32_0 : i32, i32
  }
  func.func @transform_22(%arg0: i32) -> (i32, i32) {
    %c0_i32 = arith.constant 0 : i32
    %c0_i32_0 = arith.constant 0 : i32
    %c0_i32_1 = arith.constant 0 : i32
    return %c0_i32, %c0_i32_0 : i32, i32
  }
  func.func @transform_23(%arg0: i32) -> (i32, i32) {
    %c0_i32 = arith.constant 0 : i32
    %c0_i32_0 = arith.constant 0 : i32
    %c0_i32_1 = arith.constant 0 : i32
    return %c0_i32, %c0_i32_0 : i32, i32
  }
  func.func @transform_24(%arg0: i32) -> (i32, i32) {
    %c0_i32 = arith.constant 0 : i32
    %c0_i32_0 = arith.constant 0 : i32
    %c0_i32_1 = arith.constant 0 : i32
    return %c0_i32, %c0_i32_0 : i32, i32
  }
  func.func @transform_25(%arg0: i32) -> (i32, i32, i32) {
    %c0_i32 = arith.constant 0 : i32
    %c0_i32_0 = arith.constant 0 : i32
    %c0_i32_1 = arith.constant 0 : i32
    return %arg0, %c0_i32, %c0_i32_0 : i32, i32, i32
  }
}

</mosaic_0001>

<llo_original>
// kernel: reverse
$region0: #{reverse}
  %s0 = inlined_call_operand.vmem [shape: f32[2,256], index: 0, kind: input, shape index: {}]
  %s1 = inlined_call_operand.vmem [shape: f32[2,256], index: 1, kind: output, shape index: {}]
  %v2 = vlaneseq
  %v3 = vsub.s32 127, %v2
  %4 = vset.pattern.permute.xlu0 %v3
  $region1: #{reverse} parent=0
    #allocation0 [shape = 'u8[4096]{0}', space=vmem, size = 0x1000, scoped, tag = 'operand span for operand 0']
    #allocation1 [shape = 'u8[2048]{0}', space=vmem, size = 0x800, scoped, tag = 'packed  for operand 0']
    #allocation2 [shape = 'u8[4096]{0}', space=vmem, size = 0x1000, scoped, tag = 'operand span for operand 1']
    #allocation3 [shape = 'u8[2048]{0}', space=vmem, size = 0x800, scoped, tag = 'packed  for operand 1']
    loop: start=0, step=1, limit=4
    $region2: #{reverse} parent=1 // loop_pre_header
      _
    $region3: #{reverse} parent=1 // loop_header
      %s6 = sphi 0, %s10
      %p7 = scmp.ge.s32.totalorder %s6, 4
      %s13 = sphi 0, %s25
      %s14 = sphi 0, %s21
      %s15 = sphi 0, %s13
      %s16 = sphi 0, %s14
      %s17 = sphi 0, %s15
      %s18 = sphi 0, %s16
    $region4: #{reverse} parent=1 // loop_header_branch
      %9 = sbr.rel (%p7) target = $region8
    $region5: #{reverse} parent=1 // loop_body
      %s11 = ssub.s32 %s6, 1
      %s12 = ssub.s32 %s6, 2
      %s19 = sadd.s32 1, %s14
      %p20 = scmp.ge.s32.totalorder %s19, 2
      %s21 = scalar_select %p20, 0, %s19
      %s22 = sadd.s32 1, %s13
      %s23 = scalar_select %p20, %s22, %s13
      %p24 = scmp.ge.s32.totalorder %s23, 1
      %s25 = scalar_select %p24, 0, %s23
      %p26 = scmp.le.s32.totalorder 1, %s6
      %p27 = scmp.lt.s32.totalorder %s6, 3
      %p28 = pnand %p26, %p27
      %p29 = pneg %p28
      // Predicated region
      $region9: #{reverse} parent=5 // pred_check
        _
      $region10: #{reverse} parent=5 // pred_check_branch
        %31 = sbr.rel (%p28) target = $region12
      $region11: #{reverse} parent=5 // pred_region
        %s32 = ssub.s32 %s6, 1
      $region12: #{reverse} parent=5 // pred_fallthru
        _
      %p33 = scmp.lt.s32.totalorder %s6, 2
      // Predicated region
      $region13: #{reverse} parent=5 // pred_check
        %p34 = pneg %p33
      $region14: #{reverse} parent=5 // pred_check_branch
        %36 = sbr.rel (%p34) target = $region16
      $region15: #{reverse} parent=5 // pred_region
        %s37 = sand.u32 %s6, 1
        %s38 = sand.u32 %s6, 1
        %s39 = smul.addr %s38, 2
        %s40 = scalar_lea.vmem [#allocation1], %s39
        %s41 = ssub.s32 1, %s14
        %s42 = smul.addr %s13, 2
        %s43 = sadd.s32 %s41, %s42
        %s44 = smul.addr %s43, 2
        %s45 = scalar_lea.vmem %s0, %s44
        // Predicated region
        $region17: #{reverse} parent=15 // pred_check
          _
        $region18: #{reverse} parent=15 // pred_check_branch
          %47 = sbr.rel (0) target = $region20
        $region19: #{reverse} parent=15 // pred_region
          // Predicated region
          $region21: #{reverse} parent=19 // pred_check
            _
          $region22: #{reverse} parent=19 // pred_check_branch
            %49 = sbr.rel target = $region24
          $region23: #{reverse} parent=19 // pred_region
            // Predicated region
            $region36: #{reverse} parent=23 // pred_check
              _
            $region37: #{reverse} parent=23 // pred_check_branch
              %64 = sbr.rel (0) target = $region39
            $region38: #{reverse} parent=23 // pred_region
              loop: start=0, step=1, limit=1
              $region40: #{reverse} parent=38 // loop_pre_header
                _
              $region41: #{reverse} parent=38 // loop_header
                %s67 = sphi 0, %s71
                %p68 = scmp.ge.s32.totalorder %s67, 1
                %s72 = sphi %s45, %s45
                %s73 = sphi %s40, %s40
              $region42: #{reverse} parent=38 // loop_header_branch
                %70 = sbr.rel (%p68) target = $region46
              $region43: #{reverse} parent=38 // loop_body
                %v74 = vld [vmem:[%s72] sm:$0x3]
                %75 = vst [vmem:[%s73] sm:$0x3] %v74
              $region44: #{reverse} parent=38 // loop_footer
                %s71 = sadd.s32 1, %s67
              $region45: #{reverse} parent=38 // loop_footer_branch
                %66 = sbr.rel target = $region41
              $region46: #{reverse} parent=38 // loop_exit
                _
            $region39: #{reverse} parent=23 // pred_fallthru
              _
          $region24: #{reverse} parent=19 // pred_fallthru
            _
          // Predicated region
          $region25: #{reverse} parent=19 // pred_check
            _
          $region26: #{reverse} parent=19 // pred_check_branch
            %51 = sbr.rel (0) target = $region28
          $region27: #{reverse} parent=19 // pred_region
            loop: start=0, step=1, limit=1
            $region29: #{reverse} parent=27 // loop_pre_header
              _
            $region30: #{reverse} parent=27 // loop_header
              %s54 = sphi 0, %s58
              %p55 = scmp.ge.s32.totalorder %s54, 1
              %s59 = sphi %s45, %s45
              %s60 = sphi %s40, %s40
            $region31: #{reverse} parent=27 // loop_header_branch
              %57 = sbr.rel (%p55) target = $region35
            $region32: #{reverse} parent=27 // loop_body
              %v61 = vld [vmem:[%s59] sm:$0x3]
              %62 = vst [vmem:[%s60] sm:$0x3] %v61
            $region33: #{reverse} parent=27 // loop_footer
              %s58 = sadd.s32 1, %s54
            $region34: #{reverse} parent=27 // loop_footer_branch
              %53 = sbr.rel target = $region30
            $region35: #{reverse} parent=27 // loop_exit
              _
          $region28: #{reverse} parent=19 // pred_fallthru
            _
        $region20: #{reverse} parent=15 // pred_fallthru
          _
        %76 = vnop
      $region16: #{reverse} parent=5 // pred_fallthru
        _
      %p77 = scmp.le.s32.totalorder 1, %s6
      %p78 = scmp.lt.s32.totalorder %s6, 3
      %p79 = pnand %p77, %p78
      %p80 = pneg %p79
      // Predicated region
      $region47: #{reverse} parent=5 // pred_check
        _
      $region48: #{reverse} parent=5 // pred_check_branch
        %82 = sbr.rel (%p79) target = $region50
      $region49: #{reverse} parent=5 // pred_region
        %s83 = ssub.s32 %s6, 1
        %s84 = sand.u32 %s11, 1
        %s85 = sand.u32 %s11, 1
        %s86 = smul.addr %s85, 2
        %s87 = scalar_lea.vmem [#allocation1], %s86
        %s88 = sand.u32 %s11, 1
        %s89 = sand.u32 %s11, 1
        %s90 = smul.addr %s89, 2
        %s91 = scalar_lea.vmem [#allocation1], %s90
        %s92 = sand.u32 %s11, 1
        %s93 = sand.u32 %s11, 1
        %s94 = smul.addr %s93, 2
        %s95 = scalar_lea.vmem [#allocation3], %s94
        %s97 = sshllo.u32 0, 2
        %v98 = vld [vmem:[%s91] sm:%s97]
        %99 = vst [vmem:[#allocation0] sm:%s97] %v98
        %s100 = ssub.s32 1, %s16
        %v101 = vld [vmem:[#allocation0] sm:$0xff]
        %102 = vperm.xlu0 %4, %v101
        %v103 = vpop.permute.xlu0 %102
        %104 = vst [vmem:[#allocation2] sm:$0xff] %v103
        %s106 = sshllo.u32 0, 2
        %v108 = vld [vmem:[#allocation2] sm:%s106]
        %s109 = sshllo.u32 0, 2
        %110 = vst [vmem:[%s95] sm:%s109] %v108
        %s111 = sand.u32 %s11, 1
        %s112 = sand.u32 %s11, 1
        %s113 = smul.addr %s112, 2
        %s114 = scalar_lea.vmem [#allocation3], %s113
        %s115 = smul.addr %s15, 2
        %s116 = sadd.s32 %s16, %s115
        %s117 = smul.addr %s116, 2
        %s118 = scalar_lea.vmem %s1, %s117
        // Predicated region
        $region51: #{reverse} parent=49 // pred_check
          _
        $region52: #{reverse} parent=49 // pred_check_branch
          %120 = sbr.rel (0) target = $region54
        $region53: #{reverse} parent=49 // pred_region
          // Predicated region
          $region55: #{reverse} parent=53 // pred_check
            _
          $region56: #{reverse} parent=53 // pred_check_branch
            %122 = sbr.rel target = $region58
          $region57: #{reverse} parent=53 // pred_region
            // Predicated region
            $region70: #{reverse} parent=57 // pred_check
              _
            $region71: #{reverse} parent=57 // pred_check_branch
              %137 = sbr.rel (0) target = $region73
            $region72: #{reverse} parent=57 // pred_region
              loop: start=0, step=1, limit=1
              $region74: #{reverse} parent=72 // loop_pre_header
                _
              $region75: #{reverse} parent=72 // loop_header
                %s140 = sphi 0, %s144
                %p141 = scmp.ge.s32.totalorder %s140, 1
                %s145 = sphi %s114, %s114
                %s146 = sphi %s118, %s118
              $region76: #{reverse} parent=72 // loop_header_branch
                %143 = sbr.rel (%p141) target = $region80
              $region77: #{reverse} parent=72 // loop_body
                %v147 = vld [vmem:[%s145] sm:$0x3]
                %148 = vst [vmem:[%s146] sm:$0x3] %v147
              $region78: #{reverse} parent=72 // loop_footer
                %s144 = sadd.s32 1, %s140
              $region79: #{reverse} parent=72 // loop_footer_branch
                %139 = sbr.rel target = $region75
              $region80: #{reverse} parent=72 // loop_exit
                _
            $region73: #{reverse} parent=57 // pred_fallthru
              _
          $region58: #{reverse} parent=53 // pred_fallthru
            _
          // Predicated region
          $region59: #{reverse} parent=53 // pred_check
            _
          $region60: #{reverse} parent=53 // pred_check_branch
            %124 = sbr.rel (0) target = $region62
          $region61: #{reverse} parent=53 // pred_region
            loop: start=0, step=1, limit=1
            $region63: #{reverse} parent=61 // loop_pre_header
              _
            $region64: #{reverse} parent=61 // loop_header
              %s127 = sphi 0, %s131
              %p128 = scmp.ge.s32.totalorder %s127, 1
              %s132 = sphi %s114, %s114
              %s133 = sphi %s118, %s118
            $region65: #{reverse} parent=61 // loop_header_branch
              %130 = sbr.rel (%p128) target = $region69
            $region66: #{reverse} parent=61 // loop_body
              %v134 = vld [vmem:[%s132] sm:$0x3]
              %135 = vst [vmem:[%s133] sm:$0x3] %v134
            $region67: #{reverse} parent=61 // loop_footer
              %s131 = sadd.s32 1, %s127
            $region68: #{reverse} parent=61 // loop_footer_branch
              %126 = sbr.rel target = $region64
            $region69: #{reverse} parent=61 // loop_exit
              _
          $region62: #{reverse} parent=53 // pred_fallthru
            _
        $region54: #{reverse} parent=49 // pred_fallthru
          _
        %149 = vnop
      $region50: #{reverse} parent=5 // pred_fallthru
        _
      %p150 = scmp.le.s32.totalorder 2, %s6
      // Predicated region
      $region81: #{reverse} parent=5 // pred_check
        %p151 = pneg %p150
      $region82: #{reverse} parent=5 // pred_check_branch
        %153 = sbr.rel (%p151) target = $region84
      $region83: #{reverse} parent=5 // pred_region
        %s154 = ssub.s32 %s6, 2
        %s155 = sand.u32 %s12, 1
        %s156 = sand.u32 %s12, 1
        %s157 = smul.addr %s156, 2
        %s158 = scalar_lea.vmem [#allocation3], %s157
      $region84: #{reverse} parent=5 // pred_fallthru
        _
    $region6: #{reverse} parent=1 // loop_footer
      %s10 = sadd.s32 1, %s6
    $region7: #{reverse} parent=1 // loop_footer_branch
      %5 = sbr.rel target = $region3
    $region8: #{reverse} parent=1 // loop_exit
      _

// kernel: tile.18
$region0: #{tile.18}
  #allocation0 [shape = 's32[1]{0}', space=sflag, size = 0x4, scoped, tag = 'scoped memory for tile.18']
  %s0 = inlined_call_operand.vmem [shape: f32[64], index: 0, kind: input, shape index: {}]
  %s1 = inlined_call_operand.vmem [shape: f32[8,64], index: 1, kind: output, shape index: {}]
  // Predicated region
  $region2: #{tile.18} parent=0 // pred_check
    _
  $region3: #{tile.18} parent=0 // pred_check_branch
    %3 = sbr.rel (0) target = $region5
  $region4: #{tile.18} parent=0 // pred_region
    _
  $region5: #{tile.18} parent=0 // pred_fallthru
    _
  %v4 = vld [vmem:[%s0] ss:$0 sm:$0xff]
  %5 = vst [vmem:[%s1] sm:$0xff] %v4

// kernel: tile.13
$region0: #{tile.13}
  #allocation0 [shape = 's32[1]{0}', space=sflag, size = 0x4, scoped, tag = 'scoped memory for tile.13']
  %s0 = inlined_call_operand.vmem [shape: f32[32], index: 0, kind: input, shape index: {}]
  %s1 = inlined_call_operand.vmem [shape: f32[8,32], index: 1, kind: output, shape index: {}]
  // Predicated region
  $region2: #{tile.13} parent=0 // pred_check
    _
  $region3: #{tile.13} parent=0 // pred_check_branch
    %3 = sbr.rel (0) target = $region5
  $region4: #{tile.13} parent=0 // pred_region
    _
  $region5: #{tile.13} parent=0 // pred_fallthru
    _
  %v4 = vld [vmem:[%s0] ss:$0 sm:$0xff]
  %5 = vst [vmem:[%s1] sm:$0xff] %v4

// kernel: tile.19
$region0: #{tile.19}
  %s0 = inlined_call_operand.vmem [shape: f32[8,64], index: 0, kind: input, shape index: {}]
  %s1 = inlined_call_operand.vmem [shape: f32[1,512], index: 1, kind: output, shape index: {}]
  $region1: #{tile.19} parent=0
    #allocation0 [shape = 'u8[16384]{0}', space=vmem, size = 0x4000, scoped, tag = 'scoped mem for output reshape']
    %v2 = vld [vmem:[%s0] ss:$2 sm:$0xf]
    %vm3 = vcmask 523264
    %4 = vst.msk [vmem:[#allocation0] ss:$8 sm:$0xf] %vm3, %v2
    %s5 = scalar_lea.vmem %s0, 1
    %v6 = vld [vmem:[%s5] ss:$2 sm:$0xf]
    %7 = vrot.lane.b32.xlu0 %v6, 64
    %v8 = vpop.permute.xlu0 %7
    %vm9 = vcmask 1048064
    %10 = vst.msk [vmem:[#allocation0] ss:$8 sm:$0xf] %vm9, %v8
    %s12 = sshllo.u32 0, 1
    %v14 = vld [vmem:[#allocation0] sm:%s12]
    %s15 = sshllo.u32 0, 1
    %16 = vst [vmem:[%s1] sm:%s15] %v14
    %s17 = scalar_lea.vmem [#allocation0], 8
    %v18 = vld [vmem:[%s17] sm:%s12]
    %s19 = sshllo.u32 0, 1
    %s20 = scalar_lea.vmem %s1, 1
    %21 = vst [vmem:[%s20] sm:%s19] %v18
    %s22 = scalar_lea.vmem [#allocation0], 16
    %v23 = vld [vmem:[%s22] sm:%s12]
    %s24 = sshllo.u32 0, 1
    %s25 = smul.addr 1, 2
    %s26 = scalar_lea.vmem %s1, %s25
    %27 = vst [vmem:[%s26] sm:%s24] %v23
    %s28 = scalar_lea.vmem [#allocation0], 24
    %v29 = vld [vmem:[%s28] sm:%s12]
    %s30 = sshllo.u32 0, 1
    %s31 = smul.addr 1, 3
    %s32 = scalar_lea.vmem %s1, %s31
    %33 = vst [vmem:[%s32] sm:%s30] %v29

// kernel: tile.14
$region0: #{tile.14}
  %s0 = inlined_call_operand.vmem [shape: f32[8,32], index: 0, kind: input, shape index: {}]
  %s1 = inlined_call_operand.vmem [shape: f32[1,256], index: 1, kind: output, shape index: {}]
  $region1: #{tile.14} parent=0
    #allocation0 [shape = 'u8[8192]{0}', space=vmem, size = 0x2000, scoped, tag = 'scoped mem for output reshape']
    %s2 = smov 3
    %v3 = vld [vmem:[%s0] ss:$4 sm:%s2]
    %vm4 = vcmask 261120
    %5 = vst.msk [vmem:[#allocation0] ss:$8 sm:$0x3] %vm4, %v3
    %s6 = scalar_lea.vmem %s0, 3
    %s7 = smov 3
    %v8 = vld [vmem:[%s6] ss:$4 sm:%s7]
    %9 = vrot.lane.b32.xlu0 %v8, 96
    %v10 = vpop.permute.xlu0 %9
    %vm11 = vcmask 1048320
    %12 = vst.msk [vmem:[#allocation0] ss:$8 sm:$0x3] %vm11, %v10
    %s13 = scalar_lea.vmem %s0, 2
    %s14 = smov 3
    %v15 = vld [vmem:[%s13] ss:$4 sm:%s14]
    %16 = vrot.lane.b32.xlu0 %v15, 64
    %v17 = vpop.permute.xlu0 %16
    %vm18 = vcmask 785920
    %19 = vst.msk [vmem:[#allocation0] ss:$8 sm:$0x3] %vm18, %v17
    %s20 = scalar_lea.vmem %s0, 1
    %s21 = smov 3
    %v22 = vld [vmem:[%s20] ss:$4 sm:%s21]
    %23 = vrot.lane.b32.xlu0 %v22, 32
    %v24 = vpop.permute.xlu0 %23
    %vm25 = vcmask 523520
    %26 = vst.msk [vmem:[#allocation0] ss:$8 sm:$0x3] %vm25, %v24
    %s28 = sshllo.u32 0, 1
    %v30 = vld [vmem:[#allocation0] sm:%s28]
    %s31 = sshllo.u32 0, 1
    %32 = vst [vmem:[%s1] sm:%s31] %v30
    %s33 = scalar_lea.vmem [#allocation0], 8
    %v34 = vld [vmem:[%s33] sm:%s28]
    %s35 = sshllo.u32 0, 1
    %s36 = scalar_lea.vmem %s1, 1
    %37 = vst [vmem:[%s36] sm:%s35] %v34

// kernel: mel_transformer_forward.1
$region0: #{mel_transformer_forward.1}
  #allocation0 [shape = 'u32[]', space=smem, size = 0x4, offset = 0x4, fixed_abs, tag = 'smem constant byte address 0x4 - core index']
  #allocation1 [shape = 'u32[144,128]{1,0:T(1,128)}', space=vmem, size = 0x12000, scoped, tag = 'internal scratch']
  %s0 = inlined_call_operand.vmem [shape: f32[2,10,160], index: 0, kind: input, shape index: {}]
  %s1 = inlined_call_operand.vmem [shape: bf16[3,160,512], index: 1, kind: input, shape index: {}]
  %s2 = inlined_call_operand.vmem [shape: bf16[256,8], index: 2, kind: input, shape index: {}]
  %s3 = inlined_call_operand.vmem [shape: bf16[3,8,256], index: 3, kind: input, shape index: {}]
  %s4 = inlined_call_operand.vmem [shape: f32[1,256], index: 4, kind: input, shape index: {}]
  %s5 = inlined_call_operand.vmem [shape: bf16[3,256,512], index: 5, kind: input, shape index: {}]
  %s6 = inlined_call_operand.vmem [shape: f32[1,512], index: 6, kind: input, shape index: {}]
  %s7 = inlined_call_operand.vmem [shape: bf16[512,128], index: 7, kind: input, shape index: {}]
  %s8 = inlined_call_operand.vmem [shape: f32[8,128], index: 8, kind: input, shape index: {}]
  %s9 = inlined_call_operand.vmem [shape: bf16[2,128,384], index: 9, kind: input, shape index: {}]
  %s10 = inlined_call_operand.vmem [shape: f32[2,1,384], index: 10, kind: input, shape index: {}]
  %s11 = inlined_call_operand.vmem [shape: bf16[2,128,128], index: 11, kind: input, shape index: {}]
  %s12 = inlined_call_operand.vmem [shape: f32[2,1,128], index: 12, kind: input, shape index: {}]
  %s13 = inlined_call_operand.vmem [shape: f32[2,1,128], index: 13, kind: input, shape index: {}]
  %s14 = inlined_call_operand.vmem [shape: f32[2,1,128], index: 14, kind: input, shape index: {}]
  %s15 = inlined_call_operand.vmem [shape: bf16[2,128,256], index: 15, kind: input, shape index: {}]
  %s16 = inlined_call_operand.vmem [shape: f32[2,1,256], index: 16, kind: input, shape index: {}]
  %s17 = inlined_call_operand.vmem [shape: bf16[2,256,128], index: 17, kind: input, shape index: {}]
  %s18 = inlined_call_operand.vmem [shape: f32[2,1,128], index: 18, kind: input, shape index: {}]
  %s19 = inlined_call_operand.vmem [shape: f32[2,1,128], index: 19, kind: input, shape index: {}]
  %s20 = inlined_call_operand.vmem [shape: f32[2,1,128], index: 20, kind: input, shape index: {}]
  %s21 = inlined_call_operand.vmem [shape: f32[1,128], index: 21, kind: input, shape index: {}]
  %s22 = inlined_call_operand.vmem [shape: f32[1,128], index: 22, kind: input, shape index: {}]
  %s23 = inlined_call_operand.vmem [shape: bf16[128,128], index: 23, kind: input, shape index: {}]
  %s24 = inlined_call_operand.vmem [shape: f32[1,128], index: 24, kind: input, shape index: {}]
  %s25 = inlined_call_operand.hbm [shape: f32[2,1,128], index: 25, kind: output, shape index: {}]
  %s26 = sld [smem:[#allocation0]]
  $region133: #{mel_transformer_forward.1} parent=0
    _
  %s28 = ssub.s32 1, %s26
  %s29 = scalar_select 0, %s28, %s26
  $region1: #{mel_transformer_forward.1} parent=0
    #allocation2 [shape = 'u8[1024]{0}', space=vmem, size = 0x400, scoped, tag = 'output window, operand 0']
    #allocation3 [shape = 's32[2]{0}', space=sflag, size = 0x8, scoped, tag = 'scoped memory for mel_transformer_forward.1']
    %30 = vsyncpa [#allocation3], 0
    %s31 = scalar_lea.sflag [#allocation3], 1
    %32 = vsyncpa %s31, 0
    loop: start=0, step=1, limit=4
    $region2: #{mel_transformer_forward.1} parent=1 // loop_pre_header
      _
    $region3: #{mel_transformer_forward.1} parent=1 // loop_header
      %s34 = sphi 0, %s38
      %p35 = scmp.ge.s32.totalorder %s34, 4
      %s44 = sphi 0, %s46
      %s47 = sphi 0, %s44
      %s48 = sphi 0, %s47
      %s64 = sphi 0, %s48
      %s68 = sphi 0, %s68
      %s70 = sphi 0, %s68
      %s71 = sphi 0, %s70
      %s85 = sphi 0, %s71
      %s89 = sphi 0, %s89
      %s91 = sphi 0, %s89
      %s92 = sphi 0, %s91
      %s106 = sphi 0, %s92
      %s110 = sphi 0, %s110
      %s112 = sphi 0, %s110
      %s113 = sphi 0, %s112
      %s127 = sphi 0, %s113
      %s131 = sphi 0, %s131
      %s133 = sphi 0, %s131
      %s134 = sphi 0, %s133
      %s148 = sphi 0, %s134
      %s152 = sphi 0, %s152
      %s154 = sphi 0, %s152
      %s155 = sphi 0, %s154
      %s169 = sphi 0, %s155
      %s173 = sphi 0, %s173
      %s175 = sphi 0, %s173
      %s176 = sphi 0, %s175
      %s190 = sphi 0, %s176
      %s194 = sphi 0, %s194
      %s196 = sphi 0, %s194
      %s197 = sphi 0, %s196
      %s211 = sphi 0, %s197
      %s215 = sphi 0, %s215
      %s217 = sphi 0, %s215
      %s218 = sphi 0, %s217
      %s232 = sphi 0, %s218
      %s236 = sphi 0, %s236
      %s238 = sphi 0, %s236
      %s239 = sphi 0, %s238
      %s253 = sphi 0, %s239
      %s257 = sphi 0, %s257
      %s259 = sphi 0, %s257
      %s260 = sphi 0, %s259
      %s274 = sphi 0, %s260
      %s278 = sphi 0, %s278
      %s280 = sphi 0, %s278
      %s281 = sphi 0, %s280
      %s295 = sphi 0, %s281
      %s299 = sphi 0, %s299
      %s301 = sphi 0, %s299
      %s302 = sphi 0, %s301
      %s316 = sphi 0, %s302
      %s320 = sphi 0, %s320
      %s322 = sphi 0, %s320
      %s323 = sphi 0, %s322
      %s337 = sphi 0, %s323
      %s341 = sphi 0, %s341
      %s343 = sphi 0, %s341
      %s344 = sphi 0, %s343
      %s358 = sphi 0, %s344
      %s362 = sphi 0, %s362
      %s364 = sphi 0, %s362
      %s365 = sphi 0, %s364
      %s379 = sphi 0, %s365
      %s383 = sphi 0, %s383
      %s385 = sphi 0, %s383
      %s386 = sphi 0, %s385
      %s400 = sphi 0, %s386
      %s404 = sphi 0, %s404
      %s406 = sphi 0, %s404
      %s407 = sphi 0, %s406
      %s421 = sphi 0, %s407
      %s425 = sphi 0, %s425
      %s427 = sphi 0, %s425
      %s428 = sphi 0, %s427
      %s442 = sphi 0, %s428
      %s446 = sphi 0, %s446
      %s448 = sphi 0, %s446
      %s449 = sphi 0, %s448
      %s463 = sphi 0, %s449
      %s467 = sphi 0, %s467
      %s469 = sphi 0, %s467
      %s470 = sphi 0, %s469
      %s484 = sphi 0, %s470
      %s488 = sphi 0, %s488
      %s490 = sphi 0, %s488
      %s491 = sphi 0, %s490
      %s505 = sphi 0, %s491
      %s509 = sphi 0, %s509
      %s511 = sphi 0, %s509
      %s512 = sphi 0, %s511
      %s526 = sphi 0, %s512
      %s530 = sphi 0, %s530
      %s532 = sphi 0, %s530
      %s533 = sphi 0, %s532
      %s547 = sphi 0, %s533
      %s551 = sphi 0, %s551
      %s553 = sphi 0, %s551
      %s554 = sphi 0, %s553
      %s568 = sphi 0, %s554
      %s574 = sphi 0, %s576
      %s577 = sphi 0, %s574
      %s578 = sphi 0, %s577
      %s594 = sphi 0, %s578
    $region4: #{mel_transformer_forward.1} parent=1 // loop_header_branch
      %37 = sbr.rel (%p35) target = $region8
    $region5: #{mel_transformer_forward.1} parent=1 // loop_body
      %s39 = ssub.s32 %s34, 1
      %s40 = ssub.s32 %s34, 2
      %s41 = sadd.s32 %s34, 1
      %s42 = ssub.s32 %s34, %s41
      %p43 = scmp.eq.s32.totalorder %s42, 0
      %s45 = sadd.s32 %s44, 1
      %s46 = scalar_select %p43, %s44, %s45
      %p49 = pneg %p43
      %p50 = scmp.eq.s32.totalorder %s34, 1
      %p51 = por %p49, %p50
      %p52 = scmp.ne.s32.totalorder %s44, %s47
      %p53 = scmp.eq.s32.totalorder %s34, 0
      %p54 = por %p52, %p53
      %p55 = scmp.ne.s32.totalorder %s44, %s47
      %p56 = scmp.eq.s32.totalorder %s39, 1
      %p57 = por %p55, %p56
      %p58 = scmp.ne.s32.totalorder %s47, %s48
      %p59 = scmp.eq.s32.totalorder %s39, 0
      %p60 = por %p58, %p59
      %p61 = scmp.ne.s32.totalorder %s47, %s48
      %p62 = scmp.eq.s32.totalorder %s40, 1
      %p63 = por %p61, %p62
      %p65 = scmp.ne.s32.totalorder %s48, %s64
      %p66 = scmp.eq.s32.totalorder %s40, 0
      %p67 = por %p65, %p66
      %s69 = sadd.s32 %s68, 1
      %p72 = scmp.eq.s32.totalorder %s34, 1
      %p73 = scmp.ne.s32.totalorder %s68, %s70
      %p74 = scmp.eq.s32.totalorder %s34, 0
      %p75 = por %p73, %p74
      %p76 = scmp.ne.s32.totalorder %s68, %s70
      %p77 = scmp.eq.s32.totalorder %s39, 1
      %p78 = por %p76, %p77
      %p79 = scmp.ne.s32.totalorder %s70, %s71
      %p80 = scmp.eq.s32.totalorder %s39, 0
      %p81 = por %p79, %p80
      %p82 = scmp.ne.s32.totalorder %s70, %s71
      %p83 = scmp.eq.s32.totalorder %s40, 1
      %p84 = por %p82, %p83
      %p86 = scmp.ne.s32.totalorder %s71, %s85
      %p87 = scmp.eq.s32.totalorder %s40, 0
      %p88 = por %p86, %p87
      %s90 = sadd.s32 %s89, 1
      %p93 = scmp.eq.s32.totalorder %s34, 1
      %p94 = scmp.ne.s32.totalorder %s89, %s91
      %p95 = scmp.eq.s32.totalorder %s34, 0
      %p96 = por %p94, %p95
      %p97 = scmp.ne.s32.totalorder %s89, %s91
      %p98 = scmp.eq.s32.totalorder %s39, 1
      %p99 = por %p97, %p98
      %p100 = scmp.ne.s32.totalorder %s91, %s92
      %p101 = scmp.eq.s32.totalorder %s39, 0
      %p102 = por %p100, %p101
      %p103 = scmp.ne.s32.totalorder %s91, %s92
      %p104 = scmp.eq.s32.totalorder %s40, 1
      %p105 = por %p103, %p104
      %p107 = scmp.ne.s32.totalorder %s92, %s106
      %p108 = scmp.eq.s32.totalorder %s40, 0
      %p109 = por %p107, %p108
      %s111 = sadd.s32 %s110, 1
      %p114 = scmp.eq.s32.totalorder %s34, 1
      %p115 = scmp.ne.s32.totalorder %s110, %s112
      %p116 = scmp.eq.s32.totalorder %s34, 0
      %p117 = por %p115, %p116
      %p118 = scmp.ne.s32.totalorder %s110, %s112
      %p119 = scmp.eq.s32.totalorder %s39, 1
      %p120 = por %p118, %p119
      %p121 = scmp.ne.s32.totalorder %s112, %s113
      %p122 = scmp.eq.s32.totalorder %s39, 0
      %p123 = por %p121, %p122
      %p124 = scmp.ne.s32.totalorder %s112, %s113
      %p125 = scmp.eq.s32.totalorder %s40, 1
      %p126 = por %p124, %p125
      %p128 = scmp.ne.s32.totalorder %s113, %s127
      %p129 = scmp.eq.s32.totalorder %s40, 0
      %p130 = por %p128, %p129
      %s132 = sadd.s32 %s131, 1
      %p135 = scmp.eq.s32.totalorder %s34, 1
      %p136 = scmp.ne.s32.totalorder %s131, %s133
      %p137 = scmp.eq.s32.totalorder %s34, 0
      %p138 = por %p136, %p137
      %p139 = scmp.ne.s32.totalorder %s131, %s133
      %p140 = scmp.eq.s32.totalorder %s39, 1
      %p141 = por %p139, %p140
      %p142 = scmp.ne.s32.totalorder %s133, %s134
      %p143 = scmp.eq.s32.totalorder %s39, 0
      %p144 = por %p142, %p143
      %p145 = scmp.ne.s32.totalorder %s133, %s134
      %p146 = scmp.eq.s32.totalorder %s40, 1
      %p147 = por %p145, %p146
      %p149 = scmp.ne.s32.totalorder %s134, %s148
      %p150 = scmp.eq.s32.totalorder %s40, 0
      %p151 = por %p149, %p150
      %s153 = sadd.s32 %s152, 1
      %p156 = scmp.eq.s32.totalorder %s34, 1
      %p157 = scmp.ne.s32.totalorder %s152, %s154
      %p158 = scmp.eq.s32.totalorder %s34, 0
      %p159 = por %p157, %p158
      %p160 = scmp.ne.s32.totalorder %s152, %s154
      %p161 = scmp.eq.s32.totalorder %s39, 1
      %p162 = por %p160, %p161
      %p163 = scmp.ne.s32.totalorder %s154, %s155
      %p164 = scmp.eq.s32.totalorder %s39, 0
      %p165 = por %p163, %p164
      %p166 = scmp.ne.s32.totalorder %s154, %s155
      %p167 = scmp.eq.s32.totalorder %s40, 1
      %p168 = por %p166, %p167
      %p170 = scmp.ne.s32.totalorder %s155, %s169
      %p171 = scmp.eq.s32.totalorder %s40, 0
      %p172 = por %p170, %p171
      %s174 = sadd.s32 %s173, 1
      %p177 = scmp.eq.s32.totalorder %s34, 1
      %p178 = scmp.ne.s32.totalorder %s173, %s175
      %p179 = scmp.eq.s32.totalorder %s34, 0
      %p180 = por %p178, %p179
      %p181 = scmp.ne.s32.totalorder %s173, %s175
      %p182 = scmp.eq.s32.totalorder %s39, 1
      %p183 = por %p181, %p182
      %p184 = scmp.ne.s32.totalorder %s175, %s176
      %p185 = scmp.eq.s32.totalorder %s39, 0
      %p186 = por %p184, %p185
      %p187 = scmp.ne.s32.totalorder %s175, %s176
      %p188 = scmp.eq.s32.totalorder %s40, 1
      %p189 = por %p187, %p188
      %p191 = scmp.ne.s32.totalorder %s176, %s190
      %p192 = scmp.eq.s32.totalorder %s40, 0
      %p193 = por %p191, %p192
      %s195 = sadd.s32 %s194, 1
      %p198 = scmp.eq.s32.totalorder %s34, 1
      %p199 = scmp.ne.s32.totalorder %s194, %s196
      %p200 = scmp.eq.s32.totalorder %s34, 0
      %p201 = por %p199, %p200
      %p202 = scmp.ne.s32.totalorder %s194, %s196
      %p203 = scmp.eq.s32.totalorder %s39, 1
      %p204 = por %p202, %p203
      %p205 = scmp.ne.s32.totalorder %s196, %s197
      %p206 = scmp.eq.s32.totalorder %s39, 0
      %p207 = por %p205, %p206
      %p208 = scmp.ne.s32.totalorder %s196, %s197
      %p209 = scmp.eq.s32.totalorder %s40, 1
      %p210 = por %p208, %p209
      %p212 = scmp.ne.s32.totalorder %s197, %s211
      %p213 = scmp.eq.s32.totalorder %s40, 0
      %p214 = por %p212, %p213
      %s216 = sadd.s32 %s215, 1
      %p219 = scmp.eq.s32.totalorder %s34, 1
      %p220 = scmp.ne.s32.totalorder %s215, %s217
      %p221 = scmp.eq.s32.totalorder %s34, 0
      %p222 = por %p220, %p221
      %p223 = scmp.ne.s32.totalorder %s215, %s217
      %p224 = scmp.eq.s32.totalorder %s39, 1
      %p225 = por %p223, %p224
      %p226 = scmp.ne.s32.totalorder %s217, %s218
      %p227 = scmp.eq.s32.totalorder %s39, 0
      %p228 = por %p226, %p227
      %p229 = scmp.ne.s32.totalorder %s217, %s218
      %p230 = scmp.eq.s32.totalorder %s40, 1
      %p231 = por %p229, %p230
      %p233 = scmp.ne.s32.totalorder %s218, %s232
      %p234 = scmp.eq.s32.totalorder %s40, 0
      %p235 = por %p233, %p234
      %s237 = sadd.s32 %s236, 1
      %p240 = scmp.eq.s32.totalorder %s34, 1
      %p241 = scmp.ne.s32.totalorder %s236, %s238
      %p242 = scmp.eq.s32.totalorder %s34, 0
      %p243 = por %p241, %p242
      %p244 = scmp.ne.s32.totalorder %s236, %s238
      %p245 = scmp.eq.s32.totalorder %s39, 1
      %p246 = por %p244, %p245
      %p247 = scmp.ne.s32.totalorder %s238, %s239
      %p248 = scmp.eq.s32.totalorder %s39, 0
      %p249 = por %p247, %p248
      %p250 = scmp.ne.s32.totalorder %s238, %s239
      %p251 = scmp.eq.s32.totalorder %s40, 1
      %p252 = por %p250, %p251
      %p254 = scmp.ne.s32.totalorder %s239, %s253
      %p255 = scmp.eq.s32.totalorder %s40, 0
      %p256 = por %p254, %p255
      %s258 = sadd.s32 %s257, 1
      %p261 = scmp.eq.s32.totalorder %s34, 1
      %p262 = scmp.ne.s32.totalorder %s257, %s259
      %p263 = scmp.eq.s32.totalorder %s34, 0
      %p264 = por %p262, %p263
      %p265 = scmp.ne.s32.totalorder %s257, %s259
      %p266 = scmp.eq.s32.totalorder %s39, 1
      %p267 = por %p265, %p266
      %p268 = scmp.ne.s32.totalorder %s259, %s260
      %p269 = scmp.eq.s32.totalorder %s39, 0
      %p270 = por %p268, %p269
      %p271 = scmp.ne.s32.totalorder %s259, %s260
      %p272 = scmp.eq.s32.totalorder %s40, 1
      %p273 = por %p271, %p272
      %p275 = scmp.ne.s32.totalorder %s260, %s274
      %p276 = scmp.eq.s32.totalorder %s40, 0
      %p277 = por %p275, %p276
      %s279 = sadd.s32 %s278, 1
      %p282 = scmp.eq.s32.totalorder %s34, 1
      %p283 = scmp.ne.s32.totalorder %s278, %s280
      %p284 = scmp.eq.s32.totalorder %s34, 0
      %p285 = por %p283, %p284
      %p286 = scmp.ne.s32.totalorder %s278, %s280
      %p287 = scmp.eq.s32.totalorder %s39, 1
      %p288 = por %p286, %p287
      %p289 = scmp.ne.s32.totalorder %s280, %s281
      %p290 = scmp.eq.s32.totalorder %s39, 0
      %p291 = por %p289, %p290
      %p292 = scmp.ne.s32.totalorder %s280, %s281
      %p293 = scmp.eq.s32.totalorder %s40, 1
      %p294 = por %p292, %p293
      %p296 = scmp.ne.s32.totalorder %s281, %s295
      %p297 = scmp.eq.s32.totalorder %s40, 0
      %p298 = por %p296, %p297
      %s300 = sadd.s32 %s299, 1
      %p303 = scmp.eq.s32.totalorder %s34, 1
      %p304 = scmp.ne.s32.totalorder %s299, %s301
      %p305 = scmp.eq.s32.totalorder %s34, 0
      %p306 = por %p304, %p305
      %p307 = scmp.ne.s32.totalorder %s299, %s301
      %p308 = scmp.eq.s32.totalorder %s39, 1
      %p309 = por %p307, %p308
      %p310 = scmp.ne.s32.totalorder %s301, %s302
      %p311 = scmp.eq.s32.totalorder %s39, 0
      %p312 = por %p310, %p311
      %p313 = scmp.ne.s32.totalorder %s301, %s302
      %p314 = scmp.eq.s32.totalorder %s40, 1
      %p315 = por %p313, %p314
      %p317 = scmp.ne.s32.totalorder %s302, %s316
      %p318 = scmp.eq.s32.totalorder %s40, 0
      %p319 = por %p317, %p318
      %s321 = sadd.s32 %s320, 1
      %p324 = scmp.eq.s32.totalorder %s34, 1
      %p325 = scmp.ne.s32.totalorder %s320, %s322
      %p326 = scmp.eq.s32.totalorder %s34, 0
      %p327 = por %p325, %p326
      %p328 = scmp.ne.s32.totalorder %s320, %s322
      %p329 = scmp.eq.s32.totalorder %s39, 1
      %p330 = por %p328, %p329
      %p331 = scmp.ne.s32.totalorder %s322, %s323
      %p332 = scmp.eq.s32.totalorder %s39, 0
      %p333 = por %p331, %p332
      %p334 = scmp.ne.s32.totalorder %s322, %s323
      %p335 = scmp.eq.s32.totalorder %s40, 1
      %p336 = por %p334, %p335
      %p338 = scmp.ne.s32.totalorder %s323, %s337
      %p339 = scmp.eq.s32.totalorder %s40, 0
      %p340 = por %p338, %p339
      %s342 = sadd.s32 %s341, 1
      %p345 = scmp.eq.s32.totalorder %s34, 1
      %p346 = scmp.ne.s32.totalorder %s341, %s343
      %p347 = scmp.eq.s32.totalorder %s34, 0
      %p348 = por %p346, %p347
      %p349 = scmp.ne.s32.totalorder %s341, %s343
      %p350 = scmp.eq.s32.totalorder %s39, 1
      %p351 = por %p349, %p350
      %p352 = scmp.ne.s32.totalorder %s343, %s344
      %p353 = scmp.eq.s32.totalorder %s39, 0
      %p354 = por %p352, %p353
      %p355 = scmp.ne.s32.totalorder %s343, %s344
      %p356 = scmp.eq.s32.totalorder %s40, 1
      %p357 = por %p355, %p356
      %p359 = scmp.ne.s32.totalorder %s344, %s358
      %p360 = scmp.eq.s32.totalorder %s40, 0
      %p361 = por %p359, %p360
      %s363 = sadd.s32 %s362, 1
      %p366 = scmp.eq.s32.totalorder %s34, 1
      %p367 = scmp.ne.s32.totalorder %s362, %s364
      %p368 = scmp.eq.s32.totalorder %s34, 0
      %p369 = por %p367, %p368
      %p370 = scmp.ne.s32.totalorder %s362, %s364
      %p371 = scmp.eq.s32.totalorder %s39, 1
      %p372 = por %p370, %p371
      %p373 = scmp.ne.s32.totalorder %s364, %s365
      %p374 = scmp.eq.s32.totalorder %s39, 0
      %p375 = por %p373, %p374
      %p376 = scmp.ne.s32.totalorder %s364, %s365
      %p377 = scmp.eq.s32.totalorder %s40, 1
      %p378 = por %p376, %p377
      %p380 = scmp.ne.s32.totalorder %s365, %s379
      %p381 = scmp.eq.s32.totalorder %s40, 0
      %p382 = por %p380, %p381
      %s384 = sadd.s32 %s383, 1
      %p387 = scmp.eq.s32.totalorder %s34, 1
      %p388 = scmp.ne.s32.totalorder %s383, %s385
      %p389 = scmp.eq.s32.totalorder %s34, 0
      %p390 = por %p388, %p389
      %p391 = scmp.ne.s32.totalorder %s383, %s385
      %p392 = scmp.eq.s32.totalorder %s39, 1
      %p393 = por %p391, %p392
      %p394 = scmp.ne.s32.totalorder %s385, %s386
      %p395 = scmp.eq.s32.totalorder %s39, 0
      %p396 = por %p394, %p395
      %p397 = scmp.ne.s32.totalorder %s385, %s386
      %p398 = scmp.eq.s32.totalorder %s40, 1
      %p399 = por %p397, %p398
      %p401 = scmp.ne.s32.totalorder %s386, %s400
      %p402 = scmp.eq.s32.totalorder %s40, 0
      %p403 = por %p401, %p402
      %s405 = sadd.s32 %s404, 1
      %p408 = scmp.eq.s32.totalorder %s34, 1
      %p409 = scmp.ne.s32.totalorder %s404, %s406
      %p410 = scmp.eq.s32.totalorder %s34, 0
      %p411 = por %p409, %p410
      %p412 = scmp.ne.s32.totalorder %s404, %s406
      %p413 = scmp.eq.s32.totalorder %s39, 1
      %p414 = por %p412, %p413
      %p415 = scmp.ne.s32.totalorder %s406, %s407
      %p416 = scmp.eq.s32.totalorder %s39, 0
      %p417 = por %p415, %p416
      %p418 = scmp.ne.s32.totalorder %s406, %s407
      %p419 = scmp.eq.s32.totalorder %s40, 1
      %p420 = por %p418, %p419
      %p422 = scmp.ne.s32.totalorder %s407, %s421
      %p423 = scmp.eq.s32.totalorder %s40, 0
      %p424 = por %p422, %p423
      %s426 = sadd.s32 %s425, 1
      %p429 = scmp.eq.s32.totalorder %s34, 1
      %p430 = scmp.ne.s32.totalorder %s425, %s427
      %p431 = scmp.eq.s32.totalorder %s34, 0
      %p432 = por %p430, %p431
      %p433 = scmp.ne.s32.totalorder %s425, %s427
      %p434 = scmp.eq.s32.totalorder %s39, 1
      %p435 = por %p433, %p434
      %p436 = scmp.ne.s32.totalorder %s427, %s428
      %p437 = scmp.eq.s32.totalorder %s39, 0
      %p438 = por %p436, %p437
      %p439 = scmp.ne.s32.totalorder %s427, %s428
      %p440 = scmp.eq.s32.totalorder %s40, 1
      %p441 = por %p439, %p440
      %p443 = scmp.ne.s32.totalorder %s428, %s442
      %p444 = scmp.eq.s32.totalorder %s40, 0
      %p445 = por %p443, %p444
      %s447 = sadd.s32 %s446, 1
      %p450 = scmp.eq.s32.totalorder %s34, 1
      %p451 = scmp.ne.s32.totalorder %s446, %s448
      %p452 = scmp.eq.s32.totalorder %s34, 0
      %p453 = por %p451, %p452
      %p454 = scmp.ne.s32.totalorder %s446, %s448
      %p455 = scmp.eq.s32.totalorder %s39, 1
      %p456 = por %p454, %p455
      %p457 = scmp.ne.s32.totalorder %s448, %s449
      %p458 = scmp.eq.s32.totalorder %s39, 0
      %p459 = por %p457, %p458
      %p460 = scmp.ne.s32.totalorder %s448, %s449
      %p461 = scmp.eq.s32.totalorder %s40, 1
      %p462 = por %p460, %p461
      %p464 = scmp.ne.s32.totalorder %s449, %s463
      %p465 = scmp.eq.s32.totalorder %s40, 0
      %p466 = por %p464, %p465
      %s468 = sadd.s32 %s467, 1
      %p471 = scmp.eq.s32.totalorder %s34, 1
      %p472 = scmp.ne.s32.totalorder %s467, %s469
      %p473 = scmp.eq.s32.totalorder %s34, 0
      %p474 = por %p472, %p473
      %p475 = scmp.ne.s32.totalorder %s467, %s469
      %p476 = scmp.eq.s32.totalorder %s39, 1
      %p477 = por %p475, %p476
      %p478 = scmp.ne.s32.totalorder %s469, %s470
      %p479 = scmp.eq.s32.totalorder %s39, 0
      %p480 = por %p478, %p479
      %p481 = scmp.ne.s32.totalorder %s469, %s470
      %p482 = scmp.eq.s32.totalorder %s40, 1
      %p483 = por %p481, %p482
      %p485 = scmp.ne.s32.totalorder %s470, %s484
      %p486 = scmp.eq.s32.totalorder %s40, 0
      %p487 = por %p485, %p486
      %s489 = sadd.s32 %s488, 1
      %p492 = scmp.eq.s32.totalorder %s34, 1
      %p493 = scmp.ne.s32.totalorder %s488, %s490
      %p494 = scmp.eq.s32.totalorder %s34, 0
      %p495 = por %p493, %p494
      %p496 = scmp.ne.s32.totalorder %s488, %s490
      %p497 = scmp.eq.s32.totalorder %s39, 1
      %p498 = por %p496, %p497
      %p499 = scmp.ne.s32.totalorder %s490, %s491
      %p500 = scmp.eq.s32.totalorder %s39, 0
      %p501 = por %p499, %p500
      %p502 = scmp.ne.s32.totalorder %s490, %s491
      %p503 = scmp.eq.s32.totalorder %s40, 1
      %p504 = por %p502, %p503
      %p506 = scmp.ne.s32.totalorder %s491, %s505
      %p507 = scmp.eq.s32.totalorder %s40, 0
      %p508 = por %p506, %p507
      %s510 = sadd.s32 %s509, 1
      %p513 = scmp.eq.s32.totalorder %s34, 1
      %p514 = scmp.ne.s32.totalorder %s509, %s511
      %p515 = scmp.eq.s32.totalorder %s34, 0
      %p516 = por %p514, %p515
      %p517 = scmp.ne.s32.totalorder %s509, %s511
      %p518 = scmp.eq.s32.totalorder %s39, 1
      %p519 = por %p517, %p518
      %p520 = scmp.ne.s32.totalorder %s511, %s512
      %p521 = scmp.eq.s32.totalorder %s39, 0
      %p522 = por %p520, %p521
      %p523 = scmp.ne.s32.totalorder %s511, %s512
      %p524 = scmp.eq.s32.totalorder %s40, 1
      %p525 = por %p523, %p524
      %p527 = scmp.ne.s32.totalorder %s512, %s526
      %p528 = scmp.eq.s32.totalorder %s40, 0
      %p529 = por %p527, %p528
      %s531 = sadd.s32 %s530, 1
      %p534 = scmp.eq.s32.totalorder %s34, 1
      %p535 = scmp.ne.s32.totalorder %s530, %s532
      %p536 = scmp.eq.s32.totalorder %s34, 0
      %p537 = por %p535, %p536
      %p538 = scmp.ne.s32.totalorder %s530, %s532
      %p539 = scmp.eq.s32.totalorder %s39, 1
      %p540 = por %p538, %p539
      %p541 = scmp.ne.s32.totalorder %s532, %s533
      %p542 = scmp.eq.s32.totalorder %s39, 0
      %p543 = por %p541, %p542
      %p544 = scmp.ne.s32.totalorder %s532, %s533
      %p545 = scmp.eq.s32.totalorder %s40, 1
      %p546 = por %p544, %p545
      %p548 = scmp.ne.s32.totalorder %s533, %s547
      %p549 = scmp.eq.s32.totalorder %s40, 0
      %p550 = por %p548, %p549
      %s552 = sadd.s32 %s551, 1
      %p555 = scmp.eq.s32.totalorder %s34, 1
      %p556 = scmp.ne.s32.totalorder %s551, %s553
      %p557 = scmp.eq.s32.totalorder %s34, 0
      %p558 = por %p556, %p557
      %p559 = scmp.ne.s32.totalorder %s551, %s553
      %p560 = scmp.eq.s32.totalorder %s39, 1
      %p561 = por %p559, %p560
      %p562 = scmp.ne.s32.totalorder %s553, %s554
      %p563 = scmp.eq.s32.totalorder %s39, 0
      %p564 = por %p562, %p563
      %p565 = scmp.ne.s32.totalorder %s553, %s554
      %p566 = scmp.eq.s32.totalorder %s40, 1
      %p567 = por %p565, %p566
      %p569 = scmp.ne.s32.totalorder %s554, %s568
      %p570 = scmp.eq.s32.totalorder %s40, 0
      %p571 = por %p569, %p570
      %s572 = ssub.s32 %s34, %s41
      %p573 = scmp.eq.s32.totalorder %s572, 0
      %s575 = sadd.s32 %s574, 1
      %s576 = scalar_select %p573, %s574, %s575
      %p579 = pneg %p573
      %p580 = scmp.eq.s32.totalorder %s34, 1
      %p581 = por %p579, %p580
      %p582 = scmp.ne.s32.totalorder %s574, %s577
      %p583 = scmp.eq.s32.totalorder %s34, 0
      %p584 = por %p582, %p583
      %p585 = scmp.ne.s32.totalorder %s574, %s577
      %p586 = scmp.eq.s32.totalorder %s39, 1
      %p587 = por %p585, %p586
      %p588 = scmp.ne.s32.totalorder %s577, %s578
      %p589 = scmp.eq.s32.totalorder %s39, 0
      %p590 = por %p588, %p589
      %p591 = scmp.ne.s32.totalorder %s577, %s578
      %p592 = scmp.eq.s32.totalorder %s40, 1
      %p593 = por %p591, %p592
      %p595 = scmp.ne.s32.totalorder %s578, %s594
      %p596 = scmp.eq.s32.totalorder %s40, 0
      %p597 = por %p595, %p596
      %p598 = scmp.le.s32.totalorder 1, %s34
      %p599 = scmp.lt.s32.totalorder %s34, 3
      %p600 = pnand %p598, %p599
      %p601 = pneg %p600
      // Predicated region
      $region9: #{mel_transformer_forward.1} parent=5 // pred_check
        _
      $region10: #{mel_transformer_forward.1} parent=5 // pred_check_branch
        %603 = sbr.rel (%p600) target = $region12
      $region11: #{mel_transformer_forward.1} parent=5 // pred_region
        %s604 = ssub.s32 %s34, 1
        // Predicated region
        $region13: #{mel_transformer_forward.1} parent=11 // pred_check
          %p605 = pneg %p81
        $region14: #{mel_transformer_forward.1} parent=11 // pred_check_branch
          %607 = sbr.rel (%p605) target = $region16
        $region15: #{mel_transformer_forward.1} parent=11 // pred_region
          _
        $region16: #{mel_transformer_forward.1} parent=11 // pred_fallthru
          _
        // Predicated region
        $region17: #{mel_transformer_forward.1} parent=11 // pred_check
          %p608 = pneg %p102
        $region18: #{mel_transformer_forward.1} parent=11 // pred_check_branch
          %610 = sbr.rel (%p608) target = $region20
        $region19: #{mel_transformer_forward.1} parent=11 // pred_region
          _
        $region20: #{mel_transformer_forward.1} parent=11 // pred_fallthru
          _
        // Predicated region
        $region21: #{mel_transformer_forward.1} parent=11 // pred_check
          %p611 = pneg %p123
        $region22: #{mel_transformer_forward.1} parent=11 // pred_check_branch
          %613 = sbr.rel (%p611) target = $region24
        $region23: #{mel_transformer_forward.1} parent=11 // pred_region
          _
        $region24: #{mel_transformer_forward.1} parent=11 // pred_fallthru
          _
        // Predicated region
        $region25: #{mel_transformer_forward.1} parent=11 // pred_check
          %p614 = pneg %p144
        $region26: #{mel_transformer_forward.1} parent=11 // pred_check_branch
          %616 = sbr.rel (%p614) target = $region28
        $region27: #{mel_transformer_forward.1} parent=11 // pred_region
          _
        $region28: #{mel_transformer_forward.1} parent=11 // pred_fallthru
          _
        // Predicated region
        $region29: #{mel_transformer_forward.1} parent=11 // pred_check
          %p617 = pneg %p165
        $region30: #{mel_transformer_forward.1} parent=11 // pred_check_branch
          %619 = sbr.rel (%p617) target = $region32
        $region31: #{mel_transformer_forward.1} parent=11 // pred_region
          _
        $region32: #{mel_transformer_forward.1} parent=11 // pred_fallthru
          _
        // Predicated region
        $region33: #{mel_transformer_forward.1} parent=11 // pred_check
          %p620 = pneg %p186
        $region34: #{mel_transformer_forward.1} parent=11 // pred_check_branch
          %622 = sbr.rel (%p620) target = $region36
        $region35: #{mel_transformer_forward.1} parent=11 // pred_region
          _
        $region36: #{mel_transformer_forward.1} parent=11 // pred_fallthru
          _
        // Predicated region
        $region37: #{mel_transformer_forward.1} parent=11 // pred_check
          %p623 = pneg %p207
        $region38: #{mel_transformer_forward.1} parent=11 // pred_check_branch
          %625 = sbr.rel (%p623) target = $region40
        $region39: #{mel_transformer_forward.1} parent=11 // pred_region
          _
        $region40: #{mel_transformer_forward.1} parent=11 // pred_fallthru
          _
        // Predicated region
        $region41: #{mel_transformer_forward.1} parent=11 // pred_check
          %p626 = pneg %p228
        $region42: #{mel_transformer_forward.1} parent=11 // pred_check_branch
          %628 = sbr.rel (%p626) target = $region44
        $region43: #{mel_transformer_forward.1} parent=11 // pred_region
          _
        $region44: #{mel_transformer_forward.1} parent=11 // pred_fallthru
          _
        // Predicated region
        $region45: #{mel_transformer_forward.1} parent=11 // pred_check
          %p629 = pneg %p249
        $region46: #{mel_transformer_forward.1} parent=11 // pred_check_branch
          %631 = sbr.rel (%p629) target = $region48
        $region47: #{mel_transformer_forward.1} parent=11 // pred_region
          _
        $region48: #{mel_transformer_forward.1} parent=11 // pred_fallthru
          _
        // Predicated region
        $region49: #{mel_transformer_forward.1} parent=11 // pred_check
          %p632 = pneg %p270
        $region50: #{mel_transformer_forward.1} parent=11 // pred_check_branch
          %634 = sbr.rel (%p632) target = $region52
        $region51: #{mel_transformer_forward.1} parent=11 // pred_region
          _
        $region52: #{mel_transformer_forward.1} parent=11 // pred_fallthru
          _
        // Predicated region
        $region53: #{mel_transformer_forward.1} parent=11 // pred_check
          %p635 = pneg %p291
        $region54: #{mel_transformer_forward.1} parent=11 // pred_check_branch
          %637 = sbr.rel (%p635) target = $region56
        $region55: #{mel_transformer_forward.1} parent=11 // pred_region
          _
        $region56: #{mel_transformer_forward.1} parent=11 // pred_fallthru
          _
        // Predicated region
        $region57: #{mel_transformer_forward.1} parent=11 // pred_check
          %p638 = pneg %p312
        $region58: #{mel_transformer_forward.1} parent=11 // pred_check_branch
          %640 = sbr.rel (%p638) target = $region60
        $region59: #{mel_transformer_forward.1} parent=11 // pred_region
          _
        $region60: #{mel_transformer_forward.1} parent=11 // pred_fallthru
          _
        // Predicated region
        $region61: #{mel_transformer_forward.1} parent=11 // pred_check
          %p641 = pneg %p333
        $region62: #{mel_transformer_forward.1} parent=11 // pred_check_branch
          %643 = sbr.rel (%p641) target = $region64
        $region63: #{mel_transformer_forward.1} parent=11 // pred_region
          _
        $region64: #{mel_transformer_forward.1} parent=11 // pred_fallthru
          _
        // Predicated region
        $region65: #{mel_transformer_forward.1} parent=11 // pred_check
          %p644 = pneg %p354
        $region66: #{mel_transformer_forward.1} parent=11 // pred_check_branch
          %646 = sbr.rel (%p644) target = $region68
        $region67: #{mel_transformer_forward.1} parent=11 // pred_region
          _
        $region68: #{mel_transformer_forward.1} parent=11 // pred_fallthru
          _
        // Predicated region
        $region69: #{mel_transformer_forward.1} parent=11 // pred_check
          %p647 = pneg %p375
        $region70: #{mel_transformer_forward.1} parent=11 // pred_check_branch
          %649 = sbr.rel (%p647) target = $region72
        $region71: #{mel_transformer_forward.1} parent=11 // pred_region
          _
        $region72: #{mel_transformer_forward.1} parent=11 // pred_fallthru
          _
        // Predicated region
        $region73: #{mel_transformer_forward.1} parent=11 // pred_check
          %p650 = pneg %p396
        $region74: #{mel_transformer_forward.1} parent=11 // pred_check_branch
          %652 = sbr.rel (%p650) target = $region76
        $region75: #{mel_transformer_forward.1} parent=11 // pred_region
          _
        $region76: #{mel_transformer_forward.1} parent=11 // pred_fallthru
          _
        // Predicated region
        $region77: #{mel_transformer_forward.1} parent=11 // pred_check
          %p653 = pneg %p417
        $region78: #{mel_transformer_forward.1} parent=11 // pred_check_branch
          %655 = sbr.rel (%p653) target = $region80
        $region79: #{mel_transformer_forward.1} parent=11 // pred_region
          _
        $region80: #{mel_transformer_forward.1} parent=11 // pred_fallthru
          _
        // Predicated region
        $region81: #{mel_transformer_forward.1} parent=11 // pred_check
          %p656 = pneg %p438
        $region82: #{mel_transformer_forward.1} parent=11 // pred_check_branch
          %658 = sbr.rel (%p656) target = $region84
        $region83: #{mel_transformer_forward.1} parent=11 // pred_region
          _
        $region84: #{mel_transformer_forward.1} parent=11 // pred_fallthru
          _
        // Predicated region
        $region85: #{mel_transformer_forward.1} parent=11 // pred_check
          %p659 = pneg %p459
        $region86: #{mel_transformer_forward.1} parent=11 // pred_check_branch
          %661 = sbr.rel (%p659) target = $region88
        $region87: #{mel_transformer_forward.1} parent=11 // pred_region
          _
        $region88: #{mel_transformer_forward.1} parent=11 // pred_fallthru
          _
        // Predicated region
        $region89: #{mel_transformer_forward.1} parent=11 // pred_check
          %p662 = pneg %p480
        $region90: #{mel_transformer_forward.1} parent=11 // pred_check_branch
          %664 = sbr.rel (%p662) target = $region92
        $region91: #{mel_transformer_forward.1} parent=11 // pred_region
          _
        $region92: #{mel_transformer_forward.1} parent=11 // pred_fallthru
          _
        // Predicated region
        $region93: #{mel_transformer_forward.1} parent=11 // pred_check
          %p665 = pneg %p501
        $region94: #{mel_transformer_forward.1} parent=11 // pred_check_branch
          %667 = sbr.rel (%p665) target = $region96
        $region95: #{mel_transformer_forward.1} parent=11 // pred_region
          _
        $region96: #{mel_transformer_forward.1} parent=11 // pred_fallthru
          _
        // Predicated region
        $region97: #{mel_transformer_forward.1} parent=11 // pred_check
          %p668 = pneg %p522
        $region98: #{mel_transformer_forward.1} parent=11 // pred_check_branch
          %670 = sbr.rel (%p668) target = $region100
        $region99: #{mel_transformer_forward.1} parent=11 // pred_region
          _
        $region100: #{mel_transformer_forward.1} parent=11 // pred_fallthru
          _
        // Predicated region
        $region101: #{mel_transformer_forward.1} parent=11 // pred_check
          %p671 = pneg %p543
        $region102: #{mel_transformer_forward.1} parent=11 // pred_check_branch
          %673 = sbr.rel (%p671) target = $region104
        $region103: #{mel_transformer_forward.1} parent=11 // pred_region
          _
        $region104: #{mel_transformer_forward.1} parent=11 // pred_fallthru
          _
        // Predicated region
        $region105: #{mel_transformer_forward.1} parent=11 // pred_check
          %p674 = pneg %p564
        $region106: #{mel_transformer_forward.1} parent=11 // pred_check_branch
          %676 = sbr.rel (%p674) target = $region108
        $region107: #{mel_transformer_forward.1} parent=11 // pred_region
          _
        $region108: #{mel_transformer_forward.1} parent=11 // pred_fallthru
          _
      $region12: #{mel_transformer_forward.1} parent=5 // pred_fallthru
        _
      %p677 = scmp.lt.s32.totalorder %s34, 2
      // Predicated region
      $region109: #{mel_transformer_forward.1} parent=5 // pred_check
        %p678 = pneg %p677
      $region110: #{mel_transformer_forward.1} parent=5 // pred_check_branch
        %680 = sbr.rel (%p678) target = $region112
      $region111: #{mel_transformer_forward.1} parent=5 // pred_region
        // Predicated region
        $region113: #{mel_transformer_forward.1} parent=111 // pred_check
          %p681 = pneg %p54
        $region114: #{mel_transformer_forward.1} parent=111 // pred_check_branch
          %683 = sbr.rel (%p681) target = $region116
        $region115: #{mel_transformer_forward.1} parent=111 // pred_region
          %p684 = scmp.lt.s32.totalorder %s34, 1
          %s685 = scalar_select %p684, %s34, 1
          %s686 = smul.addr %s685, 4
          %s687 = smul.addr %s686, 8
          %s688 = scalar_lea.vmem %s0, %s687
        $region116: #{mel_transformer_forward.1} parent=111 // pred_fallthru
          _
      $region112: #{mel_transformer_forward.1} parent=5 // pred_fallthru
        _
      %p689 = scmp.le.s32.totalorder 1, %s34
      %p690 = scmp.lt.s32.totalorder %s34, 3
      %p691 = pnand %p689, %p690
      %p692 = pneg %p691
      // Predicated region
      $region117: #{mel_transformer_forward.1} parent=5 // pred_check
        _
      $region118: #{mel_transformer_forward.1} parent=5 // pred_check_branch
        %694 = sbr.rel (%p691) target = $region120
      $region119: #{mel_transformer_forward.1} parent=5 // pred_region
        %s695 = ssub.s32 %s34, 1
        %p696 = scmp.lt.s32.totalorder %s39, 1
        %s697 = scalar_select %p696, %s39, 1
        %s698 = smul.addr %s697, 4
        %s699 = smul.addr %s698, 8
        %s700 = scalar_lea.vmem %s0, %s699
        %p701 = pneg %p60
        %p702 = pneg %p57
        %p703 = pneg %p81
        %p704 = pneg %p78
        %p705 = pneg %p102
        %p706 = pneg %p99
        %p707 = pneg %p123
        %p708 = pneg %p120
        %p709 = pneg %p144
        %p710 = pneg %p141
        %p711 = pneg %p165
        %p712 = pneg %p162
        %p713 = pneg %p186
        %p714 = pneg %p183
        %p715 = pneg %p207
        %p716 = pneg %p204
        %p717 = pneg %p228
        %p718 = pneg %p225
        %p719 = pneg %p249
        %p720 = pneg %p246
        %p721 = pneg %p270
        %p722 = pneg %p267
        %p723 = pneg %p291
        %p724 = pneg %p288
        %p725 = pneg %p312
        %p726 = pneg %p309
        %p727 = pneg %p333
        %p728 = pneg %p330
        %p729 = pneg %p354
        %p730 = pneg %p351
        %p731 = pneg %p375
        %p732 = pneg %p372
        %p733 = pneg %p396
        %p734 = pneg %p393
        %p735 = pneg %p417
        %p736 = pneg %p414
        %p737 = pneg %p438
        %p738 = pneg %p435
        %p739 = pneg %p459
        %p740 = pneg %p456
        %p741 = pneg %p480
        %p742 = pneg %p477
        %p743 = pneg %p501
        %p744 = pneg %p498
        %p745 = pneg %p522
        %p746 = pneg %p519
        %p747 = pneg %p543
        %p748 = pneg %p540
        %p749 = pneg %p564
        %p750 = pneg %p561
        %p751 = pneg %p590
        %p752 = pneg %p587
        %s753 = sand.u32 %s577, 1
        %s754 = scalar_lea.sflag [#allocation3], %s753
        %s755 = sand.u32 %s577, 1
        %s756 = scalar_lea.vmem [#allocation2], %s755
        %p757 = scmp.lt.s32.totalorder %s39, 1
        %s758 = scalar_select %p757, %s39, 1
        %s759 = smul.addr %s758, 4
        %s760 = smul.addr %s759, 8
        %s761 = scalar_lea.vmem %s0, %s760
        %v763 = vld [vmem:[%s761] sm:$0xff]
        %v764 = vld [vmem:[%s761 + $0x8] sm:$0xff]
        %v765 = vpack.c.bf16 %v763, %v763
        %v766 = vpack.c.bf16 %v764, %v764
        %v767 = vld [vmem:[%s1] sm:$0xff]
        %v768 = vld [vmem:[%s1 + $0x8] sm:$0xff]
        %v769 = vld [vmem:[%s1 + $0x10] sm:$0xff]
        %v770 = vld [vmem:[%s1 + $0x18] sm:$0xff]
        %v771 = vld [vmem:[%s1 + $0x20] sm:$0xff]
        %v772 = vld [vmem:[%s1 + $0x28] sm:$0xff]
        %v773 = vld [vmem:[%s1 + $0x30] sm:$0xff]
        %v774 = vld [vmem:[%s1 + $0x38] sm:$0xff]
        %v775 = vld [vmem:[%s1 + $0x40] sm:$0xff]
        %v776 = vld [vmem:[%s1 + $0x48] sm:$0xff]
        %v777 = vld [vmem:[%s1 + $0x50] sm:$0xff]
        %v778 = vld [vmem:[%s1 + $0x58] sm:$0xff]
        %v779 = vld [vmem:[%s1 + $0x60] sm:$0xff]
        %v780 = vld [vmem:[%s1 + $0x68] sm:$0xff]
        %v781 = vld [vmem:[%s1 + $0x70] sm:$0xff]
        %v782 = vld [vmem:[%s1 + $0x78] sm:$0xff]
        %v783 = vld [vmem:[%s1 + $0x80] sm:$0xff]
        %v784 = vld [vmem:[%s1 + $0x88] sm:$0xff]
        %v785 = vld [vmem:[%s1 + $0x90] sm:$0xff]
        %v786 = vld [vmem:[%s1 + $0x98] sm:$0xff]
        %v787 = vld [vmem:[%s1 + $0xa0] sm:$0xff]
        %v788 = vld [vmem:[%s1 + $0xa8] sm:$0xff]
        %v789 = vld [vmem:[%s1 + $0xb0] sm:$0xff]
        %v790 = vld [vmem:[%s1 + $0xb8] sm:$0xff]
        %v791 = vld [vmem:[%s1 + $0xc0] sm:$0xff]
        %v792 = vld [vmem:[%s1 + $0xc8] sm:$0xff]
        %v793 = vld [vmem:[%s1 + $0xd0] sm:$0xff]
        %v794 = vld [vmem:[%s1 + $0xd8] sm:$0xff]
        %v795 = vld [vmem:[%s1 + $0xe0] sm:$0xff]
        %v796 = vld [vmem:[%s1 + $0xe8] sm:$0xff]
        %v797 = vld [vmem:[%s1 + $0xf0] sm:$0xff]
        %v798 = vld [vmem:[%s1 + $0xf8] sm:$0xff]
        %v799 = vld [vmem:[%s1 + $0x100] sm:$0xff]
        %v800 = vld [vmem:[%s1 + $0x108] sm:$0xff]
        %v801 = vld [vmem:[%s1 + $0x110] sm:$0xff]
        %v802 = vld [vmem:[%s1 + $0x118] sm:$0xff]
        %v803 = vld [vmem:[%s1 + $0x120] sm:$0xff]
        %v804 = vld [vmem:[%s1 + $0x128] sm:$0xff]
        %v805 = vld [vmem:[%s1 + $0x130] sm:$0xff]
        %v806 = vld [vmem:[%s1 + $0x138] sm:$0xff]
        %v807 = vld [vmem:[%s761] sm:$0xfe]
        %v808 = vld [vmem:[%s761 + $0x8] sm:$0xfe]
        %v809 = vld [vmem:[%s761 + $0x10] sm:$0x1]
        %v810 = vld [vmem:[%s761 + $0x18] sm:$0x1]
        %v811 = vpack.c.bf16 %v809, %v807
        %v812 = vpack.c.bf16 %v810, %v808
        %s813 = scalar_lea.vmem %s1, 320
        %v814 = vld [vmem:[%s813] sm:$0xff]
        %v815 = vld [vmem:[%s813 + $0x8] sm:$0xff]
        %v816 = vld [vmem:[%s813 + $0x10] sm:$0xff]
        %v817 = vld [vmem:[%s813 + $0x18] sm:$0xff]
        %v818 = vld [vmem:[%s813 + $0x20] sm:$0xff]
        %v819 = vld [vmem:[%s813 + $0x28] sm:$0xff]
        %v820 = vld [vmem:[%s813 + $0x30] sm:$0xff]
        %v821 = vld [vmem:[%s813 + $0x38] sm:$0xff]
        %v822 = vld [vmem:[%s813 + $0x40] sm:$0xff]
        %v823 = vld [vmem:[%s813 + $0x48] sm:$0xff]
        %v824 = vld [vmem:[%s813 + $0x50] sm:$0xff]
        %v825 = vld [vmem:[%s813 + $0x58] sm:$0xff]
        %v826 = vld [vmem:[%s813 + $0x60] sm:$0xff]
        %v827 = vld [vmem:[%s813 + $0x68] sm:$0xff]
        %v828 = vld [vmem:[%s813 + $0x70] sm:$0xff]
        %v829 = vld [vmem:[%s813 + $0x78] sm:$0xff]
        %v830 = vld [vmem:[%s813 + $0x80] sm:$0xff]
        %v831 = vld [vmem:[%s813 + $0x88] sm:$0xff]
        %v832 = vld [vmem:[%s813 + $0x90] sm:$0xff]
        %v833 = vld [vmem:[%s813 + $0x98] sm:$0xff]
        %v834 = vld [vmem:[%s813 + $0xa0] sm:$0xff]
        %v835 = vld [vmem:[%s813 + $0xa8] sm:$0xff]
        %v836 = vld [vmem:[%s813 + $0xb0] sm:$0xff]
        %v837 = vld [vmem:[%s813 + $0xb8] sm:$0xff]
        %v838 = vld [vmem:[%s813 + $0xc0] sm:$0xff]
        %v839 = vld [vmem:[%s813 + $0xc8] sm:$0xff]
        %v840 = vld [vmem:[%s813 + $0xd0] sm:$0xff]
        %v841 = vld [vmem:[%s813 + $0xd8] sm:$0xff]
        %v842 = vld [vmem:[%s813 + $0xe0] sm:$0xff]
        %v843 = vld [vmem:[%s813 + $0xe8] sm:$0xff]
        %v844 = vld [vmem:[%s813 + $0xf0] sm:$0xff]
        %v845 = vld [vmem:[%s813 + $0xf8] sm:$0xff]
        %v846 = vld [vmem:[%s813 + $0x100] sm:$0xff]
        %v847 = vld [vmem:[%s813 + $0x108] sm:$0xff]
        %v848 = vld [vmem:[%s813 + $0x110] sm:$0xff]
        %v849 = vld [vmem:[%s813 + $0x118] sm:$0xff]
        %v850 = vld [vmem:[%s813 + $0x120] sm:$0xff]
        %v851 = vld [vmem:[%s813 + $0x128] sm:$0xff]
        %v852 = vld [vmem:[%s813 + $0x130] sm:$0xff]
        %v853 = vld [vmem:[%s813 + $0x138] sm:$0xff]
        %v855 = vshrl.u32 %v811, 16
        %v857 = vshll.u32 %v811, 16
        %v859 = vrot.slane %v857, 1
        %v860 = vor.u32 %v855, %v859
        %v862 = vshrl.u32 %v812, 16
        %v864 = vshll.u32 %v812, 16
        %v866 = vrot.slane %v864, 1
        %v867 = vor.u32 %v862, %v866
        %v909 = vunpack.c.l.b16 %v814
        %v910 = vunpack.c.h.b16 %v814
        %v911 = vunpack.c.l.b16 %v815
        %v912 = vunpack.c.h.b16 %v815
        %v913 = vunpack.c.l.b16 %v816
        %v914 = vunpack.c.h.b16 %v816
        %v915 = vunpack.c.l.b16 %v817
        %v916 = vunpack.c.h.b16 %v817
        %v917 = vunpack.c.l.b16 %v818
        %v918 = vunpack.c.h.b16 %v818
        %v919 = vunpack.c.l.b16 %v819
        %v920 = vunpack.c.h.b16 %v819
        %v921 = vunpack.c.l.b16 %v820
        %v922 = vunpack.c.h.b16 %v820
        %v923 = vunpack.c.l.b16 %v821
        %v924 = vunpack.c.h.b16 %v821
        %v925 = vunpack.c.l.b16 %v822
        %v926 = vunpack.c.h.b16 %v822
        %v927 = vunpack.c.l.b16 %v823
        %v928 = vunpack.c.h.b16 %v823
        %v929 = vunpack.c.l.b16 %v824
        %v930 = vunpack.c.h.b16 %v824
        %v931 = vunpack.c.l.b16 %v825
        %v932 = vunpack.c.h.b16 %v825
        %v933 = vunpack.c.l.b16 %v826
        %v934 = vunpack.c.h.b16 %v826
        %v935 = vunpack.c.l.b16 %v827
        %v936 = vunpack.c.h.b16 %v827
        %v937 = vunpack.c.l.b16 %v828
        %v938 = vunpack.c.h.b16 %v828
        %v939 = vunpack.c.l.b16 %v829
        %v940 = vunpack.c.h.b16 %v829
        %v941 = vunpack.c.l.b16 %v830
        %v942 = vunpack.c.h.b16 %v830
        %v943 = vunpack.c.l.b16 %v831
        %v944 = vunpack.c.h.b16 %v831
        %v945 = vunpack.c.l.b16 %v832
        %v946 = vunpack.c.h.b16 %v832
        %v947 = vunpack.c.l.b16 %v833
        %v948 = vunpack.c.h.b16 %v833
        %v949 = vunpack.c.l.b16 %v834
        %v950 = vunpack.c.h.b16 %v834
        %v951 = vunpack.c.l.b16 %v835
        %v952 = vunpack.c.h.b16 %v835
        %v953 = vunpack.c.l.b16 %v836
        %v954 = vunpack.c.h.b16 %v836
        %v955 = vunpack.c.l.b16 %v837
        %v956 = vunpack.c.h.b16 %v837
        %v957 = vunpack.c.l.b16 %v838
        %v958 = vunpack.c.h.b16 %v838
        %v959 = vunpack.c.l.b16 %v839
        %v960 = vunpack.c.h.b16 %v839
        %v961 = vunpack.c.l.b16 %v840
        %v962 = vunpack.c.h.b16 %v840
        %v963 = vunpack.c.l.b16 %v841
        %v964 = vunpack.c.h.b16 %v841
        %v965 = vunpack.c.l.b16 %v842
        %v966 = vunpack.c.h.b16 %v842
        %v967 = vunpack.c.l.b16 %v843
        %v968 = vunpack.c.h.b16 %v843
        %v969 = vunpack.c.l.b16 %v844
        %v970 = vunpack.c.h.b16 %v844
        %v971 = vunpack.c.l.b16 %v845
        %v972 = vunpack.c.h.b16 %v845
        %v973 = vunpack.c.l.b16 %v846
        %v974 = vunpack.c.h.b16 %v846
        %v975 = vunpack.c.l.b16 %v847
        %v976 = vunpack.c.h.b16 %v847
        %v977 = vunpack.c.l.b16 %v848
        %v978 = vunpack.c.h.b16 %v848
        %v979 = vunpack.c.l.b16 %v849
        %v980 = vunpack.c.h.b16 %v849
        %v981 = vunpack.c.l.b16 %v850
        %v982 = vunpack.c.h.b16 %v850
        %v983 = vunpack.c.l.b16 %v851
        %v984 = vunpack.c.h.b16 %v851
        %v985 = vunpack.c.l.b16 %v852
        %v986 = vunpack.c.h.b16 %v852
        %v987 = vunpack.c.l.b16 %v853
        %v988 = vunpack.c.h.b16 %v853
        %v989 = vpack.c.b16 %v913, %v909
        %v990 = vpack.c.b16 %v914, %v910
        %v991 = vpack.c.b16 %v915, %v911
        %v992 = vpack.c.b16 %v916, %v912
        %v993 = vpack.c.b16 %v921, %v917
        %v994 = vpack.c.b16 %v922, %v918
        %v995 = vpack.c.b16 %v923, %v919
        %v996 = vpack.c.b16 %v924, %v920
        %v997 = vpack.c.b16 %v929, %v925
        %v998 = vpack.c.b16 %v930, %v926
        %v999 = vpack.c.b16 %v931, %v927
        %v1000 = vpack.c.b16 %v932, %v928
        %v1001 = vpack.c.b16 %v937, %v933
        %v1002 = vpack.c.b16 %v938, %v934
        %v1003 = vpack.c.b16 %v939, %v935
        %v1004 = vpack.c.b16 %v940, %v936
        %v1005 = vpack.c.b16 %v945, %v941
        %v1006 = vpack.c.b16 %v946, %v942
        %v1007 = vpack.c.b16 %v947, %v943
        %v1008 = vpack.c.b16 %v948, %v944
        %v1009 = vpack.c.b16 %v953, %v949
        %v1010 = vpack.c.b16 %v954, %v950
        %v1011 = vpack.c.b16 %v955, %v951
        %v1012 = vpack.c.b16 %v956, %v952
        %v1013 = vpack.c.b16 %v961, %v957
        %v1014 = vpack.c.b16 %v962, %v958
        %v1015 = vpack.c.b16 %v963, %v959
        %v1016 = vpack.c.b16 %v964, %v960
        %v1017 = vpack.c.b16 %v969, %v965
        %v1018 = vpack.c.b16 %v970, %v966
        %v1019 = vpack.c.b16 %v971, %v967
        %v1020 = vpack.c.b16 %v972, %v968
        %v1021 = vpack.c.b16 %v977, %v973
        %v1022 = vpack.c.b16 %v978, %v974
        %v1023 = vpack.c.b16 %v979, %v975
        %v1024 = vpack.c.b16 %v980, %v976
        %v1025 = vpack.c.b16 %v985, %v981
        %v1026 = vpack.c.b16 %v986, %v982
        %v1027 = vpack.c.b16 %v987, %v983
        %v1028 = vpack.c.b16 %v988, %v984
        %vm1069 = vcmask 261120
        %v1071 = vsel %vm1069, %v867, 0
        %1073 = vmatprep.subr.bf16.mxu0 %v990
        %1074 = vmatpush1.bf16.msra.mxu0 %v989
        %1075 = vmatprep.subr.bf16.mxu0 %v994
        %1076 = vmatpush1.bf16.msra.mxu0 %v993
        %1077 = vmatprep.subr.bf16.mxu0 %v998
        %1078 = vmatpush1.bf16.msra.mxu0 %v997
        %1079 = vmatprep.subr.bf16.mxu0 %v1002
        %1080 = vmatpush1.bf16.msra.mxu0 %v1001
        %1081 = vmatprep.subr.bf16.mxu0 %v1006
        %1082 = vmatpush1.bf16.msra.mxu0 %v1005
        %1083 = vmatprep.subr.bf16.mxu0 %v1010
        %1084 = vmatpush1.bf16.msra.mxu0 %v1009
        %1085 = vmatprep.subr.bf16.mxu0 %v1014
        %1086 = vmatpush1.bf16.msra.mxu0 %v1013
        %1087 = vmatprep.subr.bf16.mxu0 %v1018
        %1088 = vmatpush1.bf16.msra.mxu0 %v1017
        %1089 = vmatprep.subr.bf16.mxu0 %v1022
        %1090 = vmatpush1.bf16.msra.mxu0 %v1021
        %1091 = vmatprep.subr.bf16.mxu0 %v1026
        %1092 = vmatpush1.bf16.msra.mxu0 %v1025
        %1093 = vmatprep.subr.bf16.mxu0 0
        %1094 = vmatpush1.bf16.msra.mxu0 0
        %1095 = vmatprep.subr.bf16.mxu0 0
        %1096 = vmatpush1.bf16.msra.mxu0 0
        %1097 = vmatprep.subr.bf16.mxu0 0
        %1098 = vmatpush1.bf16.msra.mxu0 0
        %1099 = vmatprep.subr.bf16.mxu0 0
        %1100 = vmatpush1.bf16.msra.mxu0 0
        %1101 = vmatprep.subr.bf16.mxu0 0
        %1102 = vmatpush1.bf16.msra.mxu0 0
        %1103 = vmatprep.subr.bf16.mxu0 0
        %1104 = vmatpush1.bf16.msra.mxu0 0
        %1105 = vmatprep.mubr.bf16.mxu0 %v1071
        %1106 = vmatmul.mubr.bf16.gmra.mrb[0].mxu0 %v860
        %v1107 = vpop.f32.mrb[0].mxu0
        %v1108 = vadd.f32 0.0, %v1107
        %v1109 = vpop.f32.mrb[0].mxu0
        %v1110 = vadd.f32 0.0, %v1109
        %v1111 = vpop.f32.mrb[0].mxu0
        %v1112 = vpop.f32.mrb[0].mxu0
        %1113 = vdwg.mxu0
        %1114 = vmatprep.subr.bf16.mxu0 %v992
        %1115 = vmatpush1.bf16.msra.mxu0 %v991
        %1116 = vmatprep.subr.bf16.mxu0 %v996
        %1117 = vmatpush1.bf16.msra.mxu0 %v995
        %1118 = vmatprep.subr.bf16.mxu0 %v1000
        %1119 = vmatpush1.bf16.msra.mxu0 %v999
        %1120 = vmatprep.subr.bf16.mxu0 %v1004
        %1121 = vmatpush1.bf16.msra.mxu0 %v1003
        %1122 = vmatprep.subr.bf16.mxu0 %v1008
        %1123 = vmatpush1.bf16.msra.mxu0 %v1007
        %1124 = vmatprep.subr.bf16.mxu0 %v1012
        %1125 = vmatpush1.bf16.msra.mxu0 %v1011
        %1126 = vmatprep.subr.bf16.mxu0 %v1016
        %1127 = vmatpush1.bf16.msra.mxu0 %v1015
        %1128 = vmatprep.subr.bf16.mxu0 %v1020
        %1129 = vmatpush1.bf16.msra.mxu0 %v1019
        %1130 = vmatprep.subr.bf16.mxu0 %v1024
        %1131 = vmatpush1.bf16.msra.mxu0 %v1023
        %1132 = vmatprep.subr.bf16.mxu0 %v1028
        %1133 = vmatpush1.bf16.msra.mxu0 %v1027
        %1134 = vmatprep.subr.bf16.mxu0 0
        %1135 = vmatpush1.bf16.msra.mxu0 0
        %1136 = vmatprep.subr.bf16.mxu0 0
        %1137 = vmatpush1.bf16.msra.mxu0 0
        %1138 = vmatprep.subr.bf16.mxu0 0
        %1139 = vmatpush1.bf16.msra.mxu0 0
        %1140 = vmatprep.subr.bf16.mxu0 0
        %1141 = vmatpush1.bf16.msra.mxu0 0
        %1142 = vmatprep.subr.bf16.mxu0 0
        %1143 = vmatpush1.bf16.msra.mxu0 0
        %1144 = vmatprep.subr.bf16.mxu0 0
        %1145 = vmatpush1.bf16.msra.mxu0 0
        %1146 = vmatprep.mubr.bf16.mxu0 %v1071
        %1147 = vmatmul.mubr.bf16.gmra.mrb[0].mxu0 %v860
        %v1148 = vpop.f32.mrb[0].mxu0
        %v1149 = vadd.f32 0.0, %v1148
        %v1150 = vpop.f32.mrb[0].mxu0
        %v1151 = vadd.f32 0.0, %v1150
        %v1152 = vpop.f32.mrb[0].mxu0
        %v1153 = vpop.f32.mrb[0].mxu0
        %1154 = vdwg.mxu0
        %v1195 = vunpack.c.l.b16 %v767
        %v1196 = vunpack.c.h.b16 %v767
        %v1197 = vunpack.c.l.b16 %v768
        %v1198 = vunpack.c.h.b16 %v768
        %v1199 = vunpack.c.l.b16 %v769
        %v1200 = vunpack.c.h.b16 %v769
        %v1201 = vunpack.c.l.b16 %v770
        %v1202 = vunpack.c.h.b16 %v770
        %v1203 = vunpack.c.l.b16 %v771
        %v1204 = vunpack.c.h.b16 %v771
        %v1205 = vunpack.c.l.b16 %v772
        %v1206 = vunpack.c.h.b16 %v772
        %v1207 = vunpack.c.l.b16 %v773
        %v1208 = vunpack.c.h.b16 %v773
        %v1209 = vunpack.c.l.b16 %v774
        %v1210 = vunpack.c.h.b16 %v774
        %v1211 = vunpack.c.l.b16 %v775
        %v1212 = vunpack.c.h.b16 %v775
        %v1213 = vunpack.c.l.b16 %v776
        %v1214 = vunpack.c.h.b16 %v776
        %v1215 = vunpack.c.l.b16 %v777
        %v1216 = vunpack.c.h.b16 %v777
        %v1217 = vunpack.c.l.b16 %v778
        %v1218 = vunpack.c.h.b16 %v778
        %v1219 = vunpack.c.l.b16 %v779
        %v1220 = vunpack.c.h.b16 %v779
        %v1221 = vunpack.c.l.b16 %v780
        %v1222 = vunpack.c.h.b16 %v780
        %v1223 = vunpack.c.l.b16 %v781
        %v1224 = vunpack.c.h.b16 %v781
        %v1225 = vunpack.c.l.b16 %v782
        %v1226 = vunpack.c.h.b16 %v782
        %v1227 = vunpack.c.l.b16 %v783
        %v1228 = vunpack.c.h.b16 %v783
        %v1229 = vunpack.c.l.b16 %v784
        %v1230 = vunpack.c.h.b16 %v784
        %v1231 = vunpack.c.l.b16 %v785
        %v1232 = vunpack.c.h.b16 %v785
        %v1233 = vunpack.c.l.b16 %v786
        %v1234 = vunpack.c.h.b16 %v786
        %v1235 = vunpack.c.l.b16 %v787
        %v1236 = vunpack.c.h.b16 %v787
        %v1237 = vunpack.c.l.b16 %v788
        %v1238 = vunpack.c.h.b16 %v788
        %v1239 = vunpack.c.l.b16 %v789
        %v1240 = vunpack.c.h.b16 %v789
        %v1241 = vunpack.c.l.b16 %v790
        %v1242 = vunpack.c.h.b16 %v790
        %v1243 = vunpack.c.l.b16 %v791
        %v1244 = vunpack.c.h.b16 %v791
        %v1245 = vunpack.c.l.b16 %v792
        %v1246 = vunpack.c.h.b16 %v792
        %v1247 = vunpack.c.l.b16 %v793
        %v1248 = vunpack.c.h.b16 %v793
        %v1249 = vunpack.c.l.b16 %v794
        %v1250 = vunpack.c.h.b16 %v794
        %v1251 = vunpack.c.l.b16 %v795
        %v1252 = vunpack.c.h.b16 %v795
        %v1253 = vunpack.c.l.b16 %v796
        %v1254 = vunpack.c.h.b16 %v796
        %v1255 = vunpack.c.l.b16 %v797
        %v1256 = vunpack.c.h.b16 %v797
        %v1257 = vunpack.c.l.b16 %v798
        %v1258 = vunpack.c.h.b16 %v798
        %v1259 = vunpack.c.l.b16 %v799
        %v1260 = vunpack.c.h.b16 %v799
        %v1261 = vunpack.c.l.b16 %v800
        %v1262 = vunpack.c.h.b16 %v800
        %v1263 = vunpack.c.l.b16 %v801
        %v1264 = vunpack.c.h.b16 %v801
        %v1265 = vunpack.c.l.b16 %v802
        %v1266 = vunpack.c.h.b16 %v802
        %v1267 = vunpack.c.l.b16 %v803
        %v1268 = vunpack.c.h.b16 %v803
        %v1269 = vunpack.c.l.b16 %v804
        %v1270 = vunpack.c.h.b16 %v804
        %v1271 = vunpack.c.l.b16 %v805
        %v1272 = vunpack.c.h.b16 %v805
        %v1273 = vunpack.c.l.b16 %v806
        %v1274 = vunpack.c.h.b16 %v806
        %v1275 = vpack.c.b16 %v1199, %v1195
        %v1276 = vpack.c.b16 %v1200, %v1196
        %v1277 = vpack.c.b16 %v1201, %v1197
        %v1278 = vpack.c.b16 %v1202, %v1198
        %v1279 = vpack.c.b16 %v1207, %v1203
        %v1280 = vpack.c.b16 %v1208, %v1204
        %v1281 = vpack.c.b16 %v1209, %v1205
        %v1282 = vpack.c.b16 %v1210, %v1206
        %v1283 = vpack.c.b16 %v1215, %v1211
        %v1284 = vpack.c.b16 %v1216, %v1212
        %v1285 = vpack.c.b16 %v1217, %v1213
        %v1286 = vpack.c.b16 %v1218, %v1214
        %v1287 = vpack.c.b16 %v1223, %v1219
        %v1288 = vpack.c.b16 %v1224, %v1220
        %v1289 = vpack.c.b16 %v1225, %v1221
        %v1290 = vpack.c.b16 %v1226, %v1222
        %v1291 = vpack.c.b16 %v1231, %v1227
        %v1292 = vpack.c.b16 %v1232, %v1228
        %v1293 = vpack.c.b16 %v1233, %v1229
        %v1294 = vpack.c.b16 %v1234, %v1230
        %v1295 = vpack.c.b16 %v1239, %v1235
        %v1296 = vpack.c.b16 %v1240, %v1236
        %v1297 = vpack.c.b16 %v1241, %v1237
        %v1298 = vpack.c.b16 %v1242, %v1238
        %v1299 = vpack.c.b16 %v1247, %v1243
        %v1300 = vpack.c.b16 %v1248, %v1244
        %v1301 = vpack.c.b16 %v1249, %v1245
        %v1302 = vpack.c.b16 %v1250, %v1246
        %v1303 = vpack.c.b16 %v1255, %v1251
        %v1304 = vpack.c.b16 %v1256, %v1252
        %v1305 = vpack.c.b16 %v1257, %v1253
        %v1306 = vpack.c.b16 %v1258, %v1254
        %v1307 = vpack.c.b16 %v1263, %v1259
        %v1308 = vpack.c.b16 %v1264, %v1260
        %v1309 = vpack.c.b16 %v1265, %v1261
        %v1310 = vpack.c.b16 %v1266, %v1262
        %v1311 = vpack.c.b16 %v1271, %v1267
        %v1312 = vpack.c.b16 %v1272, %v1268
        %v1313 = vpack.c.b16 %v1273, %v1269
        %v1314 = vpack.c.b16 %v1274, %v1270
        %v1356 = vsel %vm1069, %v766, 0
        %1358 = vmatprep.subr.bf16.mxu0 %v1276
        %1359 = vmatpush1.bf16.msra.mxu0 %v1275
        %1360 = vmatprep.subr.bf16.mxu0 %v1280
        %1361 = vmatpush1.bf16.msra.mxu0 %v1279
        %1362 = vmatprep.subr.bf16.mxu0 %v1284
        %1363 = vmatpush1.bf16.msra.mxu0 %v1283
        %1364 = vmatprep.subr.bf16.mxu0 %v1288
        %1365 = vmatpush1.bf16.msra.mxu0 %v1287
        %1366 = vmatprep.subr.bf16.mxu0 %v1292
        %1367 = vmatpush1.bf16.msra.mxu0 %v1291
        %1368 = vmatprep.subr.bf16.mxu0 %v1296
        %1369 = vmatpush1.bf16.msra.mxu0 %v1295
        %1370 = vmatprep.subr.bf16.mxu0 %v1300
        %1371 = vmatpush1.bf16.msra.mxu0 %v1299
        %1372 = vmatprep.subr.bf16.mxu0 %v1304
        %1373 = vmatpush1.bf16.msra.mxu0 %v1303
        %1374 = vmatprep.subr.bf16.mxu0 %v1308
        %1375 = vmatpush1.bf16.msra.mxu0 %v1307
        %1376 = vmatprep.subr.bf16.mxu0 %v1312
        %1377 = vmatpush1.bf16.msra.mxu0 %v1311
        %1378 = vmatprep.subr.bf16.mxu0 0
        %1379 = vmatpush1.bf16.msra.mxu0 0
        %1380 = vmatprep.subr.bf16.mxu0 0
        %1381 = vmatpush1.bf16.msra.mxu0 0
        %1382 = vmatprep.subr.bf16.mxu0 0
        %1383 = vmatpush1.bf16.msra.mxu0 0
        %1384 = vmatprep.subr.bf16.mxu0 0
        %1385 = vmatpush1.bf16.msra.mxu0 0
        %1386 = vmatprep.subr.bf16.mxu0 0
        %1387 = vmatpush1.bf16.msra.mxu0 0
        %1388 = vmatprep.subr.bf16.mxu0 0
        %1389 = vmatpush1.bf16.msra.mxu0 0
        %1390 = vmatprep.mubr.bf16.mxu0 %v1356
        %1391 = vmatmul.mubr.bf16.gmra.mrb[0].mxu0 %v765
        %v1392 = vpop.f32.mrb[0].mxu0
        %v1393 = vadd.f32 %v1108, %v1392
        %v1394 = vpop.f32.mrb[0].mxu0
        %v1395 = vadd.f32 %v1110, %v1394
        %v1396 = vpop.f32.mrb[0].mxu0
        %v1397 = vpop.f32.mrb[0].mxu0
        %1398 = vdwg.mxu0
        %1399 = vmatprep.subr.bf16.mxu0 %v1278
        %1400 = vmatpush1.bf16.msra.mxu0 %v1277
        %1401 = vmatprep.subr.bf16.mxu0 %v1282
        %1402 = vmatpush1.bf16.msra.mxu0 %v1281
        %1403 = vmatprep.subr.bf16.mxu0 %v1286
        %1404 = vmatpush1.bf16.msra.mxu0 %v1285
        %1405 = vmatprep.subr.bf16.mxu0 %v1290
        %1406 = vmatpush1.bf16.msra.mxu0 %v1289
        %1407 = vmatprep.subr.bf16.mxu0 %v1294
        %1408 = vmatpush1.bf16.msra.mxu0 %v1293
        %1409 = vmatprep.subr.bf16.mxu0 %v1298
        %1410 = vmatpush1.bf16.msra.mxu0 %v1297
        %1411 = vmatprep.subr.bf16.mxu0 %v1302
        %1412 = vmatpush1.bf16.msra.mxu0 %v1301
        %1413 = vmatprep.subr.bf16.mxu0 %v1306
        %1414 = vmatpush1.bf16.msra.mxu0 %v1305
        %1415 = vmatprep.subr.bf16.mxu0 %v1310
        %1416 = vmatpush1.bf16.msra.mxu0 %v1309
        %1417 = vmatprep.subr.bf16.mxu0 %v1314
        %1418 = vmatpush1.bf16.msra.mxu0 %v1313
        %1419 = vmatprep.subr.bf16.mxu0 0
        %1420 = vmatpush1.bf16.msra.mxu0 0
        %1421 = vmatprep.subr.bf16.mxu0 0
        %1422 = vmatpush1.bf16.msra.mxu0 0
        %1423 = vmatprep.subr.bf16.mxu0 0
        %1424 = vmatpush1.bf16.msra.mxu0 0
        %1425 = vmatprep.subr.bf16.mxu0 0
        %1426 = vmatpush1.bf16.msra.mxu0 0
        %1427 = vmatprep.subr.bf16.mxu0 0
        %1428 = vmatpush1.bf16.msra.mxu0 0
        %1429 = vmatprep.subr.bf16.mxu0 0
        %1430 = vmatpush1.bf16.msra.mxu0 0
        %1431 = vmatprep.mubr.bf16.mxu0 %v1356
        %1432 = vmatmul.mubr.bf16.gmra.mrb[0].mxu0 %v765
        %v1433 = vpop.f32.mrb[0].mxu0
        %v1434 = vadd.f32 %v1149, %v1433
        %v1435 = vpop.f32.mrb[0].mxu0
        %v1436 = vadd.f32 %v1151, %v1435
        %v1437 = vpop.f32.mrb[0].mxu0
        %v1438 = vpop.f32.mrb[0].mxu0
        %1439 = vdwg.mxu0
        %v1440 = vld [vmem:[%s761] sm:$0xfc]
        %v1441 = vld [vmem:[%s761 + $0x8] sm:$0xfc]
        %v1442 = vld [vmem:[%s761 + $0x10] sm:$0x3]
        %v1443 = vld [vmem:[%s761 + $0x18] sm:$0x3]
        %v1444 = vpack.c.bf16 %v1442, %v1440
        %v1445 = vpack.c.bf16 %v1443, %v1441
        %s1446 = scalar_lea.vmem %s1, 640
        %v1447 = vld [vmem:[%s1446] sm:$0xff]
        %v1448 = vld [vmem:[%s1446 + $0x8] sm:$0xff]
        %v1449 = vld [vmem:[%s1446 + $0x10] sm:$0xff]
        %v1450 = vld [vmem:[%s1446 + $0x18] sm:$0xff]
        %v1451 = vld [vmem:[%s1446 + $0x20] sm:$0xff]
        %v1452 = vld [vmem:[%s1446 + $0x28] sm:$0xff]
        %v1453 = vld [vmem:[%s1446 + $0x30] sm:$0xff]
        %v1454 = vld [vmem:[%s1446 + $0x38] sm:$0xff]
        %v1455 = vld [vmem:[%s1446 + $0x40] sm:$0xff]
        %v1456 = vld [vmem:[%s1446 + $0x48] sm:$0xff]
        %v1457 = vld [vmem:[%s1446 + $0x50] sm:$0xff]
        %v1458 = vld [vmem:[%s1446 + $0x58] sm:$0xff]
        %v1459 = vld [vmem:[%s1446 + $0x60] sm:$0xff]
        %v1460 = vld [vmem:[%s1446 + $0x68] sm:$0xff]
        %v1461 = vld [vmem:[%s1446 + $0x70] sm:$0xff]
        %v1462 = vld [vmem:[%s1446 + $0x78] sm:$0xff]
        %v1463 = vld [vmem:[%s1446 + $0x80] sm:$0xff]
        %v1464 = vld [vmem:[%s1446 + $0x88] sm:$0xff]
        %v1465 = vld [vmem:[%s1446 + $0x90] sm:$0xff]
        %v1466 = vld [vmem:[%s1446 + $0x98] sm:$0xff]
        %v1467 = vld [vmem:[%s1446 + $0xa0] sm:$0xff]
        %v1468 = vld [vmem:[%s1446 + $0xa8] sm:$0xff]
        %v1469 = vld [vmem:[%s1446 + $0xb0] sm:$0xff]
        %v1470 = vld [vmem:[%s1446 + $0xb8] sm:$0xff]
        %v1471 = vld [vmem:[%s1446 + $0xc0] sm:$0xff]
        %v1472 = vld [vmem:[%s1446 + $0xc8] sm:$0xff]
        %v1473 = vld [vmem:[%s1446 + $0xd0] sm:$0xff]
        %v1474 = vld [vmem:[%s1446 + $0xd8] sm:$0xff]
        %v1475 = vld [vmem:[%s1446 + $0xe0] sm:$0xff]
        %v1476 = vld [vmem:[%s1446 + $0xe8] sm:$0xff]
        %v1477 = vld [vmem:[%s1446 + $0xf0] sm:$0xff]
        %v1478 = vld [vmem:[%s1446 + $0xf8] sm:$0xff]
        %v1479 = vld [vmem:[%s1446 + $0x100] sm:$0xff]
        %v1480 = vld [vmem:[%s1446 + $0x108] sm:$0xff]
        %v1481 = vld [vmem:[%s1446 + $0x110] sm:$0xff]
        %v1482 = vld [vmem:[%s1446 + $0x118] sm:$0xff]
        %v1483 = vld [vmem:[%s1446 + $0x120] sm:$0xff]
        %v1484 = vld [vmem:[%s1446 + $0x128] sm:$0xff]
        %v1485 = vld [vmem:[%s1446 + $0x130] sm:$0xff]
        %v1486 = vld [vmem:[%s1446 + $0x138] sm:$0xff]
        %v1489 = vrot.slane %v1444, 1
        %v1490 = vrot.slane %v1445, 1
        %v1532 = vunpack.c.l.b16 %v1447
        %v1533 = vunpack.c.h.b16 %v1447
        %v1534 = vunpack.c.l.b16 %v1448
        %v1535 = vunpack.c.h.b16 %v1448
        %v1536 = vunpack.c.l.b16 %v1449
        %v1537 = vunpack.c.h.b16 %v1449
        %v1538 = vunpack.c.l.b16 %v1450
        %v1539 = vunpack.c.h.b16 %v1450
        %v1540 = vunpack.c.l.b16 %v1451
        %v1541 = vunpack.c.h.b16 %v1451
        %v1542 = vunpack.c.l.b16 %v1452
        %v1543 = vunpack.c.h.b16 %v1452
        %v1544 = vunpack.c.l.b16 %v1453
        %v1545 = vunpack.c.h.b16 %v1453
        %v1546 = vunpack.c.l.b16 %v1454
        %v1547 = vunpack.c.h.b16 %v1454
        %v1548 = vunpack.c.l.b16 %v1455
        %v1549 = vunpack.c.h.b16 %v1455
        %v1550 = vunpack.c.l.b16 %v1456
        %v1551 = vunpack.c.h.b16 %v1456
        %v1552 = vunpack.c.l.b16 %v1457
        %v1553 = vunpack.c.h.b16 %v1457
        %v1554 = vunpack.c.l.b16 %v1458
        %v1555 = vunpack.c.h.b16 %v1458
        %v1556 = vunpack.c.l.b16 %v1459
        %v1557 = vunpack.c.h.b16 %v1459
        %v1558 = vunpack.c.l.b16 %v1460
        %v1559 = vunpack.c.h.b16 %v1460
        %v1560 = vunpack.c.l.b16 %v1461
        %v1561 = vunpack.c.h.b16 %v1461
        %v1562 = vunpack.c.l.b16 %v1462
        %v1563 = vunpack.c.h.b16 %v1462
        %v1564 = vunpack.c.l.b16 %v1463
        %v1565 = vunpack.c.h.b16 %v1463
        %v1566 = vunpack.c.l.b16 %v1464
        %v1567 = vunpack.c.h.b16 %v1464
        %v1568 = vunpack.c.l.b16 %v1465
        %v1569 = vunpack.c.h.b16 %v1465
        %v1570 = vunpack.c.l.b16 %v1466
        %v1571 = vunpack.c.h.b16 %v1466
        %v1572 = vunpack.c.l.b16 %v1467
        %v1573 = vunpack.c.h.b16 %v1467
        %v1574 = vunpack.c.l.b16 %v1468
        %v1575 = vunpack.c.h.b16 %v1468
        %v1576 = vunpack.c.l.b16 %v1469
        %v1577 = vunpack.c.h.b16 %v1469
        %v1578 = vunpack.c.l.b16 %v1470
        %v1579 = vunpack.c.h.b16 %v1470
        %v1580 = vunpack.c.l.b16 %v1471
        %v1581 = vunpack.c.h.b16 %v1471
        %v1582 = vunpack.c.l.b16 %v1472
        %v1583 = vunpack.c.h.b16 %v1472
        %v1584 = vunpack.c.l.b16 %v1473
        %v1585 = vunpack.c.h.b16 %v1473
        %v1586 = vunpack.c.l.b16 %v1474
        %v1587 = vunpack.c.h.b16 %v1474
        %v1588 = vunpack.c.l.b16 %v1475
        %v1589 = vunpack.c.h.b16 %v1475
        %v1590 = vunpack.c.l.b16 %v1476
        %v1591 = vunpack.c.h.b16 %v1476
        %v1592 = vunpack.c.l.b16 %v1477
        %v1593 = vunpack.c.h.b16 %v1477
        %v1594 = vunpack.c.l.b16 %v1478
        %v1595 = vunpack.c.h.b16 %v1478
        %v1596 = vunpack.c.l.b16 %v1479
        %v1597 = vunpack.c.h.b16 %v1479
        %v1598 = vunpack.c.l.b16 %v1480
        %v1599 = vunpack.c.h.b16 %v1480
        %v1600 = vunpack.c.l.b16 %v1481
        %v1601 = vunpack.c.h.b16 %v1481
        %v1602 = vunpack.c.l.b16 %v1482
        %v1603 = vunpack.c.h.b16 %v1482
        %v1604 = vunpack.c.l.b16 %v1483
        %v1605 = vunpack.c.h.b16 %v1483
        %v1606 = vunpack.c.l.b16 %v1484
        %v1607 = vunpack.c.h.b16 %v1484
        %v1608 = vunpack.c.l.b16 %v1485
        %v1609 = vunpack.c.h.b16 %v1485
        %v1610 = vunpack.c.l.b16 %v1486
        %v1611 = vunpack.c.h.b16 %v1486
        %v1612 = vpack.c.b16 %v1536, %v1532
        %v1613 = vpack.c.b16 %v1537, %v1533
        %v1614 = vpack.c.b16 %v1538, %v1534
        %v1615 = vpack.c.b16 %v1539, %v1535
        %v1616 = vpack.c.b16 %v1544, %v1540
        %v1617 = vpack.c.b16 %v1545, %v1541
        %v1618 = vpack.c.b16 %v1546, %v1542
        %v1619 = vpack.c.b16 %v1547, %v1543
        %v1620 = vpack.c.b16 %v1552, %v1548
        %v1621 = vpack.c.b16 %v1553, %v1549
        %v1622 = vpack.c.b16 %v1554, %v1550
        %v1623 = vpack.c.b16 %v1555, %v1551
        %v1624 = vpack.c.b16 %v1560, %v1556
        %v1625 = vpack.c.b16 %v1561, %v1557
        %v1626 = vpack.c.b16 %v1562, %v1558
        %v1627 = vpack.c.b16 %v1563, %v1559
        %v1628 = vpack.c.b16 %v1568, %v1564
        %v1629 = vpack.c.b16 %v1569, %v1565
        %v1630 = vpack.c.b16 %v1570, %v1566
        %v1631 = vpack.c.b16 %v1571, %v1567
        %v1632 = vpack.c.b16 %v1576, %v1572
        %v1633 = vpack.c.b16 %v1577, %v1573
        %v1634 = vpack.c.b16 %v1578, %v1574
        %v1635 = vpack.c.b16 %v1579, %v1575
        %v1636 = vpack.c.b16 %v1584, %v1580
        %v1637 = vpack.c.b16 %v1585, %v1581
        %v1638 = vpack.c.b16 %v1586, %v1582
        %v1639 = vpack.c.b16 %v1587, %v1583
        %v1640 = vpack.c.b16 %v1592, %v1588
        %v1641 = vpack.c.b16 %v1593, %v1589
        %v1642 = vpack.c.b16 %v1594, %v1590
        %v1643 = vpack.c.b16 %v1595, %v1591
        %v1644 = vpack.c.b16 %v1600, %v1596
        %v1645 = vpack.c.b16 %v1601, %v1597
        %v1646 = vpack.c.b16 %v1602, %v1598
        %v1647 = vpack.c.b16 %v1603, %v1599
        %v1648 = vpack.c.b16 %v1608, %v1604
        %v1649 = vpack.c.b16 %v1609, %v1605
        %v1650 = vpack.c.b16 %v1610, %v1606
        %v1651 = vpack.c.b16 %v1611, %v1607
        %v1693 = vsel %vm1069, %v1490, 0
        %1695 = vmatprep.subr.bf16.mxu0 %v1613
        %1696 = vmatpush1.bf16.msra.mxu0 %v1612
        %1697 = vmatprep.subr.bf16.mxu0 %v1617
        %1698 = vmatpush1.bf16.msra.mxu0 %v1616
        %1699 = vmatprep.subr.bf16.mxu0 %v1621
        %1700 = vmatpush1.bf16.msra.mxu0 %v1620
        %1701 = vmatprep.subr.bf16.mxu0 %v1625
        %1702 = vmatpush1.bf16.msra.mxu0 %v1624
        %1703 = vmatprep.subr.bf16.mxu0 %v1629
        %1704 = vmatpush1.bf16.msra.mxu0 %v1628
        %1705 = vmatprep.subr.bf16.mxu0 %v1633
        %1706 = vmatpush1.bf16.msra.mxu0 %v1632
        %1707 = vmatprep.subr.bf16.mxu0 %v1637
        %1708 = vmatpush1.bf16.msra.mxu0 %v1636
        %1709 = vmatprep.subr.bf16.mxu0 %v1641
        %1710 = vmatpush1.bf16.msra.mxu0 %v1640
        %1711 = vmatprep.subr.bf16.mxu0 %v1645
        %1712 = vmatpush1.bf16.msra.mxu0 %v1644
        %1713 = vmatprep.subr.bf16.mxu0 %v1649
        %1714 = vmatpush1.bf16.msra.mxu0 %v1648
        %1715 = vmatprep.subr.bf16.mxu0 0
        %1716 = vmatpush1.bf16.msra.mxu0 0
        %1717 = vmatprep.subr.bf16.mxu0 0
        %1718 = vmatpush1.bf16.msra.mxu0 0
        %1719 = vmatprep.subr.bf16.mxu0 0
        %1720 = vmatpush1.bf16.msra.mxu0 0
        %1721 = vmatprep.subr.bf16.mxu0 0
        %1722 = vmatpush1.bf16.msra.mxu0 0
        %1723 = vmatprep.subr.bf16.mxu0 0
        %1724 = vmatpush1.bf16.msra.mxu0 0
        %1725 = vmatprep.subr.bf16.mxu0 0
        %1726 = vmatpush1.bf16.msra.mxu0 0
        %1727 = vmatprep.mubr.bf16.mxu0 %v1693
        %1728 = vmatmul.mubr.bf16.gmra.mrb[0].mxu0 %v1489
        %v1729 = vpop.f32.mrb[0].mxu0
        %v1730 = vadd.f32 0.0, %v1729
        %v1731 = vpop.f32.mrb[0].mxu0
        %v1732 = vadd.f32 0.0, %v1731
        %v1733 = vpop.f32.mrb[0].mxu0
        %v1734 = vpop.f32.mrb[0].mxu0
        %1735 = vdwg.mxu0
        %1736 = vmatprep.subr.bf16.mxu0 %v1615
        %1737 = vmatpush1.bf16.msra.mxu0 %v1614
        %1738 = vmatprep.subr.bf16.mxu0 %v1619
        %1739 = vmatpush1.bf16.msra.mxu0 %v1618
        %1740 = vmatprep.subr.bf16.mxu0 %v1623
        %1741 = vmatpush1.bf16.msra.mxu0 %v1622
        %1742 = vmatprep.subr.bf16.mxu0 %v1627
        %1743 = vmatpush1.bf16.msra.mxu0 %v1626
        %1744 = vmatprep.subr.bf16.mxu0 %v1631
        %1745 = vmatpush1.bf16.msra.mxu0 %v1630
        %1746 = vmatprep.subr.bf16.mxu0 %v1635
        %1747 = vmatpush1.bf16.msra.mxu0 %v1634
        %1748 = vmatprep.subr.bf16.mxu0 %v1639
        %1749 = vmatpush1.bf16.msra.mxu0 %v1638
        %1750 = vmatprep.subr.bf16.mxu0 %v1643
        %1751 = vmatpush1.bf16.msra.mxu0 %v1642
        %1752 = vmatprep.subr.bf16.mxu0 %v1647
        %1753 = vmatpush1.bf16.msra.mxu0 %v1646
        %1754 = vmatprep.subr.bf16.mxu0 %v1651
        %1755 = vmatpush1.bf16.msra.mxu0 %v1650
        %1756 = vmatprep.subr.bf16.mxu0 0
        %1757 = vmatpush1.bf16.msra.mxu0 0
        %1758 = vmatprep.subr.bf16.mxu0 0
        %1759 = vmatpush1.bf16.msra.mxu0 0
        %1760 = vmatprep.subr.bf16.mxu0 0
        %1761 = vmatpush1.bf16.msra.mxu0 0
        %1762 = vmatprep.subr.bf16.mxu0 0
        %1763 = vmatpush1.bf16.msra.mxu0 0
        %1764 = vmatprep.subr.bf16.mxu0 0
        %1765 = vmatpush1.bf16.msra.mxu0 0
        %1766 = vmatprep.subr.bf16.mxu0 0
        %1767 = vmatpush1.bf16.msra.mxu0 0
        %1768 = vmatprep.mubr.bf16.mxu0 %v1693
        %1769 = vmatmul.mubr.bf16.gmra.mrb[0].mxu0 %v1489
        %v1770 = vpop.f32.mrb[0].mxu0
        %v1771 = vadd.f32 0.0, %v1770
        %v1772 = vpop.f32.mrb[0].mxu0
        %v1773 = vadd.f32 0.0, %v1772
        %v1774 = vpop.f32.mrb[0].mxu0
        %v1775 = vpop.f32.mrb[0].mxu0
        %1776 = vdwg.mxu0
        %v1777 = vadd.f32 %v1393, %v1730
        %v1778 = vadd.f32 %v1395, %v1732
        %v1779 = vadd.f32 %v1434, %v1771
        %v1780 = vadd.f32 %v1436, %v1773
        %v1781 = vmul.f32 %v1777, %v1777
        %v1782 = vmul.f32 %v1778, %v1778
        %v1783 = vmul.f32 %v1779, %v1779
        %v1784 = vmul.f32 %v1780, %v1780
        %v1785 = vadd.f32 %v1781, %v1783
        %v1786 = vadd.f32 %v1782, %v1784
        %v1787 = vpack.c.bf16 %v1785, %v1785
        %v1788 = vpack.c.bf16 %v1786, %v1786
        %v1789 = vld [vmem:[%s2] sm:$0xf]
        %v1790 = vld [vmem:[%s2 + $0x4] sm:$0xf]
        %v1791 = vld [vmem:[%s2 + $0x8] sm:$0xf]
        %v1792 = vld [vmem:[%s2 + $0xc] sm:$0xf]
        %v1793 = vld [vmem:[%s2 + $0x10] sm:$0xf]
        %v1794 = vld [vmem:[%s2 + $0x14] sm:$0xf]
        %v1795 = vld [vmem:[%s2 + $0x18] sm:$0xf]
        %v1796 = vld [vmem:[%s2 + $0x1c] sm:$0xf]
        %v1797 = vld [vmem:[%s2 + $0x20] sm:$0xf]
        %v1798 = vld [vmem:[%s2 + $0x24] sm:$0xf]
        %v1799 = vld [vmem:[%s2 + $0x28] sm:$0xf]
        %v1800 = vld [vmem:[%s2 + $0x2c] sm:$0xf]
        %v1801 = vld [vmem:[%s2 + $0x30] sm:$0xf]
        %v1802 = vld [vmem:[%s2 + $0x34] sm:$0xf]
        %v1803 = vld [vmem:[%s2 + $0x38] sm:$0xf]
        %v1804 = vld [vmem:[%s2 + $0x3c] sm:$0xf]
        %v1805 = vld [vmem:[%s2 + $0x40] sm:$0xf]
        %v1806 = vld [vmem:[%s2 + $0x44] sm:$0xf]
        %v1807 = vld [vmem:[%s2 + $0x48] sm:$0xf]
        %v1808 = vld [vmem:[%s2 + $0x4c] sm:$0xf]
        %v1809 = vld [vmem:[%s2 + $0x50] sm:$0xf]
        %v1810 = vld [vmem:[%s2 + $0x54] sm:$0xf]
        %v1811 = vld [vmem:[%s2 + $0x58] sm:$0xf]
        %v1812 = vld [vmem:[%s2 + $0x5c] sm:$0xf]
        %v1813 = vld [vmem:[%s2 + $0x60] sm:$0xf]
        %v1814 = vld [vmem:[%s2 + $0x64] sm:$0xf]
        %v1815 = vld [vmem:[%s2 + $0x68] sm:$0xf]
        %v1816 = vld [vmem:[%s2 + $0x6c] sm:$0xf]
        %v1817 = vld [vmem:[%s2 + $0x70] sm:$0xf]
        %v1818 = vld [vmem:[%s2 + $0x74] sm:$0xf]
        %v1819 = vld [vmem:[%s2 + $0x78] sm:$0xf]
        %v1820 = vld [vmem:[%s2 + $0x7c] sm:$0xf]
        %v1853 = vunpack.c.l.b16 %v1789
        %v1854 = vunpack.c.l.b16 %v1790
        %v1855 = vunpack.c.l.b16 %v1791
        %v1856 = vunpack.c.l.b16 %v1792
        %v1857 = vunpack.c.l.b16 %v1793
        %v1858 = vunpack.c.l.b16 %v1794
        %v1859 = vunpack.c.l.b16 %v1795
        %v1860 = vunpack.c.l.b16 %v1796
        %v1861 = vunpack.c.l.b16 %v1797
        %v1862 = vunpack.c.l.b16 %v1798
        %v1863 = vunpack.c.l.b16 %v1799
        %v1864 = vunpack.c.l.b16 %v1800
        %v1865 = vunpack.c.l.b16 %v1801
        %v1866 = vunpack.c.l.b16 %v1802
        %v1867 = vunpack.c.l.b16 %v1803
        %v1868 = vunpack.c.l.b16 %v1804
        %v1869 = vunpack.c.l.b16 %v1805
        %v1870 = vunpack.c.l.b16 %v1806
        %v1871 = vunpack.c.l.b16 %v1807
        %v1872 = vunpack.c.l.b16 %v1808
        %v1873 = vunpack.c.l.b16 %v1809
        %v1874 = vunpack.c.l.b16 %v1810
        %v1875 = vunpack.c.l.b16 %v1811
        %v1876 = vunpack.c.l.b16 %v1812
        %v1877 = vunpack.c.l.b16 %v1813
        %v1878 = vunpack.c.l.b16 %v1814
        %v1879 = vunpack.c.l.b16 %v1815
        %v1880 = vunpack.c.l.b16 %v1816
        %v1881 = vunpack.c.l.b16 %v1817
        %v1882 = vunpack.c.l.b16 %v1818
        %v1883 = vunpack.c.l.b16 %v1819
        %v1884 = vunpack.c.l.b16 %v1820
        %v1885 = vpack.c.b16 %v1854, %v1853
        %v1886 = vpack.c.b16 %v1856, %v1855
        %v1887 = vpack.c.b16 %v1858, %v1857
        %v1888 = vpack.c.b16 %v1860, %v1859
        %v1889 = vpack.c.b16 %v1862, %v1861
        %v1890 = vpack.c.b16 %v1864, %v1863
        %v1891 = vpack.c.b16 %v1866, %v1865
        %v1892 = vpack.c.b16 %v1868, %v1867
        %v1893 = vpack.c.b16 %v1870, %v1869
        %v1894 = vpack.c.b16 %v1872, %v1871
        %v1895 = vpack.c.b16 %v1874, %v1873
        %v1896 = vpack.c.b16 %v1876, %v1875
        %v1897 = vpack.c.b16 %v1878, %v1877
        %v1898 = vpack.c.b16 %v1880, %v1879
        %v1899 = vpack.c.b16 %v1882, %v1881
        %v1900 = vpack.c.b16 %v1884, %v1883
        %1917 = vmatprep.subr.bf16.mxu0 0
        %1918 = vmatpush1.bf16.msra.mxu0 %v1885
        %1919 = vmatprep.subr.bf16.mxu0 0
        %1920 = vmatpush1.bf16.msra.mxu0 %v1886
        %1921 = vmatprep.subr.bf16.mxu0 0
        %1922 = vmatpush1.bf16.msra.mxu0 %v1887
        %1923 = vmatprep.subr.bf16.mxu0 0
        %1924 = vmatpush1.bf16.msra.mxu0 %v1888
        %1925 = vmatprep.subr.bf16.mxu0 0
        %1926 = vmatpush1.bf16.msra.mxu0 %v1889
        %1927 = vmatprep.subr.bf16.mxu0 0
        %1928 = vmatpush1.bf16.msra.mxu0 %v1890
        %1929 = vmatprep.subr.bf16.mxu0 0
        %1930 = vmatpush1.bf16.msra.mxu0 %v1891
        %1931 = vmatprep.subr.bf16.mxu0 0
        %1932 = vmatpush1.bf16.msra.mxu0 %v1892
        %1933 = vmatprep.subr.bf16.mxu0 0
        %1934 = vmatpush1.bf16.msra.mxu0 %v1893
        %1935 = vmatprep.subr.bf16.mxu0 0
        %1936 = vmatpush1.bf16.msra.mxu0 %v1894
        %1937 = vmatprep.subr.bf16.mxu0 0
        %1938 = vmatpush1.bf16.msra.mxu0 %v1895
        %1939 = vmatprep.subr.bf16.mxu0 0
        %1940 = vmatpush1.bf16.msra.mxu0 %v1896
        %1941 = vmatprep.subr.bf16.mxu0 0
        %1942 = vmatpush1.bf16.msra.mxu0 %v1897
        %1943 = vmatprep.subr.bf16.mxu0 0
        %1944 = vmatpush1.bf16.msra.mxu0 %v1898
        %1945 = vmatprep.subr.bf16.mxu0 0
        %1946 = vmatpush1.bf16.msra.mxu0 %v1899
        %1947 = vmatprep.subr.bf16.mxu0 0
        %1948 = vmatpush1.bf16.msra.mxu0 %v1900
        %1949 = vmatprep.mubr.bf16.mxu0 %v1788
        %1950 = vmatmul.mubr.bf16.gmra.mrb[0].mxu0 %v1787
        %v1951 = vpop.f32.mrb[0].mxu0
        %v1952 = vadd.f32 0.0, %v1951
        %v1953 = vpop.f32.mrb[0].mxu0
        %v1954 = vpop.f32.mrb[0].mxu0
        %v1955 = vpop.f32.mrb[0].mxu0
        %1956 = vdwg.mxu0
        %v1957 = vmax.f32 %v1952, 1e-10
        %v1958 = vlog2.pop %v1957
        %v1959 = vmul.f32 %v1958, 0.6931472
        %v1960 = vmul.f32 %v1959, 4.3429446
        %v1961 = vlaneseq
        %v1962 = vshrl.u32 %v1961, 7
        %vm1963 = vcmp.eq.s32.totalorder %v1962, 0
        %v1964 = vrot.slane %v1960, 7
        %v1965 = vsel %vm1963, 0.0, %v1964
        %vm1966 = vcmp.eq.s32.totalorder %v1962, 7
        %v1967 = vrot.slane %v1960, 1
        %v1968 = vsel %vm1966, 0.0, %v1967
        %v1969 = vpack.c.bf16 %v1965, %v1965
        %v1970 = vld [vmem:[%s3] sm:$0xff]
        %v1971 = vpack.c.bf16 %v1960, %v1960
        %s1972 = scalar_lea.vmem %s3, 8
        %v1973 = vld [vmem:[%s1972] sm:$0xff]
        %v1975 = vunpack.c.l.b16 %v1973
        %v1976 = vunpack.c.h.b16 %v1973
        %v1977 = vpack.c.b16 %v1975, %v1975
        %v1978 = vpack.c.b16 %v1976, %v1976
        %vm1979 = vcmask 64512
        %v1981 = vsel %vm1979, %v1971, 0
        %vm1983 = vcmask 1043456
        %v1985 = vsel %vm1983, %v1977, 0
        %v1988 = vsel %vm1983, %v1978, 0
        %1990 = vmatprep.subr.bf16.mxu0 %v1988
        %1991 = vmatpush1.bf16.msra.mxu0 %v1985
        %1992 = vmatprep.subr.bf16.mxu0 0
        %1993 = vmatpush1.bf16.msra.mxu0 0
        %1994 = vmatprep.subr.bf16.mxu0 0
        %1995 = vmatpush1.bf16.msra.mxu0 0
        %1996 = vmatprep.subr.bf16.mxu0 0
        %1997 = vmatpush1.bf16.msra.mxu0 0
        %1998 = vmatprep.subr.bf16.mxu0 0
        %1999 = vmatpush1.bf16.msra.mxu0 0
        %2000 = vmatprep.subr.bf16.mxu0 0
        %2001 = vmatpush1.bf16.msra.mxu0 0
        %2002 = vmatprep.subr.bf16.mxu0 0
        %2003 = vmatpush1.bf16.msra.mxu0 0
        %2004 = vmatprep.subr.bf16.mxu0 0
        %2005 = vmatpush1.bf16.msra.mxu0 0
        %2006 = vmatprep.subr.bf16.mxu0 0
        %2007 = vmatpush1.bf16.msra.mxu0 0
        %2008 = vmatprep.subr.bf16.mxu0 0
        %2009 = vmatpush1.bf16.msra.mxu0 0
        %2010 = vmatprep.subr.bf16.mxu0 0
        %2011 = vmatpush1.bf16.msra.mxu0 0
        %2012 = vmatprep.subr.bf16.mxu0 0
        %2013 = vmatpush1.bf16.msra.mxu0 0
        %2014 = vmatprep.subr.bf16.mxu0 0
        %2015 = vmatpush1.bf16.msra.mxu0 0
        %2016 = vmatprep.subr.bf16.mxu0 0
        %2017 = vmatpush1.bf16.msra.mxu0 0
        %2018 = vmatprep.subr.bf16.mxu0 0
        %2019 = vmatpush1.bf16.msra.mxu0 0
        %2020 = vmatprep.subr.bf16.mxu0 0
        %2021 = vmatpush1.bf16.msra.mxu0 0
        %2022 = vmatprep.mubr.bf16.mxu0 0
        %2023 = vmatmul.mubr.bf16.gmra.mrb[0].mxu0 %v1981
        %v2024 = vpop.f32.mrb[0].mxu0
        %v2025 = vadd.f32 0.0, %v2024
        %v2026 = vpop.f32.mrb[0].mxu0
        %v2027 = vadd.f32 0.0, %v2026
        %v2028 = vpop.f32.mrb[0].mxu0
        %v2029 = vpop.f32.mrb[0].mxu0
        %2030 = vdwg.mxu0
        %v2032 = vunpack.c.l.b16 %v1970
        %v2033 = vunpack.c.h.b16 %v1970
        %v2034 = vpack.c.b16 %v2032, %v2032
        %v2035 = vpack.c.b16 %v2033, %v2033
        %v2037 = vsel %vm1979, %v1969, 0
        %v2040 = vsel %vm1983, %v2034, 0
        %v2043 = vsel %vm1983, %v2035, 0
        %2045 = vmatprep.subr.bf16.mxu0 %v2043
        %2046 = vmatpush1.bf16.msra.mxu0 %v2040
        %2047 = vmatprep.subr.bf16.mxu0 0
        %2048 = vmatpush1.bf16.msra.mxu0 0
        %2049 = vmatprep.subr.bf16.mxu0 0
        %2050 = vmatpush1.bf16.msra.mxu0 0
        %2051 = vmatprep.subr.bf16.mxu0 0
        %2052 = vmatpush1.bf16.msra.mxu0 0
        %2053 = vmatprep.subr.bf16.mxu0 0
        %2054 = vmatpush1.bf16.msra.mxu0 0
        %2055 = vmatprep.subr.bf16.mxu0 0
        %2056 = vmatpush1.bf16.msra.mxu0 0
        %2057 = vmatprep.subr.bf16.mxu0 0
        %2058 = vmatpush1.bf16.msra.mxu0 0
        %2059 = vmatprep.subr.bf16.mxu0 0
        %2060 = vmatpush1.bf16.msra.mxu0 0
        %2061 = vmatprep.subr.bf16.mxu0 0
        %2062 = vmatpush1.bf16.msra.mxu0 0
        %2063 = vmatprep.subr.bf16.mxu0 0
        %2064 = vmatpush1.bf16.msra.mxu0 0
        %2065 = vmatprep.subr.bf16.mxu0 0
        %2066 = vmatpush1.bf16.msra.mxu0 0
        %2067 = vmatprep.subr.bf16.mxu0 0
        %2068 = vmatpush1.bf16.msra.mxu0 0
        %2069 = vmatprep.subr.bf16.mxu0 0
        %2070 = vmatpush1.bf16.msra.mxu0 0
        %2071 = vmatprep.subr.bf16.mxu0 0
        %2072 = vmatpush1.bf16.msra.mxu0 0
        %2073 = vmatprep.subr.bf16.mxu0 0
        %2074 = vmatpush1.bf16.msra.mxu0 0
        %2075 = vmatprep.subr.bf16.mxu0 0
        %2076 = vmatpush1.bf16.msra.mxu0 0
        %2077 = vmatprep.mubr.bf16.mxu0 0
        %2078 = vmatmul.mubr.bf16.gmra.mrb[0].mxu0 %v2037
        %v2079 = vpop.f32.mrb[0].mxu0
        %v2080 = vadd.f32 %v2025, %v2079
        %v2081 = vpop.f32.mrb[0].mxu0
        %v2082 = vadd.f32 %v2027, %v2081
        %v2083 = vpop.f32.mrb[0].mxu0
        %v2084 = vpop.f32.mrb[0].mxu0
        %2085 = vdwg.mxu0
        %v2086 = vpack.c.bf16 %v1968, %v1968
        %s2087 = scalar_lea.vmem %s3, 16
        %v2088 = vld [vmem:[%s2087] sm:$0xff]
        %v2090 = vunpack.c.l.b16 %v2088
        %v2091 = vunpack.c.h.b16 %v2088
        %v2092 = vpack.c.b16 %v2090, %v2090
        %v2093 = vpack.c.b16 %v2091, %v2091
        %v2095 = vsel %vm1979, %v2086, 0
        %v2098 = vsel %vm1983, %v2092, 0
        %v2101 = vsel %vm1983, %v2093, 0
        %2103 = vmatprep.subr.bf16.mxu0 %v2101
        %2104 = vmatpush1.bf16.msra.mxu0 %v2098
        %2105 = vmatprep.subr.bf16.mxu0 0
        %2106 = vmatpush1.bf16.msra.mxu0 0
        %2107 = vmatprep.subr.bf16.mxu0 0
        %2108 = vmatpush1.bf16.msra.mxu0 0
        %2109 = vmatprep.subr.bf16.mxu0 0
        %2110 = vmatpush1.bf16.msra.mxu0 0
        %2111 = vmatprep.subr.bf16.mxu0 0
        %2112 = vmatpush1.bf16.msra.mxu0 0
        %2113 = vmatprep.subr.bf16.mxu0 0
        %2114 = vmatpush1.bf16.msra.mxu0 0
        %2115 = vmatprep.subr.bf16.mxu0 0
        %2116 = vmatpush1.bf16.msra.mxu0 0
        %2117 = vmatprep.subr.bf16.mxu0 0
        %2118 = vmatpush1.bf16.msra.mxu0 0
        %2119 = vmatprep.subr.bf16.mxu0 0
        %2120 = vmatpush1.bf16.msra.mxu0 0
        %2121 = vmatprep.subr.bf16.mxu0 0
        %2122 = vmatpush1.bf16.msra.mxu0 0
        %2123 = vmatprep.subr.bf16.mxu0 0
        %2124 = vmatpush1.bf16.msra.mxu0 0
        %2125 = vmatprep.subr.bf16.mxu0 0
        %2126 = vmatpush1.bf16.msra.mxu0 0
        %2127 = vmatprep.subr.bf16.mxu0 0
        %2128 = vmatpush1.bf16.msra.mxu0 0
        %2129 = vmatprep.subr.bf16.mxu0 0
        %2130 = vmatpush1.bf16.msra.mxu0 0
        %2131 = vmatprep.subr.bf16.mxu0 0
        %2132 = vmatpush1.bf16.msra.mxu0 0
        %2133 = vmatprep.subr.bf16.mxu0 0
        %2134 = vmatpush1.bf16.msra.mxu0 0
        %2135 = vmatprep.mubr.bf16.mxu0 0
        %2136 = vmatmul.mubr.bf16.gmra.mrb[0].mxu0 %v2095
        %v2137 = vpop.f32.mrb[0].mxu0
        %v2138 = vadd.f32 0.0, %v2137
        %v2139 = vpop.f32.mrb[0].mxu0
        %v2140 = vadd.f32 0.0, %v2139
        %v2141 = vpop.f32.mrb[0].mxu0
        %v2142 = vpop.f32.mrb[0].mxu0
        %2143 = vdwg.mxu0
        %v2144 = vadd.f32 %v2080, %v2138
        %v2145 = vadd.f32 %v2082, %v2140
        %v2146 = vld [vmem:[%s4] sm:$0x3]
        %v2148 = vlaneseq
        %v2149 = vshrl.u32 %v2148, 7
        %v2150 = vsub.s32 0, %v2149
        %v2151 = vrot.slane %v2146, %v2150
        %v2152 = vlaneseq
        %v2153 = vshrl.u32 %v2152, 7
        %v2154 = vsub.s32 1, %v2153
        %v2155 = vrot.slane %v2146, %v2154
        %v2158 = vadd.f32 %v2144, %v2151
        %v2159 = vadd.f32 %v2145, %v2155
        %v2160 = vmax.f32 %v2158, 0.0
        %v2161 = vmax.f32 %v2159, 0.0
        %v2162 = vrot.slane %v2160, 7
        %v2163 = vrot.slane %v2161, 7
        %v2164 = vsel %vm1963, 0.0, %v2162
        %v2165 = vsel %vm1963, 0.0, %v2163
        %v2166 = vrot.slane %v2160, 1
        %v2167 = vrot.slane %v2161, 1
        %v2168 = vsel %vm1966, 0.0, %v2166
        %v2169 = vsel %vm1966, 0.0, %v2167
        %v2170 = vpack.c.bf16 %v2164, %v2164
        %v2171 = vpack.c.bf16 %v2165, %v2165
        %v2172 = vld [vmem:[%s5] sm:$0xff]
        %v2173 = vld [vmem:[%s5 + $0x8] sm:$0xff]
        %v2174 = vld [vmem:[%s5 + $0x10] sm:$0xff]
        %v2175 = vld [vmem:[%s5 + $0x18] sm:$0xff]
        %v2176 = vld [vmem:[%s5 + $0x20] sm:$0xff]
        %v2177 = vld [vmem:[%s5 + $0x28] sm:$0xff]
        %v2178 = vld [vmem:[%s5 + $0x30] sm:$0xff]
        %v2179 = vld [vmem:[%s5 + $0x38] sm:$0xff]
        %v2180 = vld [vmem:[%s5 + $0x40] sm:$0xff]
        %v2181 = vld [vmem:[%s5 + $0x48] sm:$0xff]
        %v2182 = vld [vmem:[%s5 + $0x50] sm:$0xff]
        %v2183 = vld [vmem:[%s5 + $0x58] sm:$0xff]
        %v2184 = vld [vmem:[%s5 + $0x60] sm:$0xff]
        %v2185 = vld [vmem:[%s5 + $0x68] sm:$0xff]
        %v2186 = vld [vmem:[%s5 + $0x70] sm:$0xff]
        %v2187 = vld [vmem:[%s5 + $0x78] sm:$0xff]
        %v2188 = vld [vmem:[%s5 + $0x80] sm:$0xff]
        %v2189 = vld [vmem:[%s5 + $0x88] sm:$0xff]
        %v2190 = vld [vmem:[%s5 + $0x90] sm:$0xff]
        %v2191 = vld [vmem:[%s5 + $0x98] sm:$0xff]
        %v2192 = vld [vmem:[%s5 + $0xa0] sm:$0xff]
        %v2193 = vld [vmem:[%s5 + $0xa8] sm:$0xff]
        %v2194 = vld [vmem:[%s5 + $0xb0] sm:$0xff]
        %v2195 = vld [vmem:[%s5 + $0xb8] sm:$0xff]
        %v2196 = vld [vmem:[%s5 + $0xc0] sm:$0xff]
        %v2197 = vld [vmem:[%s5 + $0xc8] sm:$0xff]
        %v2198 = vld [vmem:[%s5 + $0xd0] sm:$0xff]
        %v2199 = vld [vmem:[%s5 + $0xd8] sm:$0xff]
        %v2200 = vld [vmem:[%s5 + $0xe0] sm:$0xff]
        %v2201 = vld [vmem:[%s5 + $0xe8] sm:$0xff]
        %v2202 = vld [vmem:[%s5 + $0xf0] sm:$0xff]
        %v2203 = vld [vmem:[%s5 + $0xf8] sm:$0xff]
        %v2204 = vld [vmem:[%s5 + $0x100] sm:$0xff]
        %v2205 = vld [vmem:[%s5 + $0x108] sm:$0xff]
        %v2206 = vld [vmem:[%s5 + $0x110] sm:$0xff]
        %v2207 = vld [vmem:[%s5 + $0x118] sm:$0xff]
        %v2208 = vld [vmem:[%s5 + $0x120] sm:$0xff]
        %v2209 = vld [vmem:[%s5 + $0x128] sm:$0xff]
        %v2210 = vld [vmem:[%s5 + $0x130] sm:$0xff]
        %v2211 = vld [vmem:[%s5 + $0x138] sm:$0xff]
        %v2212 = vld [vmem:[%s5 + $0x140] sm:$0xff]
        %v2213 = vld [vmem:[%s5 + $0x148] sm:$0xff]
        %v2214 = vld [vmem:[%s5 + $0x150] sm:$0xff]
        %v2215 = vld [vmem:[%s5 + $0x158] sm:$0xff]
        %v2216 = vld [vmem:[%s5 + $0x160] sm:$0xff]
        %v2217 = vld [vmem:[%s5 + $0x168] sm:$0xff]
        %v2218 = vld [vmem:[%s5 + $0x170] sm:$0xff]
        %v2219 = vld [vmem:[%s5 + $0x178] sm:$0xff]
        %v2220 = vld [vmem:[%s5 + $0x180] sm:$0xff]
        %v2221 = vld [vmem:[%s5 + $0x188] sm:$0xff]
        %v2222 = vld [vmem:[%s5 + $0x190] sm:$0xff]
        %v2223 = vld [vmem:[%s5 + $0x198] sm:$0xff]
        %v2224 = vld [vmem:[%s5 + $0x1a0] sm:$0xff]
        %v2225 = vld [vmem:[%s5 + $0x1a8] sm:$0xff]
        %v2226 = vld [vmem:[%s5 + $0x1b0] sm:$0xff]
        %v2227 = vld [vmem:[%s5 + $0x1b8] sm:$0xff]
        %v2228 = vld [vmem:[%s5 + $0x1c0] sm:$0xff]
        %v2229 = vld [vmem:[%s5 + $0x1c8] sm:$0xff]
        %v2230 = vld [vmem:[%s5 + $0x1d0] sm:$0xff]
        %v2231 = vld [vmem:[%s5 + $0x1d8] sm:$0xff]
        %v2232 = vld [vmem:[%s5 + $0x1e0] sm:$0xff]
        %v2233 = vld [vmem:[%s5 + $0x1e8] sm:$0xff]
        %v2234 = vld [vmem:[%s5 + $0x1f0] sm:$0xff]
        %v2235 = vld [vmem:[%s5 + $0x1f8] sm:$0xff]
        %v2236 = vpack.c.bf16 %v2160, %v2160
        %v2237 = vpack.c.bf16 %v2161, %v2161
        %s2238 = scalar_lea.vmem %s5, 512
        %v2239 = vld [vmem:[%s2238] sm:$0xff]
        %v2240 = vld [vmem:[%s2238 + $0x8] sm:$0xff]
        %v2241 = vld [vmem:[%s2238 + $0x10] sm:$0xff]
        %v2242 = vld [vmem:[%s2238 + $0x18] sm:$0xff]
        %v2243 = vld [vmem:[%s2238 + $0x20] sm:$0xff]
        %v2244 = vld [vmem:[%s2238 + $0x28] sm:$0xff]
        %v2245 = vld [vmem:[%s2238 + $0x30] sm:$0xff]
        %v2246 = vld [vmem:[%s2238 + $0x38] sm:$0xff]
        %v2247 = vld [vmem:[%s2238 + $0x40] sm:$0xff]
        %v2248 = vld [vmem:[%s2238 + $0x48] sm:$0xff]
        %v2249 = vld [vmem:[%s2238 + $0x50] sm:$0xff]
        %v2250 = vld [vmem:[%s2238 + $0x58] sm:$0xff]
        %v2251 = vld [vmem:[%s2238 + $0x60] sm:$0xff]
        %v2252 = vld [vmem:[%s2238 + $0x68] sm:$0xff]
        %v2253 = vld [vmem:[%s2238 + $0x70] sm:$0xff]
        %v2254 = vld [vmem:[%s2238 + $0x78] sm:$0xff]
        %v2255 = vld [vmem:[%s2238 + $0x80] sm:$0xff]
        %v2256 = vld [vmem:[%s2238 + $0x88] sm:$0xff]
        %v2257 = vld [vmem:[%s2238 + $0x90] sm:$0xff]
        %v2258 = vld [vmem:[%s2238 + $0x98] sm:$0xff]
        %v2259 = vld [vmem:[%s2238 + $0xa0] sm:$0xff]
        %v2260 = vld [vmem:[%s2238 + $0xa8] sm:$0xff]
        %v2261 = vld [vmem:[%s2238 + $0xb0] sm:$0xff]
        %v2262 = vld [vmem:[%s2238 + $0xb8] sm:$0xff]
        %v2263 = vld [vmem:[%s2238 + $0xc0] sm:$0xff]
        %v2264 = vld [vmem:[%s2238 + $0xc8] sm:$0xff]
        %v2265 = vld [vmem:[%s2238 + $0xd0] sm:$0xff]
        %v2266 = vld [vmem:[%s2238 + $0xd8] sm:$0xff]
        %v2267 = vld [vmem:[%s2238 + $0xe0] sm:$0xff]
        %v2268 = vld [vmem:[%s2238 + $0xe8] sm:$0xff]
        %v2269 = vld [vmem:[%s2238 + $0xf0] sm:$0xff]
        %v2270 = vld [vmem:[%s2238 + $0xf8] sm:$0xff]
        %v2271 = vld [vmem:[%s2238 + $0x100] sm:$0xff]
        %v2272 = vld [vmem:[%s2238 + $0x108] sm:$0xff]
        %v2273 = vld [vmem:[%s2238 + $0x110] sm:$0xff]
        %v2274 = vld [vmem:[%s2238 + $0x118] sm:$0xff]
        %v2275 = vld [vmem:[%s2238 + $0x120] sm:$0xff]
        %v2276 = vld [vmem:[%s2238 + $0x128] sm:$0xff]
        %v2277 = vld [vmem:[%s2238 + $0x130] sm:$0xff]
        %v2278 = vld [vmem:[%s2238 + $0x138] sm:$0xff]
        %v2279 = vld [vmem:[%s2238 + $0x140] sm:$0xff]
        %v2280 = vld [vmem:[%s2238 + $0x148] sm:$0xff]
        %v2281 = vld [vmem:[%s2238 + $0x150] sm:$0xff]
        %v2282 = vld [vmem:[%s2238 + $0x158] sm:$0xff]
        %v2283 = vld [vmem:[%s2238 + $0x160] sm:$0xff]
        %v2284 = vld [vmem:[%s2238 + $0x168] sm:$0xff]
        %v2285 = vld [vmem:[%s2238 + $0x170] sm:$0xff]
        %v2286 = vld [vmem:[%s2238 + $0x178] sm:$0xff]
        %v2287 = vld [vmem:[%s2238 + $0x180] sm:$0xff]
        %v2288 = vld [vmem:[%s2238 + $0x188] sm:$0xff]
        %v2289 = vld [vmem:[%s2238 + $0x190] sm:$0xff]
        %v2290 = vld [vmem:[%s2238 + $0x198] sm:$0xff]
        %v2291 = vld [vmem:[%s2238 + $0x1a0] sm:$0xff]
        %v2292 = vld [vmem:[%s2238 + $0x1a8] sm:$0xff]
        %v2293 = vld [vmem:[%s2238 + $0x1b0] sm:$0xff]
        %v2294 = vld [vmem:[%s2238 + $0x1b8] sm:$0xff]
        %v2295 = vld [vmem:[%s2238 + $0x1c0] sm:$0xff]
        %v2296 = vld [vmem:[%s2238 + $0x1c8] sm:$0xff]
        %v2297 = vld [vmem:[%s2238 + $0x1d0] sm:$0xff]
        %v2298 = vld [vmem:[%s2238 + $0x1d8] sm:$0xff]
        %v2299 = vld [vmem:[%s2238 + $0x1e0] sm:$0xff]
        %v2300 = vld [vmem:[%s2238 + $0x1e8] sm:$0xff]
        %v2301 = vld [vmem:[%s2238 + $0x1f0] sm:$0xff]
        %v2302 = vld [vmem:[%s2238 + $0x1f8] sm:$0xff]
        %v2367 = vunpack.c.l.b16 %v2239
        %v2368 = vunpack.c.h.b16 %v2239
        %v2369 = vunpack.c.l.b16 %v2240
        %v2370 = vunpack.c.h.b16 %v2240
        %v2371 = vunpack.c.l.b16 %v2241
        %v2372 = vunpack.c.h.b16 %v2241
        %v2373 = vunpack.c.l.b16 %v2242
        %v2374 = vunpack.c.h.b16 %v2242
        %v2375 = vunpack.c.l.b16 %v2243
        %v2376 = vunpack.c.h.b16 %v2243
        %v2377 = vunpack.c.l.b16 %v2244
        %v2378 = vunpack.c.h.b16 %v2244
        %v2379 = vunpack.c.l.b16 %v2245
        %v2380 = vunpack.c.h.b16 %v2245
        %v2381 = vunpack.c.l.b16 %v2246
        %v2382 = vunpack.c.h.b16 %v2246
        %v2383 = vunpack.c.l.b16 %v2247
        %v2384 = vunpack.c.h.b16 %v2247
        %v2385 = vunpack.c.l.b16 %v2248
        %v2386 = vunpack.c.h.b16 %v2248
        %v2387 = vunpack.c.l.b16 %v2249
        %v2388 = vunpack.c.h.b16 %v2249
        %v2389 = vunpack.c.l.b16 %v2250
        %v2390 = vunpack.c.h.b16 %v2250
        %v2391 = vunpack.c.l.b16 %v2251
        %v2392 = vunpack.c.h.b16 %v2251
        %v2393 = vunpack.c.l.b16 %v2252
        %v2394 = vunpack.c.h.b16 %v2252
        %v2395 = vunpack.c.l.b16 %v2253
        %v2396 = vunpack.c.h.b16 %v2253
        %v2397 = vunpack.c.l.b16 %v2254
        %v2398 = vunpack.c.h.b16 %v2254
        %v2399 = vunpack.c.l.b16 %v2255
        %v2400 = vunpack.c.h.b16 %v2255
        %v2401 = vunpack.c.l.b16 %v2256
        %v2402 = vunpack.c.h.b16 %v2256
        %v2403 = vunpack.c.l.b16 %v2257
        %v2404 = vunpack.c.h.b16 %v2257
        %v2405 = vunpack.c.l.b16 %v2258
        %v2406 = vunpack.c.h.b16 %v2258
        %v2407 = vunpack.c.l.b16 %v2259
        %v2408 = vunpack.c.h.b16 %v2259
        %v2409 = vunpack.c.l.b16 %v2260
        %v2410 = vunpack.c.h.b16 %v2260
        %v2411 = vunpack.c.l.b16 %v2261
        %v2412 = vunpack.c.h.b16 %v2261
        %v2413 = vunpack.c.l.b16 %v2262
        %v2414 = vunpack.c.h.b16 %v2262
        %v2415 = vunpack.c.l.b16 %v2263
        %v2416 = vunpack.c.h.b16 %v2263
        %v2417 = vunpack.c.l.b16 %v2264
        %v2418 = vunpack.c.h.b16 %v2264
        %v2419 = vunpack.c.l.b16 %v2265
        %v2420 = vunpack.c.h.b16 %v2265
        %v2421 = vunpack.c.l.b16 %v2266
        %v2422 = vunpack.c.h.b16 %v2266
        %v2423 = vunpack.c.l.b16 %v2267
        %v2424 = vunpack.c.h.b16 %v2267
        %v2425 = vunpack.c.l.b16 %v2268
        %v2426 = vunpack.c.h.b16 %v2268
        %v2427 = vunpack.c.l.b16 %v2269
        %v2428 = vunpack.c.h.b16 %v2269
        %v2429 = vunpack.c.l.b16 %v2270
        %v2430 = vunpack.c.h.b16 %v2270
        %v2431 = vunpack.c.l.b16 %v2271
        %v2432 = vunpack.c.h.b16 %v2271
        %v2433 = vunpack.c.l.b16 %v2272
        %v2434 = vunpack.c.h.b16 %v2272
        %v2435 = vunpack.c.l.b16 %v2273
        %v2436 = vunpack.c.h.b16 %v2273
        %v2437 = vunpack.c.l.b16 %v2274
        %v2438 = vunpack.c.h.b16 %v2274
        %v2439 = vunpack.c.l.b16 %v2275
        %v2440 = vunpack.c.h.b16 %v2275
        %v2441 = vunpack.c.l.b16 %v2276
        %v2442 = vunpack.c.h.b16 %v2276
        %v2443 = vunpack.c.l.b16 %v2277
        %v2444 = vunpack.c.h.b16 %v2277
        %v2445 = vunpack.c.l.b16 %v2278
        %v2446 = vunpack.c.h.b16 %v2278
        %v2447 = vunpack.c.l.b16 %v2279
        %v2448 = vunpack.c.h.b16 %v2279
        %v2449 = vunpack.c.l.b16 %v2280
        %v2450 = vunpack.c.h.b16 %v2280
        %v2451 = vunpack.c.l.b16 %v2281
        %v2452 = vunpack.c.h.b16 %v2281
        %v2453 = vunpack.c.l.b16 %v2282
        %v2454 = vunpack.c.h.b16 %v2282
        %v2455 = vunpack.c.l.b16 %v2283
        %v2456 = vunpack.c.h.b16 %v2283
        %v2457 = vunpack.c.l.b16 %v2284
        %v2458 = vunpack.c.h.b16 %v2284
        %v2459 = vunpack.c.l.b16 %v2285
        %v2460 = vunpack.c.h.b16 %v2285
        %v2461 = vunpack.c.l.b16 %v2286
        %v2462 = vunpack.c.h.b16 %v2286
        %v2463 = vunpack.c.l.b16 %v2287
        %v2464 = vunpack.c.h.b16 %v2287
        %v2465 = vunpack.c.l.b16 %v2288
        %v2466 = vunpack.c.h.b16 %v2288
        %v2467 = vunpack.c.l.b16 %v2289
        %v2468 = vunpack.c.h.b16 %v2289
        %v2469 = vunpack.c.l.b16 %v2290
        %v2470 = vunpack.c.h.b16 %v2290
        %v2471 = vunpack.c.l.b16 %v2291
        %v2472 = vunpack.c.h.b16 %v2291
        %v2473 = vunpack.c.l.b16 %v2292
        %v2474 = vunpack.c.h.b16 %v2292
        %v2475 = vunpack.c.l.b16 %v2293
        %v2476 = vunpack.c.h.b16 %v2293
        %v2477 = vunpack.c.l.b16 %v2294
        %v2478 = vunpack.c.h.b16 %v2294
        %v2479 = vunpack.c.l.b16 %v2295
        %v2480 = vunpack.c.h.b16 %v2295
        %v2481 = vunpack.c.l.b16 %v2296
        %v2482 = vunpack.c.h.b16 %v2296
        %v2483 = vunpack.c.l.b16 %v2297
        %v2484 = vunpack.c.h.b16 %v2297
        %v2485 = vunpack.c.l.b16 %v2298
        %v2486 = vunpack.c.h.b16 %v2298
        %v2487 = vunpack.c.l.b16 %v2299
        %v2488 = vunpack.c.h.b16 %v2299
        %v2489 = vunpack.c.l.b16 %v2300
        %v2490 = vunpack.c.h.b16 %v2300
        %v2491 = vunpack.c.l.b16 %v2301
        %v2492 = vunpack.c.h.b16 %v2301
        %v2493 = vunpack.c.l.b16 %v2302
        %v2494 = vunpack.c.h.b16 %v2302
        %v2495 = vpack.c.b16 %v2371, %v2367
        %v2496 = vpack.c.b16 %v2372, %v2368
        %v2497 = vpack.c.b16 %v2373, %v2369
        %v2498 = vpack.c.b16 %v2374, %v2370
        %v2499 = vpack.c.b16 %v2379, %v2375
        %v2500 = vpack.c.b16 %v2380, %v2376
        %v2501 = vpack.c.b16 %v2381, %v2377
        %v2502 = vpack.c.b16 %v2382, %v2378
        %v2503 = vpack.c.b16 %v2387, %v2383
        %v2504 = vpack.c.b16 %v2388, %v2384
        %v2505 = vpack.c.b16 %v2389, %v2385
        %v2506 = vpack.c.b16 %v2390, %v2386
        %v2507 = vpack.c.b16 %v2395, %v2391
        %v2508 = vpack.c.b16 %v2396, %v2392
        %v2509 = vpack.c.b16 %v2397, %v2393
        %v2510 = vpack.c.b16 %v2398, %v2394
        %v2511 = vpack.c.b16 %v2403, %v2399
        %v2512 = vpack.c.b16 %v2404, %v2400
        %v2513 = vpack.c.b16 %v2405, %v2401
        %v2514 = vpack.c.b16 %v2406, %v2402
        %v2515 = vpack.c.b16 %v2411, %v2407
        %v2516 = vpack.c.b16 %v2412, %v2408
        %v2517 = vpack.c.b16 %v2413, %v2409
        %v2518 = vpack.c.b16 %v2414, %v2410
        %v2519 = vpack.c.b16 %v2419, %v2415
        %v2520 = vpack.c.b16 %v2420, %v2416
        %v2521 = vpack.c.b16 %v2421, %v2417
        %v2522 = vpack.c.b16 %v2422, %v2418
        %v2523 = vpack.c.b16 %v2427, %v2423
        %v2524 = vpack.c.b16 %v2428, %v2424
        %v2525 = vpack.c.b16 %v2429, %v2425
        %v2526 = vpack.c.b16 %v2430, %v2426
        %v2527 = vpack.c.b16 %v2435, %v2431
        %v2528 = vpack.c.b16 %v2436, %v2432
        %v2529 = vpack.c.b16 %v2437, %v2433
        %v2530 = vpack.c.b16 %v2438, %v2434
        %v2531 = vpack.c.b16 %v2443, %v2439
        %v2532 = vpack.c.b16 %v2444, %v2440
        %v2533 = vpack.c.b16 %v2445, %v2441
        %v2534 = vpack.c.b16 %v2446, %v2442
        %v2535 = vpack.c.b16 %v2451, %v2447
        %v2536 = vpack.c.b16 %v2452, %v2448
        %v2537 = vpack.c.b16 %v2453, %v2449
        %v2538 = vpack.c.b16 %v2454, %v2450
        %v2539 = vpack.c.b16 %v2459, %v2455
        %v2540 = vpack.c.b16 %v2460, %v2456
        %v2541 = vpack.c.b16 %v2461, %v2457
        %v2542 = vpack.c.b16 %v2462, %v2458
        %v2543 = vpack.c.b16 %v2467, %v2463
        %v2544 = vpack.c.b16 %v2468, %v2464
        %v2545 = vpack.c.b16 %v2469, %v2465
        %v2546 = vpack.c.b16 %v2470, %v2466
        %v2547 = vpack.c.b16 %v2475, %v2471
        %v2548 = vpack.c.b16 %v2476, %v2472
        %v2549 = vpack.c.b16 %v2477, %v2473
        %v2550 = vpack.c.b16 %v2478, %v2474
        %v2551 = vpack.c.b16 %v2483, %v2479
        %v2552 = vpack.c.b16 %v2484, %v2480
        %v2553 = vpack.c.b16 %v2485, %v2481
        %v2554 = vpack.c.b16 %v2486, %v2482
        %v2555 = vpack.c.b16 %v2491, %v2487
        %v2556 = vpack.c.b16 %v2492, %v2488
        %v2557 = vpack.c.b16 %v2493, %v2489
        %v2558 = vpack.c.b16 %v2494, %v2490
        %2623 = vmatprep.subr.bf16.mxu0 %v2496
        %2624 = vmatpush1.bf16.msra.mxu0 %v2495
        %2625 = vmatprep.subr.bf16.mxu0 %v2500
        %2626 = vmatpush1.bf16.msra.mxu0 %v2499
        %2627 = vmatprep.subr.bf16.mxu0 %v2504
        %2628 = vmatpush1.bf16.msra.mxu0 %v2503
        %2629 = vmatprep.subr.bf16.mxu0 %v2508
        %2630 = vmatpush1.bf16.msra.mxu0 %v2507
        %2631 = vmatprep.subr.bf16.mxu0 %v2512
        %2632 = vmatpush1.bf16.msra.mxu0 %v2511
        %2633 = vmatprep.subr.bf16.mxu0 %v2516
        %2634 = vmatpush1.bf16.msra.mxu0 %v2515
        %2635 = vmatprep.subr.bf16.mxu0 %v2520
        %2636 = vmatpush1.bf16.msra.mxu0 %v2519
        %2637 = vmatprep.subr.bf16.mxu0 %v2524
        %2638 = vmatpush1.bf16.msra.mxu0 %v2523
        %2639 = vmatprep.subr.bf16.mxu0 %v2528
        %2640 = vmatpush1.bf16.msra.mxu0 %v2527
        %2641 = vmatprep.subr.bf16.mxu0 %v2532
        %2642 = vmatpush1.bf16.msra.mxu0 %v2531
        %2643 = vmatprep.subr.bf16.mxu0 %v2536
        %2644 = vmatpush1.bf16.msra.mxu0 %v2535
        %2645 = vmatprep.subr.bf16.mxu0 %v2540
        %2646 = vmatpush1.bf16.msra.mxu0 %v2539
        %2647 = vmatprep.subr.bf16.mxu0 %v2544
        %2648 = vmatpush1.bf16.msra.mxu0 %v2543
        %2649 = vmatprep.subr.bf16.mxu0 %v2548
        %2650 = vmatpush1.bf16.msra.mxu0 %v2547
        %2651 = vmatprep.subr.bf16.mxu0 %v2552
        %2652 = vmatpush1.bf16.msra.mxu0 %v2551
        %2653 = vmatprep.subr.bf16.mxu0 %v2556
        %2654 = vmatpush1.bf16.msra.mxu0 %v2555
        %2655 = vmatprep.mubr.bf16.mxu0 %v2237
        %2656 = vmatmul.mubr.bf16.gmra.mrb[0].mxu0 %v2236
        %v2657 = vpop.f32.mrb[0].mxu0
        %v2658 = vadd.f32 0.0, %v2657
        %v2659 = vpop.f32.mrb[0].mxu0
        %v2660 = vadd.f32 0.0, %v2659
        %v2661 = vpop.f32.mrb[0].mxu0
        %v2662 = vpop.f32.mrb[0].mxu0
        %2663 = vdwg.mxu0
        %2664 = vmatprep.subr.bf16.mxu0 %v2498
        %2665 = vmatpush1.bf16.msra.mxu0 %v2497
        %2666 = vmatprep.subr.bf16.mxu0 %v2502
        %2667 = vmatpush1.bf16.msra.mxu0 %v2501
        %2668 = vmatprep.subr.bf16.mxu0 %v2506
        %2669 = vmatpush1.bf16.msra.mxu0 %v2505
        %2670 = vmatprep.subr.bf16.mxu0 %v2510
        %2671 = vmatpush1.bf16.msra.mxu0 %v2509
        %2672 = vmatprep.subr.bf16.mxu0 %v2514
        %2673 = vmatpush1.bf16.msra.mxu0 %v2513
        %2674 = vmatprep.subr.bf16.mxu0 %v2518
        %2675 = vmatpush1.bf16.msra.mxu0 %v2517
        %2676 = vmatprep.subr.bf16.mxu0 %v2522
        %2677 = vmatpush1.bf16.msra.mxu0 %v2521
        %2678 = vmatprep.subr.bf16.mxu0 %v2526
        %2679 = vmatpush1.bf16.msra.mxu0 %v2525
        %2680 = vmatprep.subr.bf16.mxu0 %v2530
        %2681 = vmatpush1.bf16.msra.mxu0 %v2529
        %2682 = vmatprep.subr.bf16.mxu0 %v2534
        %2683 = vmatpush1.bf16.msra.mxu0 %v2533
        %2684 = vmatprep.subr.bf16.mxu0 %v2538
        %2685 = vmatpush1.bf16.msra.mxu0 %v2537
        %2686 = vmatprep.subr.bf16.mxu0 %v2542
        %2687 = vmatpush1.bf16.msra.mxu0 %v2541
        %2688 = vmatprep.subr.bf16.mxu0 %v2546
        %2689 = vmatpush1.bf16.msra.mxu0 %v2545
        %2690 = vmatprep.subr.bf16.mxu0 %v2550
        %2691 = vmatpush1.bf16.msra.mxu0 %v2549
        %2692 = vmatprep.subr.bf16.mxu0 %v2554
        %2693 = vmatpush1.bf16.msra.mxu0 %v2553
        %2694 = vmatprep.subr.bf16.mxu0 %v2558
        %2695 = vmatpush1.bf16.msra.mxu0 %v2557
        %2696 = vmatprep.mubr.bf16.mxu0 %v2237
        %2697 = vmatmul.mubr.bf16.gmra.mrb[0].mxu0 %v2236
        %v2698 = vpop.f32.mrb[0].mxu0
        %v2699 = vadd.f32 0.0, %v2698
        %v2700 = vpop.f32.mrb[0].mxu0
        %v2701 = vadd.f32 0.0, %v2700
        %v2702 = vpop.f32.mrb[0].mxu0
        %v2703 = vpop.f32.mrb[0].mxu0
        %2704 = vdwg.mxu0
        %v2769 = vunpack.c.l.b16 %v2172
        %v2770 = vunpack.c.h.b16 %v2172
        %v2771 = vunpack.c.l.b16 %v2173
        %v2772 = vunpack.c.h.b16 %v2173
        %v2773 = vunpack.c.l.b16 %v2174
        %v2774 = vunpack.c.h.b16 %v2174
        %v2775 = vunpack.c.l.b16 %v2175
        %v2776 = vunpack.c.h.b16 %v2175
        %v2777 = vunpack.c.l.b16 %v2176
        %v2778 = vunpack.c.h.b16 %v2176
        %v2779 = vunpack.c.l.b16 %v2177
        %v2780 = vunpack.c.h.b16 %v2177
        %v2781 = vunpack.c.l.b16 %v2178
        %v2782 = vunpack.c.h.b16 %v2178
        %v2783 = vunpack.c.l.b16 %v2179
        %v2784 = vunpack.c.h.b16 %v2179
        %v2785 = vunpack.c.l.b16 %v2180
        %v2786 = vunpack.c.h.b16 %v2180
        %v2787 = vunpack.c.l.b16 %v2181
        %v2788 = vunpack.c.h.b16 %v2181
        %v2789 = vunpack.c.l.b16 %v2182
        %v2790 = vunpack.c.h.b16 %v2182
        %v2791 = vunpack.c.l.b16 %v2183
        %v2792 = vunpack.c.h.b16 %v2183
        %v2793 = vunpack.c.l.b16 %v2184
        %v2794 = vunpack.c.h.b16 %v2184
        %v2795 = vunpack.c.l.b16 %v2185
        %v2796 = vunpack.c.h.b16 %v2185
        %v2797 = vunpack.c.l.b16 %v2186
        %v2798 = vunpack.c.h.b16 %v2186
        %v2799 = vunpack.c.l.b16 %v2187
        %v2800 = vunpack.c.h.b16 %v2187
        %v2801 = vunpack.c.l.b16 %v2188
        %v2802 = vunpack.c.h.b16 %v2188
        %v2803 = vunpack.c.l.b16 %v2189
        %v2804 = vunpack.c.h.b16 %v2189
        %v2805 = vunpack.c.l.b16 %v2190
        %v2806 = vunpack.c.h.b16 %v2190
        %v2807 = vunpack.c.l.b16 %v2191
        %v2808 = vunpack.c.h.b16 %v2191
        %v2809 = vunpack.c.l.b16 %v2192
        %v2810 = vunpack.c.h.b16 %v2192
        %v2811 = vunpack.c.l.b16 %v2193
        %v2812 = vunpack.c.h.b16 %v2193
        %v2813 = vunpack.c.l.b16 %v2194
        %v2814 = vunpack.c.h.b16 %v2194
        %v2815 = vunpack.c.l.b16 %v2195
        %v2816 = vunpack.c.h.b16 %v2195
        %v2817 = vunpack.c.l.b16 %v2196
        %v2818 = vunpack.c.h.b16 %v2196
        %v2819 = vunpack.c.l.b16 %v2197
        %v2820 = vunpack.c.h.b16 %v2197
        %v2821 = vunpack.c.l.b16 %v2198
        %v2822 = vunpack.c.h.b16 %v2198
        %v2823 = vunpack.c.l.b16 %v2199
        %v2824 = vunpack.c.h.b16 %v2199
        %v2825 = vunpack.c.l.b16 %v2200
        %v2826 = vunpack.c.h.b16 %v2200
        %v2827 = vunpack.c.l.b16 %v2201
        %v2828 = vunpack.c.h.b16 %v2201
        %v2829 = vunpack.c.l.b16 %v2202
        %v2830 = vunpack.c.h.b16 %v2202
        %v2831 = vunpack.c.l.b16 %v2203
        %v2832 = vunpack.c.h.b16 %v2203
        %v2833 = vunpack.c.l.b16 %v2204
        %v2834 = vunpack.c.h.b16 %v2204
        %v2835 = vunpack.c.l.b16 %v2205
        %v2836 = vunpack.c.h.b16 %v2205
        %v2837 = vunpack.c.l.b16 %v2206
        %v2838 = vunpack.c.h.b16 %v2206
        %v2839 = vunpack.c.l.b16 %v2207
        %v2840 = vunpack.c.h.b16 %v2207
        %v2841 = vunpack.c.l.b16 %v2208
        %v2842 = vunpack.c.h.b16 %v2208
        %v2843 = vunpack.c.l.b16 %v2209
        %v2844 = vunpack.c.h.b16 %v2209
        %v2845 = vunpack.c.l.b16 %v2210
        %v2846 = vunpack.c.h.b16 %v2210
        %v2847 = vunpack.c.l.b16 %v2211
        %v2848 = vunpack.c.h.b16 %v2211
        %v2849 = vunpack.c.l.b16 %v2212
        %v2850 = vunpack.c.h.b16 %v2212
        %v2851 = vunpack.c.l.b16 %v2213
        %v2852 = vunpack.c.h.b16 %v2213
        %v2853 = vunpack.c.l.b16 %v2214
        %v2854 = vunpack.c.h.b16 %v2214
        %v2855 = vunpack.c.l.b16 %v2215
        %v2856 = vunpack.c.h.b16 %v2215
        %v2857 = vunpack.c.l.b16 %v2216
        %v2858 = vunpack.c.h.b16 %v2216
        %v2859 = vunpack.c.l.b16 %v2217
        %v2860 = vunpack.c.h.b16 %v2217
        %v2861 = vunpack.c.l.b16 %v2218
        %v2862 = vunpack.c.h.b16 %v2218
        %v2863 = vunpack.c.l.b16 %v2219
        %v2864 = vunpack.c.h.b16 %v2219
        %v2865 = vunpack.c.l.b16 %v2220
        %v2866 = vunpack.c.h.b16 %v2220
        %v2867 = vunpack.c.l.b16 %v2221
        %v2868 = vunpack.c.h.b16 %v2221
        %v2869 = vunpack.c.l.b16 %v2222
        %v2870 = vunpack.c.h.b16 %v2222
        %v2871 = vunpack.c.l.b16 %v2223
        %v2872 = vunpack.c.h.b16 %v2223
        %v2873 = vunpack.c.l.b16 %v2224
        %v2874 = vunpack.c.h.b16 %v2224
        %v2875 = vunpack.c.l.b16 %v2225
        %v2876 = vunpack.c.h.b16 %v2225
        %v2877 = vunpack.c.l.b16 %v2226
        %v2878 = vunpack.c.h.b16 %v2226
        %v2879 = vunpack.c.l.b16 %v2227
        %v2880 = vunpack.c.h.b16 %v2227
        %v2881 = vunpack.c.l.b16 %v2228
        %v2882 = vunpack.c.h.b16 %v2228
        %v2883 = vunpack.c.l.b16 %v2229
        %v2884 = vunpack.c.h.b16 %v2229
        %v2885 = vunpack.c.l.b16 %v2230
        %v2886 = vunpack.c.h.b16 %v2230
        %v2887 = vunpack.c.l.b16 %v2231
        %v2888 = vunpack.c.h.b16 %v2231
        %v2889 = vunpack.c.l.b16 %v2232
        %v2890 = vunpack.c.h.b16 %v2232
        %v2891 = vunpack.c.l.b16 %v2233
        %v2892 = vunpack.c.h.b16 %v2233
        %v2893 = vunpack.c.l.b16 %v2234
        %v2894 = vunpack.c.h.b16 %v2234
        %v2895 = vunpack.c.l.b16 %v2235
        %v2896 = vunpack.c.h.b16 %v2235
        %v2897 = vpack.c.b16 %v2773, %v2769
        %v2898 = vpack.c.b16 %v2774, %v2770
        %v2899 = vpack.c.b16 %v2775, %v2771
        %v2900 = vpack.c.b16 %v2776, %v2772
        %v2901 = vpack.c.b16 %v2781, %v2777
        %v2902 = vpack.c.b16 %v2782, %v2778
        %v2903 = vpack.c.b16 %v2783, %v2779
        %v2904 = vpack.c.b16 %v2784, %v2780
        %v2905 = vpack.c.b16 %v2789, %v2785
        %v2906 = vpack.c.b16 %v2790, %v2786
        %v2907 = vpack.c.b16 %v2791, %v2787
        %v2908 = vpack.c.b16 %v2792, %v2788
        %v2909 = vpack.c.b16 %v2797, %v2793
        %v2910 = vpack.c.b16 %v2798, %v2794
        %v2911 = vpack.c.b16 %v2799, %v2795
        %v2912 = vpack.c.b16 %v2800, %v2796
        %v2913 = vpack.c.b16 %v2805, %v2801
        %v2914 = vpack.c.b16 %v2806, %v2802
        %v2915 = vpack.c.b16 %v2807, %v2803
        %v2916 = vpack.c.b16 %v2808, %v2804
        %v2917 = vpack.c.b16 %v2813, %v2809
        %v2918 = vpack.c.b16 %v2814, %v2810
        %v2919 = vpack.c.b16 %v2815, %v2811
        %v2920 = vpack.c.b16 %v2816, %v2812
        %v2921 = vpack.c.b16 %v2821, %v2817
        %v2922 = vpack.c.b16 %v2822, %v2818
        %v2923 = vpack.c.b16 %v2823, %v2819
        %v2924 = vpack.c.b16 %v2824, %v2820
        %v2925 = vpack.c.b16 %v2829, %v2825
        %v2926 = vpack.c.b16 %v2830, %v2826
        %v2927 = vpack.c.b16 %v2831, %v2827
        %v2928 = vpack.c.b16 %v2832, %v2828
        %v2929 = vpack.c.b16 %v2837, %v2833
        %v2930 = vpack.c.b16 %v2838, %v2834
        %v2931 = vpack.c.b16 %v2839, %v2835
        %v2932 = vpack.c.b16 %v2840, %v2836
        %v2933 = vpack.c.b16 %v2845, %v2841
        %v2934 = vpack.c.b16 %v2846, %v2842
        %v2935 = vpack.c.b16 %v2847, %v2843
        %v2936 = vpack.c.b16 %v2848, %v2844
        %v2937 = vpack.c.b16 %v2853, %v2849
        %v2938 = vpack.c.b16 %v2854, %v2850
        %v2939 = vpack.c.b16 %v2855, %v2851
        %v2940 = vpack.c.b16 %v2856, %v2852
        %v2941 = vpack.c.b16 %v2861, %v2857
        %v2942 = vpack.c.b16 %v2862, %v2858
        %v2943 = vpack.c.b16 %v2863, %v2859
        %v2944 = vpack.c.b16 %v2864, %v2860
        %v2945 = vpack.c.b16 %v2869, %v2865
        %v2946 = vpack.c.b16 %v2870, %v2866
        %v2947 = vpack.c.b16 %v2871, %v2867
        %v2948 = vpack.c.b16 %v2872, %v2868
        %v2949 = vpack.c.b16 %v2877, %v2873
        %v2950 = vpack.c.b16 %v2878, %v2874
        %v2951 = vpack.c.b16 %v2879, %v2875
        %v2952 = vpack.c.b16 %v2880, %v2876
        %v2953 = vpack.c.b16 %v2885, %v2881
        %v2954 = vpack.c.b16 %v2886, %v2882
        %v2955 = vpack.c.b16 %v2887, %v2883
        %v2956 = vpack.c.b16 %v2888, %v2884
        %v2957 = vpack.c.b16 %v2893, %v2889
        %v2958 = vpack.c.b16 %v2894, %v2890
        %v2959 = vpack.c.b16 %v2895, %v2891
        %v2960 = vpack.c.b16 %v2896, %v2892
        %3025 = vmatprep.subr.bf16.mxu0 %v2898
        %3026 = vmatpush1.bf16.msra.mxu0 %v2897
        %3027 = vmatprep.subr.bf16.mxu0 %v2902
        %3028 = vmatpush1.bf16.msra.mxu0 %v2901
        %3029 = vmatprep.subr.bf16.mxu0 %v2906
        %3030 = vmatpush1.bf16.msra.mxu0 %v2905
        %3031 = vmatprep.subr.bf16.mxu0 %v2910
        %3032 = vmatpush1.bf16.msra.mxu0 %v2909
        %3033 = vmatprep.subr.bf16.mxu0 %v2914
        %3034 = vmatpush1.bf16.msra.mxu0 %v2913
        %3035 = vmatprep.subr.bf16.mxu0 %v2918
        %3036 = vmatpush1.bf16.msra.mxu0 %v2917
        %3037 = vmatprep.subr.bf16.mxu0 %v2922
        %3038 = vmatpush1.bf16.msra.mxu0 %v2921
        %3039 = vmatprep.subr.bf16.mxu0 %v2926
        %3040 = vmatpush1.bf16.msra.mxu0 %v2925
        %3041 = vmatprep.subr.bf16.mxu0 %v2930
        %3042 = vmatpush1.bf16.msra.mxu0 %v2929
        %3043 = vmatprep.subr.bf16.mxu0 %v2934
        %3044 = vmatpush1.bf16.msra.mxu0 %v2933
        %3045 = vmatprep.subr.bf16.mxu0 %v2938
        %3046 = vmatpush1.bf16.msra.mxu0 %v2937
        %3047 = vmatprep.subr.bf16.mxu0 %v2942
        %3048 = vmatpush1.bf16.msra.mxu0 %v2941
        %3049 = vmatprep.subr.bf16.mxu0 %v2946
        %3050 = vmatpush1.bf16.msra.mxu0 %v2945
        %3051 = vmatprep.subr.bf16.mxu0 %v2950
        %3052 = vmatpush1.bf16.msra.mxu0 %v2949
        %3053 = vmatprep.subr.bf16.mxu0 %v2954
        %3054 = vmatpush1.bf16.msra.mxu0 %v2953
        %3055 = vmatprep.subr.bf16.mxu0 %v2958
        %3056 = vmatpush1.bf16.msra.mxu0 %v2957
        %3057 = vmatprep.mubr.bf16.mxu0 %v2171
        %3058 = vmatmul.mubr.bf16.gmra.mrb[0].mxu0 %v2170
        %v3059 = vpop.f32.mrb[0].mxu0
        %v3060 = vadd.f32 %v2658, %v3059
        %v3061 = vpop.f32.mrb[0].mxu0
        %v3062 = vadd.f32 %v2660, %v3061
        %v3063 = vpop.f32.mrb[0].mxu0
        %v3064 = vpop.f32.mrb[0].mxu0
        %3065 = vdwg.mxu0
        %3066 = vmatprep.subr.bf16.mxu0 %v2900
        %3067 = vmatpush1.bf16.msra.mxu0 %v2899
        %3068 = vmatprep.subr.bf16.mxu0 %v2904
        %3069 = vmatpush1.bf16.msra.mxu0 %v2903
        %3070 = vmatprep.subr.bf16.mxu0 %v2908
        %3071 = vmatpush1.bf16.msra.mxu0 %v2907
        %3072 = vmatprep.subr.bf16.mxu0 %v2912
        %3073 = vmatpush1.bf16.msra.mxu0 %v2911
        %3074 = vmatprep.subr.bf16.mxu0 %v2916
        %3075 = vmatpush1.bf16.msra.mxu0 %v2915
        %3076 = vmatprep.subr.bf16.mxu0 %v2920
        %3077 = vmatpush1.bf16.msra.mxu0 %v2919
        %3078 = vmatprep.subr.bf16.mxu0 %v2924
        %3079 = vmatpush1.bf16.msra.mxu0 %v2923
        %3080 = vmatprep.subr.bf16.mxu0 %v2928
        %3081 = vmatpush1.bf16.msra.mxu0 %v2927
        %3082 = vmatprep.subr.bf16.mxu0 %v2932
        %3083 = vmatpush1.bf16.msra.mxu0 %v2931
        %3084 = vmatprep.subr.bf16.mxu0 %v2936
        %3085 = vmatpush1.bf16.msra.mxu0 %v2935
        %3086 = vmatprep.subr.bf16.mxu0 %v2940
        %3087 = vmatpush1.bf16.msra.mxu0 %v2939
        %3088 = vmatprep.subr.bf16.mxu0 %v2944
        %3089 = vmatpush1.bf16.msra.mxu0 %v2943
        %3090 = vmatprep.subr.bf16.mxu0 %v2948
        %3091 = vmatpush1.bf16.msra.mxu0 %v2947
        %3092 = vmatprep.subr.bf16.mxu0 %v2952
        %3093 = vmatpush1.bf16.msra.mxu0 %v2951
        %3094 = vmatprep.subr.bf16.mxu0 %v2956
        %3095 = vmatpush1.bf16.msra.mxu0 %v2955
        %3096 = vmatprep.subr.bf16.mxu0 %v2960
        %3097 = vmatpush1.bf16.msra.mxu0 %v2959
        %3098 = vmatprep.mubr.bf16.mxu0 %v2171
        %3099 = vmatmul.mubr.bf16.gmra.mrb[0].mxu0 %v2170
        %v3100 = vpop.f32.mrb[0].mxu0
        %v3101 = vadd.f32 %v2699, %v3100
        %v3102 = vpop.f32.mrb[0].mxu0
        %v3103 = vadd.f32 %v2701, %v3102
        %v3104 = vpop.f32.mrb[0].mxu0
        %v3105 = vpop.f32.mrb[0].mxu0
        %3106 = vdwg.mxu0
        %v3107 = vpack.c.bf16 %v2168, %v2168
        %v3108 = vpack.c.bf16 %v2169, %v2169
        %s3109 = scalar_lea.vmem %s5, 1024
        %v3110 = vld [vmem:[%s3109] sm:$0xff]
        %v3111 = vld [vmem:[%s3109 + $0x8] sm:$0xff]
        %v3112 = vld [vmem:[%s3109 + $0x10] sm:$0xff]
        %v3113 = vld [vmem:[%s3109 + $0x18] sm:$0xff]
        %v3114 = vld [vmem:[%s3109 + $0x20] sm:$0xff]
        %v3115 = vld [vmem:[%s3109 + $0x28] sm:$0xff]
        %v3116 = vld [vmem:[%s3109 + $0x30] sm:$0xff]
        %v3117 = vld [vmem:[%s3109 + $0x38] sm:$0xff]
        %v3118 = vld [vmem:[%s3109 + $0x40] sm:$0xff]
        %v3119 = vld [vmem:[%s3109 + $0x48] sm:$0xff]
        %v3120 = vld [vmem:[%s3109 + $0x50] sm:$0xff]
        %v3121 = vld [vmem:[%s3109 + $0x58] sm:$0xff]
        %v3122 = vld [vmem:[%s3109 + $0x60] sm:$0xff]
        %v3123 = vld [vmem:[%s3109 + $0x68] sm:$0xff]
        %v3124 = vld [vmem:[%s3109 + $0x70] sm:$0xff]
        %v3125 = vld [vmem:[%s3109 + $0x78] sm:$0xff]
        %v3126 = vld [vmem:[%s3109 + $0x80] sm:$0xff]
        %v3127 = vld [vmem:[%s3109 + $0x88] sm:$0xff]
        %v3128 = vld [vmem:[%s3109 + $0x90] sm:$0xff]
        %v3129 = vld [vmem:[%s3109 + $0x98] sm:$0xff]
        %v3130 = vld [vmem:[%s3109 + $0xa0] sm:$0xff]
        %v3131 = vld [vmem:[%s3109 + $0xa8] sm:$0xff]
        %v3132 = vld [vmem:[%s3109 + $0xb0] sm:$0xff]
        %v3133 = vld [vmem:[%s3109 + $0xb8] sm:$0xff]
        %v3134 = vld [vmem:[%s3109 + $0xc0] sm:$0xff]
        %v3135 = vld [vmem:[%s3109 + $0xc8] sm:$0xff]
        %v3136 = vld [vmem:[%s3109 + $0xd0] sm:$0xff]
        %v3137 = vld [vmem:[%s3109 + $0xd8] sm:$0xff]
        %v3138 = vld [vmem:[%s3109 + $0xe0] sm:$0xff]
        %v3139 = vld [vmem:[%s3109 + $0xe8] sm:$0xff]
        %v3140 = vld [vmem:[%s3109 + $0xf0] sm:$0xff]
        %v3141 = vld [vmem:[%s3109 + $0xf8] sm:$0xff]
        %v3142 = vld [vmem:[%s3109 + $0x100] sm:$0xff]
        %v3143 = vld [vmem:[%s3109 + $0x108] sm:$0xff]
        %v3144 = vld [vmem:[%s3109 + $0x110] sm:$0xff]
        %v3145 = vld [vmem:[%s3109 + $0x118] sm:$0xff]
        %v3146 = vld [vmem:[%s3109 + $0x120] sm:$0xff]
        %v3147 = vld [vmem:[%s3109 + $0x128] sm:$0xff]
        %v3148 = vld [vmem:[%s3109 + $0x130] sm:$0xff]
        %v3149 = vld [vmem:[%s3109 + $0x138] sm:$0xff]
        %v3150 = vld [vmem:[%s3109 + $0x140] sm:$0xff]
        %v3151 = vld [vmem:[%s3109 + $0x148] sm:$0xff]
        %v3152 = vld [vmem:[%s3109 + $0x150] sm:$0xff]
        %v3153 = vld [vmem:[%s3109 + $0x158] sm:$0xff]
        %v3154 = vld [vmem:[%s3109 + $0x160] sm:$0xff]
        %v3155 = vld [vmem:[%s3109 + $0x168] sm:$0xff]
        %v3156 = vld [vmem:[%s3109 + $0x170] sm:$0xff]
        %v3157 = vld [vmem:[%s3109 + $0x178] sm:$0xff]
        %v3158 = vld [vmem:[%s3109 + $0x180] sm:$0xff]
        %v3159 = vld [vmem:[%s3109 + $0x188] sm:$0xff]
        %v3160 = vld [vmem:[%s3109 + $0x190] sm:$0xff]
        %v3161 = vld [vmem:[%s3109 + $0x198] sm:$0xff]
        %v3162 = vld [vmem:[%s3109 + $0x1a0] sm:$0xff]
        %v3163 = vld [vmem:[%s3109 + $0x1a8] sm:$0xff]
        %v3164 = vld [vmem:[%s3109 + $0x1b0] sm:$0xff]
        %v3165 = vld [vmem:[%s3109 + $0x1b8] sm:$0xff]
        %v3166 = vld [vmem:[%s3109 + $0x1c0] sm:$0xff]
        %v3167 = vld [vmem:[%s3109 + $0x1c8] sm:$0xff]
        %v3168 = vld [vmem:[%s3109 + $0x1d0] sm:$0xff]
        %v3169 = vld [vmem:[%s3109 + $0x1d8] sm:$0xff]
        %v3170 = vld [vmem:[%s3109 + $0x1e0] sm:$0xff]
        %v3171 = vld [vmem:[%s3109 + $0x1e8] sm:$0xff]
        %v3172 = vld [vmem:[%s3109 + $0x1f0] sm:$0xff]
        %v3173 = vld [vmem:[%s3109 + $0x1f8] sm:$0xff]
        %v3238 = vunpack.c.l.b16 %v3110
        %v3239 = vunpack.c.h.b16 %v3110
        %v3240 = vunpack.c.l.b16 %v3111
        %v3241 = vunpack.c.h.b16 %v3111
        %v3242 = vunpack.c.l.b16 %v3112
        %v3243 = vunpack.c.h.b16 %v3112
        %v3244 = vunpack.c.l.b16 %v3113
        %v3245 = vunpack.c.h.b16 %v3113
        %v3246 = vunpack.c.l.b16 %v3114
        %v3247 = vunpack.c.h.b16 %v3114
        %v3248 = vunpack.c.l.b16 %v3115
        %v3249 = vunpack.c.h.b16 %v3115
        %v3250 = vunpack.c.l.b16 %v3116
        %v3251 = vunpack.c.h.b16 %v3116
        %v3252 = vunpack.c.l.b16 %v3117
        %v3253 = vunpack.c.h.b16 %v3117
        %v3254 = vunpack.c.l.b16 %v3118
        %v3255 = vunpack.c.h.b16 %v3118
        %v3256 = vunpack.c.l.b16 %v3119
        %v3257 = vunpack.c.h.b16 %v3119
        %v3258 = vunpack.c.l.b16 %v3120
        %v3259 = vunpack.c.h.b16 %v3120
        %v3260 = vunpack.c.l.b16 %v3121
        %v3261 = vunpack.c.h.b16 %v3121
        %v3262 = vunpack.c.l.b16 %v3122
        %v3263 = vunpack.c.h.b16 %v3122
        %v3264 = vunpack.c.l.b16 %v3123
        %v3265 = vunpack.c.h.b16 %v3123
        %v3266 = vunpack.c.l.b16 %v3124
        %v3267 = vunpack.c.h.b16 %v3124
        %v3268 = vunpack.c.l.b16 %v3125
        %v3269 = vunpack.c.h.b16 %v3125
        %v3270 = vunpack.c.l.b16 %v3126
        %v3271 = vunpack.c.h.b16 %v3126
        %v3272 = vunpack.c.l.b16 %v3127
        %v3273 = vunpack.c.h.b16 %v3127
        %v3274 = vunpack.c.l.b16 %v3128
        %v3275 = vunpack.c.h.b16 %v3128
        %v3276 = vunpack.c.l.b16 %v3129
        %v3277 = vunpack.c.h.b16 %v3129
        %v3278 = vunpack.c.l.b16 %v3130
        %v3279 = vunpack.c.h.b16 %v3130
        %v3280 = vunpack.c.l.b16 %v3131
        %v3281 = vunpack.c.h.b16 %v3131
        %v3282 = vunpack.c.l.b16 %v3132
        %v3283 = vunpack.c.h.b16 %v3132
        %v3284 = vunpack.c.l.b16 %v3133
        %v3285 = vunpack.c.h.b16 %v3133
        %v3286 = vunpack.c.l.b16 %v3134
        %v3287 = vunpack.c.h.b16 %v3134
        %v3288 = vunpack.c.l.b16 %v3135
        %v3289 = vunpack.c.h.b16 %v3135
        %v3290 = vunpack.c.l.b16 %v3136
        %v3291 = vunpack.c.h.b16 %v3136
        %v3292 = vunpack.c.l.b16 %v3137
        %v3293 = vunpack.c.h.b16 %v3137
        %v3294 = vunpack.c.l.b16 %v3138
        %v3295 = vunpack.c.h.b16 %v3138
        %v3296 = vunpack.c.l.b16 %v3139
        %v3297 = vunpack.c.h.b16 %v3139
        %v3298 = vunpack.c.l.b16 %v3140
        %v3299 = vunpack.c.h.b16 %v3140
        %v3300 = vunpack.c.l.b16 %v3141
        %v3301 = vunpack.c.h.b16 %v3141
        %v3302 = vunpack.c.l.b16 %v3142
        %v3303 = vunpack.c.h.b16 %v3142
        %v3304 = vunpack.c.l.b16 %v3143
        %v3305 = vunpack.c.h.b16 %v3143
        %v3306 = vunpack.c.l.b16 %v3144
        %v3307 = vunpack.c.h.b16 %v3144
        %v3308 = vunpack.c.l.b16 %v3145
        %v3309 = vunpack.c.h.b16 %v3145
        %v3310 = vunpack.c.l.b16 %v3146
        %v3311 = vunpack.c.h.b16 %v3146
        %v3312 = vunpack.c.l.b16 %v3147
        %v3313 = vunpack.c.h.b16 %v3147
        %v3314 = vunpack.c.l.b16 %v3148
        %v3315 = vunpack.c.h.b16 %v3148
        %v3316 = vunpack.c.l.b16 %v3149
        %v3317 = vunpack.c.h.b16 %v3149
        %v3318 = vunpack.c.l.b16 %v3150
        %v3319 = vunpack.c.h.b16 %v3150
        %v3320 = vunpack.c.l.b16 %v3151
        %v3321 = vunpack.c.h.b16 %v3151
        %v3322 = vunpack.c.l.b16 %v3152
        %v3323 = vunpack.c.h.b16 %v3152
        %v3324 = vunpack.c.l.b16 %v3153
        %v3325 = vunpack.c.h.b16 %v3153
        %v3326 = vunpack.c.l.b16 %v3154
        %v3327 = vunpack.c.h.b16 %v3154
        %v3328 = vunpack.c.l.b16 %v3155
        %v3329 = vunpack.c.h.b16 %v3155
        %v3330 = vunpack.c.l.b16 %v3156
        %v3331 = vunpack.c.h.b16 %v3156
        %v3332 = vunpack.c.l.b16 %v3157
        %v3333 = vunpack.c.h.b16 %v3157
        %v3334 = vunpack.c.l.b16 %v3158
        %v3335 = vunpack.c.h.b16 %v3158
        %v3336 = vunpack.c.l.b16 %v3159
        %v3337 = vunpack.c.h.b16 %v3159
        %v3338 = vunpack.c.l.b16 %v3160
        %v3339 = vunpack.c.h.b16 %v3160
        %v3340 = vunpack.c.l.b16 %v3161
        %v3341 = vunpack.c.h.b16 %v3161
        %v3342 = vunpack.c.l.b16 %v3162
        %v3343 = vunpack.c.h.b16 %v3162
        %v3344 = vunpack.c.l.b16 %v3163
        %v3345 = vunpack.c.h.b16 %v3163
        %v3346 = vunpack.c.l.b16 %v3164
        %v3347 = vunpack.c.h.b16 %v3164
        %v3348 = vunpack.c.l.b16 %v3165
        %v3349 = vunpack.c.h.b16 %v3165
        %v3350 = vunpack.c.l.b16 %v3166
        %v3351 = vunpack.c.h.b16 %v3166
        %v3352 = vunpack.c.l.b16 %v3167
        %v3353 = vunpack.c.h.b16 %v3167
        %v3354 = vunpack.c.l.b16 %v3168
        %v3355 = vunpack.c.h.b16 %v3168
        %v3356 = vunpack.c.l.b16 %v3169
        %v3357 = vunpack.c.h.b16 %v3169
        %v3358 = vunpack.c.l.b16 %v3170
        %v3359 = vunpack.c.h.b16 %v3170
        %v3360 = vunpack.c.l.b16 %v3171
        %v3361 = vunpack.c.h.b16 %v3171
        %v3362 = vunpack.c.l.b16 %v3172
        %v3363 = vunpack.c.h.b16 %v3172
        %v3364 = vunpack.c.l.b16 %v3173
        %v3365 = vunpack.c.h.b16 %v3173
        %v3366 = vpack.c.b16 %v3242, %v3238
        %v3367 = vpack.c.b16 %v3243, %v3239
        %v3368 = vpack.c.b16 %v3244, %v3240
        %v3369 = vpack.c.b16 %v3245, %v3241
        %v3370 = vpack.c.b16 %v3250, %v3246
        %v3371 = vpack.c.b16 %v3251, %v3247
        %v3372 = vpack.c.b16 %v3252, %v3248
        %v3373 = vpack.c.b16 %v3253, %v3249
        %v3374 = vpack.c.b16 %v3258, %v3254
        %v3375 = vpack.c.b16 %v3259, %v3255
        %v3376 = vpack.c.b16 %v3260, %v3256
        %v3377 = vpack.c.b16 %v3261, %v3257
        %v3378 = vpack.c.b16 %v3266, %v3262
        %v3379 = vpack.c.b16 %v3267, %v3263
        %v3380 = vpack.c.b16 %v3268, %v3264
        %v3381 = vpack.c.b16 %v3269, %v3265
        %v3382 = vpack.c.b16 %v3274, %v3270
        %v3383 = vpack.c.b16 %v3275, %v3271
        %v3384 = vpack.c.b16 %v3276, %v3272
        %v3385 = vpack.c.b16 %v3277, %v3273
        %v3386 = vpack.c.b16 %v3282, %v3278
        %v3387 = vpack.c.b16 %v3283, %v3279
        %v3388 = vpack.c.b16 %v3284, %v3280
        %v3389 = vpack.c.b16 %v3285, %v3281
        %v3390 = vpack.c.b16 %v3290, %v3286
        %v3391 = vpack.c.b16 %v3291, %v3287
        %v3392 = vpack.c.b16 %v3292, %v3288
        %v3393 = vpack.c.b16 %v3293, %v3289
        %v3394 = vpack.c.b16 %v3298, %v3294
        %v3395 = vpack.c.b16 %v3299, %v3295
        %v3396 = vpack.c.b16 %v3300, %v3296
        %v3397 = vpack.c.b16 %v3301, %v3297
        %v3398 = vpack.c.b16 %v3306, %v3302
        %v3399 = vpack.c.b16 %v3307, %v3303
        %v3400 = vpack.c.b16 %v3308, %v3304
        %v3401 = vpack.c.b16 %v3309, %v3305
        %v3402 = vpack.c.b16 %v3314, %v3310
        %v3403 = vpack.c.b16 %v3315, %v3311
        %v3404 = vpack.c.b16 %v3316, %v3312
        %v3405 = vpack.c.b16 %v3317, %v3313
        %v3406 = vpack.c.b16 %v3322, %v3318
        %v3407 = vpack.c.b16 %v3323, %v3319
        %v3408 = vpack.c.b16 %v3324, %v3320
        %v3409 = vpack.c.b16 %v3325, %v3321
        %v3410 = vpack.c.b16 %v3330, %v3326
        %v3411 = vpack.c.b16 %v3331, %v3327
        %v3412 = vpack.c.b16 %v3332, %v3328
        %v3413 = vpack.c.b16 %v3333, %v3329
        %v3414 = vpack.c.b16 %v3338, %v3334
        %v3415 = vpack.c.b16 %v3339, %v3335
        %v3416 = vpack.c.b16 %v3340, %v3336
        %v3417 = vpack.c.b16 %v3341, %v3337
        %v3418 = vpack.c.b16 %v3346, %v3342
        %v3419 = vpack.c.b16 %v3347, %v3343
        %v3420 = vpack.c.b16 %v3348, %v3344
        %v3421 = vpack.c.b16 %v3349, %v3345
        %v3422 = vpack.c.b16 %v3354, %v3350
        %v3423 = vpack.c.b16 %v3355, %v3351
        %v3424 = vpack.c.b16 %v3356, %v3352
        %v3425 = vpack.c.b16 %v3357, %v3353
        %v3426 = vpack.c.b16 %v3362, %v3358
        %v3427 = vpack.c.b16 %v3363, %v3359
        %v3428 = vpack.c.b16 %v3364, %v3360
        %v3429 = vpack.c.b16 %v3365, %v3361
        %3494 = vmatprep.subr.bf16.mxu0 %v3367
        %3495 = vmatpush1.bf16.msra.mxu0 %v3366
        %3496 = vmatprep.subr.bf16.mxu0 %v3371
        %3497 = vmatpush1.bf16.msra.mxu0 %v3370
        %3498 = vmatprep.subr.bf16.mxu0 %v3375
        %3499 = vmatpush1.bf16.msra.mxu0 %v3374
        %3500 = vmatprep.subr.bf16.mxu0 %v3379
        %3501 = vmatpush1.bf16.msra.mxu0 %v3378
        %3502 = vmatprep.subr.bf16.mxu0 %v3383
        %3503 = vmatpush1.bf16.msra.mxu0 %v3382
        %3504 = vmatprep.subr.bf16.mxu0 %v3387
        %3505 = vmatpush1.bf16.msra.mxu0 %v3386
        %3506 = vmatprep.subr.bf16.mxu0 %v3391
        %3507 = vmatpush1.bf16.msra.mxu0 %v3390
        %3508 = vmatprep.subr.bf16.mxu0 %v3395
        %3509 = vmatpush1.bf16.msra.mxu0 %v3394
        %3510 = vmatprep.subr.bf16.mxu0 %v3399
        %3511 = vmatpush1.bf16.msra.mxu0 %v3398
        %3512 = vmatprep.subr.bf16.mxu0 %v3403
        %3513 = vmatpush1.bf16.msra.mxu0 %v3402
        %3514 = vmatprep.subr.bf16.mxu0 %v3407
        %3515 = vmatpush1.bf16.msra.mxu0 %v3406
        %3516 = vmatprep.subr.bf16.mxu0 %v3411
        %3517 = vmatpush1.bf16.msra.mxu0 %v3410
        %3518 = vmatprep.subr.bf16.mxu0 %v3415
        %3519 = vmatpush1.bf16.msra.mxu0 %v3414
        %3520 = vmatprep.subr.bf16.mxu0 %v3419
        %3521 = vmatpush1.bf16.msra.mxu0 %v3418
        %3522 = vmatprep.subr.bf16.mxu0 %v3423
        %3523 = vmatpush1.bf16.msra.mxu0 %v3422
        %3524 = vmatprep.subr.bf16.mxu0 %v3427
        %3525 = vmatpush1.bf16.msra.mxu0 %v3426
        %3526 = vmatprep.mubr.bf16.mxu0 %v3108
        %3527 = vmatmul.mubr.bf16.gmra.mrb[0].mxu0 %v3107
        %v3528 = vpop.f32.mrb[0].mxu0
        %v3529 = vadd.f32 0.0, %v3528
        %v3530 = vpop.f32.mrb[0].mxu0
        %v3531 = vadd.f32 0.0, %v3530
        %v3532 = vpop.f32.mrb[0].mxu0
        %v3533 = vpop.f32.mrb[0].mxu0
        %3534 = vdwg.mxu0
        %3535 = vmatprep.subr.bf16.mxu0 %v3369
        %3536 = vmatpush1.bf16.msra.mxu0 %v3368
        %3537 = vmatprep.subr.bf16.mxu0 %v3373
        %3538 = vmatpush1.bf16.msra.mxu0 %v3372
        %3539 = vmatprep.subr.bf16.mxu0 %v3377
        %3540 = vmatpush1.bf16.msra.mxu0 %v3376
        %3541 = vmatprep.subr.bf16.mxu0 %v3381
        %3542 = vmatpush1.bf16.msra.mxu0 %v3380
        %3543 = vmatprep.subr.bf16.mxu0 %v3385
        %3544 = vmatpush1.bf16.msra.mxu0 %v3384
        %3545 = vmatprep.subr.bf16.mxu0 %v3389
        %3546 = vmatpush1.bf16.msra.mxu0 %v3388
        %3547 = vmatprep.subr.bf16.mxu0 %v3393
        %3548 = vmatpush1.bf16.msra.mxu0 %v3392
        %3549 = vmatprep.subr.bf16.mxu0 %v3397
        %3550 = vmatpush1.bf16.msra.mxu0 %v3396
        %3551 = vmatprep.subr.bf16.mxu0 %v3401
        %3552 = vmatpush1.bf16.msra.mxu0 %v3400
        %3553 = vmatprep.subr.bf16.mxu0 %v3405
        %3554 = vmatpush1.bf16.msra.mxu0 %v3404
        %3555 = vmatprep.subr.bf16.mxu0 %v3409
        %3556 = vmatpush1.bf16.msra.mxu0 %v3408
        %3557 = vmatprep.subr.bf16.mxu0 %v3413
        %3558 = vmatpush1.bf16.msra.mxu0 %v3412
        %3559 = vmatprep.subr.bf16.mxu0 %v3417
        %3560 = vmatpush1.bf16.msra.mxu0 %v3416
        %3561 = vmatprep.subr.bf16.mxu0 %v3421
        %3562 = vmatpush1.bf16.msra.mxu0 %v3420
        %3563 = vmatprep.subr.bf16.mxu0 %v3425
        %3564 = vmatpush1.bf16.msra.mxu0 %v3424
        %3565 = vmatprep.subr.bf16.mxu0 %v3429
        %3566 = vmatpush1.bf16.msra.mxu0 %v3428
        %3567 = vmatprep.mubr.bf16.mxu0 %v3108
        %3568 = vmatmul.mubr.bf16.gmra.mrb[0].mxu0 %v3107
        %v3569 = vpop.f32.mrb[0].mxu0
        %v3570 = vadd.f32 0.0, %v3569
        %v3571 = vpop.f32.mrb[0].mxu0
        %v3572 = vadd.f32 0.0, %v3571
        %v3573 = vpop.f32.mrb[0].mxu0
        %v3574 = vpop.f32.mrb[0].mxu0
        %3575 = vdwg.mxu0
        %v3576 = vadd.f32 %v3060, %v3529
        %v3577 = vadd.f32 %v3062, %v3531
        %v3578 = vadd.f32 %v3101, %v3570
        %v3579 = vadd.f32 %v3103, %v3572
        %v3580 = vld [vmem:[%s6] sm:$0xf]
        %v3582 = vlaneseq
        %v3583 = vshrl.u32 %v3582, 7
        %v3584 = vsub.s32 0, %v3583
        %v3585 = vrot.slane %v3580, %v3584
        %v3586 = vlaneseq
        %v3587 = vshrl.u32 %v3586, 7
        %v3588 = vsub.s32 1, %v3587
        %v3589 = vrot.slane %v3580, %v3588
        %v3590 = vlaneseq
        %v3591 = vshrl.u32 %v3590, 7
        %v3592 = vsub.s32 2, %v3591
        %v3593 = vrot.slane %v3580, %v3592
        %v3594 = vlaneseq
        %v3595 = vshrl.u32 %v3594, 7
        %v3596 = vsub.s32 3, %v3595
        %v3597 = vrot.slane %v3580, %v3596
        %v3602 = vadd.f32 %v3576, %v3585
        %v3603 = vadd.f32 %v3577, %v3589
        %v3604 = vadd.f32 %v3578, %v3593
        %v3605 = vadd.f32 %v3579, %v3597
        %v3606 = vmax.f32 %v3602, 0.0
        %v3607 = vmax.f32 %v3603, 0.0
        %v3608 = vmax.f32 %v3604, 0.0
        %v3609 = vmax.f32 %v3605, 0.0
        %v3610 = vpack.c.bf16 %v3606, %v3606
        %v3611 = vpack.c.bf16 %v3607, %v3607
        %v3612 = vpack.c.bf16 %v3608, %v3608
        %v3613 = vpack.c.bf16 %v3609, %v3609
        %v3614 = vld [vmem:[%s7] sm:$0xf]
        %v3615 = vld [vmem:[%s7 + $0x4] sm:$0xf]
        %v3616 = vld [vmem:[%s7 + $0x8] sm:$0xf]
        %v3617 = vld [vmem:[%s7 + $0xc] sm:$0xf]
        %v3618 = vld [vmem:[%s7 + $0x10] sm:$0xf]
        %v3619 = vld [vmem:[%s7 + $0x14] sm:$0xf]
        %v3620 = vld [vmem:[%s7 + $0x18] sm:$0xf]
        %v3621 = vld [vmem:[%s7 + $0x1c] sm:$0xf]
        %v3622 = vld [vmem:[%s7 + $0x20] sm:$0xf]
        %v3623 = vld [vmem:[%s7 + $0x24] sm:$0xf]
        %v3624 = vld [vmem:[%s7 + $0x28] sm:$0xf]
        %v3625 = vld [vmem:[%s7 + $0x2c] sm:$0xf]
        %v3626 = vld [vmem:[%s7 + $0x30] sm:$0xf]
        %v3627 = vld [vmem:[%s7 + $0x34] sm:$0xf]
        %v3628 = vld [vmem:[%s7 + $0x38] sm:$0xf]
        %v3629 = vld [vmem:[%s7 + $0x3c] sm:$0xf]
        %v3630 = vld [vmem:[%s7 + $0x40] sm:$0xf]
        %v3631 = vld [vmem:[%s7 + $0x44] sm:$0xf]
        %v3632 = vld [vmem:[%s7 + $0x48] sm:$0xf]
        %v3633 = vld [vmem:[%s7 + $0x4c] sm:$0xf]
        %v3634 = vld [vmem:[%s7 + $0x50] sm:$0xf]
        %v3635 = vld [vmem:[%s7 + $0x54] sm:$0xf]
        %v3636 = vld [vmem:[%s7 + $0x58] sm:$0xf]
        %v3637 = vld [vmem:[%s7 + $0x5c] sm:$0xf]
        %v3638 = vld [vmem:[%s7 + $0x60] sm:$0xf]
        %v3639 = vld [vmem:[%s7 + $0x64] sm:$0xf]
        %v3640 = vld [vmem:[%s7 + $0x68] sm:$0xf]
        %v3641 = vld [vmem:[%s7 + $0x6c] sm:$0xf]
        %v3642 = vld [vmem:[%s7 + $0x70] sm:$0xf]
        %v3643 = vld [vmem:[%s7 + $0x74] sm:$0xf]
        %v3644 = vld [vmem:[%s7 + $0x78] sm:$0xf]
        %v3645 = vld [vmem:[%s7 + $0x7c] sm:$0xf]
        %v3646 = vld [vmem:[%s7 + $0x80] sm:$0xf]
        %v3647 = vld [vmem:[%s7 + $0x84] sm:$0xf]
        %v3648 = vld [vmem:[%s7 + $0x88] sm:$0xf]
        %v3649 = vld [vmem:[%s7 + $0x8c] sm:$0xf]
        %v3650 = vld [vmem:[%s7 + $0x90] sm:$0xf]
        %v3651 = vld [vmem:[%s7 + $0x94] sm:$0xf]
        %v3652 = vld [vmem:[%s7 + $0x98] sm:$0xf]
        %v3653 = vld [vmem:[%s7 + $0x9c] sm:$0xf]
        %v3654 = vld [vmem:[%s7 + $0xa0] sm:$0xf]
        %v3655 = vld [vmem:[%s7 + $0xa4] sm:$0xf]
        %v3656 = vld [vmem:[%s7 + $0xa8] sm:$0xf]
        %v3657 = vld [vmem:[%s7 + $0xac] sm:$0xf]
        %v3658 = vld [vmem:[%s7 + $0xb0] sm:$0xf]
        %v3659 = vld [vmem:[%s7 + $0xb4] sm:$0xf]
        %v3660 = vld [vmem:[%s7 + $0xb8] sm:$0xf]
        %v3661 = vld [vmem:[%s7 + $0xbc] sm:$0xf]
        %v3662 = vld [vmem:[%s7 + $0xc0] sm:$0xf]
        %v3663 = vld [vmem:[%s7 + $0xc4] sm:$0xf]
        %v3664 = vld [vmem:[%s7 + $0xc8] sm:$0xf]
        %v3665 = vld [vmem:[%s7 + $0xcc] sm:$0xf]
        %v3666 = vld [vmem:[%s7 + $0xd0] sm:$0xf]
        %v3667 = vld [vmem:[%s7 + $0xd4] sm:$0xf]
        %v3668 = vld [vmem:[%s7 + $0xd8] sm:$0xf]
        %v3669 = vld [vmem:[%s7 + $0xdc] sm:$0xf]
        %v3670 = vld [vmem:[%s7 + $0xe0] sm:$0xf]
        %v3671 = vld [vmem:[%s7 + $0xe4] sm:$0xf]
        %v3672 = vld [vmem:[%s7 + $0xe8] sm:$0xf]
        %v3673 = vld [vmem:[%s7 + $0xec] sm:$0xf]
        %v3674 = vld [vmem:[%s7 + $0xf0] sm:$0xf]
        %v3675 = vld [vmem:[%s7 + $0xf4] sm:$0xf]
        %v3676 = vld [vmem:[%s7 + $0xf8] sm:$0xf]
        %v3677 = vld [vmem:[%s7 + $0xfc] sm:$0xf]
        %v3678 = vld [vmem:[%s8] sm:$0xff]
        %v3743 = vunpack.c.l.b16 %v3614
        %v3744 = vunpack.c.l.b16 %v3615
        %v3745 = vunpack.c.l.b16 %v3616
        %v3746 = vunpack.c.l.b16 %v3617
        %v3747 = vunpack.c.l.b16 %v3618
        %v3748 = vunpack.c.l.b16 %v3619
        %v3749 = vunpack.c.l.b16 %v3620
        %v3750 = vunpack.c.l.b16 %v3621
        %v3751 = vunpack.c.l.b16 %v3622
        %v3752 = vunpack.c.l.b16 %v3623
        %v3753 = vunpack.c.l.b16 %v3624
        %v3754 = vunpack.c.l.b16 %v3625
        %v3755 = vunpack.c.l.b16 %v3626
        %v3756 = vunpack.c.l.b16 %v3627
        %v3757 = vunpack.c.l.b16 %v3628
        %v3758 = vunpack.c.l.b16 %v3629
        %v3759 = vunpack.c.l.b16 %v3630
        %v3760 = vunpack.c.l.b16 %v3631
        %v3761 = vunpack.c.l.b16 %v3632
        %v3762 = vunpack.c.l.b16 %v3633
        %v3763 = vunpack.c.l.b16 %v3634
        %v3764 = vunpack.c.l.b16 %v3635
        %v3765 = vunpack.c.l.b16 %v3636
        %v3766 = vunpack.c.l.b16 %v3637
        %v3767 = vunpack.c.l.b16 %v3638
        %v3768 = vunpack.c.l.b16 %v3639
        %v3769 = vunpack.c.l.b16 %v3640
        %v3770 = vunpack.c.l.b16 %v3641
        %v3771 = vunpack.c.l.b16 %v3642
        %v3772 = vunpack.c.l.b16 %v3643
        %v3773 = vunpack.c.l.b16 %v3644
        %v3774 = vunpack.c.l.b16 %v3645
        %v3775 = vunpack.c.l.b16 %v3646
        %v3776 = vunpack.c.l.b16 %v3647
        %v3777 = vunpack.c.l.b16 %v3648
        %v3778 = vunpack.c.l.b16 %v3649
        %v3779 = vunpack.c.l.b16 %v3650
        %v3780 = vunpack.c.l.b16 %v3651
        %v3781 = vunpack.c.l.b16 %v3652
        %v3782 = vunpack.c.l.b16 %v3653
        %v3783 = vunpack.c.l.b16 %v3654
        %v3784 = vunpack.c.l.b16 %v3655
        %v3785 = vunpack.c.l.b16 %v3656
        %v3786 = vunpack.c.l.b16 %v3657
        %v3787 = vunpack.c.l.b16 %v3658
        %v3788 = vunpack.c.l.b16 %v3659
        %v3789 = vunpack.c.l.b16 %v3660
        %v3790 = vunpack.c.l.b16 %v3661
        %v3791 = vunpack.c.l.b16 %v3662
        %v3792 = vunpack.c.l.b16 %v3663
        %v3793 = vunpack.c.l.b16 %v3664
        %v3794 = vunpack.c.l.b16 %v3665
        %v3795 = vunpack.c.l.b16 %v3666
        %v3796 = vunpack.c.l.b16 %v3667
        %v3797 = vunpack.c.l.b16 %v3668
        %v3798 = vunpack.c.l.b16 %v3669
        %v3799 = vunpack.c.l.b16 %v3670
        %v3800 = vunpack.c.l.b16 %v3671
        %v3801 = vunpack.c.l.b16 %v3672
        %v3802 = vunpack.c.l.b16 %v3673
        %v3803 = vunpack.c.l.b16 %v3674
        %v3804 = vunpack.c.l.b16 %v3675
        %v3805 = vunpack.c.l.b16 %v3676
        %v3806 = vunpack.c.l.b16 %v3677
        %v3807 = vpack.c.b16 %v3744, %v3743
        %v3808 = vpack.c.b16 %v3746, %v3745
        %v3809 = vpack.c.b16 %v3748, %v3747
        %v3810 = vpack.c.b16 %v3750, %v3749
        %v3811 = vpack.c.b16 %v3752, %v3751
        %v3812 = vpack.c.b16 %v3754, %v3753
        %v3813 = vpack.c.b16 %v3756, %v3755
        %v3814 = vpack.c.b16 %v3758, %v3757
        %v3815 = vpack.c.b16 %v3760, %v3759
        %v3816 = vpack.c.b16 %v3762, %v3761
        %v3817 = vpack.c.b16 %v3764, %v3763
        %v3818 = vpack.c.b16 %v3766, %v3765
        %v3819 = vpack.c.b16 %v3768, %v3767
        %v3820 = vpack.c.b16 %v3770, %v3769
        %v3821 = vpack.c.b16 %v3772, %v3771
        %v3822 = vpack.c.b16 %v3774, %v3773
        %v3823 = vpack.c.b16 %v3776, %v3775
        %v3824 = vpack.c.b16 %v3778, %v3777
        %v3825 = vpack.c.b16 %v3780, %v3779
        %v3826 = vpack.c.b16 %v3782, %v3781
        %v3827 = vpack.c.b16 %v3784, %v3783
        %v3828 = vpack.c.b16 %v3786, %v3785
        %v3829 = vpack.c.b16 %v3788, %v3787
        %v3830 = vpack.c.b16 %v3790, %v3789
        %v3831 = vpack.c.b16 %v3792, %v3791
        %v3832 = vpack.c.b16 %v3794, %v3793
        %v3833 = vpack.c.b16 %v3796, %v3795
        %v3834 = vpack.c.b16 %v3798, %v3797
        %v3835 = vpack.c.b16 %v3800, %v3799
        %v3836 = vpack.c.b16 %v3802, %v3801
        %v3837 = vpack.c.b16 %v3804, %v3803
        %v3838 = vpack.c.b16 %v3806, %v3805
        %3871 = vmatprep.subr.bf16.mxu0 0
        %3872 = vmatpush1.bf16.msra.mxu0 %v3807
        %3873 = vmatprep.subr.bf16.mxu0 0
        %3874 = vmatpush1.bf16.msra.mxu0 %v3808
        %3875 = vmatprep.subr.bf16.mxu0 0
        %3876 = vmatpush1.bf16.msra.mxu0 %v3809
        %3877 = vmatprep.subr.bf16.mxu0 0
        %3878 = vmatpush1.bf16.msra.mxu0 %v3810
        %3879 = vmatprep.subr.bf16.mxu0 0
        %3880 = vmatpush1.bf16.msra.mxu0 %v3811
        %3881 = vmatprep.subr.bf16.mxu0 0
        %3882 = vmatpush1.bf16.msra.mxu0 %v3812
        %3883 = vmatprep.subr.bf16.mxu0 0
        %3884 = vmatpush1.bf16.msra.mxu0 %v3813
        %3885 = vmatprep.subr.bf16.mxu0 0
        %3886 = vmatpush1.bf16.msra.mxu0 %v3814
        %3887 = vmatprep.subr.bf16.mxu0 0
        %3888 = vmatpush1.bf16.msra.mxu0 %v3815
        %3889 = vmatprep.subr.bf16.mxu0 0
        %3890 = vmatpush1.bf16.msra.mxu0 %v3816
        %3891 = vmatprep.subr.bf16.mxu0 0
        %3892 = vmatpush1.bf16.msra.mxu0 %v3817
        %3893 = vmatprep.subr.bf16.mxu0 0
        %3894 = vmatpush1.bf16.msra.mxu0 %v3818
        %3895 = vmatprep.subr.bf16.mxu0 0
        %3896 = vmatpush1.bf16.msra.mxu0 %v3819
        %3897 = vmatprep.subr.bf16.mxu0 0
        %3898 = vmatpush1.bf16.msra.mxu0 %v3820
        %3899 = vmatprep.subr.bf16.mxu0 0
        %3900 = vmatpush1.bf16.msra.mxu0 %v3821
        %3901 = vmatprep.subr.bf16.mxu0 0
        %3902 = vmatpush1.bf16.msra.mxu0 %v3822
        %3903 = vmatprep.mubr.bf16.mxu0 %v3611
        %3904 = vmatmul.mubr.bf16.gmra.mrb[0].mxu0 %v3610
        %v3905 = vpop.f32.mrb[0].mxu0
        %v3906 = vadd.f32 %v3678, %v3905
        %v3907 = vpop.f32.mrb[0].mxu0
        %v3908 = vpop.f32.mrb[0].mxu0
        %v3909 = vpop.f32.mrb[0].mxu0
        %3910 = vdwg.mxu0
        %3911 = vmatprep.subr.bf16.mxu0 0
        %3912 = vmatpush1.bf16.msra.mxu0 %v3823
        %3913 = vmatprep.subr.bf16.mxu0 0
        %3914 = vmatpush1.bf16.msra.mxu0 %v3824
        %3915 = vmatprep.subr.bf16.mxu0 0
        %3916 = vmatpush1.bf16.msra.mxu0 %v3825
        %3917 = vmatprep.subr.bf16.mxu0 0
        %3918 = vmatpush1.bf16.msra.mxu0 %v3826
        %3919 = vmatprep.subr.bf16.mxu0 0
        %3920 = vmatpush1.bf16.msra.mxu0 %v3827
        %3921 = vmatprep.subr.bf16.mxu0 0
        %3922 = vmatpush1.bf16.msra.mxu0 %v3828
        %3923 = vmatprep.subr.bf16.mxu0 0
        %3924 = vmatpush1.bf16.msra.mxu0 %v3829
        %3925 = vmatprep.subr.bf16.mxu0 0
        %3926 = vmatpush1.bf16.msra.mxu0 %v3830
        %3927 = vmatprep.subr.bf16.mxu0 0
        %3928 = vmatpush1.bf16.msra.mxu0 %v3831
        %3929 = vmatprep.subr.bf16.mxu0 0
        %3930 = vmatpush1.bf16.msra.mxu0 %v3832
        %3931 = vmatprep.subr.bf16.mxu0 0
        %3932 = vmatpush1.bf16.msra.mxu0 %v3833
        %3933 = vmatprep.subr.bf16.mxu0 0
        %3934 = vmatpush1.bf16.msra.mxu0 %v3834
        %3935 = vmatprep.subr.bf16.mxu0 0
        %3936 = vmatpush1.bf16.msra.mxu0 %v3835
        %3937 = vmatprep.subr.bf16.mxu0 0
        %3938 = vmatpush1.bf16.msra.mxu0 %v3836
        %3939 = vmatprep.subr.bf16.mxu0 0
        %3940 = vmatpush1.bf16.msra.mxu0 %v3837
        %3941 = vmatprep.subr.bf16.mxu0 0
        %3942 = vmatpush1.bf16.msra.mxu0 %v3838
        %3943 = vmatprep.mubr.bf16.mxu0 %v3613
        %3944 = vmatmul.mubr.bf16.gmra.mrb[0].mxu0 %v3612
        %v3945 = vpop.f32.mrb[0].mxu0
        %v3946 = vadd.f32 %v3906, %v3945
        %v3947 = vpop.f32.mrb[0].mxu0
        %v3948 = vpop.f32.mrb[0].mxu0
        %v3949 = vpop.f32.mrb[0].mxu0
        %3950 = vdwg.mxu0
        %v3951 = vlaneseq
        %v3952 = vand.u32 %v3951, 127
        %v3953 = vpack.c.bf16 %v3946, %v3946
        %v3954 = vld [vmem:[%s9] sm:$0xff]
        %v3955 = vld [vmem:[%s9 + $0x8] sm:$0xf]
        %v3956 = vld [vmem:[%s9 + $0xc] sm:$0xff]
        %v3957 = vld [vmem:[%s9 + $0x14] sm:$0xf]
        %v3958 = vld [vmem:[%s9 + $0x18] sm:$0xff]
        %v3959 = vld [vmem:[%s9 + $0x20] sm:$0xf]
        %v3960 = vld [vmem:[%s9 + $0x24] sm:$0xff]
        %v3961 = vld [vmem:[%s9 + $0x2c] sm:$0xf]
        %v3962 = vld [vmem:[%s9 + $0x30] sm:$0xff]
        %v3963 = vld [vmem:[%s9 + $0x38] sm:$0xf]
        %v3964 = vld [vmem:[%s9 + $0x3c] sm:$0xff]
        %v3965 = vld [vmem:[%s9 + $0x44] sm:$0xf]
        %v3966 = vld [vmem:[%s9 + $0x48] sm:$0xff]
        %v3967 = vld [vmem:[%s9 + $0x50] sm:$0xf]
        %v3968 = vld [vmem:[%s9 + $0x54] sm:$0xff]
        %v3969 = vld [vmem:[%s9 + $0x5c] sm:$0xf]
        %v3970 = vld [vmem:[%s9 + $0x60] sm:$0xff]
        %v3971 = vld [vmem:[%s9 + $0x68] sm:$0xf]
        %v3972 = vld [vmem:[%s9 + $0x6c] sm:$0xff]
        %v3973 = vld [vmem:[%s9 + $0x74] sm:$0xf]
        %v3974 = vld [vmem:[%s9 + $0x78] sm:$0xff]
        %v3975 = vld [vmem:[%s9 + $0x80] sm:$0xf]
        %v3976 = vld [vmem:[%s9 + $0x84] sm:$0xff]
        %v3977 = vld [vmem:[%s9 + $0x8c] sm:$0xf]
        %v3978 = vld [vmem:[%s9 + $0x90] sm:$0xff]
        %v3979 = vld [vmem:[%s9 + $0x98] sm:$0xf]
        %v3980 = vld [vmem:[%s9 + $0x9c] sm:$0xff]
        %v3981 = vld [vmem:[%s9 + $0xa4] sm:$0xf]
        %v3982 = vld [vmem:[%s9 + $0xa8] sm:$0xff]
        %v3983 = vld [vmem:[%s9 + $0xb0] sm:$0xf]
        %v3984 = vld [vmem:[%s9 + $0xb4] sm:$0xff]
        %v3985 = vld [vmem:[%s9 + $0xbc] sm:$0xf]
        %v3986 = vld [vmem:[%s10] sm:$0x7]
        %v3988 = vlaneseq
        %v3989 = vshrl.u32 %v3988, 7
        %v3990 = vsub.s32 0, %v3989
        %v3991 = vrot.slane %v3986, %v3990
        %v3992 = vlaneseq
        %v3993 = vshrl.u32 %v3992, 7
        %v3994 = vsub.s32 1, %v3993
        %v3995 = vrot.slane %v3986, %v3994
        %v3996 = vlaneseq
        %v3997 = vshrl.u32 %v3996, 7
        %v3998 = vsub.s32 2, %v3997
        %v3999 = vrot.slane %v3986, %v3998
        %v4035 = vunpack.c.l.b16 %v3954
        %v4036 = vunpack.c.h.b16 %v3954
        %v4037 = vunpack.c.l.b16 %v3955
        %v4038 = vunpack.c.l.b16 %v3956
        %v4039 = vunpack.c.h.b16 %v3956
        %v4040 = vunpack.c.l.b16 %v3957
        %v4041 = vunpack.c.l.b16 %v3958
        %v4042 = vunpack.c.h.b16 %v3958
        %v4043 = vunpack.c.l.b16 %v3959
        %v4044 = vunpack.c.l.b16 %v3960
        %v4045 = vunpack.c.h.b16 %v3960
        %v4046 = vunpack.c.l.b16 %v3961
        %v4047 = vunpack.c.l.b16 %v3962
        %v4048 = vunpack.c.h.b16 %v3962
        %v4049 = vunpack.c.l.b16 %v3963
        %v4050 = vunpack.c.l.b16 %v3964
        %v4051 = vunpack.c.h.b16 %v3964
        %v4052 = vunpack.c.l.b16 %v3965
        %v4053 = vunpack.c.l.b16 %v3966
        %v4054 = vunpack.c.h.b16 %v3966
        %v4055 = vunpack.c.l.b16 %v3967
        %v4056 = vunpack.c.l.b16 %v3968
        %v4057 = vunpack.c.h.b16 %v3968
        %v4058 = vunpack.c.l.b16 %v3969
        %v4059 = vunpack.c.l.b16 %v3970
        %v4060 = vunpack.c.h.b16 %v3970
        %v4061 = vunpack.c.l.b16 %v3971
        %v4062 = vunpack.c.l.b16 %v3972
        %v4063 = vunpack.c.h.b16 %v3972
        %v4064 = vunpack.c.l.b16 %v3973
        %v4065 = vunpack.c.l.b16 %v3974
        %v4066 = vunpack.c.h.b16 %v3974
        %v4067 = vunpack.c.l.b16 %v3975
        %v4068 = vunpack.c.l.b16 %v3976
        %v4069 = vunpack.c.h.b16 %v3976
        %v4070 = vunpack.c.l.b16 %v3977
        %v4071 = vunpack.c.l.b16 %v3978
        %v4072 = vunpack.c.h.b16 %v3978
        %v4073 = vunpack.c.l.b16 %v3979
        %v4074 = vunpack.c.l.b16 %v3980
        %v4075 = vunpack.c.h.b16 %v3980
        %v4076 = vunpack.c.l.b16 %v3981
        %v4077 = vunpack.c.l.b16 %v3982
        %v4078 = vunpack.c.h.b16 %v3982
        %v4079 = vunpack.c.l.b16 %v3983
        %v4080 = vunpack.c.l.b16 %v3984
        %v4081 = vunpack.c.h.b16 %v3984
        %v4082 = vunpack.c.l.b16 %v3985
        %v4083 = vpack.c.b16 %v4038, %v4035
        %v4084 = vpack.c.b16 %v4039, %v4036
        %v4085 = vpack.c.b16 %v4040, %v4037
        %v4086 = vpack.c.b16 %v4044, %v4041
        %v4087 = vpack.c.b16 %v4045, %v4042
        %v4088 = vpack.c.b16 %v4046, %v4043
        %v4089 = vpack.c.b16 %v4050, %v4047
        %v4090 = vpack.c.b16 %v4051, %v4048
        %v4091 = vpack.c.b16 %v4052, %v4049
        %v4092 = vpack.c.b16 %v4056, %v4053
        %v4093 = vpack.c.b16 %v4057, %v4054
        %v4094 = vpack.c.b16 %v4058, %v4055
        %v4095 = vpack.c.b16 %v4062, %v4059
        %v4096 = vpack.c.b16 %v4063, %v4060
        %v4097 = vpack.c.b16 %v4064, %v4061
        %v4098 = vpack.c.b16 %v4068, %v4065
        %v4099 = vpack.c.b16 %v4069, %v4066
        %v4100 = vpack.c.b16 %v4070, %v4067
        %v4101 = vpack.c.b16 %v4074, %v4071
        %v4102 = vpack.c.b16 %v4075, %v4072
        %v4103 = vpack.c.b16 %v4076, %v4073
        %v4104 = vpack.c.b16 %v4080, %v4077
        %v4105 = vpack.c.b16 %v4081, %v4078
        %v4106 = vpack.c.b16 %v4082, %v4079
        %4131 = vmatprep.subr.bf16.mxu0 %v4084
        %4132 = vmatpush1.bf16.msra.mxu0 %v4083
        %4133 = vmatprep.subr.bf16.mxu0 %v4087
        %4134 = vmatpush1.bf16.msra.mxu0 %v4086
        %4135 = vmatprep.subr.bf16.mxu0 %v4090
        %4136 = vmatpush1.bf16.msra.mxu0 %v4089
        %4137 = vmatprep.subr.bf16.mxu0 %v4093
        %4138 = vmatpush1.bf16.msra.mxu0 %v4092
        %4139 = vmatprep.subr.bf16.mxu0 %v4096
        %4140 = vmatpush1.bf16.msra.mxu0 %v4095
        %4141 = vmatprep.subr.bf16.mxu0 %v4099
        %4142 = vmatpush1.bf16.msra.mxu0 %v4098
        %4143 = vmatprep.subr.bf16.mxu0 %v4102
        %4144 = vmatpush1.bf16.msra.mxu0 %v4101
        %4145 = vmatprep.subr.bf16.mxu0 %v4105
        %4146 = vmatpush1.bf16.msra.mxu0 %v4104
        %4147 = vmatprep.subr.bf16.mxu0 0
        %4148 = vmatpush1.bf16.msra.mxu0 0
        %4149 = vmatprep.subr.bf16.mxu0 0
        %4150 = vmatpush1.bf16.msra.mxu0 0
        %4151 = vmatprep.subr.bf16.mxu0 0
        %4152 = vmatpush1.bf16.msra.mxu0 0
        %4153 = vmatprep.subr.bf16.mxu0 0
        %4154 = vmatpush1.bf16.msra.mxu0 0
        %4155 = vmatprep.subr.bf16.mxu0 0
        %4156 = vmatpush1.bf16.msra.mxu0 0
        %4157 = vmatprep.subr.bf16.mxu0 0
        %4158 = vmatpush1.bf16.msra.mxu0 0
        %4159 = vmatprep.subr.bf16.mxu0 0
        %4160 = vmatpush1.bf16.msra.mxu0 0
        %4161 = vmatprep.subr.bf16.mxu0 0
        %4162 = vmatpush1.bf16.msra.mxu0 0
        %4163 = vmatprep.mubr.bf16.mxu0 0
        %4164 = vmatmul.mubr.bf16.gmra.mrb[0].mxu0 %v3953
        %v4165 = vpop.f32.mrb[0].mxu0
        %v4166 = vadd.f32 %v3991, %v4165
        %v4167 = vpop.f32.mrb[0].mxu0
        %v4168 = vadd.f32 %v3995, %v4167
        %v4169 = vpop.f32.mrb[0].mxu0
        %v4170 = vpop.f32.mrb[0].mxu0
        %4171 = vdwg.mxu0
        %4172 = vmatprep.subr.bf16.mxu0 0
        %4173 = vmatpush1.bf16.msra.mxu0 %v4085
        %4174 = vmatprep.subr.bf16.mxu0 0
        %4175 = vmatpush1.bf16.msra.mxu0 %v4088
        %4176 = vmatprep.subr.bf16.mxu0 0
        %4177 = vmatpush1.bf16.msra.mxu0 %v4091
        %4178 = vmatprep.subr.bf16.mxu0 0
        %4179 = vmatpush1.bf16.msra.mxu0 %v4094
        %4180 = vmatprep.subr.bf16.mxu0 0
        %4181 = vmatpush1.bf16.msra.mxu0 %v4097
        %4182 = vmatprep.subr.bf16.mxu0 0
        %4183 = vmatpush1.bf16.msra.mxu0 %v4100
        %4184 = vmatprep.subr.bf16.mxu0 0
        %4185 = vmatpush1.bf16.msra.mxu0 %v4103
        %4186 = vmatprep.subr.bf16.mxu0 0
        %4187 = vmatpush1.bf16.msra.mxu0 %v4106
        %4188 = vmatprep.subr.bf16.mxu0 0
        %4189 = vmatpush1.bf16.msra.mxu0 0
        %4190 = vmatprep.subr.bf16.mxu0 0
        %4191 = vmatpush1.bf16.msra.mxu0 0
        %4192 = vmatprep.subr.bf16.mxu0 0
        %4193 = vmatpush1.bf16.msra.mxu0 0
        %4194 = vmatprep.subr.bf16.mxu0 0
        %4195 = vmatpush1.bf16.msra.mxu0 0
        %4196 = vmatprep.subr.bf16.mxu0 0
        %4197 = vmatpush1.bf16.msra.mxu0 0
        %4198 = vmatprep.subr.bf16.mxu0 0
        %4199 = vmatpush1.bf16.msra.mxu0 0
        %4200 = vmatprep.subr.bf16.mxu0 0
        %4201 = vmatpush1.bf16.msra.mxu0 0
        %4202 = vmatprep.subr.bf16.mxu0 0
        %4203 = vmatpush1.bf16.msra.mxu0 0
        %4204 = vmatprep.mubr.bf16.mxu0 0
        %4205 = vmatmul.mubr.bf16.gmra.mrb[0].mxu0 %v3953
        %v4206 = vpop.f32.mrb[0].mxu0
        %v4207 = vadd.f32 %v3999, %v4206
        %v4208 = vpop.f32.mrb[0].mxu0
        %v4209 = vpop.f32.mrb[0].mxu0
        %v4210 = vpop.f32.mrb[0].mxu0
        %4211 = vdwg.mxu0
        %v4212 = vmul.f32 %v4168, 0.17677669
        %v4213 = vpack.c.bf16 %v4212, %v4212
        %vm4214 = vcmp.ge.s32.totalorder %v3952, 0
        %vm4215 = vcmp.lt.s32.totalorder %v3952, 32
        %vm4216 = vmand %vm4214, %vm4215
        %v4217 = vsel %vm4216, %v4166, 0.0
        %v4218 = vpack.c.bf16 %v4217, %v4217
        %4219 = vmatprep.subr.bf16.mxu0 0
        %4220 = vmatpush1.bf16.xpose.msra.mxu0 %v4213
        %4221 = vmatprep.subr.bf16.mxu0 0
        %4222 = vmatpush1.bf16.xpose.msra.mxu0 0
        %4223 = vmatprep.subr.bf16.mxu0 0
        %4224 = vmatpush1.bf16.xpose.msra.mxu0 0
        %4225 = vmatprep.subr.bf16.mxu0 0
        %4226 = vmatpush1.bf16.xpose.msra.mxu0 0
        %4227 = vmatprep.subr.bf16.mxu0 0
        %4228 = vmatpush1.bf16.xpose.msra.mxu0 0
        %4229 = vmatprep.subr.bf16.mxu0 0
        %4230 = vmatpush1.bf16.xpose.msra.mxu0 0
        %4231 = vmatprep.subr.bf16.mxu0 0
        %4232 = vmatpush1.bf16.xpose.msra.mxu0 0
        %4233 = vmatprep.subr.bf16.mxu0 0
        %4234 = vmatpush1.bf16.xpose.msra.mxu0 0
        %4235 = vmatprep.subr.bf16.mxu0 0
        %4236 = vmatpush1.bf16.xpose.msra.mxu0 0
        %4237 = vmatprep.subr.bf16.mxu0 0
        %4238 = vmatpush1.bf16.xpose.msra.mxu0 0
        %4239 = vmatprep.subr.bf16.mxu0 0
        %4240 = vmatpush1.bf16.xpose.msra.mxu0 0
        %4241 = vmatprep.subr.bf16.mxu0 0
        %4242 = vmatpush1.bf16.xpose.msra.mxu0 0
        %4243 = vmatprep.subr.bf16.mxu0 0
        %4244 = vmatpush1.bf16.xpose.msra.mxu0 0
        %4245 = vmatprep.subr.bf16.mxu0 0
        %4246 = vmatpush1.bf16.xpose.msra.mxu0 0
        %4247 = vmatprep.subr.bf16.mxu0 0
        %4248 = vmatpush1.bf16.xpose.msra.mxu0 0
        %4249 = vmatprep.subr.bf16.mxu0 0
        %4250 = vmatpush1.bf16.xpose.msra.mxu0 0
        %4251 = vmatprep.mubr.bf16.mxu0 0
        %4252 = vmatmul.mubr.bf16.gmra.mrb[0].mxu0 %v4218
        %v4253 = vpop.f32.mrb[0].mxu0
        %v4254 = vadd.f32 0.0, %v4253
        %v4255 = vpop.f32.mrb[0].mxu0
        %v4256 = vpop.f32.mrb[0].mxu0
        %v4257 = vpop.f32.mrb[0].mxu0
        %4258 = vdwg.mxu0
        %v4259 = vsel %vm1979, %v4254, -inf
        %4260 = vmax.xlane.f32.xlu0 %v4259
        %v4261 = vpop.xlane.xlu0 %4260
        %v4262 = vsub.f32 %v4254, %v4261
        %v4263 = vmul.f32 %v4262, 1.442695
        %v4264 = vpow.pop %v4263
        %v4265 = vsel %vm1979, %v4264, 0.0
        %4266 = vadd.xlane.f32.xlu0 %v4265
        %v4267 = vpop.xlane.xlu0 %4266
        %v4268 = vrcp.pop %v4267
        %v4269 = vmul.f32 %v4264, %v4268
        %v4270 = vsel %vm4216, %v4207, 0.0
        %v4271 = vpack.c.bf16 %v4270, %v4270
        %v4272 = vpack.c.bf16 %v4269, %v4269
        %vm4273 = vcmp.ge.s32.totalorder %v3952, 32
        %vm4274 = vcmp.lt.s32.totalorder %v3952, 64
        %vm4275 = vmand %vm4273, %vm4274
        %v4276 = vsel %vm4275, %v4166, 0.0
        %v4277 = vpack.c.bf16 %v4276, %v4276
        %4278 = vmatprep.subr.bf16.mxu0 0
        %4279 = vmatpush1.bf16.xpose.msra.mxu0 %v4213
        %4280 = vmatprep.subr.bf16.mxu0 0
        %4281 = vmatpush1.bf16.xpose.msra.mxu0 0
        %4282 = vmatprep.subr.bf16.mxu0 0
        %4283 = vmatpush1.bf16.xpose.msra.mxu0 0
        %4284 = vmatprep.subr.bf16.mxu0 0
        %4285 = vmatpush1.bf16.xpose.msra.mxu0 0
        %4286 = vmatprep.subr.bf16.mxu0 0
        %4287 = vmatpush1.bf16.xpose.msra.mxu0 0
        %4288 = vmatprep.subr.bf16.mxu0 0
        %4289 = vmatpush1.bf16.xpose.msra.mxu0 0
        %4290 = vmatprep.subr.bf16.mxu0 0
        %4291 = vmatpush1.bf16.xpose.msra.mxu0 0
        %4292 = vmatprep.subr.bf16.mxu0 0
        %4293 = vmatpush1.bf16.xpose.msra.mxu0 0
        %4294 = vmatprep.subr.bf16.mxu0 0
        %4295 = vmatpush1.bf16.xpose.msra.mxu0 0
        %4296 = vmatprep.subr.bf16.mxu0 0
        %4297 = vmatpush1.bf16.xpose.msra.mxu0 0
        %4298 = vmatprep.subr.bf16.mxu0 0
        %4299 = vmatpush1.bf16.xpose.msra.mxu0 0
        %4300 = vmatprep.subr.bf16.mxu0 0
        %4301 = vmatpush1.bf16.xpose.msra.mxu0 0
        %4302 = vmatprep.subr.bf16.mxu0 0
        %4303 = vmatpush1.bf16.xpose.msra.mxu0 0
        %4304 = vmatprep.subr.bf16.mxu0 0
        %4305 = vmatpush1.bf16.xpose.msra.mxu0 0
        %4306 = vmatprep.subr.bf16.mxu0 0
        %4307 = vmatpush1.bf16.xpose.msra.mxu0 0
        %4308 = vmatprep.subr.bf16.mxu0 0
        %4309 = vmatpush1.bf16.xpose.msra.mxu0 0
        %4310 = vmatprep.mubr.bf16.mxu0 0
        %4311 = vmatmul.mubr.bf16.gmra.mrb[0].mxu0 %v4277
        %v4312 = vpop.f32.mrb[0].mxu0
        %v4313 = vadd.f32 0.0, %v4312
        %v4314 = vpop.f32.mrb[0].mxu0
        %v4315 = vpop.f32.mrb[0].mxu0
        %v4316 = vpop.f32.mrb[0].mxu0
        %4317 = vdwg.mxu0
        %v4318 = vsel %vm1979, %v4313, -inf
        %4319 = vmax.xlane.f32.xlu0 %v4318
        %v4320 = vpop.xlane.xlu0 %4319
        %v4321 = vsub.f32 %v4313, %v4320
        %v4322 = vmul.f32 %v4321, 1.442695
        %v4323 = vpow.pop %v4322
        %v4324 = vsel %vm1979, %v4323, 0.0
        %4325 = vadd.xlane.f32.xlu0 %v4324
        %v4326 = vpop.xlane.xlu0 %4325
        %v4327 = vrcp.pop %v4326
        %v4328 = vmul.f32 %v4323, %v4327
        %v4329 = vsel %vm4275, %v4207, 0.0
        %v4330 = vpack.c.bf16 %v4329, %v4329
        %v4331 = vpack.c.bf16 %v4328, %v4328
        %v4333 = vsel %vm1979, %v4331, 0
        %v4336 = vsel %vm1983, %v4330, 0
        %4338 = vmatprep.subr.bf16.mxu0 0
        %4339 = vmatpush1.bf16.msra.mxu0 %v4336
        %4340 = vmatprep.subr.bf16.mxu0 0
        %4341 = vmatpush1.bf16.msra.mxu0 0
        %4342 = vmatprep.subr.bf16.mxu0 0
        %4343 = vmatpush1.bf16.msra.mxu0 0
        %4344 = vmatprep.subr.bf16.mxu0 0
        %4345 = vmatpush1.bf16.msra.mxu0 0
        %4346 = vmatprep.subr.bf16.mxu0 0
        %4347 = vmatpush1.bf16.msra.mxu0 0
        %4348 = vmatprep.subr.bf16.mxu0 0
        %4349 = vmatpush1.bf16.msra.mxu0 0
        %4350 = vmatprep.subr.bf16.mxu0 0
        %4351 = vmatpush1.bf16.msra.mxu0 0
        %4352 = vmatprep.subr.bf16.mxu0 0
        %4353 = vmatpush1.bf16.msra.mxu0 0
        %4354 = vmatprep.subr.bf16.mxu0 0
        %4355 = vmatpush1.bf16.msra.mxu0 0
        %4356 = vmatprep.subr.bf16.mxu0 0
        %4357 = vmatpush1.bf16.msra.mxu0 0
        %4358 = vmatprep.subr.bf16.mxu0 0
        %4359 = vmatpush1.bf16.msra.mxu0 0
        %4360 = vmatprep.subr.bf16.mxu0 0
        %4361 = vmatpush1.bf16.msra.mxu0 0
        %4362 = vmatprep.subr.bf16.mxu0 0
        %4363 = vmatpush1.bf16.msra.mxu0 0
        %4364 = vmatprep.subr.bf16.mxu0 0
        %4365 = vmatpush1.bf16.msra.mxu0 0
        %4366 = vmatprep.subr.bf16.mxu0 0
        %4367 = vmatpush1.bf16.msra.mxu0 0
        %4368 = vmatprep.subr.bf16.mxu0 0
        %4369 = vmatpush1.bf16.msra.mxu0 0
        %4370 = vmatprep.mubr.bf16.mxu0 0
        %4371 = vmatmul.mubr.bf16.gmra.mrb[0].mxu0 %v4333
        %v4372 = vpop.f32.mrb[0].mxu0
        %v4373 = vadd.f32 0.0, %v4372
        %v4374 = vpop.f32.mrb[0].mxu0
        %v4375 = vpop.f32.mrb[0].mxu0
        %v4376 = vpop.f32.mrb[0].mxu0
        %4377 = vdwg.mxu0
        %v4379 = vsel %vm1979, %v4272, 0
        %v4382 = vsel %vm1983, %v4271, 0
        %4384 = vmatprep.subr.bf16.mxu0 0
        %4385 = vmatpush1.bf16.msra.mxu0 %v4382
        %4386 = vmatprep.subr.bf16.mxu0 0
        %4387 = vmatpush1.bf16.msra.mxu0 0
        %4388 = vmatprep.subr.bf16.mxu0 0
        %4389 = vmatpush1.bf16.msra.mxu0 0
        %4390 = vmatprep.subr.bf16.mxu0 0
        %4391 = vmatpush1.bf16.msra.mxu0 0
        %4392 = vmatprep.subr.bf16.mxu0 0
        %4393 = vmatpush1.bf16.msra.mxu0 0
        %4394 = vmatprep.subr.bf16.mxu0 0
        %4395 = vmatpush1.bf16.msra.mxu0 0
        %4396 = vmatprep.subr.bf16.mxu0 0
        %4397 = vmatpush1.bf16.msra.mxu0 0
        %4398 = vmatprep.subr.bf16.mxu0 0
        %4399 = vmatpush1.bf16.msra.mxu0 0
        %4400 = vmatprep.subr.bf16.mxu0 0
        %4401 = vmatpush1.bf16.msra.mxu0 0
        %4402 = vmatprep.subr.bf16.mxu0 0
        %4403 = vmatpush1.bf16.msra.mxu0 0
        %4404 = vmatprep.subr.bf16.mxu0 0
        %4405 = vmatpush1.bf16.msra.mxu0 0
        %4406 = vmatprep.subr.bf16.mxu0 0
        %4407 = vmatpush1.bf16.msra.mxu0 0
        %4408 = vmatprep.subr.bf16.mxu0 0
        %4409 = vmatpush1.bf16.msra.mxu0 0
        %4410 = vmatprep.subr.bf16.mxu0 0
        %4411 = vmatpush1.bf16.msra.mxu0 0
        %4412 = vmatprep.subr.bf16.mxu0 0
        %4413 = vmatpush1.bf16.msra.mxu0 0
        %4414 = vmatprep.subr.bf16.mxu0 0
        %4415 = vmatpush1.bf16.msra.mxu0 0
        %4416 = vmatprep.mubr.bf16.mxu0 0
        %4417 = vmatmul.mubr.bf16.gmra.mrb[0].mxu0 %v4379
        %v4418 = vpop.f32.mrb[0].mxu0
        %v4419 = vadd.f32 %v4373, %v4418
        %v4420 = vpop.f32.mrb[0].mxu0
        %v4421 = vpop.f32.mrb[0].mxu0
        %v4422 = vpop.f32.mrb[0].mxu0
        %4423 = vdwg.mxu0
        %vm4424 = vcmp.ge.s32.totalorder %v3952, 64
        %vm4425 = vcmp.lt.s32.totalorder %v3952, 96
        %vm4426 = vmand %vm4424, %vm4425
        %v4427 = vsel %vm4426, %v4166, 0.0
        %v4428 = vpack.c.bf16 %v4427, %v4427
        %4429 = vmatprep.subr.bf16.mxu0 0
        %4430 = vmatpush1.bf16.xpose.msra.mxu0 %v4213
        %4431 = vmatprep.subr.bf16.mxu0 0
        %4432 = vmatpush1.bf16.xpose.msra.mxu0 0
        %4433 = vmatprep.subr.bf16.mxu0 0
        %4434 = vmatpush1.bf16.xpose.msra.mxu0 0
        %4435 = vmatprep.subr.bf16.mxu0 0
        %4436 = vmatpush1.bf16.xpose.msra.mxu0 0
        %4437 = vmatprep.subr.bf16.mxu0 0
        %4438 = vmatpush1.bf16.xpose.msra.mxu0 0
        %4439 = vmatprep.subr.bf16.mxu0 0
        %4440 = vmatpush1.bf16.xpose.msra.mxu0 0
        %4441 = vmatprep.subr.bf16.mxu0 0
        %4442 = vmatpush1.bf16.xpose.msra.mxu0 0
        %4443 = vmatprep.subr.bf16.mxu0 0
        %4444 = vmatpush1.bf16.xpose.msra.mxu0 0
        %4445 = vmatprep.subr.bf16.mxu0 0
        %4446 = vmatpush1.bf16.xpose.msra.mxu0 0
        %4447 = vmatprep.subr.bf16.mxu0 0
        %4448 = vmatpush1.bf16.xpose.msra.mxu0 0
        %4449 = vmatprep.subr.bf16.mxu0 0
        %4450 = vmatpush1.bf16.xpose.msra.mxu0 0
        %4451 = vmatprep.subr.bf16.mxu0 0
        %4452 = vmatpush1.bf16.xpose.msra.mxu0 0
        %4453 = vmatprep.subr.bf16.mxu0 0
        %4454 = vmatpush1.bf16.xpose.msra.mxu0 0
        %4455 = vmatprep.subr.bf16.mxu0 0
        %4456 = vmatpush1.bf16.xpose.msra.mxu0 0
        %4457 = vmatprep.subr.bf16.mxu0 0
        %4458 = vmatpush1.bf16.xpose.msra.mxu0 0
        %4459 = vmatprep.subr.bf16.mxu0 0
        %4460 = vmatpush1.bf16.xpose.msra.mxu0 0
        %4461 = vmatprep.mubr.bf16.mxu0 0
        %4462 = vmatmul.mubr.bf16.gmra.mrb[0].mxu0 %v4428
        %v4463 = vpop.f32.mrb[0].mxu0
        %v4464 = vadd.f32 0.0, %v4463
        %v4465 = vpop.f32.mrb[0].mxu0
        %v4466 = vpop.f32.mrb[0].mxu0
        %v4467 = vpop.f32.mrb[0].mxu0
        %4468 = vdwg.mxu0
        %v4469 = vsel %vm1979, %v4464, -inf
        %4470 = vmax.xlane.f32.xlu0 %v4469
        %v4471 = vpop.xlane.xlu0 %4470
        %v4472 = vsub.f32 %v4464, %v4471
        %v4473 = vmul.f32 %v4472, 1.442695
        %v4474 = vpow.pop %v4473
        %v4475 = vsel %vm1979, %v4474, 0.0
        %4476 = vadd.xlane.f32.xlu0 %v4475
        %v4477 = vpop.xlane.xlu0 %4476
        %v4478 = vrcp.pop %v4477
        %v4479 = vmul.f32 %v4474, %v4478
        %v4480 = vsel %vm4426, %v4207, 0.0
        %v4481 = vpack.c.bf16 %v4480, %v4480
        %v4482 = vpack.c.bf16 %v4479, %v4479
        %v4484 = vsel %vm1979, %v4482, 0
        %v4487 = vsel %vm1983, %v4481, 0
        %4489 = vmatprep.subr.bf16.mxu0 0
        %4490 = vmatpush1.bf16.msra.mxu0 %v4487
        %4491 = vmatprep.subr.bf16.mxu0 0
        %4492 = vmatpush1.bf16.msra.mxu0 0
        %4493 = vmatprep.subr.bf16.mxu0 0
        %4494 = vmatpush1.bf16.msra.mxu0 0
        %4495 = vmatprep.subr.bf16.mxu0 0
        %4496 = vmatpush1.bf16.msra.mxu0 0
        %4497 = vmatprep.subr.bf16.mxu0 0
        %4498 = vmatpush1.bf16.msra.mxu0 0
        %4499 = vmatprep.subr.bf16.mxu0 0
        %4500 = vmatpush1.bf16.msra.mxu0 0
        %4501 = vmatprep.subr.bf16.mxu0 0
        %4502 = vmatpush1.bf16.msra.mxu0 0
        %4503 = vmatprep.subr.bf16.mxu0 0
        %4504 = vmatpush1.bf16.msra.mxu0 0
        %4505 = vmatprep.subr.bf16.mxu0 0
        %4506 = vmatpush1.bf16.msra.mxu0 0
        %4507 = vmatprep.subr.bf16.mxu0 0
        %4508 = vmatpush1.bf16.msra.mxu0 0
        %4509 = vmatprep.subr.bf16.mxu0 0
        %4510 = vmatpush1.bf16.msra.mxu0 0
        %4511 = vmatprep.subr.bf16.mxu0 0
        %4512 = vmatpush1.bf16.msra.mxu0 0
        %4513 = vmatprep.subr.bf16.mxu0 0
        %4514 = vmatpush1.bf16.msra.mxu0 0
        %4515 = vmatprep.subr.bf16.mxu0 0
        %4516 = vmatpush1.bf16.msra.mxu0 0
        %4517 = vmatprep.subr.bf16.mxu0 0
        %4518 = vmatpush1.bf16.msra.mxu0 0
        %4519 = vmatprep.subr.bf16.mxu0 0
        %4520 = vmatpush1.bf16.msra.mxu0 0
        %4521 = vmatprep.mubr.bf16.mxu0 0
        %4522 = vmatmul.mubr.bf16.gmra.mrb[0].mxu0 %v4484
        %v4523 = vpop.f32.mrb[0].mxu0
        %v4524 = vadd.f32 0.0, %v4523
        %v4525 = vpop.f32.mrb[0].mxu0
        %v4526 = vpop.f32.mrb[0].mxu0
        %v4527 = vpop.f32.mrb[0].mxu0
        %4528 = vdwg.mxu0
        %v4529 = vadd.f32 %v4419, %v4524
        %vm4530 = vcmp.ge.s32.totalorder %v3952, 96
        %vm4531 = vcmp.lt.s32.totalorder %v3952, 128
        %vm4532 = vmand %vm4530, %vm4531
        %v4533 = vsel %vm4532, %v4166, 0.0
        %v4534 = vpack.c.bf16 %v4533, %v4533
        %4535 = vmatprep.subr.bf16.mxu0 0
        %4536 = vmatpush1.bf16.xpose.msra.mxu0 %v4213
        %4537 = vmatprep.subr.bf16.mxu0 0
        %4538 = vmatpush1.bf16.xpose.msra.mxu0 0
        %4539 = vmatprep.subr.bf16.mxu0 0
        %4540 = vmatpush1.bf16.xpose.msra.mxu0 0
        %4541 = vmatprep.subr.bf16.mxu0 0
        %4542 = vmatpush1.bf16.xpose.msra.mxu0 0
        %4543 = vmatprep.subr.bf16.mxu0 0
        %4544 = vmatpush1.bf16.xpose.msra.mxu0 0
        %4545 = vmatprep.subr.bf16.mxu0 0
        %4546 = vmatpush1.bf16.xpose.msra.mxu0 0
        %4547 = vmatprep.subr.bf16.mxu0 0
        %4548 = vmatpush1.bf16.xpose.msra.mxu0 0
        %4549 = vmatprep.subr.bf16.mxu0 0
        %4550 = vmatpush1.bf16.xpose.msra.mxu0 0
        %4551 = vmatprep.subr.bf16.mxu0 0
        %4552 = vmatpush1.bf16.xpose.msra.mxu0 0
        %4553 = vmatprep.subr.bf16.mxu0 0
        %4554 = vmatpush1.bf16.xpose.msra.mxu0 0
        %4555 = vmatprep.subr.bf16.mxu0 0
        %4556 = vmatpush1.bf16.xpose.msra.mxu0 0
        %4557 = vmatprep.subr.bf16.mxu0 0
        %4558 = vmatpush1.bf16.xpose.msra.mxu0 0
        %4559 = vmatprep.subr.bf16.mxu0 0
        %4560 = vmatpush1.bf16.xpose.msra.mxu0 0
        %4561 = vmatprep.subr.bf16.mxu0 0
        %4562 = vmatpush1.bf16.xpose.msra.mxu0 0
        %4563 = vmatprep.subr.bf16.mxu0 0
        %4564 = vmatpush1.bf16.xpose.msra.mxu0 0
        %4565 = vmatprep.subr.bf16.mxu0 0
        %4566 = vmatpush1.bf16.xpose.msra.mxu0 0
        %4567 = vmatprep.mubr.bf16.mxu0 0
        %4568 = vmatmul.mubr.bf16.gmra.mrb[0].mxu0 %v4534
        %v4569 = vpop.f32.mrb[0].mxu0
        %v4570 = vadd.f32 0.0, %v4569
        %v4571 = vpop.f32.mrb[0].mxu0
        %v4572 = vpop.f32.mrb[0].mxu0
        %v4573 = vpop.f32.mrb[0].mxu0
        %4574 = vdwg.mxu0
        %v4575 = vsel %vm1979, %v4570, -inf
        %4576 = vmax.xlane.f32.xlu0 %v4575
        %v4577 = vpop.xlane.xlu0 %4576
        %v4578 = vsub.f32 %v4570, %v4577
        %v4579 = vmul.f32 %v4578, 1.442695
        %v4580 = vpow.pop %v4579
        %v4581 = vsel %vm1979, %v4580, 0.0
        %4582 = vadd.xlane.f32.xlu0 %v4581
        %v4583 = vpop.xlane.xlu0 %4582
        %v4584 = vrcp.pop %v4583
        %v4585 = vmul.f32 %v4580, %v4584
        %v4586 = vsel %vm4532, %v4207, 0.0
        %v4587 = vpack.c.bf16 %v4586, %v4586
        %v4588 = vpack.c.bf16 %v4585, %v4585
        %v4590 = vsel %vm1979, %v4588, 0
        %v4593 = vsel %vm1983, %v4587, 0
        %4595 = vmatprep.subr.bf16.mxu0 0
        %4596 = vmatpush1.bf16.msra.mxu0 %v4593
        %4597 = vmatprep.subr.bf16.mxu0 0
        %4598 = vmatpush1.bf16.msra.mxu0 0
        %4599 = vmatprep.subr.bf16.mxu0 0
        %4600 = vmatpush1.bf16.msra.mxu0 0
        %4601 = vmatprep.subr.bf16.mxu0 0
        %4602 = vmatpush1.bf16.msra.mxu0 0
        %4603 = vmatprep.subr.bf16.mxu0 0
        %4604 = vmatpush1.bf16.msra.mxu0 0
        %4605 = vmatprep.subr.bf16.mxu0 0
        %4606 = vmatpush1.bf16.msra.mxu0 0
        %4607 = vmatprep.subr.bf16.mxu0 0
        %4608 = vmatpush1.bf16.msra.mxu0 0
        %4609 = vmatprep.subr.bf16.mxu0 0
        %4610 = vmatpush1.bf16.msra.mxu0 0
        %4611 = vmatprep.subr.bf16.mxu0 0
        %4612 = vmatpush1.bf16.msra.mxu0 0
        %4613 = vmatprep.subr.bf16.mxu0 0
        %4614 = vmatpush1.bf16.msra.mxu0 0
        %4615 = vmatprep.subr.bf16.mxu0 0
        %4616 = vmatpush1.bf16.msra.mxu0 0
        %4617 = vmatprep.subr.bf16.mxu0 0
        %4618 = vmatpush1.bf16.msra.mxu0 0
        %4619 = vmatprep.subr.bf16.mxu0 0
        %4620 = vmatpush1.bf16.msra.mxu0 0
        %4621 = vmatprep.subr.bf16.mxu0 0
        %4622 = vmatpush1.bf16.msra.mxu0 0
        %4623 = vmatprep.subr.bf16.mxu0 0
        %4624 = vmatpush1.bf16.msra.mxu0 0
        %4625 = vmatprep.subr.bf16.mxu0 0
        %4626 = vmatpush1.bf16.msra.mxu0 0
        %4627 = vmatprep.mubr.bf16.mxu0 0
        %4628 = vmatmul.mubr.bf16.gmra.mrb[0].mxu0 %v4590
        %v4629 = vpop.f32.mrb[0].mxu0
        %v4630 = vadd.f32 0.0, %v4629
        %v4631 = vpop.f32.mrb[0].mxu0
        %v4632 = vpop.f32.mrb[0].mxu0
        %v4633 = vpop.f32.mrb[0].mxu0
        %4634 = vdwg.mxu0
        %v4635 = vadd.f32 %v4529, %v4630
        %v4636 = vpack.c.bf16 %v4635, %v4635
        %v4637 = vld [vmem:[%s11] sm:$0xf]
        %v4638 = vld [vmem:[%s11 + $0x4] sm:$0xf]
        %v4639 = vld [vmem:[%s11 + $0x8] sm:$0xf]
        %v4640 = vld [vmem:[%s11 + $0xc] sm:$0xf]
        %v4641 = vld [vmem:[%s11 + $0x10] sm:$0xf]
        %v4642 = vld [vmem:[%s11 + $0x14] sm:$0xf]
        %v4643 = vld [vmem:[%s11 + $0x18] sm:$0xf]
        %v4644 = vld [vmem:[%s11 + $0x1c] sm:$0xf]
        %v4645 = vld [vmem:[%s11 + $0x20] sm:$0xf]
        %v4646 = vld [vmem:[%s11 + $0x24] sm:$0xf]
        %v4647 = vld [vmem:[%s11 + $0x28] sm:$0xf]
        %v4648 = vld [vmem:[%s11 + $0x2c] sm:$0xf]
        %v4649 = vld [vmem:[%s11 + $0x30] sm:$0xf]
        %v4650 = vld [vmem:[%s11 + $0x34] sm:$0xf]
        %v4651 = vld [vmem:[%s11 + $0x38] sm:$0xf]
        %v4652 = vld [vmem:[%s11 + $0x3c] sm:$0xf]
        %v4653 = vld [vmem:[%s12] sm:$0x1]
        %v4655 = vlaneseq
        %v4656 = vshrl.u32 %v4655, 7
        %v4657 = vsub.s32 0, %v4656
        %v4658 = vrot.slane %v4653, %v4657
        %v4676 = vunpack.c.l.b16 %v4637
        %v4677 = vunpack.c.l.b16 %v4638
        %v4678 = vunpack.c.l.b16 %v4639
        %v4679 = vunpack.c.l.b16 %v4640
        %v4680 = vunpack.c.l.b16 %v4641
        %v4681 = vunpack.c.l.b16 %v4642
        %v4682 = vunpack.c.l.b16 %v4643
        %v4683 = vunpack.c.l.b16 %v4644
        %v4684 = vunpack.c.l.b16 %v4645
        %v4685 = vunpack.c.l.b16 %v4646
        %v4686 = vunpack.c.l.b16 %v4647
        %v4687 = vunpack.c.l.b16 %v4648
        %v4688 = vunpack.c.l.b16 %v4649
        %v4689 = vunpack.c.l.b16 %v4650
        %v4690 = vunpack.c.l.b16 %v4651
        %v4691 = vunpack.c.l.b16 %v4652
        %v4692 = vpack.c.b16 %v4677, %v4676
        %v4693 = vpack.c.b16 %v4679, %v4678
        %v4694 = vpack.c.b16 %v4681, %v4680
        %v4695 = vpack.c.b16 %v4683, %v4682
        %v4696 = vpack.c.b16 %v4685, %v4684
        %v4697 = vpack.c.b16 %v4687, %v4686
        %v4698 = vpack.c.b16 %v4689, %v4688
        %v4699 = vpack.c.b16 %v4691, %v4690
        %4708 = vmatprep.subr.bf16.mxu0 0
        %4709 = vmatpush1.bf16.msra.mxu0 %v4692
        %4710 = vmatprep.subr.bf16.mxu0 0
        %4711 = vmatpush1.bf16.msra.mxu0 %v4693
        %4712 = vmatprep.subr.bf16.mxu0 0
        %4713 = vmatpush1.bf16.msra.mxu0 %v4694
        %4714 = vmatprep.subr.bf16.mxu0 0
        %4715 = vmatpush1.bf16.msra.mxu0 %v4695
        %4716 = vmatprep.subr.bf16.mxu0 0
        %4717 = vmatpush1.bf16.msra.mxu0 %v4696
        %4718 = vmatprep.subr.bf16.mxu0 0
        %4719 = vmatpush1.bf16.msra.mxu0 %v4697
        %4720 = vmatprep.subr.bf16.mxu0 0
        %4721 = vmatpush1.bf16.msra.mxu0 %v4698
        %4722 = vmatprep.subr.bf16.mxu0 0
        %4723 = vmatpush1.bf16.msra.mxu0 %v4699
        %4724 = vmatprep.subr.bf16.mxu0 0
        %4725 = vmatpush1.bf16.msra.mxu0 0
        %4726 = vmatprep.subr.bf16.mxu0 0
        %4727 = vmatpush1.bf16.msra.mxu0 0
        %4728 = vmatprep.subr.bf16.mxu0 0
        %4729 = vmatpush1.bf16.msra.mxu0 0
        %4730 = vmatprep.subr.bf16.mxu0 0
        %4731 = vmatpush1.bf16.msra.mxu0 0
        %4732 = vmatprep.subr.bf16.mxu0 0
        %4733 = vmatpush1.bf16.msra.mxu0 0
        %4734 = vmatprep.subr.bf16.mxu0 0
        %4735 = vmatpush1.bf16.msra.mxu0 0
        %4736 = vmatprep.subr.bf16.mxu0 0
        %4737 = vmatpush1.bf16.msra.mxu0 0
        %4738 = vmatprep.subr.bf16.mxu0 0
        %4739 = vmatpush1.bf16.msra.mxu0 0
        %4740 = vmatprep.mubr.bf16.mxu0 0
        %4741 = vmatmul.mubr.bf16.gmra.mrb[0].mxu0 %v4636
        %v4742 = vpop.f32.mrb[0].mxu0
        %v4743 = vadd.f32 %v4658, %v4742
        %v4744 = vpop.f32.mrb[0].mxu0
        %v4745 = vpop.f32.mrb[0].mxu0
        %v4746 = vpop.f32.mrb[0].mxu0
        %4747 = vdwg.mxu0
        %v4748 = vadd.f32 %v3946, %v4743
        %v4749 = vld [vmem:[%s13] sm:$0x1]
        %v4750 = vld [vmem:[%s14] sm:$0x1]
        %4751 = vadd.xlane.f32.xlu0 %v4748
        %v4752 = vpop.xlane.xlu0 %4751
        %v4753 = vrcp.pop 128.0
        %v4754 = vmul.f32 %v4752, %v4753
        %v4755 = vsub.f32 %v4748, %v4754
        %v4756 = vmul.f32 %v4755, %v4755
        %4757 = vadd.xlane.f32.xlu0 %v4756
        %v4758 = vpop.xlane.xlu0 %4757
        %v4759 = vmul.f32 %v4758, %v4753
        %v4760 = vadd.f32 %v4759, 1e-05
        %v4761 = vrsqrt.pop %v4760
        %v4762 = vmul.f32 %v4755, %v4761
        %v4764 = vlaneseq
        %v4765 = vshrl.u32 %v4764, 7
        %v4766 = vsub.s32 0, %v4765
        %v4767 = vrot.slane %v4749, %v4766
        %v4769 = vmul.f32 %v4762, %v4767
        %v4771 = vlaneseq
        %v4772 = vshrl.u32 %v4771, 7
        %v4773 = vsub.s32 0, %v4772
        %v4774 = vrot.slane %v4750, %v4773
        %v4776 = vadd.f32 %v4769, %v4774
        %v4777 = vpack.c.bf16 %v4776, %v4776
        %v4778 = vld [vmem:[%s15] sm:$0xff]
        %v4779 = vld [vmem:[%s15 + $0x8] sm:$0xff]
        %v4780 = vld [vmem:[%s15 + $0x10] sm:$0xff]
        %v4781 = vld [vmem:[%s15 + $0x18] sm:$0xff]
        %v4782 = vld [vmem:[%s15 + $0x20] sm:$0xff]
        %v4783 = vld [vmem:[%s15 + $0x28] sm:$0xff]
        %v4784 = vld [vmem:[%s15 + $0x30] sm:$0xff]
        %v4785 = vld [vmem:[%s15 + $0x38] sm:$0xff]
        %v4786 = vld [vmem:[%s15 + $0x40] sm:$0xff]
        %v4787 = vld [vmem:[%s15 + $0x48] sm:$0xff]
        %v4788 = vld [vmem:[%s15 + $0x50] sm:$0xff]
        %v4789 = vld [vmem:[%s15 + $0x58] sm:$0xff]
        %v4790 = vld [vmem:[%s15 + $0x60] sm:$0xff]
        %v4791 = vld [vmem:[%s15 + $0x68] sm:$0xff]
        %v4792 = vld [vmem:[%s15 + $0x70] sm:$0xff]
        %v4793 = vld [vmem:[%s15 + $0x78] sm:$0xff]
        %v4794 = vld [vmem:[%s16] sm:$0x3]
        %v4796 = vlaneseq
        %v4797 = vshrl.u32 %v4796, 7
        %v4798 = vsub.s32 0, %v4797
        %v4799 = vrot.slane %v4794, %v4798
        %v4800 = vlaneseq
        %v4801 = vshrl.u32 %v4800, 7
        %v4802 = vsub.s32 1, %v4801
        %v4803 = vrot.slane %v4794, %v4802
        %v4822 = vunpack.c.l.b16 %v4778
        %v4823 = vunpack.c.h.b16 %v4778
        %v4824 = vunpack.c.l.b16 %v4779
        %v4825 = vunpack.c.h.b16 %v4779
        %v4826 = vunpack.c.l.b16 %v4780
        %v4827 = vunpack.c.h.b16 %v4780
        %v4828 = vunpack.c.l.b16 %v4781
        %v4829 = vunpack.c.h.b16 %v4781
        %v4830 = vunpack.c.l.b16 %v4782
        %v4831 = vunpack.c.h.b16 %v4782
        %v4832 = vunpack.c.l.b16 %v4783
        %v4833 = vunpack.c.h.b16 %v4783
        %v4834 = vunpack.c.l.b16 %v4784
        %v4835 = vunpack.c.h.b16 %v4784
        %v4836 = vunpack.c.l.b16 %v4785
        %v4837 = vunpack.c.h.b16 %v4785
        %v4838 = vunpack.c.l.b16 %v4786
        %v4839 = vunpack.c.h.b16 %v4786
        %v4840 = vunpack.c.l.b16 %v4787
        %v4841 = vunpack.c.h.b16 %v4787
        %v4842 = vunpack.c.l.b16 %v4788
        %v4843 = vunpack.c.h.b16 %v4788
        %v4844 = vunpack.c.l.b16 %v4789
        %v4845 = vunpack.c.h.b16 %v4789
        %v4846 = vunpack.c.l.b16 %v4790
        %v4847 = vunpack.c.h.b16 %v4790
        %v4848 = vunpack.c.l.b16 %v4791
        %v4849 = vunpack.c.h.b16 %v4791
        %v4850 = vunpack.c.l.b16 %v4792
        %v4851 = vunpack.c.h.b16 %v4792
        %v4852 = vunpack.c.l.b16 %v4793
        %v4853 = vunpack.c.h.b16 %v4793
        %v4854 = vpack.c.b16 %v4824, %v4822
        %v4855 = vpack.c.b16 %v4825, %v4823
        %v4856 = vpack.c.b16 %v4828, %v4826
        %v4857 = vpack.c.b16 %v4829, %v4827
        %v4858 = vpack.c.b16 %v4832, %v4830
        %v4859 = vpack.c.b16 %v4833, %v4831
        %v4860 = vpack.c.b16 %v4836, %v4834
        %v4861 = vpack.c.b16 %v4837, %v4835
        %v4862 = vpack.c.b16 %v4840, %v4838
        %v4863 = vpack.c.b16 %v4841, %v4839
        %v4864 = vpack.c.b16 %v4844, %v4842
        %v4865 = vpack.c.b16 %v4845, %v4843
        %v4866 = vpack.c.b16 %v4848, %v4846
        %v4867 = vpack.c.b16 %v4849, %v4847
        %v4868 = vpack.c.b16 %v4852, %v4850
        %v4869 = vpack.c.b16 %v4853, %v4851
        %4886 = vmatprep.subr.bf16.mxu0 %v4855
        %4887 = vmatpush1.bf16.msra.mxu0 %v4854
        %4888 = vmatprep.subr.bf16.mxu0 %v4857
        %4889 = vmatpush1.bf16.msra.mxu0 %v4856
        %4890 = vmatprep.subr.bf16.mxu0 %v4859
        %4891 = vmatpush1.bf16.msra.mxu0 %v4858
        %4892 = vmatprep.subr.bf16.mxu0 %v4861
        %4893 = vmatpush1.bf16.msra.mxu0 %v4860
        %4894 = vmatprep.subr.bf16.mxu0 %v4863
        %4895 = vmatpush1.bf16.msra.mxu0 %v4862
        %4896 = vmatprep.subr.bf16.mxu0 %v4865
        %4897 = vmatpush1.bf16.msra.mxu0 %v4864
        %4898 = vmatprep.subr.bf16.mxu0 %v4867
        %4899 = vmatpush1.bf16.msra.mxu0 %v4866
        %4900 = vmatprep.subr.bf16.mxu0 %v4869
        %4901 = vmatpush1.bf16.msra.mxu0 %v4868
        %4902 = vmatprep.subr.bf16.mxu0 0
        %4903 = vmatpush1.bf16.msra.mxu0 0
        %4904 = vmatprep.subr.bf16.mxu0 0
        %4905 = vmatpush1.bf16.msra.mxu0 0
        %4906 = vmatprep.subr.bf16.mxu0 0
        %4907 = vmatpush1.bf16.msra.mxu0 0
        %4908 = vmatprep.subr.bf16.mxu0 0
        %4909 = vmatpush1.bf16.msra.mxu0 0
        %4910 = vmatprep.subr.bf16.mxu0 0
        %4911 = vmatpush1.bf16.msra.mxu0 0
        %4912 = vmatprep.subr.bf16.mxu0 0
        %4913 = vmatpush1.bf16.msra.mxu0 0
        %4914 = vmatprep.subr.bf16.mxu0 0
        %4915 = vmatpush1.bf16.msra.mxu0 0
        %4916 = vmatprep.subr.bf16.mxu0 0
        %4917 = vmatpush1.bf16.msra.mxu0 0
        %4918 = vmatprep.mubr.bf16.mxu0 0
        %4919 = vmatmul.mubr.bf16.gmra.mrb[0].mxu0 %v4777
        %v4920 = vpop.f32.mrb[0].mxu0
        %v4921 = vadd.f32 %v4799, %v4920
        %v4922 = vpop.f32.mrb[0].mxu0
        %v4923 = vadd.f32 %v4803, %v4922
        %v4924 = vpop.f32.mrb[0].mxu0
        %v4925 = vpop.f32.mrb[0].mxu0
        %4926 = vdwg.mxu0
        %v4927 = vmax.f32 %v4921, 0.0
        %v4928 = vmax.f32 %v4923, 0.0
        %v4929 = vpack.c.bf16 %v4927, %v4927
        %v4930 = vpack.c.bf16 %v4928, %v4928
        %v4931 = vld [vmem:[%s17] sm:$0xf]
        %v4932 = vld [vmem:[%s17 + $0x4] sm:$0xf]
        %v4933 = vld [vmem:[%s17 + $0x8] sm:$0xf]
        %v4934 = vld [vmem:[%s17 + $0xc] sm:$0xf]
        %v4935 = vld [vmem:[%s17 + $0x10] sm:$0xf]
        %v4936 = vld [vmem:[%s17 + $0x14] sm:$0xf]
        %v4937 = vld [vmem:[%s17 + $0x18] sm:$0xf]
        %v4938 = vld [vmem:[%s17 + $0x1c] sm:$0xf]
        %v4939 = vld [vmem:[%s17 + $0x20] sm:$0xf]
        %v4940 = vld [vmem:[%s17 + $0x24] sm:$0xf]
        %v4941 = vld [vmem:[%s17 + $0x28] sm:$0xf]
        %v4942 = vld [vmem:[%s17 + $0x2c] sm:$0xf]
        %v4943 = vld [vmem:[%s17 + $0x30] sm:$0xf]
        %v4944 = vld [vmem:[%s17 + $0x34] sm:$0xf]
        %v4945 = vld [vmem:[%s17 + $0x38] sm:$0xf]
        %v4946 = vld [vmem:[%s17 + $0x3c] sm:$0xf]
        %v4947 = vld [vmem:[%s17 + $0x40] sm:$0xf]
        %v4948 = vld [vmem:[%s17 + $0x44] sm:$0xf]
        %v4949 = vld [vmem:[%s17 + $0x48] sm:$0xf]
        %v4950 = vld [vmem:[%s17 + $0x4c] sm:$0xf]
        %v4951 = vld [vmem:[%s17 + $0x50] sm:$0xf]
        %v4952 = vld [vmem:[%s17 + $0x54] sm:$0xf]
        %v4953 = vld [vmem:[%s17 + $0x58] sm:$0xf]
        %v4954 = vld [vmem:[%s17 + $0x5c] sm:$0xf]
        %v4955 = vld [vmem:[%s17 + $0x60] sm:$0xf]
        %v4956 = vld [vmem:[%s17 + $0x64] sm:$0xf]
        %v4957 = vld [vmem:[%s17 + $0x68] sm:$0xf]
        %v4958 = vld [vmem:[%s17 + $0x6c] sm:$0xf]
        %v4959 = vld [vmem:[%s17 + $0x70] sm:$0xf]
        %v4960 = vld [vmem:[%s17 + $0x74] sm:$0xf]
        %v4961 = vld [vmem:[%s17 + $0x78] sm:$0xf]
        %v4962 = vld [vmem:[%s17 + $0x7c] sm:$0xf]
        %v4963 = vld [vmem:[%s18] sm:$0x1]
        %v4965 = vlaneseq
        %v4966 = vshrl.u32 %v4965, 7
        %v4967 = vsub.s32 0, %v4966
        %v4968 = vrot.slane %v4963, %v4967
        %v5002 = vunpack.c.l.b16 %v4931
        %v5003 = vunpack.c.l.b16 %v4932
        %v5004 = vunpack.c.l.b16 %v4933
        %v5005 = vunpack.c.l.b16 %v4934
        %v5006 = vunpack.c.l.b16 %v4935
        %v5007 = vunpack.c.l.b16 %v4936
        %v5008 = vunpack.c.l.b16 %v4937
        %v5009 = vunpack.c.l.b16 %v4938
        %v5010 = vunpack.c.l.b16 %v4939
        %v5011 = vunpack.c.l.b16 %v4940
        %v5012 = vunpack.c.l.b16 %v4941
        %v5013 = vunpack.c.l.b16 %v4942
        %v5014 = vunpack.c.l.b16 %v4943
        %v5015 = vunpack.c.l.b16 %v4944
        %v5016 = vunpack.c.l.b16 %v4945
        %v5017 = vunpack.c.l.b16 %v4946
        %v5018 = vunpack.c.l.b16 %v4947
        %v5019 = vunpack.c.l.b16 %v4948
        %v5020 = vunpack.c.l.b16 %v4949
        %v5021 = vunpack.c.l.b16 %v4950
        %v5022 = vunpack.c.l.b16 %v4951
        %v5023 = vunpack.c.l.b16 %v4952
        %v5024 = vunpack.c.l.b16 %v4953
        %v5025 = vunpack.c.l.b16 %v4954
        %v5026 = vunpack.c.l.b16 %v4955
        %v5027 = vunpack.c.l.b16 %v4956
        %v5028 = vunpack.c.l.b16 %v4957
        %v5029 = vunpack.c.l.b16 %v4958
        %v5030 = vunpack.c.l.b16 %v4959
        %v5031 = vunpack.c.l.b16 %v4960
        %v5032 = vunpack.c.l.b16 %v4961
        %v5033 = vunpack.c.l.b16 %v4962
        %v5034 = vpack.c.b16 %v5003, %v5002
        %v5035 = vpack.c.b16 %v5005, %v5004
        %v5036 = vpack.c.b16 %v5007, %v5006
        %v5037 = vpack.c.b16 %v5009, %v5008
        %v5038 = vpack.c.b16 %v5011, %v5010
        %v5039 = vpack.c.b16 %v5013, %v5012
        %v5040 = vpack.c.b16 %v5015, %v5014
        %v5041 = vpack.c.b16 %v5017, %v5016
        %v5042 = vpack.c.b16 %v5019, %v5018
        %v5043 = vpack.c.b16 %v5021, %v5020
        %v5044 = vpack.c.b16 %v5023, %v5022
        %v5045 = vpack.c.b16 %v5025, %v5024
        %v5046 = vpack.c.b16 %v5027, %v5026
        %v5047 = vpack.c.b16 %v5029, %v5028
        %v5048 = vpack.c.b16 %v5031, %v5030
        %v5049 = vpack.c.b16 %v5033, %v5032
        %5066 = vmatprep.subr.bf16.mxu0 0
        %5067 = vmatpush1.bf16.msra.mxu0 %v5034
        %5068 = vmatprep.subr.bf16.mxu0 0
        %5069 = vmatpush1.bf16.msra.mxu0 %v5035
        %5070 = vmatprep.subr.bf16.mxu0 0
        %5071 = vmatpush1.bf16.msra.mxu0 %v5036
        %5072 = vmatprep.subr.bf16.mxu0 0
        %5073 = vmatpush1.bf16.msra.mxu0 %v5037
        %5074 = vmatprep.subr.bf16.mxu0 0
        %5075 = vmatpush1.bf16.msra.mxu0 %v5038
        %5076 = vmatprep.subr.bf16.mxu0 0
        %5077 = vmatpush1.bf16.msra.mxu0 %v5039
        %5078 = vmatprep.subr.bf16.mxu0 0
        %5079 = vmatpush1.bf16.msra.mxu0 %v5040
        %5080 = vmatprep.subr.bf16.mxu0 0
        %5081 = vmatpush1.bf16.msra.mxu0 %v5041
        %5082 = vmatprep.subr.bf16.mxu0 0
        %5083 = vmatpush1.bf16.msra.mxu0 %v5042
        %5084 = vmatprep.subr.bf16.mxu0 0
        %5085 = vmatpush1.bf16.msra.mxu0 %v5043
        %5086 = vmatprep.subr.bf16.mxu0 0
        %5087 = vmatpush1.bf16.msra.mxu0 %v5044
        %5088 = vmatprep.subr.bf16.mxu0 0
        %5089 = vmatpush1.bf16.msra.mxu0 %v5045
        %5090 = vmatprep.subr.bf16.mxu0 0
        %5091 = vmatpush1.bf16.msra.mxu0 %v5046
        %5092 = vmatprep.subr.bf16.mxu0 0
        %5093 = vmatpush1.bf16.msra.mxu0 %v5047
        %5094 = vmatprep.subr.bf16.mxu0 0
        %5095 = vmatpush1.bf16.msra.mxu0 %v5048
        %5096 = vmatprep.subr.bf16.mxu0 0
        %5097 = vmatpush1.bf16.msra.mxu0 %v5049
        %5098 = vmatprep.mubr.bf16.mxu0 %v4930
        %5099 = vmatmul.mubr.bf16.gmra.mrb[0].mxu0 %v4929
        %v5100 = vpop.f32.mrb[0].mxu0
        %v5101 = vadd.f32 %v4968, %v5100
        %v5102 = vpop.f32.mrb[0].mxu0
        %v5103 = vpop.f32.mrb[0].mxu0
        %v5104 = vpop.f32.mrb[0].mxu0
        %5105 = vdwg.mxu0
        %v5106 = vadd.f32 %v4776, %v5101
        %v5107 = vld [vmem:[%s19] sm:$0x1]
        %v5108 = vld [vmem:[%s20] sm:$0x1]
        %5109 = vadd.xlane.f32.xlu0 %v5106
        %v5110 = vpop.xlane.xlu0 %5109
        %v5111 = vmul.f32 %v5110, %v4753
        %v5112 = vsub.f32 %v5106, %v5111
        %v5113 = vmul.f32 %v5112, %v5112
        %5114 = vadd.xlane.f32.xlu0 %v5113
        %v5115 = vpop.xlane.xlu0 %5114
        %v5116 = vmul.f32 %v5115, %v4753
        %v5117 = vadd.f32 %v5116, 1e-05
        %v5118 = vrsqrt.pop %v5117
        %v5119 = vmul.f32 %v5112, %v5118
        %v5121 = vlaneseq
        %v5122 = vshrl.u32 %v5121, 7
        %v5123 = vsub.s32 0, %v5122
        %v5124 = vrot.slane %v5107, %v5123
        %v5126 = vmul.f32 %v5119, %v5124
        %v5128 = vlaneseq
        %v5129 = vshrl.u32 %v5128, 7
        %v5130 = vsub.s32 0, %v5129
        %v5131 = vrot.slane %v5108, %v5130
        %v5133 = vadd.f32 %v5126, %v5131
        %v5134 = vpack.c.bf16 %v5133, %v5133
        %s5135 = scalar_lea.vmem %s9, 192
        %v5136 = vld [vmem:[%s5135] sm:$0xff]
        %v5137 = vld [vmem:[%s5135 + $0x8] sm:$0xf]
        %v5138 = vld [vmem:[%s5135 + $0xc] sm:$0xff]
        %v5139 = vld [vmem:[%s5135 + $0x14] sm:$0xf]
        %v5140 = vld [vmem:[%s5135 + $0x18] sm:$0xff]
        %v5141 = vld [vmem:[%s5135 + $0x20] sm:$0xf]
        %v5142 = vld [vmem:[%s5135 + $0x24] sm:$0xff]
        %v5143 = vld [vmem:[%s5135 + $0x2c] sm:$0xf]
        %v5144 = vld [vmem:[%s5135 + $0x30] sm:$0xff]
        %v5145 = vld [vmem:[%s5135 + $0x38] sm:$0xf]
        %v5146 = vld [vmem:[%s5135 + $0x3c] sm:$0xff]
        %v5147 = vld [vmem:[%s5135 + $0x44] sm:$0xf]
        %v5148 = vld [vmem:[%s5135 + $0x48] sm:$0xff]
        %v5149 = vld [vmem:[%s5135 + $0x50] sm:$0xf]
        %v5150 = vld [vmem:[%s5135 + $0x54] sm:$0xff]
        %v5151 = vld [vmem:[%s5135 + $0x5c] sm:$0xf]
        %v5152 = vld [vmem:[%s5135 + $0x60] sm:$0xff]
        %v5153 = vld [vmem:[%s5135 + $0x68] sm:$0xf]
        %v5154 = vld [vmem:[%s5135 + $0x6c] sm:$0xff]
        %v5155 = vld [vmem:[%s5135 + $0x74] sm:$0xf]
        %v5156 = vld [vmem:[%s5135 + $0x78] sm:$0xff]
        %v5157 = vld [vmem:[%s5135 + $0x80] sm:$0xf]
        %v5158 = vld [vmem:[%s5135 + $0x84] sm:$0xff]
        %v5159 = vld [vmem:[%s5135 + $0x8c] sm:$0xf]
        %v5160 = vld [vmem:[%s5135 + $0x90] sm:$0xff]
        %v5161 = vld [vmem:[%s5135 + $0x98] sm:$0xf]
        %v5162 = vld [vmem:[%s5135 + $0x9c] sm:$0xff]
        %v5163 = vld [vmem:[%s5135 + $0xa4] sm:$0xf]
        %v5164 = vld [vmem:[%s5135 + $0xa8] sm:$0xff]
        %v5165 = vld [vmem:[%s5135 + $0xb0] sm:$0xf]
        %v5166 = vld [vmem:[%s5135 + $0xb4] sm:$0xff]
        %v5167 = vld [vmem:[%s5135 + $0xbc] sm:$0xf]
        %s5168 = scalar_lea.vmem %s10, 3
        %v5169 = vld [vmem:[%s5168] sm:$0x7]
        %v5171 = vlaneseq
        %v5172 = vshrl.u32 %v5171, 7
        %v5173 = vsub.s32 0, %v5172
        %v5174 = vrot.slane %v5169, %v5173
        %v5175 = vlaneseq
        %v5176 = vshrl.u32 %v5175, 7
        %v5177 = vsub.s32 1, %v5176
        %v5178 = vrot.slane %v5169, %v5177
        %v5179 = vlaneseq
        %v5180 = vshrl.u32 %v5179, 7
        %v5181 = vsub.s32 2, %v5180
        %v5182 = vrot.slane %v5169, %v5181
        %v5218 = vunpack.c.l.b16 %v5136
        %v5219 = vunpack.c.h.b16 %v5136
        %v5220 = vunpack.c.l.b16 %v5137
        %v5221 = vunpack.c.l.b16 %v5138
        %v5222 = vunpack.c.h.b16 %v5138
        %v5223 = vunpack.c.l.b16 %v5139
        %v5224 = vunpack.c.l.b16 %v5140
        %v5225 = vunpack.c.h.b16 %v5140
        %v5226 = vunpack.c.l.b16 %v5141
        %v5227 = vunpack.c.l.b16 %v5142
        %v5228 = vunpack.c.h.b16 %v5142
        %v5229 = vunpack.c.l.b16 %v5143
        %v5230 = vunpack.c.l.b16 %v5144
        %v5231 = vunpack.c.h.b16 %v5144
        %v5232 = vunpack.c.l.b16 %v5145
        %v5233 = vunpack.c.l.b16 %v5146
        %v5234 = vunpack.c.h.b16 %v5146
        %v5235 = vunpack.c.l.b16 %v5147
        %v5236 = vunpack.c.l.b16 %v5148
        %v5237 = vunpack.c.h.b16 %v5148
        %v5238 = vunpack.c.l.b16 %v5149
        %v5239 = vunpack.c.l.b16 %v5150
        %v5240 = vunpack.c.h.b16 %v5150
        %v5241 = vunpack.c.l.b16 %v5151
        %v5242 = vunpack.c.l.b16 %v5152
        %v5243 = vunpack.c.h.b16 %v5152
        %v5244 = vunpack.c.l.b16 %v5153
        %v5245 = vunpack.c.l.b16 %v5154
        %v5246 = vunpack.c.h.b16 %v5154
        %v5247 = vunpack.c.l.b16 %v5155
        %v5248 = vunpack.c.l.b16 %v5156
        %v5249 = vunpack.c.h.b16 %v5156
        %v5250 = vunpack.c.l.b16 %v5157
        %v5251 = vunpack.c.l.b16 %v5158
        %v5252 = vunpack.c.h.b16 %v5158
        %v5253 = vunpack.c.l.b16 %v5159
        %v5254 = vunpack.c.l.b16 %v5160
        %v5255 = vunpack.c.h.b16 %v5160
        %v5256 = vunpack.c.l.b16 %v5161
        %v5257 = vunpack.c.l.b16 %v5162
        %v5258 = vunpack.c.h.b16 %v5162
        %v5259 = vunpack.c.l.b16 %v5163
        %v5260 = vunpack.c.l.b16 %v5164
        %v5261 = vunpack.c.h.b16 %v5164
        %v5262 = vunpack.c.l.b16 %v5165
        %v5263 = vunpack.c.l.b16 %v5166
        %v5264 = vunpack.c.h.b16 %v5166
        %v5265 = vunpack.c.l.b16 %v5167
        %v5266 = vpack.c.b16 %v5221, %v5218
        %v5267 = vpack.c.b16 %v5222, %v5219
        %v5268 = vpack.c.b16 %v5223, %v5220
        %v5269 = vpack.c.b16 %v5227, %v5224
        %v5270 = vpack.c.b16 %v5228, %v5225
        %v5271 = vpack.c.b16 %v5229, %v5226
        %v5272 = vpack.c.b16 %v5233, %v5230
        %v5273 = vpack.c.b16 %v5234, %v5231
        %v5274 = vpack.c.b16 %v5235, %v5232
        %v5275 = vpack.c.b16 %v5239, %v5236
        %v5276 = vpack.c.b16 %v5240, %v5237
        %v5277 = vpack.c.b16 %v5241, %v5238
        %v5278 = vpack.c.b16 %v5245, %v5242
        %v5279 = vpack.c.b16 %v5246, %v5243
        %v5280 = vpack.c.b16 %v5247, %v5244
        %v5281 = vpack.c.b16 %v5251, %v5248
        %v5282 = vpack.c.b16 %v5252, %v5249
        %v5283 = vpack.c.b16 %v5253, %v5250
        %v5284 = vpack.c.b16 %v5257, %v5254
        %v5285 = vpack.c.b16 %v5258, %v5255
        %v5286 = vpack.c.b16 %v5259, %v5256
        %v5287 = vpack.c.b16 %v5263, %v5260
        %v5288 = vpack.c.b16 %v5264, %v5261
        %v5289 = vpack.c.b16 %v5265, %v5262
        %5314 = vmatprep.subr.bf16.mxu0 %v5267
        %5315 = vmatpush1.bf16.msra.mxu0 %v5266
        %5316 = vmatprep.subr.bf16.mxu0 %v5270
        %5317 = vmatpush1.bf16.msra.mxu0 %v5269
        %5318 = vmatprep.subr.bf16.mxu0 %v5273
        %5319 = vmatpush1.bf16.msra.mxu0 %v5272
        %5320 = vmatprep.subr.bf16.mxu0 %v5276
        %5321 = vmatpush1.bf16.msra.mxu0 %v5275
        %5322 = vmatprep.subr.bf16.mxu0 %v5279
        %5323 = vmatpush1.bf16.msra.mxu0 %v5278
        %5324 = vmatprep.subr.bf16.mxu0 %v5282
        %5325 = vmatpush1.bf16.msra.mxu0 %v5281
        %5326 = vmatprep.subr.bf16.mxu0 %v5285
        %5327 = vmatpush1.bf16.msra.mxu0 %v5284
        %5328 = vmatprep.subr.bf16.mxu0 %v5288
        %5329 = vmatpush1.bf16.msra.mxu0 %v5287
        %5330 = vmatprep.subr.bf16.mxu0 0
        %5331 = vmatpush1.bf16.msra.mxu0 0
        %5332 = vmatprep.subr.bf16.mxu0 0
        %5333 = vmatpush1.bf16.msra.mxu0 0
        %5334 = vmatprep.subr.bf16.mxu0 0
        %5335 = vmatpush1.bf16.msra.mxu0 0
        %5336 = vmatprep.subr.bf16.mxu0 0
        %5337 = vmatpush1.bf16.msra.mxu0 0
        %5338 = vmatprep.subr.bf16.mxu0 0
        %5339 = vmatpush1.bf16.msra.mxu0 0
        %5340 = vmatprep.subr.bf16.mxu0 0
        %5341 = vmatpush1.bf16.msra.mxu0 0
        %5342 = vmatprep.subr.bf16.mxu0 0
        %5343 = vmatpush1.bf16.msra.mxu0 0
        %5344 = vmatprep.subr.bf16.mxu0 0
        %5345 = vmatpush1.bf16.msra.mxu0 0
        %5346 = vmatprep.mubr.bf16.mxu0 0
        %5347 = vmatmul.mubr.bf16.gmra.mrb[0].mxu0 %v5134
        %v5348 = vpop.f32.mrb[0].mxu0
        %v5349 = vadd.f32 %v5174, %v5348
        %v5350 = vpop.f32.mrb[0].mxu0
        %v5351 = vadd.f32 %v5178, %v5350
        %v5352 = vpop.f32.mrb[0].mxu0
        %v5353 = vpop.f32.mrb[0].mxu0
        %5354 = vdwg.mxu0
        %5355 = vmatprep.subr.bf16.mxu0 0
        %5356 = vmatpush1.bf16.msra.mxu0 %v5268
        %5357 = vmatprep.subr.bf16.mxu0 0
        %5358 = vmatpush1.bf16.msra.mxu0 %v5271
        %5359 = vmatprep.subr.bf16.mxu0 0
        %5360 = vmatpush1.bf16.msra.mxu0 %v5274
        %5361 = vmatprep.subr.bf16.mxu0 0
        %5362 = vmatpush1.bf16.msra.mxu0 %v5277
        %5363 = vmatprep.subr.bf16.mxu0 0
        %5364 = vmatpush1.bf16.msra.mxu0 %v5280
        %5365 = vmatprep.subr.bf16.mxu0 0
        %5366 = vmatpush1.bf16.msra.mxu0 %v5283
        %5367 = vmatprep.subr.bf16.mxu0 0
        %5368 = vmatpush1.bf16.msra.mxu0 %v5286
        %5369 = vmatprep.subr.bf16.mxu0 0
        %5370 = vmatpush1.bf16.msra.mxu0 %v5289
        %5371 = vmatprep.subr.bf16.mxu0 0
        %5372 = vmatpush1.bf16.msra.mxu0 0
        %5373 = vmatprep.subr.bf16.mxu0 0
        %5374 = vmatpush1.bf16.msra.mxu0 0
        %5375 = vmatprep.subr.bf16.mxu0 0
        %5376 = vmatpush1.bf16.msra.mxu0 0
        %5377 = vmatprep.subr.bf16.mxu0 0
        %5378 = vmatpush1.bf16.msra.mxu0 0
        %5379 = vmatprep.subr.bf16.mxu0 0
        %5380 = vmatpush1.bf16.msra.mxu0 0
        %5381 = vmatprep.subr.bf16.mxu0 0
        %5382 = vmatpush1.bf16.msra.mxu0 0
        %5383 = vmatprep.subr.bf16.mxu0 0
        %5384 = vmatpush1.bf16.msra.mxu0 0
        %5385 = vmatprep.subr.bf16.mxu0 0
        %5386 = vmatpush1.bf16.msra.mxu0 0
        %5387 = vmatprep.mubr.bf16.mxu0 0
        %5388 = vmatmul.mubr.bf16.gmra.mrb[0].mxu0 %v5134
        %v5389 = vpop.f32.mrb[0].mxu0
        %v5390 = vadd.f32 %v5182, %v5389
        %v5391 = vpop.f32.mrb[0].mxu0
        %v5392 = vpop.f32.mrb[0].mxu0
        %v5393 = vpop.f32.mrb[0].mxu0
        %5394 = vdwg.mxu0
        %v5395 = vmul.f32 %v5351, 0.17677669
        %v5396 = vpack.c.bf16 %v5395, %v5395
        %v5397 = vsel %vm4216, %v5349, 0.0
        %v5398 = vpack.c.bf16 %v5397, %v5397
        %5399 = vmatprep.subr.bf16.mxu0 0
        %5400 = vmatpush1.bf16.xpose.msra.mxu0 %v5396
        %5401 = vmatprep.subr.bf16.mxu0 0
        %5402 = vmatpush1.bf16.xpose.msra.mxu0 0
        %5403 = vmatprep.subr.bf16.mxu0 0
        %5404 = vmatpush1.bf16.xpose.msra.mxu0 0
        %5405 = vmatprep.subr.bf16.mxu0 0
        %5406 = vmatpush1.bf16.xpose.msra.mxu0 0
        %5407 = vmatprep.subr.bf16.mxu0 0
        %5408 = vmatpush1.bf16.xpose.msra.mxu0 0
        %5409 = vmatprep.subr.bf16.mxu0 0
        %5410 = vmatpush1.bf16.xpose.msra.mxu0 0
        %5411 = vmatprep.subr.bf16.mxu0 0
        %5412 = vmatpush1.bf16.xpose.msra.mxu0 0
        %5413 = vmatprep.subr.bf16.mxu0 0
        %5414 = vmatpush1.bf16.xpose.msra.mxu0 0
        %5415 = vmatprep.subr.bf16.mxu0 0
        %5416 = vmatpush1.bf16.xpose.msra.mxu0 0
        %5417 = vmatprep.subr.bf16.mxu0 0
        %5418 = vmatpush1.bf16.xpose.msra.mxu0 0
        %5419 = vmatprep.subr.bf16.mxu0 0
        %5420 = vmatpush1.bf16.xpose.msra.mxu0 0
        %5421 = vmatprep.subr.bf16.mxu0 0
        %5422 = vmatpush1.bf16.xpose.msra.mxu0 0
        %5423 = vmatprep.subr.bf16.mxu0 0
        %5424 = vmatpush1.bf16.xpose.msra.mxu0 0
        %5425 = vmatprep.subr.bf16.mxu0 0
        %5426 = vmatpush1.bf16.xpose.msra.mxu0 0
        %5427 = vmatprep.subr.bf16.mxu0 0
        %5428 = vmatpush1.bf16.xpose.msra.mxu0 0
        %5429 = vmatprep.subr.bf16.mxu0 0
        %5430 = vmatpush1.bf16.xpose.msra.mxu0 0
        %5431 = vmatprep.mubr.bf16.mxu0 0
        %5432 = vmatmul.mubr.bf16.gmra.mrb[0].mxu0 %v5398
        %v5433 = vpop.f32.mrb[0].mxu0
        %v5434 = vadd.f32 0.0, %v5433
        %v5435 = vpop.f32.mrb[0].mxu0
        %v5436 = vpop.f32.mrb[0].mxu0
        %v5437 = vpop.f32.mrb[0].mxu0
        %5438 = vdwg.mxu0
        %v5439 = vsel %vm1979, %v5434, -inf
        %5440 = vmax.xlane.f32.xlu0 %v5439
        %v5441 = vpop.xlane.xlu0 %5440
        %v5442 = vsub.f32 %v5434, %v5441
        %v5443 = vmul.f32 %v5442, 1.442695
        %v5444 = vpow.pop %v5443
        %v5445 = vsel %vm1979, %v5444, 0.0
        %5446 = vadd.xlane.f32.xlu0 %v5445
        %v5447 = vpop.xlane.xlu0 %5446
        %v5448 = vrcp.pop %v5447
        %v5449 = vmul.f32 %v5444, %v5448
        %v5450 = vsel %vm4216, %v5390, 0.0
        %v5451 = vpack.c.bf16 %v5450, %v5450
        %v5452 = vpack.c.bf16 %v5449, %v5449
        %v5453 = vsel %vm4275, %v5349, 0.0
        %v5454 = vpack.c.bf16 %v5453, %v5453
        %5455 = vmatprep.subr.bf16.mxu0 0
        %5456 = vmatpush1.bf16.xpose.msra.mxu0 %v5396
        %5457 = vmatprep.subr.bf16.mxu0 0
        %5458 = vmatpush1.bf16.xpose.msra.mxu0 0
        %5459 = vmatprep.subr.bf16.mxu0 0
        %5460 = vmatpush1.bf16.xpose.msra.mxu0 0
        %5461 = vmatprep.subr.bf16.mxu0 0
        %5462 = vmatpush1.bf16.xpose.msra.mxu0 0
        %5463 = vmatprep.subr.bf16.mxu0 0
        %5464 = vmatpush1.bf16.xpose.msra.mxu0 0
        %5465 = vmatprep.subr.bf16.mxu0 0
        %5466 = vmatpush1.bf16.xpose.msra.mxu0 0
        %5467 = vmatprep.subr.bf16.mxu0 0
        %5468 = vmatpush1.bf16.xpose.msra.mxu0 0
        %5469 = vmatprep.subr.bf16.mxu0 0
        %5470 = vmatpush1.bf16.xpose.msra.mxu0 0
        %5471 = vmatprep.subr.bf16.mxu0 0
        %5472 = vmatpush1.bf16.xpose.msra.mxu0 0
        %5473 = vmatprep.subr.bf16.mxu0 0
        %5474 = vmatpush1.bf16.xpose.msra.mxu0 0
        %5475 = vmatprep.subr.bf16.mxu0 0
        %5476 = vmatpush1.bf16.xpose.msra.mxu0 0
        %5477 = vmatprep.subr.bf16.mxu0 0
        %5478 = vmatpush1.bf16.xpose.msra.mxu0 0
        %5479 = vmatprep.subr.bf16.mxu0 0
        %5480 = vmatpush1.bf16.xpose.msra.mxu0 0
        %5481 = vmatprep.subr.bf16.mxu0 0
        %5482 = vmatpush1.bf16.xpose.msra.mxu0 0
        %5483 = vmatprep.subr.bf16.mxu0 0
        %5484 = vmatpush1.bf16.xpose.msra.mxu0 0
        %5485 = vmatprep.subr.bf16.mxu0 0
        %5486 = vmatpush1.bf16.xpose.msra.mxu0 0
        %5487 = vmatprep.mubr.bf16.mxu0 0
        %5488 = vmatmul.mubr.bf16.gmra.mrb[0].mxu0 %v5454
        %v5489 = vpop.f32.mrb[0].mxu0
        %v5490 = vadd.f32 0.0, %v5489
        %v5491 = vpop.f32.mrb[0].mxu0
        %v5492 = vpop.f32.mrb[0].mxu0
        %v5493 = vpop.f32.mrb[0].mxu0
        %5494 = vdwg.mxu0
        %v5495 = vsel %vm1979, %v5490, -inf
        %5496 = vmax.xlane.f32.xlu0 %v5495
        %v5497 = vpop.xlane.xlu0 %5496
        %v5498 = vsub.f32 %v5490, %v5497
        %v5499 = vmul.f32 %v5498, 1.442695
        %v5500 = vpow.pop %v5499
        %v5501 = vsel %vm1979, %v5500, 0.0
        %5502 = vadd.xlane.f32.xlu0 %v5501
        %v5503 = vpop.xlane.xlu0 %5502
        %v5504 = vrcp.pop %v5503
        %v5505 = vmul.f32 %v5500, %v5504
        %v5506 = vsel %vm4275, %v5390, 0.0
        %v5507 = vpack.c.bf16 %v5506, %v5506
        %v5508 = vpack.c.bf16 %v5505, %v5505
        %v5510 = vsel %vm1979, %v5508, 0
        %v5513 = vsel %vm1983, %v5507, 0
        %5515 = vmatprep.subr.bf16.mxu0 0
        %5516 = vmatpush1.bf16.msra.mxu0 %v5513
        %5517 = vmatprep.subr.bf16.mxu0 0
        %5518 = vmatpush1.bf16.msra.mxu0 0
        %5519 = vmatprep.subr.bf16.mxu0 0
        %5520 = vmatpush1.bf16.msra.mxu0 0
        %5521 = vmatprep.subr.bf16.mxu0 0
        %5522 = vmatpush1.bf16.msra.mxu0 0
        %5523 = vmatprep.subr.bf16.mxu0 0
        %5524 = vmatpush1.bf16.msra.mxu0 0
        %5525 = vmatprep.subr.bf16.mxu0 0
        %5526 = vmatpush1.bf16.msra.mxu0 0
        %5527 = vmatprep.subr.bf16.mxu0 0
        %5528 = vmatpush1.bf16.msra.mxu0 0
        %5529 = vmatprep.subr.bf16.mxu0 0
        %5530 = vmatpush1.bf16.msra.mxu0 0
        %5531 = vmatprep.subr.bf16.mxu0 0
        %5532 = vmatpush1.bf16.msra.mxu0 0
        %5533 = vmatprep.subr.bf16.mxu0 0
        %5534 = vmatpush1.bf16.msra.mxu0 0
        %5535 = vmatprep.subr.bf16.mxu0 0
        %5536 = vmatpush1.bf16.msra.mxu0 0
        %5537 = vmatprep.subr.bf16.mxu0 0
        %5538 = vmatpush1.bf16.msra.mxu0 0
        %5539 = vmatprep.subr.bf16.mxu0 0
        %5540 = vmatpush1.bf16.msra.mxu0 0
        %5541 = vmatprep.subr.bf16.mxu0 0
        %5542 = vmatpush1.bf16.msra.mxu0 0
        %5543 = vmatprep.subr.bf16.mxu0 0
        %5544 = vmatpush1.bf16.msra.mxu0 0
        %5545 = vmatprep.subr.bf16.mxu0 0
        %5546 = vmatpush1.bf16.msra.mxu0 0
        %5547 = vmatprep.mubr.bf16.mxu0 0
        %5548 = vmatmul.mubr.bf16.gmra.mrb[0].mxu0 %v5510
        %v5549 = vpop.f32.mrb[0].mxu0
        %v5550 = vadd.f32 0.0, %v5549
        %v5551 = vpop.f32.mrb[0].mxu0
        %v5552 = vpop.f32.mrb[0].mxu0
        %v5553 = vpop.f32.mrb[0].mxu0
        %5554 = vdwg.mxu0
        %v5556 = vsel %vm1979, %v5452, 0
        %v5559 = vsel %vm1983, %v5451, 0
        %5561 = vmatprep.subr.bf16.mxu0 0
        %5562 = vmatpush1.bf16.msra.mxu0 %v5559
        %5563 = vmatprep.subr.bf16.mxu0 0
        %5564 = vmatpush1.bf16.msra.mxu0 0
        %5565 = vmatprep.subr.bf16.mxu0 0
        %5566 = vmatpush1.bf16.msra.mxu0 0
        %5567 = vmatprep.subr.bf16.mxu0 0
        %5568 = vmatpush1.bf16.msra.mxu0 0
        %5569 = vmatprep.subr.bf16.mxu0 0
        %5570 = vmatpush1.bf16.msra.mxu0 0
        %5571 = vmatprep.subr.bf16.mxu0 0
        %5572 = vmatpush1.bf16.msra.mxu0 0
        %5573 = vmatprep.subr.bf16.mxu0 0
        %5574 = vmatpush1.bf16.msra.mxu0 0
        %5575 = vmatprep.subr.bf16.mxu0 0
        %5576 = vmatpush1.bf16.msra.mxu0 0
        %5577 = vmatprep.subr.bf16.mxu0 0
        %5578 = vmatpush1.bf16.msra.mxu0 0
        %5579 = vmatprep.subr.bf16.mxu0 0
        %5580 = vmatpush1.bf16.msra.mxu0 0
        %5581 = vmatprep.subr.bf16.mxu0 0
        %5582 = vmatpush1.bf16.msra.mxu0 0
        %5583 = vmatprep.subr.bf16.mxu0 0
        %5584 = vmatpush1.bf16.msra.mxu0 0
        %5585 = vmatprep.subr.bf16.mxu0 0
        %5586 = vmatpush1.bf16.msra.mxu0 0
        %5587 = vmatprep.subr.bf16.mxu0 0
        %5588 = vmatpush1.bf16.msra.mxu0 0
        %5589 = vmatprep.subr.bf16.mxu0 0
        %5590 = vmatpush1.bf16.msra.mxu0 0
        %5591 = vmatprep.subr.bf16.mxu0 0
        %5592 = vmatpush1.bf16.msra.mxu0 0
        %5593 = vmatprep.mubr.bf16.mxu0 0
        %5594 = vmatmul.mubr.bf16.gmra.mrb[0].mxu0 %v5556
        %v5595 = vpop.f32.mrb[0].mxu0
        %v5596 = vadd.f32 %v5550, %v5595
        %v5597 = vpop.f32.mrb[0].mxu0
        %v5598 = vpop.f32.mrb[0].mxu0
        %v5599 = vpop.f32.mrb[0].mxu0
        %5600 = vdwg.mxu0
        %v5601 = vsel %vm4426, %v5349, 0.0
        %v5602 = vpack.c.bf16 %v5601, %v5601
        %5603 = vmatprep.subr.bf16.mxu0 0
        %5604 = vmatpush1.bf16.xpose.msra.mxu0 %v5396
        %5605 = vmatprep.subr.bf16.mxu0 0
        %5606 = vmatpush1.bf16.xpose.msra.mxu0 0
        %5607 = vmatprep.subr.bf16.mxu0 0
        %5608 = vmatpush1.bf16.xpose.msra.mxu0 0
        %5609 = vmatprep.subr.bf16.mxu0 0
        %5610 = vmatpush1.bf16.xpose.msra.mxu0 0
        %5611 = vmatprep.subr.bf16.mxu0 0
        %5612 = vmatpush1.bf16.xpose.msra.mxu0 0
        %5613 = vmatprep.subr.bf16.mxu0 0
        %5614 = vmatpush1.bf16.xpose.msra.mxu0 0
        %5615 = vmatprep.subr.bf16.mxu0 0
        %5616 = vmatpush1.bf16.xpose.msra.mxu0 0
        %5617 = vmatprep.subr.bf16.mxu0 0
        %5618 = vmatpush1.bf16.xpose.msra.mxu0 0
        %5619 = vmatprep.subr.bf16.mxu0 0
        %5620 = vmatpush1.bf16.xpose.msra.mxu0 0
        %5621 = vmatprep.subr.bf16.mxu0 0
        %5622 = vmatpush1.bf16.xpose.msra.mxu0 0
        %5623 = vmatprep.subr.bf16.mxu0 0
        %5624 = vmatpush1.bf16.xpose.msra.mxu0 0
        %5625 = vmatprep.subr.bf16.mxu0 0
        %5626 = vmatpush1.bf16.xpose.msra.mxu0 0
        %5627 = vmatprep.subr.bf16.mxu0 0
        %5628 = vmatpush1.bf16.xpose.msra.mxu0 0
        %5629 = vmatprep.subr.bf16.mxu0 0
        %5630 = vmatpush1.bf16.xpose.msra.mxu0 0
        %5631 = vmatprep.subr.bf16.mxu0 0
        %5632 = vmatpush1.bf16.xpose.msra.mxu0 0
        %5633 = vmatprep.subr.bf16.mxu0 0
        %5634 = vmatpush1.bf16.xpose.msra.mxu0 0
        %5635 = vmatprep.mubr.bf16.mxu0 0
        %5636 = vmatmul.mubr.bf16.gmra.mrb[0].mxu0 %v5602
        %v5637 = vpop.f32.mrb[0].mxu0
        %v5638 = vadd.f32 0.0, %v5637
        %v5639 = vpop.f32.mrb[0].mxu0
        %v5640 = vpop.f32.mrb[0].mxu0
        %v5641 = vpop.f32.mrb[0].mxu0
        %5642 = vdwg.mxu0
        %v5643 = vsel %vm1979, %v5638, -inf
        %5644 = vmax.xlane.f32.xlu0 %v5643
        %v5645 = vpop.xlane.xlu0 %5644
        %v5646 = vsub.f32 %v5638, %v5645
        %v5647 = vmul.f32 %v5646, 1.442695
        %v5648 = vpow.pop %v5647
        %v5649 = vsel %vm1979, %v5648, 0.0
        %5650 = vadd.xlane.f32.xlu0 %v5649
        %v5651 = vpop.xlane.xlu0 %5650
        %v5652 = vrcp.pop %v5651
        %v5653 = vmul.f32 %v5648, %v5652
        %v5654 = vsel %vm4426, %v5390, 0.0
        %v5655 = vpack.c.bf16 %v5654, %v5654
        %v5656 = vpack.c.bf16 %v5653, %v5653
        %v5658 = vsel %vm1979, %v5656, 0
        %v5661 = vsel %vm1983, %v5655, 0
        %5663 = vmatprep.subr.bf16.mxu0 0
        %5664 = vmatpush1.bf16.msra.mxu0 %v5661
        %5665 = vmatprep.subr.bf16.mxu0 0
        %5666 = vmatpush1.bf16.msra.mxu0 0
        %5667 = vmatprep.subr.bf16.mxu0 0
        %5668 = vmatpush1.bf16.msra.mxu0 0
        %5669 = vmatprep.subr.bf16.mxu0 0
        %5670 = vmatpush1.bf16.msra.mxu0 0
        %5671 = vmatprep.subr.bf16.mxu0 0
        %5672 = vmatpush1.bf16.msra.mxu0 0
        %5673 = vmatprep.subr.bf16.mxu0 0
        %5674 = vmatpush1.bf16.msra.mxu0 0
        %5675 = vmatprep.subr.bf16.mxu0 0
        %5676 = vmatpush1.bf16.msra.mxu0 0
        %5677 = vmatprep.subr.bf16.mxu0 0
        %5678 = vmatpush1.bf16.msra.mxu0 0
        %5679 = vmatprep.subr.bf16.mxu0 0
        %5680 = vmatpush1.bf16.msra.mxu0 0
        %5681 = vmatprep.subr.bf16.mxu0 0
        %5682 = vmatpush1.bf16.msra.mxu0 0
        %5683 = vmatprep.subr.bf16.mxu0 0
        %5684 = vmatpush1.bf16.msra.mxu0 0
        %5685 = vmatprep.subr.bf16.mxu0 0
        %5686 = vmatpush1.bf16.msra.mxu0 0
        %5687 = vmatprep.subr.bf16.mxu0 0
        %5688 = vmatpush1.bf16.msra.mxu0 0
        %5689 = vmatprep.subr.bf16.mxu0 0
        %5690 = vmatpush1.bf16.msra.mxu0 0
        %5691 = vmatprep.subr.bf16.mxu0 0
        %5692 = vmatpush1.bf16.msra.mxu0 0
        %5693 = vmatprep.subr.bf16.mxu0 0
        %5694 = vmatpush1.bf16.msra.mxu0 0
        %5695 = vmatprep.mubr.bf16.mxu0 0
        %5696 = vmatmul.mubr.bf16.gmra.mrb[0].mxu0 %v5658
        %v5697 = vpop.f32.mrb[0].mxu0
        %v5698 = vadd.f32 0.0, %v5697
        %v5699 = vpop.f32.mrb[0].mxu0
        %v5700 = vpop.f32.mrb[0].mxu0
        %v5701 = vpop.f32.mrb[0].mxu0
        %5702 = vdwg.mxu0
        %v5703 = vadd.f32 %v5596, %v5698
        %v5704 = vsel %vm4532, %v5349, 0.0
        %v5705 = vpack.c.bf16 %v5704, %v5704
        %5706 = vmatprep.subr.bf16.mxu0 0
        %5707 = vmatpush1.bf16.xpose.msra.mxu0 %v5396
        %5708 = vmatprep.subr.bf16.mxu0 0
        %5709 = vmatpush1.bf16.xpose.msra.mxu0 0
        %5710 = vmatprep.subr.bf16.mxu0 0
        %5711 = vmatpush1.bf16.xpose.msra.mxu0 0
        %5712 = vmatprep.subr.bf16.mxu0 0
        %5713 = vmatpush1.bf16.xpose.msra.mxu0 0
        %5714 = vmatprep.subr.bf16.mxu0 0
        %5715 = vmatpush1.bf16.xpose.msra.mxu0 0
        %5716 = vmatprep.subr.bf16.mxu0 0
        %5717 = vmatpush1.bf16.xpose.msra.mxu0 0
        %5718 = vmatprep.subr.bf16.mxu0 0
        %5719 = vmatpush1.bf16.xpose.msra.mxu0 0
        %5720 = vmatprep.subr.bf16.mxu0 0
        %5721 = vmatpush1.bf16.xpose.msra.mxu0 0
        %5722 = vmatprep.subr.bf16.mxu0 0
        %5723 = vmatpush1.bf16.xpose.msra.mxu0 0
        %5724 = vmatprep.subr.bf16.mxu0 0
        %5725 = vmatpush1.bf16.xpose.msra.mxu0 0
        %5726 = vmatprep.subr.bf16.mxu0 0
        %5727 = vmatpush1.bf16.xpose.msra.mxu0 0
        %5728 = vmatprep.subr.bf16.mxu0 0
        %5729 = vmatpush1.bf16.xpose.msra.mxu0 0
        %5730 = vmatprep.subr.bf16.mxu0 0
        %5731 = vmatpush1.bf16.xpose.msra.mxu0 0
        %5732 = vmatprep.subr.bf16.mxu0 0
        %5733 = vmatpush1.bf16.xpose.msra.mxu0 0
        %5734 = vmatprep.subr.bf16.mxu0 0
        %5735 = vmatpush1.bf16.xpose.msra.mxu0 0
        %5736 = vmatprep.subr.bf16.mxu0 0
        %5737 = vmatpush1.bf16.xpose.msra.mxu0 0
        %5738 = vmatprep.mubr.bf16.mxu0 0
        %5739 = vmatmul.mubr.bf16.gmra.mrb[0].mxu0 %v5705
        %v5740 = vpop.f32.mrb[0].mxu0
        %v5741 = vadd.f32 0.0, %v5740
        %v5742 = vpop.f32.mrb[0].mxu0
        %v5743 = vpop.f32.mrb[0].mxu0
        %v5744 = vpop.f32.mrb[0].mxu0
        %5745 = vdwg.mxu0
        %v5746 = vsel %vm1979, %v5741, -inf
        %5747 = vmax.xlane.f32.xlu0 %v5746
        %v5748 = vpop.xlane.xlu0 %5747
        %v5749 = vsub.f32 %v5741, %v5748
        %v5750 = vmul.f32 %v5749, 1.442695
        %v5751 = vpow.pop %v5750
        %v5752 = vsel %vm1979, %v5751, 0.0
        %5753 = vadd.xlane.f32.xlu0 %v5752
        %v5754 = vpop.xlane.xlu0 %5753
        %v5755 = vrcp.pop %v5754
        %v5756 = vmul.f32 %v5751, %v5755
        %v5757 = vsel %vm4532, %v5390, 0.0
        %v5758 = vpack.c.bf16 %v5757, %v5757
        %v5759 = vpack.c.bf16 %v5756, %v5756
        %v5761 = vsel %vm1979, %v5759, 0
        %v5764 = vsel %vm1983, %v5758, 0
        %5766 = vmatprep.subr.bf16.mxu0 0
        %5767 = vmatpush1.bf16.msra.mxu0 %v5764
        %5768 = vmatprep.subr.bf16.mxu0 0
        %5769 = vmatpush1.bf16.msra.mxu0 0
        %5770 = vmatprep.subr.bf16.mxu0 0
        %5771 = vmatpush1.bf16.msra.mxu0 0
        %5772 = vmatprep.subr.bf16.mxu0 0
        %5773 = vmatpush1.bf16.msra.mxu0 0
        %5774 = vmatprep.subr.bf16.mxu0 0
        %5775 = vmatpush1.bf16.msra.mxu0 0
        %5776 = vmatprep.subr.bf16.mxu0 0
        %5777 = vmatpush1.bf16.msra.mxu0 0
        %5778 = vmatprep.subr.bf16.mxu0 0
        %5779 = vmatpush1.bf16.msra.mxu0 0
        %5780 = vmatprep.subr.bf16.mxu0 0
        %5781 = vmatpush1.bf16.msra.mxu0 0
        %5782 = vmatprep.subr.bf16.mxu0 0
        %5783 = vmatpush1.bf16.msra.mxu0 0
        %5784 = vmatprep.subr.bf16.mxu0 0
        %5785 = vmatpush1.bf16.msra.mxu0 0
        %5786 = vmatprep.subr.bf16.mxu0 0
        %5787 = vmatpush1.bf16.msra.mxu0 0
        %5788 = vmatprep.subr.bf16.mxu0 0
        %5789 = vmatpush1.bf16.msra.mxu0 0
        %5790 = vmatprep.subr.bf16.mxu0 0
        %5791 = vmatpush1.bf16.msra.mxu0 0
        %5792 = vmatprep.subr.bf16.mxu0 0
        %5793 = vmatpush1.bf16.msra.mxu0 0
        %5794 = vmatprep.subr.bf16.mxu0 0
        %5795 = vmatpush1.bf16.msra.mxu0 0
        %5796 = vmatprep.subr.bf16.mxu0 0
        %5797 = vmatpush1.bf16.msra.mxu0 0
        %5798 = vmatprep.mubr.bf16.mxu0 0
        %5799 = vmatmul.mubr.bf16.gmra.mrb[0].mxu0 %v5761
        %v5800 = vpop.f32.mrb[0].mxu0
        %v5801 = vadd.f32 0.0, %v5800
        %v5802 = vpop.f32.mrb[0].mxu0
        %v5803 = vpop.f32.mrb[0].mxu0
        %v5804 = vpop.f32.mrb[0].mxu0
        %5805 = vdwg.mxu0
        %v5806 = vadd.f32 %v5703, %v5801
        %v5807 = vpack.c.bf16 %v5806, %v5806
        %s5808 = scalar_lea.vmem %s11, 64
        %v5809 = vld [vmem:[%s5808] sm:$0xf]
        %v5810 = vld [vmem:[%s5808 + $0x4] sm:$0xf]
        %v5811 = vld [vmem:[%s5808 + $0x8] sm:$0xf]
        %v5812 = vld [vmem:[%s5808 + $0xc] sm:$0xf]
        %v5813 = vld [vmem:[%s5808 + $0x10] sm:$0xf]
        %v5814 = vld [vmem:[%s5808 + $0x14] sm:$0xf]
        %v5815 = vld [vmem:[%s5808 + $0x18] sm:$0xf]
        %v5816 = vld [vmem:[%s5808 + $0x1c] sm:$0xf]
        %v5817 = vld [vmem:[%s5808 + $0x20] sm:$0xf]
        %v5818 = vld [vmem:[%s5808 + $0x24] sm:$0xf]
        %v5819 = vld [vmem:[%s5808 + $0x28] sm:$0xf]
        %v5820 = vld [vmem:[%s5808 + $0x2c] sm:$0xf]
        %v5821 = vld [vmem:[%s5808 + $0x30] sm:$0xf]
        %v5822 = vld [vmem:[%s5808 + $0x34] sm:$0xf]
        %v5823 = vld [vmem:[%s5808 + $0x38] sm:$0xf]
        %v5824 = vld [vmem:[%s5808 + $0x3c] sm:$0xf]
        %s5825 = scalar_lea.vmem %s12, 1
        %v5826 = vld [vmem:[%s5825] sm:$0x1]
        %v5828 = vlaneseq
        %v5829 = vshrl.u32 %v5828, 7
        %v5830 = vsub.s32 0, %v5829
        %v5831 = vrot.slane %v5826, %v5830
        %v5849 = vunpack.c.l.b16 %v5809
        %v5850 = vunpack.c.l.b16 %v5810
        %v5851 = vunpack.c.l.b16 %v5811
        %v5852 = vunpack.c.l.b16 %v5812
        %v5853 = vunpack.c.l.b16 %v5813
        %v5854 = vunpack.c.l.b16 %v5814
        %v5855 = vunpack.c.l.b16 %v5815
        %v5856 = vunpack.c.l.b16 %v5816
        %v5857 = vunpack.c.l.b16 %v5817
        %v5858 = vunpack.c.l.b16 %v5818
        %v5859 = vunpack.c.l.b16 %v5819
        %v5860 = vunpack.c.l.b16 %v5820
        %v5861 = vunpack.c.l.b16 %v5821
        %v5862 = vunpack.c.l.b16 %v5822
        %v5863 = vunpack.c.l.b16 %v5823
        %v5864 = vunpack.c.l.b16 %v5824
        %v5865 = vpack.c.b16 %v5850, %v5849
        %v5866 = vpack.c.b16 %v5852, %v5851
        %v5867 = vpack.c.b16 %v5854, %v5853
        %v5868 = vpack.c.b16 %v5856, %v5855
        %v5869 = vpack.c.b16 %v5858, %v5857
        %v5870 = vpack.c.b16 %v5860, %v5859
        %v5871 = vpack.c.b16 %v5862, %v5861
        %v5872 = vpack.c.b16 %v5864, %v5863
        %5881 = vmatprep.subr.bf16.mxu0 0
        %5882 = vmatpush1.bf16.msra.mxu0 %v5865
        %5883 = vmatprep.subr.bf16.mxu0 0
        %5884 = vmatpush1.bf16.msra.mxu0 %v5866
        %5885 = vmatprep.subr.bf16.mxu0 0
        %5886 = vmatpush1.bf16.msra.mxu0 %v5867
        %5887 = vmatprep.subr.bf16.mxu0 0
        %5888 = vmatpush1.bf16.msra.mxu0 %v5868
        %5889 = vmatprep.subr.bf16.mxu0 0
        %5890 = vmatpush1.bf16.msra.mxu0 %v5869
        %5891 = vmatprep.subr.bf16.mxu0 0
        %5892 = vmatpush1.bf16.msra.mxu0 %v5870
        %5893 = vmatprep.subr.bf16.mxu0 0
        %5894 = vmatpush1.bf16.msra.mxu0 %v5871
        %5895 = vmatprep.subr.bf16.mxu0 0
        %5896 = vmatpush1.bf16.msra.mxu0 %v5872
        %5897 = vmatprep.subr.bf16.mxu0 0
        %5898 = vmatpush1.bf16.msra.mxu0 0
        %5899 = vmatprep.subr.bf16.mxu0 0
        %5900 = vmatpush1.bf16.msra.mxu0 0
        %5901 = vmatprep.subr.bf16.mxu0 0
        %5902 = vmatpush1.bf16.msra.mxu0 0
        %5903 = vmatprep.subr.bf16.mxu0 0
        %5904 = vmatpush1.bf16.msra.mxu0 0
        %5905 = vmatprep.subr.bf16.mxu0 0
        %5906 = vmatpush1.bf16.msra.mxu0 0
        %5907 = vmatprep.subr.bf16.mxu0 0
        %5908 = vmatpush1.bf16.msra.mxu0 0
        %5909 = vmatprep.subr.bf16.mxu0 0
        %5910 = vmatpush1.bf16.msra.mxu0 0
        %5911 = vmatprep.subr.bf16.mxu0 0
        %5912 = vmatpush1.bf16.msra.mxu0 0
        %5913 = vmatprep.mubr.bf16.mxu0 0
        %5914 = vmatmul.mubr.bf16.gmra.mrb[0].mxu0 %v5807
        %v5915 = vpop.f32.mrb[0].mxu0
        %v5916 = vadd.f32 %v5831, %v5915
        %v5917 = vpop.f32.mrb[0].mxu0
        %v5918 = vpop.f32.mrb[0].mxu0
        %v5919 = vpop.f32.mrb[0].mxu0
        %5920 = vdwg.mxu0
        %v5921 = vadd.f32 %v5133, %v5916
        %s5922 = scalar_lea.vmem %s13, 1
        %v5923 = vld [vmem:[%s5922] sm:$0x1]
        %s5924 = scalar_lea.vmem %s14, 1
        %v5925 = vld [vmem:[%s5924] sm:$0x1]
        %5926 = vadd.xlane.f32.xlu0 %v5921
        %v5927 = vpop.xlane.xlu0 %5926
        %v5928 = vmul.f32 %v5927, %v4753
        %v5929 = vsub.f32 %v5921, %v5928
        %v5930 = vmul.f32 %v5929, %v5929
        %5931 = vadd.xlane.f32.xlu0 %v5930
        %v5932 = vpop.xlane.xlu0 %5931
        %v5933 = vmul.f32 %v5932, %v4753
        %v5934 = vadd.f32 %v5933, 1e-05
        %v5935 = vrsqrt.pop %v5934
        %v5936 = vmul.f32 %v5929, %v5935
        %v5938 = vlaneseq
        %v5939 = vshrl.u32 %v5938, 7
        %v5940 = vsub.s32 0, %v5939
        %v5941 = vrot.slane %v5923, %v5940
        %v5943 = vmul.f32 %v5936, %v5941
        %v5945 = vlaneseq
        %v5946 = vshrl.u32 %v5945, 7
        %v5947 = vsub.s32 0, %v5946
        %v5948 = vrot.slane %v5925, %v5947
        %v5950 = vadd.f32 %v5943, %v5948
        %v5951 = vpack.c.bf16 %v5950, %v5950
        %s5952 = scalar_lea.vmem %s15, 128
        %v5953 = vld [vmem:[%s5952] sm:$0xff]
        %v5954 = vld [vmem:[%s5952 + $0x8] sm:$0xff]
        %v5955 = vld [vmem:[%s5952 + $0x10] sm:$0xff]
        %v5956 = vld [vmem:[%s5952 + $0x18] sm:$0xff]
        %v5957 = vld [vmem:[%s5952 + $0x20] sm:$0xff]
        %v5958 = vld [vmem:[%s5952 + $0x28] sm:$0xff]
        %v5959 = vld [vmem:[%s5952 + $0x30] sm:$0xff]
        %v5960 = vld [vmem:[%s5952 + $0x38] sm:$0xff]
        %v5961 = vld [vmem:[%s5952 + $0x40] sm:$0xff]
        %v5962 = vld [vmem:[%s5952 + $0x48] sm:$0xff]
        %v5963 = vld [vmem:[%s5952 + $0x50] sm:$0xff]
        %v5964 = vld [vmem:[%s5952 + $0x58] sm:$0xff]
        %v5965 = vld [vmem:[%s5952 + $0x60] sm:$0xff]
        %v5966 = vld [vmem:[%s5952 + $0x68] sm:$0xff]
        %v5967 = vld [vmem:[%s5952 + $0x70] sm:$0xff]
        %v5968 = vld [vmem:[%s5952 + $0x78] sm:$0xff]
        %s5969 = scalar_lea.vmem %s16, 2
        %v5970 = vld [vmem:[%s5969] sm:$0x3]
        %v5972 = vlaneseq
        %v5973 = vshrl.u32 %v5972, 7
        %v5974 = vsub.s32 0, %v5973
        %v5975 = vrot.slane %v5970, %v5974
        %v5976 = vlaneseq
        %v5977 = vshrl.u32 %v5976, 7
        %v5978 = vsub.s32 1, %v5977
        %v5979 = vrot.slane %v5970, %v5978
        %v5998 = vunpack.c.l.b16 %v5953
        %v5999 = vunpack.c.h.b16 %v5953
        %v6000 = vunpack.c.l.b16 %v5954
        %v6001 = vunpack.c.h.b16 %v5954
        %v6002 = vunpack.c.l.b16 %v5955
        %v6003 = vunpack.c.h.b16 %v5955
        %v6004 = vunpack.c.l.b16 %v5956
        %v6005 = vunpack.c.h.b16 %v5956
        %v6006 = vunpack.c.l.b16 %v5957
        %v6007 = vunpack.c.h.b16 %v5957
        %v6008 = vunpack.c.l.b16 %v5958
        %v6009 = vunpack.c.h.b16 %v5958
        %v6010 = vunpack.c.l.b16 %v5959
        %v6011 = vunpack.c.h.b16 %v5959
        %v6012 = vunpack.c.l.b16 %v5960
        %v6013 = vunpack.c.h.b16 %v5960
        %v6014 = vunpack.c.l.b16 %v5961
        %v6015 = vunpack.c.h.b16 %v5961
        %v6016 = vunpack.c.l.b16 %v5962
        %v6017 = vunpack.c.h.b16 %v5962
        %v6018 = vunpack.c.l.b16 %v5963
        %v6019 = vunpack.c.h.b16 %v5963
        %v6020 = vunpack.c.l.b16 %v5964
        %v6021 = vunpack.c.h.b16 %v5964
        %v6022 = vunpack.c.l.b16 %v5965
        %v6023 = vunpack.c.h.b16 %v5965
        %v6024 = vunpack.c.l.b16 %v5966
        %v6025 = vunpack.c.h.b16 %v5966
        %v6026 = vunpack.c.l.b16 %v5967
        %v6027 = vunpack.c.h.b16 %v5967
        %v6028 = vunpack.c.l.b16 %v5968
        %v6029 = vunpack.c.h.b16 %v5968
        %v6030 = vpack.c.b16 %v6000, %v5998
        %v6031 = vpack.c.b16 %v6001, %v5999
        %v6032 = vpack.c.b16 %v6004, %v6002
        %v6033 = vpack.c.b16 %v6005, %v6003
        %v6034 = vpack.c.b16 %v6008, %v6006
        %v6035 = vpack.c.b16 %v6009, %v6007
        %v6036 = vpack.c.b16 %v6012, %v6010
        %v6037 = vpack.c.b16 %v6013, %v6011
        %v6038 = vpack.c.b16 %v6016, %v6014
        %v6039 = vpack.c.b16 %v6017, %v6015
        %v6040 = vpack.c.b16 %v6020, %v6018
        %v6041 = vpack.c.b16 %v6021, %v6019
        %v6042 = vpack.c.b16 %v6024, %v6022
        %v6043 = vpack.c.b16 %v6025, %v6023
        %v6044 = vpack.c.b16 %v6028, %v6026
        %v6045 = vpack.c.b16 %v6029, %v6027
        %6062 = vmatprep.subr.bf16.mxu0 %v6031
        %6063 = vmatpush1.bf16.msra.mxu0 %v6030
        %6064 = vmatprep.subr.bf16.mxu0 %v6033
        %6065 = vmatpush1.bf16.msra.mxu0 %v6032
        %6066 = vmatprep.subr.bf16.mxu0 %v6035
        %6067 = vmatpush1.bf16.msra.mxu0 %v6034
        %6068 = vmatprep.subr.bf16.mxu0 %v6037
        %6069 = vmatpush1.bf16.msra.mxu0 %v6036
        %6070 = vmatprep.subr.bf16.mxu0 %v6039
        %6071 = vmatpush1.bf16.msra.mxu0 %v6038
        %6072 = vmatprep.subr.bf16.mxu0 %v6041
        %6073 = vmatpush1.bf16.msra.mxu0 %v6040
        %6074 = vmatprep.subr.bf16.mxu0 %v6043
        %6075 = vmatpush1.bf16.msra.mxu0 %v6042
        %6076 = vmatprep.subr.bf16.mxu0 %v6045
        %6077 = vmatpush1.bf16.msra.mxu0 %v6044
        %6078 = vmatprep.subr.bf16.mxu0 0
        %6079 = vmatpush1.bf16.msra.mxu0 0
        %6080 = vmatprep.subr.bf16.mxu0 0
        %6081 = vmatpush1.bf16.msra.mxu0 0
        %6082 = vmatprep.subr.bf16.mxu0 0
        %6083 = vmatpush1.bf16.msra.mxu0 0
        %6084 = vmatprep.subr.bf16.mxu0 0
        %6085 = vmatpush1.bf16.msra.mxu0 0
        %6086 = vmatprep.subr.bf16.mxu0 0
        %6087 = vmatpush1.bf16.msra.mxu0 0
        %6088 = vmatprep.subr.bf16.mxu0 0
        %6089 = vmatpush1.bf16.msra.mxu0 0
        %6090 = vmatprep.subr.bf16.mxu0 0
        %6091 = vmatpush1.bf16.msra.mxu0 0
        %6092 = vmatprep.subr.bf16.mxu0 0
        %6093 = vmatpush1.bf16.msra.mxu0 0
        %6094 = vmatprep.mubr.bf16.mxu0 0
        %6095 = vmatmul.mubr.bf16.gmra.mrb[0].mxu0 %v5951
        %v6096 = vpop.f32.mrb[0].mxu0
        %v6097 = vadd.f32 %v5975, %v6096
        %v6098 = vpop.f32.mrb[0].mxu0
        %v6099 = vadd.f32 %v5979, %v6098
        %v6100 = vpop.f32.mrb[0].mxu0
        %v6101 = vpop.f32.mrb[0].mxu0
        %6102 = vdwg.mxu0
        %v6103 = vmax.f32 %v6097, 0.0
        %v6104 = vmax.f32 %v6099, 0.0
        %v6105 = vpack.c.bf16 %v6103, %v6103
        %v6106 = vpack.c.bf16 %v6104, %v6104
        %s6107 = scalar_lea.vmem %s17, 128
        %v6108 = vld [vmem:[%s6107] sm:$0xf]
        %v6109 = vld [vmem:[%s6107 + $0x4] sm:$0xf]
        %v6110 = vld [vmem:[%s6107 + $0x8] sm:$0xf]
        %v6111 = vld [vmem:[%s6107 + $0xc] sm:$0xf]
        %v6112 = vld [vmem:[%s6107 + $0x10] sm:$0xf]
        %v6113 = vld [vmem:[%s6107 + $0x14] sm:$0xf]
        %v6114 = vld [vmem:[%s6107 + $0x18] sm:$0xf]
        %v6115 = vld [vmem:[%s6107 + $0x1c] sm:$0xf]
        %v6116 = vld [vmem:[%s6107 + $0x20] sm:$0xf]
        %v6117 = vld [vmem:[%s6107 + $0x24] sm:$0xf]
        %v6118 = vld [vmem:[%s6107 + $0x28] sm:$0xf]
        %v6119 = vld [vmem:[%s6107 + $0x2c] sm:$0xf]
        %v6120 = vld [vmem:[%s6107 + $0x30] sm:$0xf]
        %v6121 = vld [vmem:[%s6107 + $0x34] sm:$0xf]
        %v6122 = vld [vmem:[%s6107 + $0x38] sm:$0xf]
        %v6123 = vld [vmem:[%s6107 + $0x3c] sm:$0xf]
        %v6124 = vld [vmem:[%s6107 + $0x40] sm:$0xf]
        %v6125 = vld [vmem:[%s6107 + $0x44] sm:$0xf]
        %v6126 = vld [vmem:[%s6107 + $0x48] sm:$0xf]
        %v6127 = vld [vmem:[%s6107 + $0x4c] sm:$0xf]
        %v6128 = vld [vmem:[%s6107 + $0x50] sm:$0xf]
        %v6129 = vld [vmem:[%s6107 + $0x54] sm:$0xf]
        %v6130 = vld [vmem:[%s6107 + $0x58] sm:$0xf]
        %v6131 = vld [vmem:[%s6107 + $0x5c] sm:$0xf]
        %v6132 = vld [vmem:[%s6107 + $0x60] sm:$0xf]
        %v6133 = vld [vmem:[%s6107 + $0x64] sm:$0xf]
        %v6134 = vld [vmem:[%s6107 + $0x68] sm:$0xf]
        %v6135 = vld [vmem:[%s6107 + $0x6c] sm:$0xf]
        %v6136 = vld [vmem:[%s6107 + $0x70] sm:$0xf]
        %v6137 = vld [vmem:[%s6107 + $0x74] sm:$0xf]
        %v6138 = vld [vmem:[%s6107 + $0x78] sm:$0xf]
        %v6139 = vld [vmem:[%s6107 + $0x7c] sm:$0xf]
        %s6140 = scalar_lea.vmem %s18, 1
        %v6141 = vld [vmem:[%s6140] sm:$0x1]
        %v6143 = vlaneseq
        %v6144 = vshrl.u32 %v6143, 7
        %v6145 = vsub.s32 0, %v6144
        %v6146 = vrot.slane %v6141, %v6145
        %v6180 = vunpack.c.l.b16 %v6108
        %v6181 = vunpack.c.l.b16 %v6109
        %v6182 = vunpack.c.l.b16 %v6110
        %v6183 = vunpack.c.l.b16 %v6111
        %v6184 = vunpack.c.l.b16 %v6112
        %v6185 = vunpack.c.l.b16 %v6113
        %v6186 = vunpack.c.l.b16 %v6114
        %v6187 = vunpack.c.l.b16 %v6115
        %v6188 = vunpack.c.l.b16 %v6116
        %v6189 = vunpack.c.l.b16 %v6117
        %v6190 = vunpack.c.l.b16 %v6118
        %v6191 = vunpack.c.l.b16 %v6119
        %v6192 = vunpack.c.l.b16 %v6120
        %v6193 = vunpack.c.l.b16 %v6121
        %v6194 = vunpack.c.l.b16 %v6122
        %v6195 = vunpack.c.l.b16 %v6123
        %v6196 = vunpack.c.l.b16 %v6124
        %v6197 = vunpack.c.l.b16 %v6125
        %v6198 = vunpack.c.l.b16 %v6126
        %v6199 = vunpack.c.l.b16 %v6127
        %v6200 = vunpack.c.l.b16 %v6128
        %v6201 = vunpack.c.l.b16 %v6129
        %v6202 = vunpack.c.l.b16 %v6130
        %v6203 = vunpack.c.l.b16 %v6131
        %v6204 = vunpack.c.l.b16 %v6132
        %v6205 = vunpack.c.l.b16 %v6133
        %v6206 = vunpack.c.l.b16 %v6134
        %v6207 = vunpack.c.l.b16 %v6135
        %v6208 = vunpack.c.l.b16 %v6136
        %v6209 = vunpack.c.l.b16 %v6137
        %v6210 = vunpack.c.l.b16 %v6138
        %v6211 = vunpack.c.l.b16 %v6139
        %v6212 = vpack.c.b16 %v6181, %v6180
        %v6213 = vpack.c.b16 %v6183, %v6182
        %v6214 = vpack.c.b16 %v6185, %v6184
        %v6215 = vpack.c.b16 %v6187, %v6186
        %v6216 = vpack.c.b16 %v6189, %v6188
        %v6217 = vpack.c.b16 %v6191, %v6190
        %v6218 = vpack.c.b16 %v6193, %v6192
        %v6219 = vpack.c.b16 %v6195, %v6194
        %v6220 = vpack.c.b16 %v6197, %v6196
        %v6221 = vpack.c.b16 %v6199, %v6198
        %v6222 = vpack.c.b16 %v6201, %v6200
        %v6223 = vpack.c.b16 %v6203, %v6202
        %v6224 = vpack.c.b16 %v6205, %v6204
        %v6225 = vpack.c.b16 %v6207, %v6206
        %v6226 = vpack.c.b16 %v6209, %v6208
        %v6227 = vpack.c.b16 %v6211, %v6210
        %6244 = vmatprep.subr.bf16.mxu0 0
        %6245 = vmatpush1.bf16.msra.mxu0 %v6212
        %6246 = vmatprep.subr.bf16.mxu0 0
        %6247 = vmatpush1.bf16.msra.mxu0 %v6213
        %6248 = vmatprep.subr.bf16.mxu0 0
        %6249 = vmatpush1.bf16.msra.mxu0 %v6214
        %6250 = vmatprep.subr.bf16.mxu0 0
        %6251 = vmatpush1.bf16.msra.mxu0 %v6215
        %6252 = vmatprep.subr.bf16.mxu0 0
        %6253 = vmatpush1.bf16.msra.mxu0 %v6216
        %6254 = vmatprep.subr.bf16.mxu0 0
        %6255 = vmatpush1.bf16.msra.mxu0 %v6217
        %6256 = vmatprep.subr.bf16.mxu0 0
        %6257 = vmatpush1.bf16.msra.mxu0 %v6218
        %6258 = vmatprep.subr.bf16.mxu0 0
        %6259 = vmatpush1.bf16.msra.mxu0 %v6219
        %6260 = vmatprep.subr.bf16.mxu0 0
        %6261 = vmatpush1.bf16.msra.mxu0 %v6220
        %6262 = vmatprep.subr.bf16.mxu0 0
        %6263 = vmatpush1.bf16.msra.mxu0 %v6221
        %6264 = vmatprep.subr.bf16.mxu0 0
        %6265 = vmatpush1.bf16.msra.mxu0 %v6222
        %6266 = vmatprep.subr.bf16.mxu0 0
        %6267 = vmatpush1.bf16.msra.mxu0 %v6223
        %6268 = vmatprep.subr.bf16.mxu0 0
        %6269 = vmatpush1.bf16.msra.mxu0 %v6224
        %6270 = vmatprep.subr.bf16.mxu0 0
        %6271 = vmatpush1.bf16.msra.mxu0 %v6225
        %6272 = vmatprep.subr.bf16.mxu0 0
        %6273 = vmatpush1.bf16.msra.mxu0 %v6226
        %6274 = vmatprep.subr.bf16.mxu0 0
        %6275 = vmatpush1.bf16.msra.mxu0 %v6227
        %6276 = vmatprep.mubr.bf16.mxu0 %v6106
        %6277 = vmatmul.mubr.bf16.gmra.mrb[0].mxu0 %v6105
        %v6278 = vpop.f32.mrb[0].mxu0
        %v6279 = vadd.f32 %v6146, %v6278
        %v6280 = vpop.f32.mrb[0].mxu0
        %v6281 = vpop.f32.mrb[0].mxu0
        %v6282 = vpop.f32.mrb[0].mxu0
        %6283 = vdwg.mxu0
        %v6284 = vadd.f32 %v5950, %v6279
        %s6285 = scalar_lea.vmem %s19, 1
        %v6286 = vld [vmem:[%s6285] sm:$0x1]
        %s6287 = scalar_lea.vmem %s20, 1
        %v6288 = vld [vmem:[%s6287] sm:$0x1]
        %6289 = vadd.xlane.f32.xlu0 %v6284
        %v6290 = vpop.xlane.xlu0 %6289
        %v6291 = vmul.f32 %v6290, %v4753
        %v6292 = vsub.f32 %v6284, %v6291
        %v6293 = vmul.f32 %v6292, %v6292
        %6294 = vadd.xlane.f32.xlu0 %v6293
        %v6295 = vpop.xlane.xlu0 %6294
        %v6296 = vmul.f32 %v6295, %v4753
        %v6297 = vadd.f32 %v6296, 1e-05
        %v6298 = vrsqrt.pop %v6297
        %v6299 = vmul.f32 %v6292, %v6298
        %v6301 = vlaneseq
        %v6302 = vshrl.u32 %v6301, 7
        %v6303 = vsub.s32 0, %v6302
        %v6304 = vrot.slane %v6286, %v6303
        %v6306 = vmul.f32 %v6299, %v6304
        %v6308 = vlaneseq
        %v6309 = vshrl.u32 %v6308, 7
        %v6310 = vsub.s32 0, %v6309
        %v6311 = vrot.slane %v6288, %v6310
        %v6313 = vadd.f32 %v6306, %v6311
        %v6314 = vrot.slane %v6313, 4
        %v6315 = vadd.f32 %v6313, %v6314
        %v6316 = vrot.slane %v6315, 2
        %v6317 = vadd.f32 %v6315, %v6316
        %v6318 = vrot.slane %v6317, 1
        %v6319 = vadd.f32 %v6317, %v6318
        %v6320 = vrcp.pop 8.0
        %v6321 = vmul.f32 %v6319, %v6320
        %v6322 = vld [vmem:[%s21] sm:$0x1]
        %v6323 = vld [vmem:[%s22] sm:$0x1]
        %6324 = vadd.xlane.f32.xlu0 %v6321
        %v6325 = vpop.xlane.xlu0 %6324
        %v6326 = vmul.f32 %v6325, %v4753
        %v6327 = vsub.f32 %v6321, %v6326
        %v6328 = vmul.f32 %v6327, %v6327
        %6329 = vadd.xlane.f32.xlu0 %v6328
        %v6330 = vpop.xlane.xlu0 %6329
        %v6331 = vmul.f32 %v6330, %v4753
        %v6332 = vadd.f32 %v6331, 1e-05
        %v6333 = vrsqrt.pop %v6332
        %v6334 = vmul.f32 %v6327, %v6333
        %v6335 = vmul.f32 %v6334, %v6322
        %v6336 = vadd.f32 %v6335, %v6323
        %v6337 = vpack.c.bf16 %v6336, %v6336
        %v6338 = vld [vmem:[%s23] sm:$0xf]
        %v6339 = vld [vmem:[%s23 + $0x4] sm:$0xf]
        %v6340 = vld [vmem:[%s23 + $0x8] sm:$0xf]
        %v6341 = vld [vmem:[%s23 + $0xc] sm:$0xf]
        %v6342 = vld [vmem:[%s23 + $0x10] sm:$0xf]
        %v6343 = vld [vmem:[%s23 + $0x14] sm:$0xf]
        %v6344 = vld [vmem:[%s23 + $0x18] sm:$0xf]
        %v6345 = vld [vmem:[%s23 + $0x1c] sm:$0xf]
        %v6346 = vld [vmem:[%s23 + $0x20] sm:$0xf]
        %v6347 = vld [vmem:[%s23 + $0x24] sm:$0xf]
        %v6348 = vld [vmem:[%s23 + $0x28] sm:$0xf]
        %v6349 = vld [vmem:[%s23 + $0x2c] sm:$0xf]
        %v6350 = vld [vmem:[%s23 + $0x30] sm:$0xf]
        %v6351 = vld [vmem:[%s23 + $0x34] sm:$0xf]
        %v6352 = vld [vmem:[%s23 + $0x38] sm:$0xf]
        %v6353 = vld [vmem:[%s23 + $0x3c] sm:$0xf]
        %v6354 = vld [vmem:[%s24] sm:$0x1]
        %v6371 = vunpack.c.l.b16 %v6338
        %v6372 = vunpack.c.l.b16 %v6339
        %v6373 = vunpack.c.l.b16 %v6340
        %v6374 = vunpack.c.l.b16 %v6341
        %v6375 = vunpack.c.l.b16 %v6342
        %v6376 = vunpack.c.l.b16 %v6343
        %v6377 = vunpack.c.l.b16 %v6344
        %v6378 = vunpack.c.l.b16 %v6345
        %v6379 = vunpack.c.l.b16 %v6346
        %v6380 = vunpack.c.l.b16 %v6347
        %v6381 = vunpack.c.l.b16 %v6348
        %v6382 = vunpack.c.l.b16 %v6349
        %v6383 = vunpack.c.l.b16 %v6350
        %v6384 = vunpack.c.l.b16 %v6351
        %v6385 = vunpack.c.l.b16 %v6352
        %v6386 = vunpack.c.l.b16 %v6353
        %v6387 = vpack.c.b16 %v6372, %v6371
        %v6388 = vpack.c.b16 %v6374, %v6373
        %v6389 = vpack.c.b16 %v6376, %v6375
        %v6390 = vpack.c.b16 %v6378, %v6377
        %v6391 = vpack.c.b16 %v6380, %v6379
        %v6392 = vpack.c.b16 %v6382, %v6381
        %v6393 = vpack.c.b16 %v6384, %v6383
        %v6394 = vpack.c.b16 %v6386, %v6385
        %6403 = vmatprep.subr.bf16.mxu0 0
        %6404 = vmatpush1.bf16.msra.mxu0 %v6387
        %6405 = vmatprep.subr.bf16.mxu0 0
        %6406 = vmatpush1.bf16.msra.mxu0 %v6388
        %6407 = vmatprep.subr.bf16.mxu0 0
        %6408 = vmatpush1.bf16.msra.mxu0 %v6389
        %6409 = vmatprep.subr.bf16.mxu0 0
        %6410 = vmatpush1.bf16.msra.mxu0 %v6390
        %6411 = vmatprep.subr.bf16.mxu0 0
        %6412 = vmatpush1.bf16.msra.mxu0 %v6391
        %6413 = vmatprep.subr.bf16.mxu0 0
        %6414 = vmatpush1.bf16.msra.mxu0 %v6392
        %6415 = vmatprep.subr.bf16.mxu0 0
        %6416 = vmatpush1.bf16.msra.mxu0 %v6393
        %6417 = vmatprep.subr.bf16.mxu0 0
        %6418 = vmatpush1.bf16.msra.mxu0 %v6394
        %6419 = vmatprep.subr.bf16.mxu0 0
        %6420 = vmatpush1.bf16.msra.mxu0 0
        %6421 = vmatprep.subr.bf16.mxu0 0
        %6422 = vmatpush1.bf16.msra.mxu0 0
        %6423 = vmatprep.subr.bf16.mxu0 0
        %6424 = vmatpush1.bf16.msra.mxu0 0
        %6425 = vmatprep.subr.bf16.mxu0 0
        %6426 = vmatpush1.bf16.msra.mxu0 0
        %6427 = vmatprep.subr.bf16.mxu0 0
        %6428 = vmatpush1.bf16.msra.mxu0 0
        %6429 = vmatprep.subr.bf16.mxu0 0
        %6430 = vmatpush1.bf16.msra.mxu0 0
        %6431 = vmatprep.subr.bf16.mxu0 0
        %6432 = vmatpush1.bf16.msra.mxu0 0
        %6433 = vmatprep.subr.bf16.mxu0 0
        %6434 = vmatpush1.bf16.msra.mxu0 0
        %6435 = vmatprep.mubr.bf16.mxu0 0
        %6436 = vmatmul.mubr.bf16.gmra.mrb[0].mxu0 %v6337
        %v6437 = vpop.f32.mrb[0].mxu0
        %v6438 = vadd.f32 %v6354, %v6437
        %v6439 = vpop.f32.mrb[0].mxu0
        %v6440 = vpop.f32.mrb[0].mxu0
        %v6441 = vpop.f32.mrb[0].mxu0
        %6442 = vdwg.mxu0
        %6443 = vst [vmem:[%s756] sm:$0x1] %v6438
        %s6444 = sand.u32 %s577, 1
        %s6445 = scalar_lea.sflag [#allocation3], %s6444
        %s6446 = sand.u32 %s577, 1
        %s6447 = scalar_lea.vmem [#allocation2], %s6446
        // Predicated region
        $region121: #{mel_transformer_forward.1} parent=119 // pred_check
          %p6448 = pneg %p587
        $region122: #{mel_transformer_forward.1} parent=119 // pred_check_branch
          %6450 = sbr.rel (%p6448) target = $region124
        $region123: #{mel_transformer_forward.1} parent=119 // pred_region
          %s6452 = ssub.s32 16, 16
          %6453 = vsyncadd %s6445, %s6452
          %s6454 = smul.addr %s39, 16
          %s6455 = scalar_lea.hbm %s25, %s6454
          %s6457 = sshll.u32 %s6447, 4
          %s6458 = int_to_ptr.vmem [resolvable:$true] %s6457
          %6460 = dma.vmem_to_hbm [thread:$0]  %s6458, 16, %s6455, %s6445
        $region124: #{mel_transformer_forward.1} parent=119 // pred_fallthru
          _
      $region120: #{mel_transformer_forward.1} parent=5 // pred_fallthru
        _
      %p6461 = scmp.le.s32.totalorder 2, %s34
      // Predicated region
      $region125: #{mel_transformer_forward.1} parent=5 // pred_check
        %p6462 = pneg %p6461
      $region126: #{mel_transformer_forward.1} parent=5 // pred_check_branch
        %6464 = sbr.rel (%p6462) target = $region128
      $region127: #{mel_transformer_forward.1} parent=5 // pred_region
        %s6465 = ssub.s32 %s34, 2
        // Predicated region
        $region129: #{mel_transformer_forward.1} parent=127 // pred_check
          %p6466 = pneg %p593
        $region130: #{mel_transformer_forward.1} parent=127 // pred_check_branch
          %6468 = sbr.rel (%p6466) target = $region132
        $region131: #{mel_transformer_forward.1} parent=127 // pred_region
          %s6469 = sand.u32 %s578, 1
          %s6470 = scalar_lea.sflag [#allocation3], %s6469
          %s6471 = sand.u32 %s578, 1
          %s6472 = scalar_lea.vmem [#allocation2], %s6471
          %6473 = dma.done %s6470, 16
        $region132: #{mel_transformer_forward.1} parent=127 // pred_fallthru
          _
      $region128: #{mel_transformer_forward.1} parent=5 // pred_fallthru
        _
    $region6: #{mel_transformer_forward.1} parent=1 // loop_footer
      %s38 = sadd.s32 1, %s34
    $region7: #{mel_transformer_forward.1} parent=1 // loop_footer_branch
      %33 = sbr.rel target = $region3
    $region8: #{mel_transformer_forward.1} parent=1 // loop_exit
      _
    %6474 = vsyncpa [#allocation3], 1
    %s6475 = scalar_lea.sflag [#allocation3], 1
    %6476 = vsyncpa %s6475, 1

</llo_original>
